<compile_context>
chip_gen: v5e
topology: v5e:2x2
jax: 0.10.0
libtpu: 0.0.40
codegen_flags: <defaults>
</compile_context>

<pallas_src>
import functools

import jax
import jax.numpy as jnp
from jax.experimental import pallas as pl
from jax.experimental.pallas import tpu as pltpu


_SQRT_2_OVER_PI = 0.7978845608028654


def _gelu_tanh(x):
    # GELU with tanh approximation, matching torch.nn.GELU(approximate='tanh').
    return 0.5 * x * (1.0 + jnp.tanh(_SQRT_2_OVER_PI * (x + 0.044715 * x * x * x)))


def _accumulate_step(x_ref, wfc_ref, bfc_ref, wproj_ref, bproj_ref, acc_ref, gelu_dtype):
    """One (token-tile, hidden-tile) step: acc += gelu(x @ Wfc + bfc) @ Wproj."""
    h_idx = pl.program_id(1)

    @pl.when(h_idx == 0)
    def _():
        # Seed the accumulator with the c_proj bias (added exactly once per token tile).
        acc_ref[...] = jnp.broadcast_to(
            bproj_ref[...].astype(jnp.float32), acc_ref.shape
        )

    # Cast the token tile to bf16 inside the kernel (no wrapper-side HBM pass).
    x_bf = x_ref[...].astype(jnp.bfloat16)
    # (tm, D) @ (D, th) -> (tm, th), bf16 MXU inputs, f32 accumulation.
    h = jnp.dot(x_bf, wfc_ref[...], preferred_element_type=jnp.float32)
    h = h + bfc_ref[...]
    g = _gelu_tanh(h.astype(gelu_dtype))
    # (tm, th) @ (th, D) -> (tm, D), accumulated over hidden tiles.
    acc_ref[...] += jnp.dot(
        g.astype(jnp.bfloat16), wproj_ref[...], preferred_element_type=jnp.float32
    )


def mlp_kernel_acc_in_out(x_ref, wfc_ref, bfc_ref, wproj_ref, bproj_ref, o_ref,
                          *, gelu_dtype):
    # f32 output: accumulate directly into the resident output tile (no scratch).
    _accumulate_step(x_ref, wfc_ref, bfc_ref, wproj_ref, bproj_ref, o_ref, gelu_dtype)


def mlp_kernel_scratch_acc(x_ref, wfc_ref, bfc_ref, wproj_ref, bproj_ref, o_ref, acc_ref,
                           *, gelu_dtype):
    # Narrow (e.g. bf16) output: accumulate in an f32 scratch, cast once at the end.
    _accumulate_step(x_ref, wfc_ref, bfc_ref, wproj_ref, bproj_ref, acc_ref, gelu_dtype)

    @pl.when(pl.program_id(1) == pl.num_programs(1) - 1)
    def _():
        o_ref[...] = acc_ref[...].astype(o_ref.dtype)


def _round_up(x, m):
    return (x + m - 1) // m * m


def _vmem_capacity_bytes():
    """(capacity_bytes, detected). Falls back to a conservative 64 MiB (v7x per-TC)."""
    try:
        cap = getattr(pltpu.get_tpu_info(), "vmem_capacity_bytes", None)
        if cap:
            return int(cap), True
    except Exception:
        pass
    return 64 * 1024 * 1024, False


def _choose_tiles(M, D, H, x_bytes, out_bytes, acc_in_out, gelu_bytes, budget):
    """Pick (tm, th): largest token tile that fits, preferring th == H (weights DMA'd once)."""
    th_cands = [H] + [c for c in (2048, 1024, 512, 256, 128) if c < H and H % c == 0]

    # Cap tm so the "parallel" M axis has >= 2 tiles (v7x megacore / small-batch shapes)
    # and at 1024 (already past the v6e compute-bound knee for weight reuse).
    tm_cap = max(8, min(1024, _round_up(pl.cdiv(M, 2), 8)))
    tm_cands = sorted(
        {t for t in (1024, 768, 512, 384, 256, 192, 128, 96, 64, 48, 32, 16, 8, tm_cap)
         if t <= tm_cap},
        reverse=True,
    )

    def vmem_needed(tm, th):
        n_h = H // th
        w_buf = 2 if n_h > 1 else 1    # weight block index constant over grid when th == H
        xo_buf = 2 if n_h == 1 else 1  # x / out block index constant across the H loop
        acc = 0 if acc_in_out else tm * D * 4
        inter = tm * th * (4 + gelu_bytes + 2)  # f32 pre-act + gelu + bf16 matmul operand
        return (
            xo_buf * tm * D * (x_bytes + out_bytes)
            + w_buf * 2 * D * th * 2
            + w_buf * (th + D) * 4
            + acc
            + inter
        )

    for tm in tm_cands:
        for th in th_cands:
            if vmem_needed(tm, th) <= budget:
                return tm, th
    return 8, th_cands[-1]


def _block_spec(shape, index_map, mode):
    if mode is None:
        return pl.BlockSpec(shape, index_map)
    return pl.BlockSpec(shape, index_map, pipeline_mode=mode)


@functools.partial(jax.jit, static_argnames=("tm", "th", "gelu_in_bf16", "single_buffer"))
def mlp_pallas(x, w_fc, b_fc, w_proj, b_proj, *, tm=None, th=None,
               gelu_in_bf16=None, single_buffer=True):
    """x: [B, T, D]. w_fc: [D, 4D], b_fc: [1, 4D], w_proj: [4D, D], b_proj: [1, D].

    Computes gelu_tanh(x @ w_fc + b_fc) @ w_proj + b_proj, i.e. the torch MLP with
    the PyTorch Linear weights stored transposed. Output dtype follows x.
    """
    B, T, D = x.shape
    H = w_fc.shape[1]
    M = B * T

    assert D % 128 == 0, "n_embed must be a multiple of 128 for lane-dense stores"
    assert H % 128 == 0, "hidden dim must be a multiple of 128"

    out_dtype = x.dtype
    acc_in_out = out_dtype == jnp.float32

    capacity, detected = _vmem_capacity_bytes()
    vmem_limit = min(int(capacity * 0.85), 110 * 1024 * 1024)  # headroom for internal scratch
    tile_budget = int(vmem_limit * 0.9)

    if gelu_in_bf16 is None:
        # bf16 GELU chain only on confidently-detected small-VMEM (v7x-class) chips;
        # keep f32 elsewhere (v5e has no bf16 VPU/EUP, v6e has VMEM to spare).
        gelu_in_bf16 = bool(detected and capacity <= 80 * 1024 * 1024)
    gelu_dtype = jnp.bfloat16 if gelu_in_bf16 else jnp.float32
    gelu_bytes = 2 if gelu_in_bf16 else 4

    x_bytes = x.dtype.itemsize
    out_bytes = jnp.dtype(out_dtype).itemsize

    if tm is None or th is None:
        tm_auto, th_auto = _choose_tiles(M, D, H, x_bytes, out_bytes,
                                         acc_in_out, gelu_bytes, tile_budget)
        tm = tm if tm is not None else tm_auto
        th = th if th is not None else th_auto
    th = min(th, H)
    assert H % th == 0 and th % 128 == 0, "hidden tile must divide H and be 128-aligned"
    assert tm % 8 == 0 and tm >= 8

    # Snap tm to a nearby divisor of M (>= tm/2) so no padding pass over x is needed.
    if M % tm != 0:
        for cand in range(tm - 8, tm // 2 - 1, -8):
            if cand >= 8 and M % cand == 0:
                tm = cand
                break

    n_i = pl.cdiv(M, tm)
    M_pad = n_i * tm
    n_h = H // th

    x2d = x.reshape(M, D)
    if M_pad != M:
        # TODO(synk): the ragged last token tile could be masked in-kernel instead of padded.
        x2d = jnp.pad(x2d, ((0, M_pad - M), (0, 0)))

    # bf16 MXU weights; the cast is a no-op when the caller already stores bf16 params.
    wfc_bf = w_fc if w_fc.dtype == jnp.bfloat16 else w_fc.astype(jnp.bfloat16)
    wproj_bf = w_proj if w_proj.dtype == jnp.bfloat16 else w_proj.astype(jnp.bfloat16)
    bfc_f32 = b_fc.astype(jnp.float32)
    bproj_f32 = b_proj.astype(jnp.float32)

    # Single-buffer blocks whose index is constant across the inner H loop (x / out when
    # H is tiled) or across the whole grid (weights / biases when th == H).
    xo_mode = pl.Buffered(1) if (single_buffer and n_h > 1) else None
    w_mode = pl.Buffered(1) if (single_buffer and n_h == 1) else None

    in_specs = [
        _block_spec((tm, D), lambda i, h: (i, 0), xo_mode),   # token tile
        _block_spec((D, th), lambda i, h: (0, h), w_mode),    # c_fc weight cols
        _block_spec((1, th), lambda i, h: (0, h), w_mode),    # c_fc bias tile
        _block_spec((th, D), lambda i, h: (h, 0), w_mode),    # c_proj weight rows
        _block_spec((1, D), lambda i, h: (0, 0), w_mode),     # c_proj bias (full)
    ]
    out_spec = _block_spec((tm, D), lambda i, h: (i, 0), xo_mode)

    # Weights are re-streamed once per token tile only when H is tiled (n_h > 1).
    weight_bytes_per_pass = D * H * 2 + H * D * 2 + (H + D) * 4
    cost = pl.CostEstimate(
        flops=2 * 2 * M_pad * D * H,            # two matmuls
        transcendentals=M_pad * H,              # one tanh per hidden element
        bytes_accessed=(
            M_pad * D * x_bytes
            + weight_bytes_per_pass * (n_i if n_h > 1 else 1)
            + M_pad * D * out_bytes
        ),
    )

    if acc_in_out:
        kernel = functools.partial(mlp_kernel_acc_in_out, gelu_dtype=gelu_dtype)
        scratch_shapes = []
    else:
        kernel = functools.partial(mlp_kernel_scratch_acc, gelu_dtype=gelu_dtype)
        scratch_shapes = [pltpu.VMEM((tm, D), jnp.float32)]

    out2d = pl.pallas_call(
        kernel,
        out_shape=jax.ShapeDtypeStruct((M_pad, D), out_dtype),
        grid_spec=pltpu.PrefetchScalarGridSpec(
            num_scalar_prefetch=0,
            grid=(n_i, n_h),
            in_specs=in_specs,
            out_specs=out_spec,
            scratch_shapes=scratch_shapes,
        ),
        compiler_params=pltpu.CompilerParams(
            dimension_semantics=("parallel", "arbitrary"),
            vmem_limit_bytes=vmem_limit,
        ),
        cost_estimate=cost,
    )(x2d, wfc_bf, bfc_f32, wproj_bf, bproj_f32)

    if M_pad != M:
        out2d = out2d[:M]
    return out2d.reshape(B, T, D)


def mlp_reference(x, w_fc, b_fc, w_proj, b_proj):
    h = jnp.einsum("btd,dh->bth", x, w_fc.astype(x.dtype)) + b_fc[0]
    g = _gelu_tanh(h)
    return jnp.einsum("bth,hd->btd", g, w_proj.astype(x.dtype)) + b_proj[0]


if __name__ == "__main__":
    # Small config consistent with the module (hidden = 4 * n_embed); D >= 128 keeps the
    # output lane axis dense. M = 128 auto-picks tm = 64 -> two token tiles (so the
    # "parallel" M axis actually shards across cores) and needs no padding pass.
    B, T, D = 2, 64, 256
    H = 4 * D  # 1024

    key = jax.random.PRNGKey(0)
    kx, k1, k2, k3, k4 = jax.random.split(key, 5)

    x = jax.random.normal(kx, (B, T, D), dtype=jnp.float32)
    # Parameters stored as x @ W + b (transposed vs PyTorch). Weights are cast to bf16
    # once at init (perf feedback), so the kernel wrapper's cast becomes a no-op.
    w_fc = (jax.random.normal(k1, (D, H), dtype=jnp.float32) * 0.02).astype(jnp.bfloat16)
    b_fc = jax.random.normal(k2, (1, H), dtype=jnp.float32) * 0.02
    w_proj = (jax.random.normal(k3, (H, D), dtype=jnp.float32) * 0.02).astype(jnp.bfloat16)
    b_proj = jax.random.normal(k4, (1, D), dtype=jnp.float32) * 0.02

    try:
        out = jax.block_until_ready(mlp_pallas(x, w_fc, b_fc, w_proj, b_proj))
    except Exception:
        # Safety net for jax versions without BlockSpec pipeline_mode: retry with
        # default double-buffering (identical math, slightly more VMEM).
        out = jax.block_until_ready(
            mlp_pallas(x, w_fc, b_fc, w_proj, b_proj, single_buffer=False)
        )

    ref = mlp_reference(x, w_fc, b_fc, w_proj, b_proj)
    assert out.shape == (B, T, D)
    assert out.dtype == x.dtype
    # Tolerance accounts for bf16 MXU inputs (f32 accumulation) vs the f32 reference.
    assert jnp.allclose(out, ref, atol=2e-2, rtol=2e-2), "mismatch vs reference"

    print("KERNEL_OK")
</pallas_src>

<mosaic_0001>
module attributes {stable_mosaic.version = 11 : i64} {
  func.func @mlp_kernel_acc_in_out(%arg0: i32, %arg1: i32, %arg2: memref<64x256xf32, #tpu.memory_space<vmem>>, %arg3: memref<256x1024xbf16, #tpu.memory_space<vmem>>, %arg4: memref<1x1024xf32, #tpu.memory_space<vmem>>, %arg5: memref<1024x256xbf16, #tpu.memory_space<vmem>>, %arg6: memref<1x256xf32, #tpu.memory_space<vmem>>, %arg7: memref<64x256xf32, #tpu.memory_space<vmem>>) attributes {dimension_semantics = [#tpu.dimension_semantics<parallel>, #tpu.dimension_semantics<arbitrary>], iteration_bounds = array<i64: 2, 1>, scalar_prefetch = 0 : i64, scratch_operands = 0 : i64, tpu.core_type = #tpu.core_type<tc>, window_params = [{transform_indices = @transform_0, window_bounds = array<i64: 64, 256>}, {pipeline_mode = #tpu.pipeline_mode<synchronous>, transform_indices = @transform_1, window_bounds = array<i64: 256, 1024>}, {pipeline_mode = #tpu.pipeline_mode<synchronous>, transform_indices = @transform_2, window_bounds = array<i64: 1, 1024>}, {pipeline_mode = #tpu.pipeline_mode<synchronous>, transform_indices = @transform_3, window_bounds = array<i64: 1024, 256>}, {pipeline_mode = #tpu.pipeline_mode<synchronous>, transform_indices = @transform_4, window_bounds = array<i64: 1, 256>}, {transform_indices = @transform_5, window_bounds = array<i64: 64, 256>}]} {
    %c0_i32 = arith.constant 0 : i32
    %0 = arith.cmpi eq, %arg1, %c0_i32 : i32
    %1 = arith.extui %0 : i1 to i32
    %c0_i32_0 = arith.constant 0 : i32
    %2 = arith.cmpi ne, %1, %c0_i32_0 : i32
    scf.if %2 {
      %c0_17 = arith.constant 0 : index
      %c0_18 = arith.constant 0 : index
      %29 = vector.load %arg6[%c0_17, %c0_18] : memref<1x256xf32, #tpu.memory_space<vmem>>, vector<1x256xf32>
      %30 = vector.shape_cast %29 : vector<1x256xf32> to vector<1x256xf32>
      %31 = vector.broadcast %30 : vector<1x256xf32> to vector<64x256xf32>
      %c0_19 = arith.constant 0 : index
      %c0_20 = arith.constant 0 : index
      %32 = vector.load %arg7[%c0_19, %c0_20] : memref<64x256xf32, #tpu.memory_space<vmem>>, vector<64x256xf32>
      tpu.vector_store %arg7[%c0_19, %c0_20], %31 {strides = array<i32>} : memref<64x256xf32, #tpu.memory_space<vmem>>, vector<64x256xf32>,
    } else {
    }
    %c0 = arith.constant 0 : index
    %c0_1 = arith.constant 0 : index
    %3 = vector.load %arg2[%c0, %c0_1] : memref<64x256xf32, #tpu.memory_space<vmem>>, vector<64x256xf32>
    %4 = arith.truncf %3 : vector<64x256xf32> to vector<64x256xbf16>
    %c0_2 = arith.constant 0 : index
    %c0_3 = arith.constant 0 : index
    %5 = vector.load %arg3[%c0_2, %c0_3] : memref<256x1024xbf16, #tpu.memory_space<vmem>>, vector<256x1024xbf16>
    %cst = arith.constant dense<0.000000e+00> : vector<64x1024xf32>
    %6 = tpu.matmul %4, %5, %cst {dimension_numbers = #tpu.dot_dimension_numbers<[1], [0], [0], [1], [0, 0, 1, 1], [], []>} : vector<64x256xbf16>, vector<256x1024xbf16>, vector<64x1024xf32> -> vector<64x1024xf32>
    %c0_4 = arith.constant 0 : index
    %c0_5 = arith.constant 0 : index
    %7 = vector.load %arg4[%c0_4, %c0_5] : memref<1x1024xf32, #tpu.memory_space<vmem>>, vector<1x1024xf32>
    %8 = vector.broadcast %7 : vector<1x1024xf32> to vector<64x1024xf32>
    %9 = arith.addf %6, %8 : vector<64x1024xf32>
    %cst_6 = arith.constant 5.000000e-01 : f32
    %10 = vector.broadcast %cst_6 : f32 to vector<64x1024xf32>
    %11 = arith.mulf %10, %9 : vector<64x1024xf32>
    %cst_7 = arith.constant 4.471500e-02 : f32
    %12 = vector.broadcast %cst_7 : f32 to vector<64x1024xf32>
    %13 = arith.mulf %12, %9 : vector<64x1024xf32>
    %14 = arith.mulf %13, %9 : vector<64x1024xf32>
    %15 = arith.mulf %14, %9 : vector<64x1024xf32>
    %16 = arith.addf %9, %15 : vector<64x1024xf32>
    %cst_8 = arith.constant 0.797884583 : f32
    %17 = vector.broadcast %cst_8 : f32 to vector<64x1024xf32>
    %18 = arith.mulf %17, %16 : vector<64x1024xf32>
    %19 = math.tanh %18 : vector<64x1024xf32>
    %cst_9 = arith.constant 1.000000e+00 : f32
    %20 = vector.broadcast %cst_9 : f32 to vector<64x1024xf32>
    %21 = arith.addf %20, %19 : vector<64x1024xf32>
    %22 = arith.mulf %11, %21 : vector<64x1024xf32>
    %c0_10 = arith.constant 0 : index
    %c0_11 = arith.constant 0 : index
    %23 = vector.load %arg7[%c0_10, %c0_11] : memref<64x256xf32, #tpu.memory_space<vmem>>, vector<64x256xf32>
    %24 = arith.truncf %22 : vector<64x1024xf32> to vector<64x1024xbf16>
    %c0_12 = arith.constant 0 : index
    %c0_13 = arith.constant 0 : index
    %25 = vector.load %arg5[%c0_12, %c0_13] : memref<1024x256xbf16, #tpu.memory_space<vmem>>, vector<1024x256xbf16>
    %cst_14 = arith.constant dense<0.000000e+00> : vector<64x256xf32>
    %26 = tpu.matmul %24, %25, %cst_14 {dimension_numbers = #tpu.dot_dimension_numbers<[1], [0], [0], [1], [0, 0, 1, 1], [], []>} : vector<64x1024xbf16>, vector<1024x256xbf16>, vector<64x256xf32> -> vector<64x256xf32>
    %27 = arith.addf %23, %26 : vector<64x256xf32>
    %c0_15 = arith.constant 0 : index
    %c0_16 = arith.constant 0 : index
    %28 = vector.load %arg7[%c0_15, %c0_16] : memref<64x256xf32, #tpu.memory_space<vmem>>, vector<64x256xf32>
    tpu.vector_store %arg7[%c0_15, %c0_16], %27 {strides = array<i32>} : memref<64x256xf32, #tpu.memory_space<vmem>>, vector<64x256xf32>,
    return
  }
  func.func @transform_0(%arg0: i32, %arg1: i32) -> (i32, i32) {
    %c0_i32 = arith.constant 0 : i32
    %c0_i32_0 = arith.constant 0 : i32
    return %arg0, %c0_i32 : i32, i32
  }
  func.func @transform_1(%arg0: i32, %arg1: i32) -> (i32, i32) {
    %c0_i32 = arith.constant 0 : i32
    %c0_i32_0 = arith.constant 0 : i32
    return %c0_i32, %arg1 : i32, i32
  }
  func.func @transform_2(%arg0: i32, %arg1: i32) -> (i32, i32) {
    %c0_i32 = arith.constant 0 : i32
    %c0_i32_0 = arith.constant 0 : i32
    return %c0_i32, %arg1 : i32, i32
  }
  func.func @transform_3(%arg0: i32, %arg1: i32) -> (i32, i32) {
    %c0_i32 = arith.constant 0 : i32
    %c0_i32_0 = arith.constant 0 : i32
    return %arg1, %c0_i32 : i32, i32
  }
  func.func @transform_4(%arg0: i32, %arg1: i32) -> (i32, i32) {
    %c0_i32 = arith.constant 0 : i32
    %c0_i32_0 = arith.constant 0 : i32
    %c0_i32_1 = arith.constant 0 : i32
    return %c0_i32, %c0_i32_0 : i32, i32
  }
  func.func @transform_5(%arg0: i32, %arg1: i32) -> (i32, i32) {
    %c0_i32 = arith.constant 0 : i32
    %c0_i32_0 = arith.constant 0 : i32
    return %arg0, %c0_i32 : i32, i32
  }
}

module attributes {stable_mosaic.version = 11 : i64} {
  func.func @mlp_kernel_acc_in_out(%arg0: i32, %arg1: i32, %arg2: memref<64x256xf32, #tpu.memory_space<vmem>>, %arg3: memref<256x1024xbf16, #tpu.memory_space<vmem>>, %arg4: memref<1x1024xf32, #tpu.memory_space<vmem>>, %arg5: memref<1024x256xbf16, #tpu.memory_space<vmem>>, %arg6: memref<1x256xf32, #tpu.memory_space<vmem>>, %arg7: memref<64x256xf32, #tpu.memory_space<vmem>>) attributes {dimension_semantics = [#tpu.dimension_semantics<parallel>, #tpu.dimension_semantics<arbitrary>], iteration_bounds = array<i64: 2, 1>, scalar_prefetch = 0 : i64, scratch_operands = 0 : i64, tpu.core_type = #tpu.core_type<tc>, window_params = [{transform_indices = @transform_0, window_bounds = array<i64: 64, 256>}, {transform_indices = @transform_1, window_bounds = array<i64: 256, 1024>}, {transform_indices = @transform_2, window_bounds = array<i64: 1, 1024>}, {transform_indices = @transform_3, window_bounds = array<i64: 1024, 256>}, {pipeline_mode = #tpu.pipeline_mode<synchronous>, transform_indices = @transform_4, window_bounds = array<i64: 1, 256>}, {transform_indices = @transform_5, window_bounds = array<i64: 64, 256>}]} {
    %c0_i32 = arith.constant 0 : i32
    %0 = arith.cmpi eq, %arg1, %c0_i32 : i32
    %1 = arith.extui %0 : i1 to i32
    %c0_i32_0 = arith.constant 0 : i32
    %2 = arith.cmpi ne, %1, %c0_i32_0 : i32
    scf.if %2 {
      %c0_17 = arith.constant 0 : index
      %c0_18 = arith.constant 0 : index
      %29 = vector.load %arg6[%c0_17, %c0_18] : memref<1x256xf32, #tpu.memory_space<vmem>>, vector<1x256xf32>
      %30 = vector.shape_cast %29 : vector<1x256xf32> to vector<1x256xf32>
      %31 = vector.broadcast %30 : vector<1x256xf32> to vector<64x256xf32>
      %c0_19 = arith.constant 0 : index
      %c0_20 = arith.constant 0 : index
      %32 = vector.load %arg7[%c0_19, %c0_20] : memref<64x256xf32, #tpu.memory_space<vmem>>, vector<64x256xf32>
      tpu.vector_store %arg7[%c0_19, %c0_20], %31 {strides = array<i32>} : memref<64x256xf32, #tpu.memory_space<vmem>>, vector<64x256xf32>,
    } else {
    }
    %c0 = arith.constant 0 : index
    %c0_1 = arith.constant 0 : index
    %3 = vector.load %arg2[%c0, %c0_1] : memref<64x256xf32, #tpu.memory_space<vmem>>, vector<64x256xf32>
    %4 = arith.truncf %3 : vector<64x256xf32> to vector<64x256xbf16>
    %c0_2 = arith.constant 0 : index
    %c0_3 = arith.constant 0 : index
    %5 = vector.load %arg3[%c0_2, %c0_3] : memref<256x1024xbf16, #tpu.memory_space<vmem>>, vector<256x1024xbf16>
    %cst = arith.constant dense<0.000000e+00> : vector<64x1024xf32>
    %6 = tpu.matmul %4, %5, %cst {dimension_numbers = #tpu.dot_dimension_numbers<[1], [0], [0], [1], [0, 0, 1, 1], [], []>} : vector<64x256xbf16>, vector<256x1024xbf16>, vector<64x1024xf32> -> vector<64x1024xf32>
    %c0_4 = arith.constant 0 : index
    %c0_5 = arith.constant 0 : index
    %7 = vector.load %arg4[%c0_4, %c0_5] : memref<1x1024xf32, #tpu.memory_space<vmem>>, vector<1x1024xf32>
    %8 = vector.broadcast %7 : vector<1x1024xf32> to vector<64x1024xf32>
    %9 = arith.addf %6, %8 : vector<64x1024xf32>
    %cst_6 = arith.constant 5.000000e-01 : f32
    %10 = vector.broadcast %cst_6 : f32 to vector<64x1024xf32>
    %11 = arith.mulf %10, %9 : vector<64x1024xf32>
    %cst_7 = arith.constant 4.471500e-02 : f32
    %12 = vector.broadcast %cst_7 : f32 to vector<64x1024xf32>
    %13 = arith.mulf %12, %9 : vector<64x1024xf32>
    %14 = arith.mulf %13, %9 : vector<64x1024xf32>
    %15 = arith.mulf %14, %9 : vector<64x1024xf32>
    %16 = arith.addf %9, %15 : vector<64x1024xf32>
    %cst_8 = arith.constant 0.797884583 : f32
    %17 = vector.broadcast %cst_8 : f32 to vector<64x1024xf32>
    %18 = arith.mulf %17, %16 : vector<64x1024xf32>
    %19 = math.tanh %18 : vector<64x1024xf32>
    %cst_9 = arith.constant 1.000000e+00 : f32
    %20 = vector.broadcast %cst_9 : f32 to vector<64x1024xf32>
    %21 = arith.addf %20, %19 : vector<64x1024xf32>
    %22 = arith.mulf %11, %21 : vector<64x1024xf32>
    %c0_10 = arith.constant 0 : index
    %c0_11 = arith.constant 0 : index
    %23 = vector.load %arg7[%c0_10, %c0_11] : memref<64x256xf32, #tpu.memory_space<vmem>>, vector<64x256xf32>
    %24 = arith.truncf %22 : vector<64x1024xf32> to vector<64x1024xbf16>
    %c0_12 = arith.constant 0 : index
    %c0_13 = arith.constant 0 : index
    %25 = vector.load %arg5[%c0_12, %c0_13] : memref<1024x256xbf16, #tpu.memory_space<vmem>>, vector<1024x256xbf16>
    %cst_14 = arith.constant dense<0.000000e+00> : vector<64x256xf32>
    %26 = tpu.matmul %24, %25, %cst_14 {dimension_numbers = #tpu.dot_dimension_numbers<[1], [0], [0], [1], [0, 0, 1, 1], [], []>} : vector<64x1024xbf16>, vector<1024x256xbf16>, vector<64x256xf32> -> vector<64x256xf32>
    %27 = arith.addf %23, %26 : vector<64x256xf32>
    %c0_15 = arith.constant 0 : index
    %c0_16 = arith.constant 0 : index
    %28 = vector.load %arg7[%c0_15, %c0_16] : memref<64x256xf32, #tpu.memory_space<vmem>>, vector<64x256xf32>
    tpu.vector_store %arg7[%c0_15, %c0_16], %27 {strides = array<i32>} : memref<64x256xf32, #tpu.memory_space<vmem>>, vector<64x256xf32>,
    return
  }
  func.func @transform_0(%arg0: i32, %arg1: i32) -> (i32, i32) {
    %c0_i32 = arith.constant 0 : i32
    %c0_i32_0 = arith.constant 0 : i32
    return %arg0, %c0_i32 : i32, i32
  }
  func.func @transform_1(%arg0: i32, %arg1: i32) -> (i32, i32) {
    %c0_i32 = arith.constant 0 : i32
    %c0_i32_0 = arith.constant 0 : i32
    return %c0_i32, %arg1 : i32, i32
  }
  func.func @transform_2(%arg0: i32, %arg1: i32) -> (i32, i32) {
    %c0_i32 = arith.constant 0 : i32
    %c0_i32_0 = arith.constant 0 : i32
    return %c0_i32, %arg1 : i32, i32
  }
  func.func @transform_3(%arg0: i32, %arg1: i32) -> (i32, i32) {
    %c0_i32 = arith.constant 0 : i32
    %c0_i32_0 = arith.constant 0 : i32
    return %arg1, %c0_i32 : i32, i32
  }
  func.func @transform_4(%arg0: i32, %arg1: i32) -> (i32, i32) {
    %c0_i32 = arith.constant 0 : i32
    %c0_i32_0 = arith.constant 0 : i32
    %c0_i32_1 = arith.constant 0 : i32
    return %c0_i32, %c0_i32_0 : i32, i32
  }
  func.func @transform_5(%arg0: i32, %arg1: i32) -> (i32, i32) {
    %c0_i32 = arith.constant 0 : i32
    %c0_i32_0 = arith.constant 0 : i32
    return %arg0, %c0_i32 : i32, i32
  }
}

</mosaic_0001>

<llo_original>
// kernel: mlp_pallas.1
$region0: #{mlp_pallas.1}
  #allocation0 [shape = 'u32[]', space=smem, size = 0x4, offset = 0x4, fixed_abs, tag = 'smem constant byte address 0x4 - core index']
  #allocation1 [shape = 'u32[72,128]{1,0:T(1,128)}', space=vmem, size = 0x9000, scoped, tag = 'internal scratch']
  %s0 = inlined_call_operand.hbm [shape: f32[128,256], index: 0, kind: input, shape index: {}]
  %s1 = inlined_call_operand.hbm [shape: bf16[256,1024], index: 1, kind: input, shape index: {}]
  %s2 = inlined_call_operand.hbm [shape: f32[1,1024], index: 2, kind: input, shape index: {}]
  %s3 = inlined_call_operand.hbm [shape: bf16[1024,256], index: 3, kind: input, shape index: {}]
  %s4 = inlined_call_operand.vmem [shape: f32[1,256], index: 4, kind: input, shape index: {}]
  %s5 = inlined_call_operand.hbm [shape: f32[128,256], index: 5, kind: output, shape index: {}]
  %s6 = sld [smem:[#allocation0]]
  $region73: #{mlp_pallas.1} parent=0
    _
  %s8 = ssub.s32 1, %s6
  %s9 = scalar_select 0, %s8, %s6
  $region1: #{mlp_pallas.1} parent=0
    #allocation2 [shape = 'u8[131072]{0}', space=vmem, size = 0x20000, scoped, tag = 'input window, operand 0']
    #allocation3 [shape = 's32[2]{0}', space=sflag, size = 0x8, scoped, tag = 'scoped memory for mlp_pallas.1']
    #allocation4 [shape = 's32[2]{0}', space=sflag, size = 0x8, scoped, tag = 'scoped memory for mlp_pallas.1']
    #allocation5 [shape = 'u8[524288]{0}', space=vmem, size = 0x80000, scoped, tag = 'input window, operand 1, single buffered']
    #allocation6 [shape = 's32[1]{0}', space=sflag, size = 0x4, scoped, tag = 'scoped memory for mlp_pallas.1']
    #allocation7 [shape = 'u8[4096]{0}', space=vmem, size = 0x1000, scoped, tag = 'input window, operand 2, single buffered']
    #allocation8 [shape = 'u8[524288]{0}', space=vmem, size = 0x80000, scoped, tag = 'input window, operand 3, single buffered']
    #allocation9 [shape = 's32[1]{0}', space=sflag, size = 0x4, scoped, tag = 'scoped memory for mlp_pallas.1']
    #allocation10 [shape = 'u8[131072]{0}', space=vmem, size = 0x20000, scoped, tag = 'output window, operand 0']
    %10 = vsyncpa [#allocation3], 0
    %s11 = scalar_lea.sflag [#allocation3], 1
    %12 = vsyncpa %s11, 0
    %13 = vsyncpa [#allocation6], 0
    %14 = vsyncpa [#allocation9], 0
    %15 = vsyncpa [#allocation4], 0
    %s16 = scalar_lea.sflag [#allocation4], 1
    %17 = vsyncpa %s16, 0
    loop: start=0, step=1, limit=4
    $region2: #{mlp_pallas.1} parent=1 // loop_pre_header
      _
    $region3: #{mlp_pallas.1} parent=1 // loop_header
      %s19 = sphi 0, %s23
      %p20 = scmp.ge.s32.totalorder %s19, 4
      %s26 = sphi 0, %s38
      %s27 = sphi 0, %s34
      %s28 = sphi 0, %s26
      %s29 = sphi 0, %s27
      %s30 = sphi 0, %s28
      %s31 = sphi 0, %s29
      %s41 = sphi 0, %s43
      %s44 = sphi 0, %s41
      %s45 = sphi 0, %s44
      %s61 = sphi 0, %s45
      %s67 = sphi 0, %s69
      %s70 = sphi 0, %s67
      %s71 = sphi 0, %s70
      %s87 = sphi 0, %s71
      %s93 = sphi 0, %s95
      %s96 = sphi 0, %s93
      %s97 = sphi 0, %s96
      %s113 = sphi 0, %s97
      %s119 = sphi 0, %s121
      %s122 = sphi 0, %s119
      %s123 = sphi 0, %s122
      %s139 = sphi 0, %s123
      %s143 = sphi 0, %s143
      %s145 = sphi 0, %s143
      %s146 = sphi 0, %s145
      %s160 = sphi 0, %s146
      %s166 = sphi 0, %s168
      %s169 = sphi 0, %s166
      %s170 = sphi 0, %s169
      %s186 = sphi 0, %s170
    $region4: #{mlp_pallas.1} parent=1 // loop_header_branch
      %22 = sbr.rel (%p20) target = $region8
    $region5: #{mlp_pallas.1} parent=1 // loop_body
      %s24 = ssub.s32 %s19, 1
      %s25 = ssub.s32 %s19, 2
      %s32 = sadd.s32 1, %s27
      %p33 = scmp.ge.s32.totalorder %s32, 1
      %s34 = scalar_select %p33, 0, %s32
      %s35 = sadd.s32 1, %s26
      %s36 = scalar_select %p33, %s35, %s26
      %p37 = scmp.ge.s32.totalorder %s36, 2
      %s38 = scalar_select %p37, 0, %s36
      %s39 = ssub.s32 %s26, %s38
      %p40 = scmp.eq.s32.totalorder %s39, 0
      %s42 = sadd.s32 %s41, 1
      %s43 = scalar_select %p40, %s41, %s42
      %p46 = pneg %p40
      %p47 = scmp.eq.s32.totalorder %s19, 1
      %p48 = por %p46, %p47
      %p49 = scmp.ne.s32.totalorder %s41, %s44
      %p50 = scmp.eq.s32.totalorder %s19, 0
      %p51 = por %p49, %p50
      %p52 = scmp.ne.s32.totalorder %s41, %s44
      %p53 = scmp.eq.s32.totalorder %s24, 1
      %p54 = por %p52, %p53
      %p55 = scmp.ne.s32.totalorder %s44, %s45
      %p56 = scmp.eq.s32.totalorder %s24, 0
      %p57 = por %p55, %p56
      %p58 = scmp.ne.s32.totalorder %s44, %s45
      %p59 = scmp.eq.s32.totalorder %s25, 1
      %p60 = por %p58, %p59
      %p62 = scmp.ne.s32.totalorder %s45, %s61
      %p63 = scmp.eq.s32.totalorder %s25, 0
      %p64 = por %p62, %p63
      %s65 = ssub.s32 %s27, %s34
      %p66 = scmp.eq.s32.totalorder %s65, 0
      %s68 = sadd.s32 %s67, 1
      %s69 = scalar_select %p66, %s67, %s68
      %p72 = pneg %p66
      %p73 = scmp.eq.s32.totalorder %s19, 1
      %p74 = por %p72, %p73
      %p75 = scmp.ne.s32.totalorder %s67, %s70
      %p76 = scmp.eq.s32.totalorder %s19, 0
      %p77 = por %p75, %p76
      %p78 = scmp.ne.s32.totalorder %s67, %s70
      %p79 = scmp.eq.s32.totalorder %s24, 1
      %p80 = por %p78, %p79
      %p81 = scmp.ne.s32.totalorder %s70, %s71
      %p82 = scmp.eq.s32.totalorder %s24, 0
      %p83 = por %p81, %p82
      %p84 = scmp.ne.s32.totalorder %s70, %s71
      %p85 = scmp.eq.s32.totalorder %s25, 1
      %p86 = por %p84, %p85
      %p88 = scmp.ne.s32.totalorder %s71, %s87
      %p89 = scmp.eq.s32.totalorder %s25, 0
      %p90 = por %p88, %p89
      %s91 = ssub.s32 %s27, %s34
      %p92 = scmp.eq.s32.totalorder %s91, 0
      %s94 = sadd.s32 %s93, 1
      %s95 = scalar_select %p92, %s93, %s94
      %p98 = pneg %p92
      %p99 = scmp.eq.s32.totalorder %s19, 1
      %p100 = por %p98, %p99
      %p101 = scmp.ne.s32.totalorder %s93, %s96
      %p102 = scmp.eq.s32.totalorder %s19, 0
      %p103 = por %p101, %p102
      %p104 = scmp.ne.s32.totalorder %s93, %s96
      %p105 = scmp.eq.s32.totalorder %s24, 1
      %p106 = por %p104, %p105
      %p107 = scmp.ne.s32.totalorder %s96, %s97
      %p108 = scmp.eq.s32.totalorder %s24, 0
      %p109 = por %p107, %p108
      %p110 = scmp.ne.s32.totalorder %s96, %s97
      %p111 = scmp.eq.s32.totalorder %s25, 1
      %p112 = por %p110, %p111
      %p114 = scmp.ne.s32.totalorder %s97, %s113
      %p115 = scmp.eq.s32.totalorder %s25, 0
      %p116 = por %p114, %p115
      %s117 = ssub.s32 %s27, %s34
      %p118 = scmp.eq.s32.totalorder %s117, 0
      %s120 = sadd.s32 %s119, 1
      %s121 = scalar_select %p118, %s119, %s120
      %p124 = pneg %p118
      %p125 = scmp.eq.s32.totalorder %s19, 1
      %p126 = por %p124, %p125
      %p127 = scmp.ne.s32.totalorder %s119, %s122
      %p128 = scmp.eq.s32.totalorder %s19, 0
      %p129 = por %p127, %p128
      %p130 = scmp.ne.s32.totalorder %s119, %s122
      %p131 = scmp.eq.s32.totalorder %s24, 1
      %p132 = por %p130, %p131
      %p133 = scmp.ne.s32.totalorder %s122, %s123
      %p134 = scmp.eq.s32.totalorder %s24, 0
      %p135 = por %p133, %p134
      %p136 = scmp.ne.s32.totalorder %s122, %s123
      %p137 = scmp.eq.s32.totalorder %s25, 1
      %p138 = por %p136, %p137
      %p140 = scmp.ne.s32.totalorder %s123, %s139
      %p141 = scmp.eq.s32.totalorder %s25, 0
      %p142 = por %p140, %p141
      %s144 = sadd.s32 %s143, 1
      %p147 = scmp.eq.s32.totalorder %s19, 1
      %p148 = scmp.ne.s32.totalorder %s143, %s145
      %p149 = scmp.eq.s32.totalorder %s19, 0
      %p150 = por %p148, %p149
      %p151 = scmp.ne.s32.totalorder %s143, %s145
      %p152 = scmp.eq.s32.totalorder %s24, 1
      %p153 = por %p151, %p152
      %p154 = scmp.ne.s32.totalorder %s145, %s146
      %p155 = scmp.eq.s32.totalorder %s24, 0
      %p156 = por %p154, %p155
      %p157 = scmp.ne.s32.totalorder %s145, %s146
      %p158 = scmp.eq.s32.totalorder %s25, 1
      %p159 = por %p157, %p158
      %p161 = scmp.ne.s32.totalorder %s146, %s160
      %p162 = scmp.eq.s32.totalorder %s25, 0
      %p163 = por %p161, %p162
      %s164 = ssub.s32 %s26, %s38
      %p165 = scmp.eq.s32.totalorder %s164, 0
      %s167 = sadd.s32 %s166, 1
      %s168 = scalar_select %p165, %s166, %s167
      %p171 = pneg %p165
      %p172 = scmp.eq.s32.totalorder %s19, 1
      %p173 = por %p171, %p172
      %p174 = scmp.ne.s32.totalorder %s166, %s169
      %p175 = scmp.eq.s32.totalorder %s19, 0
      %p176 = por %p174, %p175
      %p177 = scmp.ne.s32.totalorder %s166, %s169
      %p178 = scmp.eq.s32.totalorder %s24, 1
      %p179 = por %p177, %p178
      %p180 = scmp.ne.s32.totalorder %s169, %s170
      %p181 = scmp.eq.s32.totalorder %s24, 0
      %p182 = por %p180, %p181
      %p183 = scmp.ne.s32.totalorder %s169, %s170
      %p184 = scmp.eq.s32.totalorder %s25, 1
      %p185 = por %p183, %p184
      %p187 = scmp.ne.s32.totalorder %s170, %s186
      %p188 = scmp.eq.s32.totalorder %s25, 0
      %p189 = por %p187, %p188
      %p190 = scmp.le.s32.totalorder 1, %s19
      %p191 = scmp.lt.s32.totalorder %s19, 3
      %p192 = pnand %p190, %p191
      %p193 = pneg %p192
      // Predicated region
      $region9: #{mlp_pallas.1} parent=5 // pred_check
        _
      $region10: #{mlp_pallas.1} parent=5 // pred_check_branch
        %195 = sbr.rel (%p192) target = $region12
      $region11: #{mlp_pallas.1} parent=5 // pred_region
        %s196 = ssub.s32 %s19, 1
        // Predicated region
        $region13: #{mlp_pallas.1} parent=11 // pred_check
          %p197 = pneg %p83
        $region14: #{mlp_pallas.1} parent=11 // pred_check_branch
          %199 = sbr.rel (%p197) target = $region16
        $region15: #{mlp_pallas.1} parent=11 // pred_region
          %s200 = smul.u32 8, %s29
          %202 = vsyncadd [#allocation6], 0
          %s203 = smul.addr %s200, 4
          %s204 = scalar_lea.hbm %s1, %s203
          %s205 = sshll.u32 %s204, 4
          %s206 = int_to_ptr.hbm [resolvable:$true] %s205
          %s207 = sshll.u32 [#allocation5], 4
          %s208 = int_to_ptr.vmem [resolvable:$true] %s207
          %213 = dma.hbm_to_vmem [thread:$0]  %s206, 16384, %s208, [#allocation6], 512, 512, 32
        $region16: #{mlp_pallas.1} parent=11 // pred_fallthru
          _
        // Predicated region
        $region17: #{mlp_pallas.1} parent=11 // pred_check
          %p214 = pneg %p109
        $region18: #{mlp_pallas.1} parent=11 // pred_check_branch
          %216 = sbr.rel (%p214) target = $region20
        $region19: #{mlp_pallas.1} parent=11 // pred_region
          %s217 = smul.u32 8, %s29
          %219 = vsyncadd [#allocation6], 0
          %s220 = scalar_lea.hbm %s2, %s217
          %s222 = sshll.u32 %s220, 4
          %s223 = int_to_ptr.hbm [resolvable:$true] %s222
          %s224 = sshll.u32 [#allocation7], 4
          %s225 = int_to_ptr.vmem [resolvable:$true] %s224
          %227 = dma.hbm_to_vmem [thread:$0]  %s223, 128, %s225, [#allocation6]
        $region20: #{mlp_pallas.1} parent=11 // pred_fallthru
          _
        // Predicated region
        $region21: #{mlp_pallas.1} parent=11 // pred_check
          %p228 = pneg %p135
        $region22: #{mlp_pallas.1} parent=11 // pred_check_branch
          %230 = sbr.rel (%p228) target = $region24
        $region23: #{mlp_pallas.1} parent=11 // pred_region
          %s231 = smul.u32 128, %s29
          %233 = vsyncadd [#allocation9], 0
          %s234 = smul.addr %s231, 2
          %s235 = smul.addr %s234, 4
          %s236 = scalar_lea.hbm %s3, %s235
          %s237 = sshll.u32 %s236, 4
          %s238 = int_to_ptr.hbm [resolvable:$true] %s237
          %s239 = sshll.u32 [#allocation8], 4
          %s240 = int_to_ptr.vmem [resolvable:$true] %s239
          %245 = dma.hbm_to_vmem [thread:$0]  %s238, 16384, %s240, [#allocation9], 128, 128, 8
        $region24: #{mlp_pallas.1} parent=11 // pred_fallthru
          _
        // Predicated region
        $region25: #{mlp_pallas.1} parent=11 // pred_check
          %p246 = pneg %p156
        $region26: #{mlp_pallas.1} parent=11 // pred_check_branch
          %248 = sbr.rel (%p246) target = $region28
        $region27: #{mlp_pallas.1} parent=11 // pred_region
          _
        $region28: #{mlp_pallas.1} parent=11 // pred_fallthru
          _
      $region12: #{mlp_pallas.1} parent=5 // pred_fallthru
        _
      %p249 = scmp.lt.s32.totalorder %s19, 2
      // Predicated region
      $region29: #{mlp_pallas.1} parent=5 // pred_check
        %p250 = pneg %p249
      $region30: #{mlp_pallas.1} parent=5 // pred_check_branch
        %252 = sbr.rel (%p250) target = $region32
      $region31: #{mlp_pallas.1} parent=5 // pred_region
        // Predicated region
        $region33: #{mlp_pallas.1} parent=31 // pred_check
          %p253 = pneg %p51
        $region34: #{mlp_pallas.1} parent=31 // pred_check_branch
          %255 = sbr.rel (%p253) target = $region36
        $region35: #{mlp_pallas.1} parent=31 // pred_region
          %s256 = sand.u32 %s41, 1
          %s257 = scalar_lea.sflag [#allocation3], %s256
          %s258 = sand.u32 %s41, 1
          %s259 = smul.addr %s258, 128
          %s260 = scalar_lea.vmem [#allocation2], %s259
          %s261 = smul.u32 8, %s26
          %263 = vsyncadd %s257, 0
          %s264 = smul.addr %s261, 2
          %s265 = smul.addr %s264, 8
          %s266 = scalar_lea.hbm %s0, %s265
          %s267 = sshll.u32 %s266, 4
          %s268 = int_to_ptr.hbm [resolvable:$true] %s267
          %s269 = sshll.u32 %s260, 4
          %s270 = int_to_ptr.vmem [resolvable:$true] %s269
          %275 = dma.hbm_to_vmem [thread:$0]  %s268, 2048, %s270, %s257, 256, 256, 16
        $region36: #{mlp_pallas.1} parent=31 // pred_fallthru
          _
      $region32: #{mlp_pallas.1} parent=5 // pred_fallthru
        _
      %p276 = scmp.le.s32.totalorder 1, %s19
      %p277 = scmp.lt.s32.totalorder %s19, 3
      %p278 = pnand %p276, %p277
      %p279 = pneg %p278
      // Predicated region
      $region37: #{mlp_pallas.1} parent=5 // pred_check
        _
      $region38: #{mlp_pallas.1} parent=5 // pred_check_branch
        %281 = sbr.rel (%p278) target = $region40
      $region39: #{mlp_pallas.1} parent=5 // pred_region
        %s282 = ssub.s32 %s19, 1
        %s283 = sand.u32 %s44, 1
        %s284 = scalar_lea.sflag [#allocation3], %s283
        %s285 = sand.u32 %s44, 1
        %s286 = smul.addr %s285, 128
        %s287 = scalar_lea.vmem [#allocation2], %s286
        // Predicated region
        $region41: #{mlp_pallas.1} parent=39 // pred_check
          %p288 = pneg %p57
        $region42: #{mlp_pallas.1} parent=39 // pred_check_branch
          %290 = sbr.rel (%p288) target = $region44
        $region43: #{mlp_pallas.1} parent=39 // pred_region
          %292 = dma.done %s284, 2048
        $region44: #{mlp_pallas.1} parent=39 // pred_fallthru
          _
        // Predicated region
        $region45: #{mlp_pallas.1} parent=39 // pred_check
          %p293 = pneg %p83
        $region46: #{mlp_pallas.1} parent=39 // pred_check_branch
          %295 = sbr.rel (%p293) target = $region48
        $region47: #{mlp_pallas.1} parent=39 // pred_region
          %297 = dma.done [#allocation6], 16384
        $region48: #{mlp_pallas.1} parent=39 // pred_fallthru
          _
        // Predicated region
        $region49: #{mlp_pallas.1} parent=39 // pred_check
          %p298 = pneg %p109
        $region50: #{mlp_pallas.1} parent=39 // pred_check_branch
          %300 = sbr.rel (%p298) target = $region52
        $region51: #{mlp_pallas.1} parent=39 // pred_region
          %302 = dma.done [#allocation6], 128
        $region52: #{mlp_pallas.1} parent=39 // pred_fallthru
          _
        // Predicated region
        $region53: #{mlp_pallas.1} parent=39 // pred_check
          %p303 = pneg %p135
        $region54: #{mlp_pallas.1} parent=39 // pred_check_branch
          %305 = sbr.rel (%p303) target = $region56
        $region55: #{mlp_pallas.1} parent=39 // pred_region
          %307 = dma.done [#allocation9], 16384
        $region56: #{mlp_pallas.1} parent=39 // pred_fallthru
          _
        %s308 = sand.u32 %s44, 1
        %s309 = scalar_lea.sflag [#allocation3], %s308
        %s310 = sand.u32 %s44, 1
        %s311 = smul.addr %s310, 128
        %s312 = scalar_lea.vmem [#allocation2], %s311
        %p313 = pneg %p57
        %p314 = pneg %p54
        %p315 = pneg %p83
        %p316 = pneg %p80
        %p317 = pneg %p109
        %p318 = pneg %p106
        %p319 = pneg %p135
        %p320 = pneg %p132
        %p321 = pneg %p156
        %p322 = pneg %p153
        %p323 = pneg %p182
        %p324 = pneg %p179
        %s325 = sand.u32 %s169, 1
        %s326 = scalar_lea.sflag [#allocation4], %s325
        %s327 = sand.u32 %s169, 1
        %s328 = smul.addr %s327, 128
        %s329 = scalar_lea.vmem [#allocation10], %s328
        %s330 = smul.u32 8, %s28
        %s331 = smul.u32 8, %s29
        %s332 = smul.u32 8, %s29
        %s333 = smul.u32 128, %s29
        %s334 = smul.u32 8, %s28
        %p335 = scmp.eq.s32.totalorder %s29, 0
        // Predicated region
        $region57: #{mlp_pallas.1} parent=39 // pred_check
          %p336 = pneg %p335
        $region58: #{mlp_pallas.1} parent=39 // pred_check_branch
          %338 = sbr.rel (%p336) target = $region60
        $region59: #{mlp_pallas.1} parent=39 // pred_region
          %v339 = vld [vmem:[%s4] sm:$0x3]
          %v341 = vperm.slane %v339, 0
          %v342 = vperm.slane %v339, 1
          %345 = vst [vmem:[%s329] sm:$0xff] %v341
          %346 = vst [vmem:[%s329 + $0x8] sm:$0xff] %v342
          %347 = vst [vmem:[%s329 + $0x10] sm:$0xff] %v341
          %348 = vst [vmem:[%s329 + $0x18] sm:$0xff] %v342
          %349 = vst [vmem:[%s329 + $0x20] sm:$0xff] %v341
          %350 = vst [vmem:[%s329 + $0x28] sm:$0xff] %v342
          %351 = vst [vmem:[%s329 + $0x30] sm:$0xff] %v341
          %352 = vst [vmem:[%s329 + $0x38] sm:$0xff] %v342
          %353 = vst [vmem:[%s329 + $0x40] sm:$0xff] %v341
          %354 = vst [vmem:[%s329 + $0x48] sm:$0xff] %v342
          %355 = vst [vmem:[%s329 + $0x50] sm:$0xff] %v341
          %356 = vst [vmem:[%s329 + $0x58] sm:$0xff] %v342
          %357 = vst [vmem:[%s329 + $0x60] sm:$0xff] %v341
          %358 = vst [vmem:[%s329 + $0x68] sm:$0xff] %v342
          %359 = vst [vmem:[%s329 + $0x70] sm:$0xff] %v341
          %360 = vst [vmem:[%s329 + $0x78] sm:$0xff] %v342
        $region60: #{mlp_pallas.1} parent=39 // pred_fallthru
          _
        %v361 = vld [vmem:[%s287] sm:$0xff]
        %v362 = vld [vmem:[%s287 + $0x8] sm:$0xff]
        %v363 = vld [vmem:[%s287 + $0x10] sm:$0xff]
        %v364 = vld [vmem:[%s287 + $0x18] sm:$0xff]
        %v365 = vld [vmem:[%s287 + $0x20] sm:$0xff]
        %v366 = vld [vmem:[%s287 + $0x28] sm:$0xff]
        %v367 = vld [vmem:[%s287 + $0x30] sm:$0xff]
        %v368 = vld [vmem:[%s287 + $0x38] sm:$0xff]
        %v369 = vld [vmem:[%s287 + $0x40] sm:$0xff]
        %v370 = vld [vmem:[%s287 + $0x48] sm:$0xff]
        %v371 = vld [vmem:[%s287 + $0x50] sm:$0xff]
        %v372 = vld [vmem:[%s287 + $0x58] sm:$0xff]
        %v373 = vld [vmem:[%s287 + $0x60] sm:$0xff]
        %v374 = vld [vmem:[%s287 + $0x68] sm:$0xff]
        %v375 = vld [vmem:[%s287 + $0x70] sm:$0xff]
        %v376 = vld [vmem:[%s287 + $0x78] sm:$0xff]
        %v377 = vpack.c.bf16 %v363, %v361
        %v378 = vpack.c.bf16 %v364, %v362
        %v379 = vpack.c.bf16 %v367, %v365
        %v380 = vpack.c.bf16 %v368, %v366
        %v381 = vpack.c.bf16 %v371, %v369
        %v382 = vpack.c.bf16 %v372, %v370
        %v383 = vpack.c.bf16 %v375, %v373
        %v384 = vpack.c.bf16 %v376, %v374
        %v385 = vld [vmem:[#allocation5] sm:$0xff]
        %v386 = vld [vmem:[#allocation5 + $0x8] sm:$0xff]
        %v387 = vld [vmem:[#allocation5 + $0x10] sm:$0xff]
        %v388 = vld [vmem:[#allocation5 + $0x18] sm:$0xff]
        %v389 = vld [vmem:[#allocation5 + $0x20] sm:$0xff]
        %v390 = vld [vmem:[#allocation5 + $0x28] sm:$0xff]
        %v391 = vld [vmem:[#allocation5 + $0x30] sm:$0xff]
        %v392 = vld [vmem:[#allocation5 + $0x38] sm:$0xff]
        %v393 = vld [vmem:[#allocation5 + $0x40] sm:$0xff]
        %v394 = vld [vmem:[#allocation5 + $0x48] sm:$0xff]
        %v395 = vld [vmem:[#allocation5 + $0x50] sm:$0xff]
        %v396 = vld [vmem:[#allocation5 + $0x58] sm:$0xff]
        %v397 = vld [vmem:[#allocation5 + $0x60] sm:$0xff]
        %v398 = vld [vmem:[#allocation5 + $0x68] sm:$0xff]
        %v399 = vld [vmem:[#allocation5 + $0x70] sm:$0xff]
        %v400 = vld [vmem:[#allocation5 + $0x78] sm:$0xff]
        %v401 = vld [vmem:[#allocation5 + $0x80] sm:$0xff]
        %v402 = vld [vmem:[#allocation5 + $0x88] sm:$0xff]
        %v403 = vld [vmem:[#allocation5 + $0x90] sm:$0xff]
        %v404 = vld [vmem:[#allocation5 + $0x98] sm:$0xff]
        %v405 = vld [vmem:[#allocation5 + $0xa0] sm:$0xff]
        %v406 = vld [vmem:[#allocation5 + $0xa8] sm:$0xff]
        %v407 = vld [vmem:[#allocation5 + $0xb0] sm:$0xff]
        %v408 = vld [vmem:[#allocation5 + $0xb8] sm:$0xff]
        %v409 = vld [vmem:[#allocation5 + $0xc0] sm:$0xff]
        %v410 = vld [vmem:[#allocation5 + $0xc8] sm:$0xff]
        %v411 = vld [vmem:[#allocation5 + $0xd0] sm:$0xff]
        %v412 = vld [vmem:[#allocation5 + $0xd8] sm:$0xff]
        %v413 = vld [vmem:[#allocation5 + $0xe0] sm:$0xff]
        %v414 = vld [vmem:[#allocation5 + $0xe8] sm:$0xff]
        %v415 = vld [vmem:[#allocation5 + $0xf0] sm:$0xff]
        %v416 = vld [vmem:[#allocation5 + $0xf8] sm:$0xff]
        %v417 = vld [vmem:[#allocation5 + $0x100] sm:$0xff]
        %v418 = vld [vmem:[#allocation5 + $0x108] sm:$0xff]
        %v419 = vld [vmem:[#allocation5 + $0x110] sm:$0xff]
        %v420 = vld [vmem:[#allocation5 + $0x118] sm:$0xff]
        %v421 = vld [vmem:[#allocation5 + $0x120] sm:$0xff]
        %v422 = vld [vmem:[#allocation5 + $0x128] sm:$0xff]
        %v423 = vld [vmem:[#allocation5 + $0x130] sm:$0xff]
        %v424 = vld [vmem:[#allocation5 + $0x138] sm:$0xff]
        %v425 = vld [vmem:[#allocation5 + $0x140] sm:$0xff]
        %v426 = vld [vmem:[#allocation5 + $0x148] sm:$0xff]
        %v427 = vld [vmem:[#allocation5 + $0x150] sm:$0xff]
        %v428 = vld [vmem:[#allocation5 + $0x158] sm:$0xff]
        %v429 = vld [vmem:[#allocation5 + $0x160] sm:$0xff]
        %v430 = vld [vmem:[#allocation5 + $0x168] sm:$0xff]
        %v431 = vld [vmem:[#allocation5 + $0x170] sm:$0xff]
        %v432 = vld [vmem:[#allocation5 + $0x178] sm:$0xff]
        %v433 = vld [vmem:[#allocation5 + $0x180] sm:$0xff]
        %v434 = vld [vmem:[#allocation5 + $0x188] sm:$0xff]
        %v435 = vld [vmem:[#allocation5 + $0x190] sm:$0xff]
        %v436 = vld [vmem:[#allocation5 + $0x198] sm:$0xff]
        %v437 = vld [vmem:[#allocation5 + $0x1a0] sm:$0xff]
        %v438 = vld [vmem:[#allocation5 + $0x1a8] sm:$0xff]
        %v439 = vld [vmem:[#allocation5 + $0x1b0] sm:$0xff]
        %v440 = vld [vmem:[#allocation5 + $0x1b8] sm:$0xff]
        %v441 = vld [vmem:[#allocation5 + $0x1c0] sm:$0xff]
        %v442 = vld [vmem:[#allocation5 + $0x1c8] sm:$0xff]
        %v443 = vld [vmem:[#allocation5 + $0x1d0] sm:$0xff]
        %v444 = vld [vmem:[#allocation5 + $0x1d8] sm:$0xff]
        %v445 = vld [vmem:[#allocation5 + $0x1e0] sm:$0xff]
        %v446 = vld [vmem:[#allocation5 + $0x1e8] sm:$0xff]
        %v447 = vld [vmem:[#allocation5 + $0x1f0] sm:$0xff]
        %v448 = vld [vmem:[#allocation5 + $0x1f8] sm:$0xff]
        %v449 = vld [vmem:[#allocation5 + $0x200] sm:$0xff]
        %v450 = vld [vmem:[#allocation5 + $0x208] sm:$0xff]
        %v451 = vld [vmem:[#allocation5 + $0x210] sm:$0xff]
        %v452 = vld [vmem:[#allocation5 + $0x218] sm:$0xff]
        %v453 = vld [vmem:[#allocation5 + $0x220] sm:$0xff]
        %v454 = vld [vmem:[#allocation5 + $0x228] sm:$0xff]
        %v455 = vld [vmem:[#allocation5 + $0x230] sm:$0xff]
        %v456 = vld [vmem:[#allocation5 + $0x238] sm:$0xff]
        %v457 = vld [vmem:[#allocation5 + $0x240] sm:$0xff]
        %v458 = vld [vmem:[#allocation5 + $0x248] sm:$0xff]
        %v459 = vld [vmem:[#allocation5 + $0x250] sm:$0xff]
        %v460 = vld [vmem:[#allocation5 + $0x258] sm:$0xff]
        %v461 = vld [vmem:[#allocation5 + $0x260] sm:$0xff]
        %v462 = vld [vmem:[#allocation5 + $0x268] sm:$0xff]
        %v463 = vld [vmem:[#allocation5 + $0x270] sm:$0xff]
        %v464 = vld [vmem:[#allocation5 + $0x278] sm:$0xff]
        %v465 = vld [vmem:[#allocation5 + $0x280] sm:$0xff]
        %v466 = vld [vmem:[#allocation5 + $0x288] sm:$0xff]
        %v467 = vld [vmem:[#allocation5 + $0x290] sm:$0xff]
        %v468 = vld [vmem:[#allocation5 + $0x298] sm:$0xff]
        %v469 = vld [vmem:[#allocation5 + $0x2a0] sm:$0xff]
        %v470 = vld [vmem:[#allocation5 + $0x2a8] sm:$0xff]
        %v471 = vld [vmem:[#allocation5 + $0x2b0] sm:$0xff]
        %v472 = vld [vmem:[#allocation5 + $0x2b8] sm:$0xff]
        %v473 = vld [vmem:[#allocation5 + $0x2c0] sm:$0xff]
        %v474 = vld [vmem:[#allocation5 + $0x2c8] sm:$0xff]
        %v475 = vld [vmem:[#allocation5 + $0x2d0] sm:$0xff]
        %v476 = vld [vmem:[#allocation5 + $0x2d8] sm:$0xff]
        %v477 = vld [vmem:[#allocation5 + $0x2e0] sm:$0xff]
        %v478 = vld [vmem:[#allocation5 + $0x2e8] sm:$0xff]
        %v479 = vld [vmem:[#allocation5 + $0x2f0] sm:$0xff]
        %v480 = vld [vmem:[#allocation5 + $0x2f8] sm:$0xff]
        %v481 = vld [vmem:[#allocation5 + $0x300] sm:$0xff]
        %v482 = vld [vmem:[#allocation5 + $0x308] sm:$0xff]
        %v483 = vld [vmem:[#allocation5 + $0x310] sm:$0xff]
        %v484 = vld [vmem:[#allocation5 + $0x318] sm:$0xff]
        %v485 = vld [vmem:[#allocation5 + $0x320] sm:$0xff]
        %v486 = vld [vmem:[#allocation5 + $0x328] sm:$0xff]
        %v487 = vld [vmem:[#allocation5 + $0x330] sm:$0xff]
        %v488 = vld [vmem:[#allocation5 + $0x338] sm:$0xff]
        %v489 = vld [vmem:[#allocation5 + $0x340] sm:$0xff]
        %v490 = vld [vmem:[#allocation5 + $0x348] sm:$0xff]
        %v491 = vld [vmem:[#allocation5 + $0x350] sm:$0xff]
        %v492 = vld [vmem:[#allocation5 + $0x358] sm:$0xff]
        %v493 = vld [vmem:[#allocation5 + $0x360] sm:$0xff]
        %v494 = vld [vmem:[#allocation5 + $0x368] sm:$0xff]
        %v495 = vld [vmem:[#allocation5 + $0x370] sm:$0xff]
        %v496 = vld [vmem:[#allocation5 + $0x378] sm:$0xff]
        %v497 = vld [vmem:[#allocation5 + $0x380] sm:$0xff]
        %v498 = vld [vmem:[#allocation5 + $0x388] sm:$0xff]
        %v499 = vld [vmem:[#allocation5 + $0x390] sm:$0xff]
        %v500 = vld [vmem:[#allocation5 + $0x398] sm:$0xff]
        %v501 = vld [vmem:[#allocation5 + $0x3a0] sm:$0xff]
        %v502 = vld [vmem:[#allocation5 + $0x3a8] sm:$0xff]
        %v503 = vld [vmem:[#allocation5 + $0x3b0] sm:$0xff]
        %v504 = vld [vmem:[#allocation5 + $0x3b8] sm:$0xff]
        %v505 = vld [vmem:[#allocation5 + $0x3c0] sm:$0xff]
        %v506 = vld [vmem:[#allocation5 + $0x3c8] sm:$0xff]
        %v507 = vld [vmem:[#allocation5 + $0x3d0] sm:$0xff]
        %v508 = vld [vmem:[#allocation5 + $0x3d8] sm:$0xff]
        %v509 = vld [vmem:[#allocation5 + $0x3e0] sm:$0xff]
        %v510 = vld [vmem:[#allocation5 + $0x3e8] sm:$0xff]
        %v511 = vld [vmem:[#allocation5 + $0x3f0] sm:$0xff]
        %v512 = vld [vmem:[#allocation5 + $0x3f8] sm:$0xff]
        %v513 = vld [vmem:[#allocation7] sm:$0xff]
        %v515 = vperm.slane %v513, 0
        %v516 = vperm.slane %v513, 1
        %v517 = vperm.slane %v513, 2
        %v518 = vperm.slane %v513, 3
        %v519 = vperm.slane %v513, 4
        %v520 = vperm.slane %v513, 5
        %v521 = vperm.slane %v513, 6
        %v522 = vperm.slane %v513, 7
        %v659 = vunpack.c.l.b16 %v385
        %v660 = vunpack.c.h.b16 %v385
        %v661 = vunpack.c.l.b16 %v386
        %v662 = vunpack.c.h.b16 %v386
        %v663 = vunpack.c.l.b16 %v387
        %v664 = vunpack.c.h.b16 %v387
        %v665 = vunpack.c.l.b16 %v388
        %v666 = vunpack.c.h.b16 %v388
        %v667 = vunpack.c.l.b16 %v389
        %v668 = vunpack.c.h.b16 %v389
        %v669 = vunpack.c.l.b16 %v390
        %v670 = vunpack.c.h.b16 %v390
        %v671 = vunpack.c.l.b16 %v391
        %v672 = vunpack.c.h.b16 %v391
        %v673 = vunpack.c.l.b16 %v392
        %v674 = vunpack.c.h.b16 %v392
        %v675 = vunpack.c.l.b16 %v393
        %v676 = vunpack.c.h.b16 %v393
        %v677 = vunpack.c.l.b16 %v394
        %v678 = vunpack.c.h.b16 %v394
        %v679 = vunpack.c.l.b16 %v395
        %v680 = vunpack.c.h.b16 %v395
        %v681 = vunpack.c.l.b16 %v396
        %v682 = vunpack.c.h.b16 %v396
        %v683 = vunpack.c.l.b16 %v397
        %v684 = vunpack.c.h.b16 %v397
        %v685 = vunpack.c.l.b16 %v398
        %v686 = vunpack.c.h.b16 %v398
        %v687 = vunpack.c.l.b16 %v399
        %v688 = vunpack.c.h.b16 %v399
        %v689 = vunpack.c.l.b16 %v400
        %v690 = vunpack.c.h.b16 %v400
        %v691 = vunpack.c.l.b16 %v401
        %v692 = vunpack.c.h.b16 %v401
        %v693 = vunpack.c.l.b16 %v402
        %v694 = vunpack.c.h.b16 %v402
        %v695 = vunpack.c.l.b16 %v403
        %v696 = vunpack.c.h.b16 %v403
        %v697 = vunpack.c.l.b16 %v404
        %v698 = vunpack.c.h.b16 %v404
        %v699 = vunpack.c.l.b16 %v405
        %v700 = vunpack.c.h.b16 %v405
        %v701 = vunpack.c.l.b16 %v406
        %v702 = vunpack.c.h.b16 %v406
        %v703 = vunpack.c.l.b16 %v407
        %v704 = vunpack.c.h.b16 %v407
        %v705 = vunpack.c.l.b16 %v408
        %v706 = vunpack.c.h.b16 %v408
        %v707 = vunpack.c.l.b16 %v409
        %v708 = vunpack.c.h.b16 %v409
        %v709 = vunpack.c.l.b16 %v410
        %v710 = vunpack.c.h.b16 %v410
        %v711 = vunpack.c.l.b16 %v411
        %v712 = vunpack.c.h.b16 %v411
        %v713 = vunpack.c.l.b16 %v412
        %v714 = vunpack.c.h.b16 %v412
        %v715 = vunpack.c.l.b16 %v413
        %v716 = vunpack.c.h.b16 %v413
        %v717 = vunpack.c.l.b16 %v414
        %v718 = vunpack.c.h.b16 %v414
        %v719 = vunpack.c.l.b16 %v415
        %v720 = vunpack.c.h.b16 %v415
        %v721 = vunpack.c.l.b16 %v416
        %v722 = vunpack.c.h.b16 %v416
        %v723 = vunpack.c.l.b16 %v417
        %v724 = vunpack.c.h.b16 %v417
        %v725 = vunpack.c.l.b16 %v418
        %v726 = vunpack.c.h.b16 %v418
        %v727 = vunpack.c.l.b16 %v419
        %v728 = vunpack.c.h.b16 %v419
        %v729 = vunpack.c.l.b16 %v420
        %v730 = vunpack.c.h.b16 %v420
        %v731 = vunpack.c.l.b16 %v421
        %v732 = vunpack.c.h.b16 %v421
        %v733 = vunpack.c.l.b16 %v422
        %v734 = vunpack.c.h.b16 %v422
        %v735 = vunpack.c.l.b16 %v423
        %v736 = vunpack.c.h.b16 %v423
        %v737 = vunpack.c.l.b16 %v424
        %v738 = vunpack.c.h.b16 %v424
        %v739 = vunpack.c.l.b16 %v425
        %v740 = vunpack.c.h.b16 %v425
        %v741 = vunpack.c.l.b16 %v426
        %v742 = vunpack.c.h.b16 %v426
        %v743 = vunpack.c.l.b16 %v427
        %v744 = vunpack.c.h.b16 %v427
        %v745 = vunpack.c.l.b16 %v428
        %v746 = vunpack.c.h.b16 %v428
        %v747 = vunpack.c.l.b16 %v429
        %v748 = vunpack.c.h.b16 %v429
        %v749 = vunpack.c.l.b16 %v430
        %v750 = vunpack.c.h.b16 %v430
        %v751 = vunpack.c.l.b16 %v431
        %v752 = vunpack.c.h.b16 %v431
        %v753 = vunpack.c.l.b16 %v432
        %v754 = vunpack.c.h.b16 %v432
        %v755 = vunpack.c.l.b16 %v433
        %v756 = vunpack.c.h.b16 %v433
        %v757 = vunpack.c.l.b16 %v434
        %v758 = vunpack.c.h.b16 %v434
        %v759 = vunpack.c.l.b16 %v435
        %v760 = vunpack.c.h.b16 %v435
        %v761 = vunpack.c.l.b16 %v436
        %v762 = vunpack.c.h.b16 %v436
        %v763 = vunpack.c.l.b16 %v437
        %v764 = vunpack.c.h.b16 %v437
        %v765 = vunpack.c.l.b16 %v438
        %v766 = vunpack.c.h.b16 %v438
        %v767 = vunpack.c.l.b16 %v439
        %v768 = vunpack.c.h.b16 %v439
        %v769 = vunpack.c.l.b16 %v440
        %v770 = vunpack.c.h.b16 %v440
        %v771 = vunpack.c.l.b16 %v441
        %v772 = vunpack.c.h.b16 %v441
        %v773 = vunpack.c.l.b16 %v442
        %v774 = vunpack.c.h.b16 %v442
        %v775 = vunpack.c.l.b16 %v443
        %v776 = vunpack.c.h.b16 %v443
        %v777 = vunpack.c.l.b16 %v444
        %v778 = vunpack.c.h.b16 %v444
        %v779 = vunpack.c.l.b16 %v445
        %v780 = vunpack.c.h.b16 %v445
        %v781 = vunpack.c.l.b16 %v446
        %v782 = vunpack.c.h.b16 %v446
        %v783 = vunpack.c.l.b16 %v447
        %v784 = vunpack.c.h.b16 %v447
        %v785 = vunpack.c.l.b16 %v448
        %v786 = vunpack.c.h.b16 %v448
        %v787 = vunpack.c.l.b16 %v449
        %v788 = vunpack.c.h.b16 %v449
        %v789 = vunpack.c.l.b16 %v450
        %v790 = vunpack.c.h.b16 %v450
        %v791 = vunpack.c.l.b16 %v451
        %v792 = vunpack.c.h.b16 %v451
        %v793 = vunpack.c.l.b16 %v452
        %v794 = vunpack.c.h.b16 %v452
        %v795 = vunpack.c.l.b16 %v453
        %v796 = vunpack.c.h.b16 %v453
        %v797 = vunpack.c.l.b16 %v454
        %v798 = vunpack.c.h.b16 %v454
        %v799 = vunpack.c.l.b16 %v455
        %v800 = vunpack.c.h.b16 %v455
        %v801 = vunpack.c.l.b16 %v456
        %v802 = vunpack.c.h.b16 %v456
        %v803 = vunpack.c.l.b16 %v457
        %v804 = vunpack.c.h.b16 %v457
        %v805 = vunpack.c.l.b16 %v458
        %v806 = vunpack.c.h.b16 %v458
        %v807 = vunpack.c.l.b16 %v459
        %v808 = vunpack.c.h.b16 %v459
        %v809 = vunpack.c.l.b16 %v460
        %v810 = vunpack.c.h.b16 %v460
        %v811 = vunpack.c.l.b16 %v461
        %v812 = vunpack.c.h.b16 %v461
        %v813 = vunpack.c.l.b16 %v462
        %v814 = vunpack.c.h.b16 %v462
        %v815 = vunpack.c.l.b16 %v463
        %v816 = vunpack.c.h.b16 %v463
        %v817 = vunpack.c.l.b16 %v464
        %v818 = vunpack.c.h.b16 %v464
        %v819 = vunpack.c.l.b16 %v465
        %v820 = vunpack.c.h.b16 %v465
        %v821 = vunpack.c.l.b16 %v466
        %v822 = vunpack.c.h.b16 %v466
        %v823 = vunpack.c.l.b16 %v467
        %v824 = vunpack.c.h.b16 %v467
        %v825 = vunpack.c.l.b16 %v468
        %v826 = vunpack.c.h.b16 %v468
        %v827 = vunpack.c.l.b16 %v469
        %v828 = vunpack.c.h.b16 %v469
        %v829 = vunpack.c.l.b16 %v470
        %v830 = vunpack.c.h.b16 %v470
        %v831 = vunpack.c.l.b16 %v471
        %v832 = vunpack.c.h.b16 %v471
        %v833 = vunpack.c.l.b16 %v472
        %v834 = vunpack.c.h.b16 %v472
        %v835 = vunpack.c.l.b16 %v473
        %v836 = vunpack.c.h.b16 %v473
        %v837 = vunpack.c.l.b16 %v474
        %v838 = vunpack.c.h.b16 %v474
        %v839 = vunpack.c.l.b16 %v475
        %v840 = vunpack.c.h.b16 %v475
        %v841 = vunpack.c.l.b16 %v476
        %v842 = vunpack.c.h.b16 %v476
        %v843 = vunpack.c.l.b16 %v477
        %v844 = vunpack.c.h.b16 %v477
        %v845 = vunpack.c.l.b16 %v478
        %v846 = vunpack.c.h.b16 %v478
        %v847 = vunpack.c.l.b16 %v479
        %v848 = vunpack.c.h.b16 %v479
        %v849 = vunpack.c.l.b16 %v480
        %v850 = vunpack.c.h.b16 %v480
        %v851 = vunpack.c.l.b16 %v481
        %v852 = vunpack.c.h.b16 %v481
        %v853 = vunpack.c.l.b16 %v482
        %v854 = vunpack.c.h.b16 %v482
        %v855 = vunpack.c.l.b16 %v483
        %v856 = vunpack.c.h.b16 %v483
        %v857 = vunpack.c.l.b16 %v484
        %v858 = vunpack.c.h.b16 %v484
        %v859 = vunpack.c.l.b16 %v485
        %v860 = vunpack.c.h.b16 %v485
        %v861 = vunpack.c.l.b16 %v486
        %v862 = vunpack.c.h.b16 %v486
        %v863 = vunpack.c.l.b16 %v487
        %v864 = vunpack.c.h.b16 %v487
        %v865 = vunpack.c.l.b16 %v488
        %v866 = vunpack.c.h.b16 %v488
        %v867 = vunpack.c.l.b16 %v489
        %v868 = vunpack.c.h.b16 %v489
        %v869 = vunpack.c.l.b16 %v490
        %v870 = vunpack.c.h.b16 %v490
        %v871 = vunpack.c.l.b16 %v491
        %v872 = vunpack.c.h.b16 %v491
        %v873 = vunpack.c.l.b16 %v492
        %v874 = vunpack.c.h.b16 %v492
        %v875 = vunpack.c.l.b16 %v493
        %v876 = vunpack.c.h.b16 %v493
        %v877 = vunpack.c.l.b16 %v494
        %v878 = vunpack.c.h.b16 %v494
        %v879 = vunpack.c.l.b16 %v495
        %v880 = vunpack.c.h.b16 %v495
        %v881 = vunpack.c.l.b16 %v496
        %v882 = vunpack.c.h.b16 %v496
        %v883 = vunpack.c.l.b16 %v497
        %v884 = vunpack.c.h.b16 %v497
        %v885 = vunpack.c.l.b16 %v498
        %v886 = vunpack.c.h.b16 %v498
        %v887 = vunpack.c.l.b16 %v499
        %v888 = vunpack.c.h.b16 %v499
        %v889 = vunpack.c.l.b16 %v500
        %v890 = vunpack.c.h.b16 %v500
        %v891 = vunpack.c.l.b16 %v501
        %v892 = vunpack.c.h.b16 %v501
        %v893 = vunpack.c.l.b16 %v502
        %v894 = vunpack.c.h.b16 %v502
        %v895 = vunpack.c.l.b16 %v503
        %v896 = vunpack.c.h.b16 %v503
        %v897 = vunpack.c.l.b16 %v504
        %v898 = vunpack.c.h.b16 %v504
        %v899 = vunpack.c.l.b16 %v505
        %v900 = vunpack.c.h.b16 %v505
        %v901 = vunpack.c.l.b16 %v506
        %v902 = vunpack.c.h.b16 %v506
        %v903 = vunpack.c.l.b16 %v507
        %v904 = vunpack.c.h.b16 %v507
        %v905 = vunpack.c.l.b16 %v508
        %v906 = vunpack.c.h.b16 %v508
        %v907 = vunpack.c.l.b16 %v509
        %v908 = vunpack.c.h.b16 %v509
        %v909 = vunpack.c.l.b16 %v510
        %v910 = vunpack.c.h.b16 %v510
        %v911 = vunpack.c.l.b16 %v511
        %v912 = vunpack.c.h.b16 %v511
        %v913 = vunpack.c.l.b16 %v512
        %v914 = vunpack.c.h.b16 %v512
        %v915 = vpack.c.b16 %v667, %v659
        %v916 = vpack.c.b16 %v668, %v660
        %v917 = vpack.c.b16 %v669, %v661
        %v918 = vpack.c.b16 %v670, %v662
        %v919 = vpack.c.b16 %v671, %v663
        %v920 = vpack.c.b16 %v672, %v664
        %v921 = vpack.c.b16 %v673, %v665
        %v922 = vpack.c.b16 %v674, %v666
        %v923 = vpack.c.b16 %v683, %v675
        %v924 = vpack.c.b16 %v684, %v676
        %v925 = vpack.c.b16 %v685, %v677
        %v926 = vpack.c.b16 %v686, %v678
        %v927 = vpack.c.b16 %v687, %v679
        %v928 = vpack.c.b16 %v688, %v680
        %v929 = vpack.c.b16 %v689, %v681
        %v930 = vpack.c.b16 %v690, %v682
        %v931 = vpack.c.b16 %v699, %v691
        %v932 = vpack.c.b16 %v700, %v692
        %v933 = vpack.c.b16 %v701, %v693
        %v934 = vpack.c.b16 %v702, %v694
        %v935 = vpack.c.b16 %v703, %v695
        %v936 = vpack.c.b16 %v704, %v696
        %v937 = vpack.c.b16 %v705, %v697
        %v938 = vpack.c.b16 %v706, %v698
        %v939 = vpack.c.b16 %v715, %v707
        %v940 = vpack.c.b16 %v716, %v708
        %v941 = vpack.c.b16 %v717, %v709
        %v942 = vpack.c.b16 %v718, %v710
        %v943 = vpack.c.b16 %v719, %v711
        %v944 = vpack.c.b16 %v720, %v712
        %v945 = vpack.c.b16 %v721, %v713
        %v946 = vpack.c.b16 %v722, %v714
        %v947 = vpack.c.b16 %v731, %v723
        %v948 = vpack.c.b16 %v732, %v724
        %v949 = vpack.c.b16 %v733, %v725
        %v950 = vpack.c.b16 %v734, %v726
        %v951 = vpack.c.b16 %v735, %v727
        %v952 = vpack.c.b16 %v736, %v728
        %v953 = vpack.c.b16 %v737, %v729
        %v954 = vpack.c.b16 %v738, %v730
        %v955 = vpack.c.b16 %v747, %v739
        %v956 = vpack.c.b16 %v748, %v740
        %v957 = vpack.c.b16 %v749, %v741
        %v958 = vpack.c.b16 %v750, %v742
        %v959 = vpack.c.b16 %v751, %v743
        %v960 = vpack.c.b16 %v752, %v744
        %v961 = vpack.c.b16 %v753, %v745
        %v962 = vpack.c.b16 %v754, %v746
        %v963 = vpack.c.b16 %v763, %v755
        %v964 = vpack.c.b16 %v764, %v756
        %v965 = vpack.c.b16 %v765, %v757
        %v966 = vpack.c.b16 %v766, %v758
        %v967 = vpack.c.b16 %v767, %v759
        %v968 = vpack.c.b16 %v768, %v760
        %v969 = vpack.c.b16 %v769, %v761
        %v970 = vpack.c.b16 %v770, %v762
        %v971 = vpack.c.b16 %v779, %v771
        %v972 = vpack.c.b16 %v780, %v772
        %v973 = vpack.c.b16 %v781, %v773
        %v974 = vpack.c.b16 %v782, %v774
        %v975 = vpack.c.b16 %v783, %v775
        %v976 = vpack.c.b16 %v784, %v776
        %v977 = vpack.c.b16 %v785, %v777
        %v978 = vpack.c.b16 %v786, %v778
        %v979 = vpack.c.b16 %v795, %v787
        %v980 = vpack.c.b16 %v796, %v788
        %v981 = vpack.c.b16 %v797, %v789
        %v982 = vpack.c.b16 %v798, %v790
        %v983 = vpack.c.b16 %v799, %v791
        %v984 = vpack.c.b16 %v800, %v792
        %v985 = vpack.c.b16 %v801, %v793
        %v986 = vpack.c.b16 %v802, %v794
        %v987 = vpack.c.b16 %v811, %v803
        %v988 = vpack.c.b16 %v812, %v804
        %v989 = vpack.c.b16 %v813, %v805
        %v990 = vpack.c.b16 %v814, %v806
        %v991 = vpack.c.b16 %v815, %v807
        %v992 = vpack.c.b16 %v816, %v808
        %v993 = vpack.c.b16 %v817, %v809
        %v994 = vpack.c.b16 %v818, %v810
        %v995 = vpack.c.b16 %v827, %v819
        %v996 = vpack.c.b16 %v828, %v820
        %v997 = vpack.c.b16 %v829, %v821
        %v998 = vpack.c.b16 %v830, %v822
        %v999 = vpack.c.b16 %v831, %v823
        %v1000 = vpack.c.b16 %v832, %v824
        %v1001 = vpack.c.b16 %v833, %v825
        %v1002 = vpack.c.b16 %v834, %v826
        %v1003 = vpack.c.b16 %v843, %v835
        %v1004 = vpack.c.b16 %v844, %v836
        %v1005 = vpack.c.b16 %v845, %v837
        %v1006 = vpack.c.b16 %v846, %v838
        %v1007 = vpack.c.b16 %v847, %v839
        %v1008 = vpack.c.b16 %v848, %v840
        %v1009 = vpack.c.b16 %v849, %v841
        %v1010 = vpack.c.b16 %v850, %v842
        %v1011 = vpack.c.b16 %v859, %v851
        %v1012 = vpack.c.b16 %v860, %v852
        %v1013 = vpack.c.b16 %v861, %v853
        %v1014 = vpack.c.b16 %v862, %v854
        %v1015 = vpack.c.b16 %v863, %v855
        %v1016 = vpack.c.b16 %v864, %v856
        %v1017 = vpack.c.b16 %v865, %v857
        %v1018 = vpack.c.b16 %v866, %v858
        %v1019 = vpack.c.b16 %v875, %v867
        %v1020 = vpack.c.b16 %v876, %v868
        %v1021 = vpack.c.b16 %v877, %v869
        %v1022 = vpack.c.b16 %v878, %v870
        %v1023 = vpack.c.b16 %v879, %v871
        %v1024 = vpack.c.b16 %v880, %v872
        %v1025 = vpack.c.b16 %v881, %v873
        %v1026 = vpack.c.b16 %v882, %v874
        %v1027 = vpack.c.b16 %v891, %v883
        %v1028 = vpack.c.b16 %v892, %v884
        %v1029 = vpack.c.b16 %v893, %v885
        %v1030 = vpack.c.b16 %v894, %v886
        %v1031 = vpack.c.b16 %v895, %v887
        %v1032 = vpack.c.b16 %v896, %v888
        %v1033 = vpack.c.b16 %v897, %v889
        %v1034 = vpack.c.b16 %v898, %v890
        %v1035 = vpack.c.b16 %v907, %v899
        %v1036 = vpack.c.b16 %v908, %v900
        %v1037 = vpack.c.b16 %v909, %v901
        %v1038 = vpack.c.b16 %v910, %v902
        %v1039 = vpack.c.b16 %v911, %v903
        %v1040 = vpack.c.b16 %v912, %v904
        %v1041 = vpack.c.b16 %v913, %v905
        %v1042 = vpack.c.b16 %v914, %v906
        %1171 = vmatpush.bf16.msra.mxu0 %v971
        %1172 = vmatpush.bf16.msra.mxu0 %v963
        %1173 = vmatpush.bf16.msra.mxu0 %v955
        %1174 = vmatpush.bf16.msra.mxu0 %v947
        %1175 = vmatpush.bf16.msra.mxu0 %v939
        %1176 = vmatpush.bf16.msra.mxu0 %v931
        %1177 = vmatpush.bf16.msra.mxu0 %v923
        %1178 = vmatpush.bf16.msra.mxu0 %v915
        %1179 = vmatmul.bf16.gmra.mxu0 %v377
        %v1180 = vpop.f32.mrf.mxu0
        %v1181 = vadd.f32 %v515, %v1180
        %v1182 = vpop.f32.mrf.mxu0
        %v1183 = vadd.f32 %v515, %v1182
        %1184 = vmatmul.bf16.gmra.mxu0 %v379
        %v1185 = vpop.f32.mrf.mxu0
        %v1186 = vadd.f32 %v515, %v1185
        %v1187 = vpop.f32.mrf.mxu0
        %v1188 = vadd.f32 %v515, %v1187
        %1189 = vmatmul.bf16.gmra.mxu0 %v381
        %v1190 = vpop.f32.mrf.mxu0
        %v1191 = vadd.f32 %v515, %v1190
        %v1192 = vpop.f32.mrf.mxu0
        %v1193 = vadd.f32 %v515, %v1192
        %1194 = vmatmul.bf16.gmra.mxu0 %v383
        %v1195 = vpop.f32.mrf.mxu0
        %v1196 = vadd.f32 %v515, %v1195
        %v1197 = vpop.f32.mrf.mxu0
        %v1198 = vadd.f32 %v515, %v1197
        %1199 = vdwg.mxu0
        %1200 = vmatpush.bf16.msra.mxu0 %v1035
        %1201 = vmatpush.bf16.msra.mxu0 %v1027
        %1202 = vmatpush.bf16.msra.mxu0 %v1019
        %1203 = vmatpush.bf16.msra.mxu0 %v1011
        %1204 = vmatpush.bf16.msra.mxu0 %v1003
        %1205 = vmatpush.bf16.msra.mxu0 %v995
        %1206 = vmatpush.bf16.msra.mxu0 %v987
        %1207 = vmatpush.bf16.msra.mxu0 %v979
        %1208 = vmatmul.bf16.gmra.mxu0 %v378
        %v1209 = vpop.f32.mrf.mxu0
        %v1210 = vadd.f32 %v1181, %v1209
        %v1211 = vpop.f32.mrf.mxu0
        %v1212 = vadd.f32 %v1183, %v1211
        %1213 = vmatmul.bf16.gmra.mxu0 %v380
        %v1214 = vpop.f32.mrf.mxu0
        %v1215 = vadd.f32 %v1186, %v1214
        %v1216 = vpop.f32.mrf.mxu0
        %v1217 = vadd.f32 %v1188, %v1216
        %1218 = vmatmul.bf16.gmra.mxu0 %v382
        %v1219 = vpop.f32.mrf.mxu0
        %v1220 = vadd.f32 %v1191, %v1219
        %v1221 = vpop.f32.mrf.mxu0
        %v1222 = vadd.f32 %v1193, %v1221
        %1223 = vmatmul.bf16.gmra.mxu0 %v384
        %v1224 = vpop.f32.mrf.mxu0
        %v1225 = vadd.f32 %v1196, %v1224
        %v1226 = vpop.f32.mrf.mxu0
        %v1227 = vadd.f32 %v1198, %v1226
        %1228 = vdwg.mxu0
        %1229 = vmatpush.bf16.msra.mxu0 %v972
        %1230 = vmatpush.bf16.msra.mxu0 %v964
        %1231 = vmatpush.bf16.msra.mxu0 %v956
        %1232 = vmatpush.bf16.msra.mxu0 %v948
        %1233 = vmatpush.bf16.msra.mxu0 %v940
        %1234 = vmatpush.bf16.msra.mxu0 %v932
        %1235 = vmatpush.bf16.msra.mxu0 %v924
        %1236 = vmatpush.bf16.msra.mxu0 %v916
        %1237 = vmatmul.bf16.gmra.mxu0 %v377
        %v1238 = vpop.f32.mrf.mxu0
        %v1239 = vadd.f32 %v516, %v1238
        %v1240 = vpop.f32.mrf.mxu0
        %v1241 = vadd.f32 %v516, %v1240
        %1242 = vmatmul.bf16.gmra.mxu0 %v379
        %v1243 = vpop.f32.mrf.mxu0
        %v1244 = vadd.f32 %v516, %v1243
        %v1245 = vpop.f32.mrf.mxu0
        %v1246 = vadd.f32 %v516, %v1245
        %1247 = vmatmul.bf16.gmra.mxu0 %v381
        %v1248 = vpop.f32.mrf.mxu0
        %v1249 = vadd.f32 %v516, %v1248
        %v1250 = vpop.f32.mrf.mxu0
        %v1251 = vadd.f32 %v516, %v1250
        %1252 = vmatmul.bf16.gmra.mxu0 %v383
        %v1253 = vpop.f32.mrf.mxu0
        %v1254 = vadd.f32 %v516, %v1253
        %v1255 = vpop.f32.mrf.mxu0
        %v1256 = vadd.f32 %v516, %v1255
        %1257 = vdwg.mxu0
        %1258 = vmatpush.bf16.msra.mxu0 %v1036
        %1259 = vmatpush.bf16.msra.mxu0 %v1028
        %1260 = vmatpush.bf16.msra.mxu0 %v1020
        %1261 = vmatpush.bf16.msra.mxu0 %v1012
        %1262 = vmatpush.bf16.msra.mxu0 %v1004
        %1263 = vmatpush.bf16.msra.mxu0 %v996
        %1264 = vmatpush.bf16.msra.mxu0 %v988
        %1265 = vmatpush.bf16.msra.mxu0 %v980
        %1266 = vmatmul.bf16.gmra.mxu0 %v378
        %v1267 = vpop.f32.mrf.mxu0
        %v1268 = vadd.f32 %v1239, %v1267
        %v1269 = vpop.f32.mrf.mxu0
        %v1270 = vadd.f32 %v1241, %v1269
        %1271 = vmatmul.bf16.gmra.mxu0 %v380
        %v1272 = vpop.f32.mrf.mxu0
        %v1273 = vadd.f32 %v1244, %v1272
        %v1274 = vpop.f32.mrf.mxu0
        %v1275 = vadd.f32 %v1246, %v1274
        %1276 = vmatmul.bf16.gmra.mxu0 %v382
        %v1277 = vpop.f32.mrf.mxu0
        %v1278 = vadd.f32 %v1249, %v1277
        %v1279 = vpop.f32.mrf.mxu0
        %v1280 = vadd.f32 %v1251, %v1279
        %1281 = vmatmul.bf16.gmra.mxu0 %v384
        %v1282 = vpop.f32.mrf.mxu0
        %v1283 = vadd.f32 %v1254, %v1282
        %v1284 = vpop.f32.mrf.mxu0
        %v1285 = vadd.f32 %v1256, %v1284
        %1286 = vdwg.mxu0
        %1287 = vmatpush.bf16.msra.mxu0 %v973
        %1288 = vmatpush.bf16.msra.mxu0 %v965
        %1289 = vmatpush.bf16.msra.mxu0 %v957
        %1290 = vmatpush.bf16.msra.mxu0 %v949
        %1291 = vmatpush.bf16.msra.mxu0 %v941
        %1292 = vmatpush.bf16.msra.mxu0 %v933
        %1293 = vmatpush.bf16.msra.mxu0 %v925
        %1294 = vmatpush.bf16.msra.mxu0 %v917
        %1295 = vmatmul.bf16.gmra.mxu0 %v377
        %v1296 = vpop.f32.mrf.mxu0
        %v1297 = vadd.f32 %v517, %v1296
        %v1298 = vpop.f32.mrf.mxu0
        %v1299 = vadd.f32 %v517, %v1298
        %1300 = vmatmul.bf16.gmra.mxu0 %v379
        %v1301 = vpop.f32.mrf.mxu0
        %v1302 = vadd.f32 %v517, %v1301
        %v1303 = vpop.f32.mrf.mxu0
        %v1304 = vadd.f32 %v517, %v1303
        %1305 = vmatmul.bf16.gmra.mxu0 %v381
        %v1306 = vpop.f32.mrf.mxu0
        %v1307 = vadd.f32 %v517, %v1306
        %v1308 = vpop.f32.mrf.mxu0
        %v1309 = vadd.f32 %v517, %v1308
        %1310 = vmatmul.bf16.gmra.mxu0 %v383
        %v1311 = vpop.f32.mrf.mxu0
        %v1312 = vadd.f32 %v517, %v1311
        %v1313 = vpop.f32.mrf.mxu0
        %v1314 = vadd.f32 %v517, %v1313
        %1315 = vdwg.mxu0
        %1316 = vmatpush.bf16.msra.mxu0 %v1037
        %1317 = vmatpush.bf16.msra.mxu0 %v1029
        %1318 = vmatpush.bf16.msra.mxu0 %v1021
        %1319 = vmatpush.bf16.msra.mxu0 %v1013
        %1320 = vmatpush.bf16.msra.mxu0 %v1005
        %1321 = vmatpush.bf16.msra.mxu0 %v997
        %1322 = vmatpush.bf16.msra.mxu0 %v989
        %1323 = vmatpush.bf16.msra.mxu0 %v981
        %1324 = vmatmul.bf16.gmra.mxu0 %v378
        %v1325 = vpop.f32.mrf.mxu0
        %v1326 = vadd.f32 %v1297, %v1325
        %v1327 = vpop.f32.mrf.mxu0
        %v1328 = vadd.f32 %v1299, %v1327
        %1329 = vmatmul.bf16.gmra.mxu0 %v380
        %v1330 = vpop.f32.mrf.mxu0
        %v1331 = vadd.f32 %v1302, %v1330
        %v1332 = vpop.f32.mrf.mxu0
        %v1333 = vadd.f32 %v1304, %v1332
        %1334 = vmatmul.bf16.gmra.mxu0 %v382
        %v1335 = vpop.f32.mrf.mxu0
        %v1336 = vadd.f32 %v1307, %v1335
        %v1337 = vpop.f32.mrf.mxu0
        %v1338 = vadd.f32 %v1309, %v1337
        %1339 = vmatmul.bf16.gmra.mxu0 %v384
        %v1340 = vpop.f32.mrf.mxu0
        %v1341 = vadd.f32 %v1312, %v1340
        %v1342 = vpop.f32.mrf.mxu0
        %v1343 = vadd.f32 %v1314, %v1342
        %1344 = vdwg.mxu0
        %1345 = vmatpush.bf16.msra.mxu0 %v974
        %1346 = vmatpush.bf16.msra.mxu0 %v966
        %1347 = vmatpush.bf16.msra.mxu0 %v958
        %1348 = vmatpush.bf16.msra.mxu0 %v950
        %1349 = vmatpush.bf16.msra.mxu0 %v942
        %1350 = vmatpush.bf16.msra.mxu0 %v934
        %1351 = vmatpush.bf16.msra.mxu0 %v926
        %1352 = vmatpush.bf16.msra.mxu0 %v918
        %1353 = vmatmul.bf16.gmra.mxu0 %v377
        %v1354 = vpop.f32.mrf.mxu0
        %v1355 = vadd.f32 %v518, %v1354
        %v1356 = vpop.f32.mrf.mxu0
        %v1357 = vadd.f32 %v518, %v1356
        %1358 = vmatmul.bf16.gmra.mxu0 %v379
        %v1359 = vpop.f32.mrf.mxu0
        %v1360 = vadd.f32 %v518, %v1359
        %v1361 = vpop.f32.mrf.mxu0
        %v1362 = vadd.f32 %v518, %v1361
        %1363 = vmatmul.bf16.gmra.mxu0 %v381
        %v1364 = vpop.f32.mrf.mxu0
        %v1365 = vadd.f32 %v518, %v1364
        %v1366 = vpop.f32.mrf.mxu0
        %v1367 = vadd.f32 %v518, %v1366
        %1368 = vmatmul.bf16.gmra.mxu0 %v383
        %v1369 = vpop.f32.mrf.mxu0
        %v1370 = vadd.f32 %v518, %v1369
        %v1371 = vpop.f32.mrf.mxu0
        %v1372 = vadd.f32 %v518, %v1371
        %1373 = vdwg.mxu0
        %1374 = vmatpush.bf16.msra.mxu0 %v1038
        %1375 = vmatpush.bf16.msra.mxu0 %v1030
        %1376 = vmatpush.bf16.msra.mxu0 %v1022
        %1377 = vmatpush.bf16.msra.mxu0 %v1014
        %1378 = vmatpush.bf16.msra.mxu0 %v1006
        %1379 = vmatpush.bf16.msra.mxu0 %v998
        %1380 = vmatpush.bf16.msra.mxu0 %v990
        %1381 = vmatpush.bf16.msra.mxu0 %v982
        %1382 = vmatmul.bf16.gmra.mxu0 %v378
        %v1383 = vpop.f32.mrf.mxu0
        %v1384 = vadd.f32 %v1355, %v1383
        %v1385 = vpop.f32.mrf.mxu0
        %v1386 = vadd.f32 %v1357, %v1385
        %1387 = vmatmul.bf16.gmra.mxu0 %v380
        %v1388 = vpop.f32.mrf.mxu0
        %v1389 = vadd.f32 %v1360, %v1388
        %v1390 = vpop.f32.mrf.mxu0
        %v1391 = vadd.f32 %v1362, %v1390
        %1392 = vmatmul.bf16.gmra.mxu0 %v382
        %v1393 = vpop.f32.mrf.mxu0
        %v1394 = vadd.f32 %v1365, %v1393
        %v1395 = vpop.f32.mrf.mxu0
        %v1396 = vadd.f32 %v1367, %v1395
        %1397 = vmatmul.bf16.gmra.mxu0 %v384
        %v1398 = vpop.f32.mrf.mxu0
        %v1399 = vadd.f32 %v1370, %v1398
        %v1400 = vpop.f32.mrf.mxu0
        %v1401 = vadd.f32 %v1372, %v1400
        %1402 = vdwg.mxu0
        %1403 = vmatpush.bf16.msra.mxu0 %v975
        %1404 = vmatpush.bf16.msra.mxu0 %v967
        %1405 = vmatpush.bf16.msra.mxu0 %v959
        %1406 = vmatpush.bf16.msra.mxu0 %v951
        %1407 = vmatpush.bf16.msra.mxu0 %v943
        %1408 = vmatpush.bf16.msra.mxu0 %v935
        %1409 = vmatpush.bf16.msra.mxu0 %v927
        %1410 = vmatpush.bf16.msra.mxu0 %v919
        %1411 = vmatmul.bf16.gmra.mxu0 %v377
        %v1412 = vpop.f32.mrf.mxu0
        %v1413 = vadd.f32 %v519, %v1412
        %v1414 = vpop.f32.mrf.mxu0
        %v1415 = vadd.f32 %v519, %v1414
        %1416 = vmatmul.bf16.gmra.mxu0 %v379
        %v1417 = vpop.f32.mrf.mxu0
        %v1418 = vadd.f32 %v519, %v1417
        %v1419 = vpop.f32.mrf.mxu0
        %v1420 = vadd.f32 %v519, %v1419
        %1421 = vmatmul.bf16.gmra.mxu0 %v381
        %v1422 = vpop.f32.mrf.mxu0
        %v1423 = vadd.f32 %v519, %v1422
        %v1424 = vpop.f32.mrf.mxu0
        %v1425 = vadd.f32 %v519, %v1424
        %1426 = vmatmul.bf16.gmra.mxu0 %v383
        %v1427 = vpop.f32.mrf.mxu0
        %v1428 = vadd.f32 %v519, %v1427
        %v1429 = vpop.f32.mrf.mxu0
        %v1430 = vadd.f32 %v519, %v1429
        %1431 = vdwg.mxu0
        %1432 = vmatpush.bf16.msra.mxu0 %v1039
        %1433 = vmatpush.bf16.msra.mxu0 %v1031
        %1434 = vmatpush.bf16.msra.mxu0 %v1023
        %1435 = vmatpush.bf16.msra.mxu0 %v1015
        %1436 = vmatpush.bf16.msra.mxu0 %v1007
        %1437 = vmatpush.bf16.msra.mxu0 %v999
        %1438 = vmatpush.bf16.msra.mxu0 %v991
        %1439 = vmatpush.bf16.msra.mxu0 %v983
        %1440 = vmatmul.bf16.gmra.mxu0 %v378
        %v1441 = vpop.f32.mrf.mxu0
        %v1442 = vadd.f32 %v1413, %v1441
        %v1443 = vpop.f32.mrf.mxu0
        %v1444 = vadd.f32 %v1415, %v1443
        %1445 = vmatmul.bf16.gmra.mxu0 %v380
        %v1446 = vpop.f32.mrf.mxu0
        %v1447 = vadd.f32 %v1418, %v1446
        %v1448 = vpop.f32.mrf.mxu0
        %v1449 = vadd.f32 %v1420, %v1448
        %1450 = vmatmul.bf16.gmra.mxu0 %v382
        %v1451 = vpop.f32.mrf.mxu0
        %v1452 = vadd.f32 %v1423, %v1451
        %v1453 = vpop.f32.mrf.mxu0
        %v1454 = vadd.f32 %v1425, %v1453
        %1455 = vmatmul.bf16.gmra.mxu0 %v384
        %v1456 = vpop.f32.mrf.mxu0
        %v1457 = vadd.f32 %v1428, %v1456
        %v1458 = vpop.f32.mrf.mxu0
        %v1459 = vadd.f32 %v1430, %v1458
        %1460 = vdwg.mxu0
        %1461 = vmatpush.bf16.msra.mxu0 %v976
        %1462 = vmatpush.bf16.msra.mxu0 %v968
        %1463 = vmatpush.bf16.msra.mxu0 %v960
        %1464 = vmatpush.bf16.msra.mxu0 %v952
        %1465 = vmatpush.bf16.msra.mxu0 %v944
        %1466 = vmatpush.bf16.msra.mxu0 %v936
        %1467 = vmatpush.bf16.msra.mxu0 %v928
        %1468 = vmatpush.bf16.msra.mxu0 %v920
        %1469 = vmatmul.bf16.gmra.mxu0 %v377
        %v1470 = vpop.f32.mrf.mxu0
        %v1471 = vadd.f32 %v520, %v1470
        %v1472 = vpop.f32.mrf.mxu0
        %v1473 = vadd.f32 %v520, %v1472
        %1474 = vmatmul.bf16.gmra.mxu0 %v379
        %v1475 = vpop.f32.mrf.mxu0
        %v1476 = vadd.f32 %v520, %v1475
        %v1477 = vpop.f32.mrf.mxu0
        %v1478 = vadd.f32 %v520, %v1477
        %1479 = vmatmul.bf16.gmra.mxu0 %v381
        %v1480 = vpop.f32.mrf.mxu0
        %v1481 = vadd.f32 %v520, %v1480
        %v1482 = vpop.f32.mrf.mxu0
        %v1483 = vadd.f32 %v520, %v1482
        %1484 = vmatmul.bf16.gmra.mxu0 %v383
        %v1485 = vpop.f32.mrf.mxu0
        %v1486 = vadd.f32 %v520, %v1485
        %v1487 = vpop.f32.mrf.mxu0
        %v1488 = vadd.f32 %v520, %v1487
        %1489 = vdwg.mxu0
        %1490 = vmatpush.bf16.msra.mxu0 %v1040
        %1491 = vmatpush.bf16.msra.mxu0 %v1032
        %1492 = vmatpush.bf16.msra.mxu0 %v1024
        %1493 = vmatpush.bf16.msra.mxu0 %v1016
        %1494 = vmatpush.bf16.msra.mxu0 %v1008
        %1495 = vmatpush.bf16.msra.mxu0 %v1000
        %1496 = vmatpush.bf16.msra.mxu0 %v992
        %1497 = vmatpush.bf16.msra.mxu0 %v984
        %1498 = vmatmul.bf16.gmra.mxu0 %v378
        %v1499 = vpop.f32.mrf.mxu0
        %v1500 = vadd.f32 %v1471, %v1499
        %v1501 = vpop.f32.mrf.mxu0
        %v1502 = vadd.f32 %v1473, %v1501
        %1503 = vmatmul.bf16.gmra.mxu0 %v380
        %v1504 = vpop.f32.mrf.mxu0
        %v1505 = vadd.f32 %v1476, %v1504
        %v1506 = vpop.f32.mrf.mxu0
        %v1507 = vadd.f32 %v1478, %v1506
        %1508 = vmatmul.bf16.gmra.mxu0 %v382
        %v1509 = vpop.f32.mrf.mxu0
        %v1510 = vadd.f32 %v1481, %v1509
        %v1511 = vpop.f32.mrf.mxu0
        %v1512 = vadd.f32 %v1483, %v1511
        %1513 = vmatmul.bf16.gmra.mxu0 %v384
        %v1514 = vpop.f32.mrf.mxu0
        %v1515 = vadd.f32 %v1486, %v1514
        %v1516 = vpop.f32.mrf.mxu0
        %v1517 = vadd.f32 %v1488, %v1516
        %1518 = vdwg.mxu0
        %1519 = vmatpush.bf16.msra.mxu0 %v977
        %1520 = vmatpush.bf16.msra.mxu0 %v969
        %1521 = vmatpush.bf16.msra.mxu0 %v961
        %1522 = vmatpush.bf16.msra.mxu0 %v953
        %1523 = vmatpush.bf16.msra.mxu0 %v945
        %1524 = vmatpush.bf16.msra.mxu0 %v937
        %1525 = vmatpush.bf16.msra.mxu0 %v929
        %1526 = vmatpush.bf16.msra.mxu0 %v921
        %1527 = vmatmul.bf16.gmra.mxu0 %v377
        %v1528 = vpop.f32.mrf.mxu0
        %v1529 = vadd.f32 %v521, %v1528
        %v1530 = vpop.f32.mrf.mxu0
        %v1531 = vadd.f32 %v521, %v1530
        %1532 = vmatmul.bf16.gmra.mxu0 %v379
        %v1533 = vpop.f32.mrf.mxu0
        %v1534 = vadd.f32 %v521, %v1533
        %v1535 = vpop.f32.mrf.mxu0
        %v1536 = vadd.f32 %v521, %v1535
        %1537 = vmatmul.bf16.gmra.mxu0 %v381
        %v1538 = vpop.f32.mrf.mxu0
        %v1539 = vadd.f32 %v521, %v1538
        %v1540 = vpop.f32.mrf.mxu0
        %v1541 = vadd.f32 %v521, %v1540
        %1542 = vmatmul.bf16.gmra.mxu0 %v383
        %v1543 = vpop.f32.mrf.mxu0
        %v1544 = vadd.f32 %v521, %v1543
        %v1545 = vpop.f32.mrf.mxu0
        %v1546 = vadd.f32 %v521, %v1545
        %1547 = vdwg.mxu0
        %1548 = vmatpush.bf16.msra.mxu0 %v1041
        %1549 = vmatpush.bf16.msra.mxu0 %v1033
        %1550 = vmatpush.bf16.msra.mxu0 %v1025
        %1551 = vmatpush.bf16.msra.mxu0 %v1017
        %1552 = vmatpush.bf16.msra.mxu0 %v1009
        %1553 = vmatpush.bf16.msra.mxu0 %v1001
        %1554 = vmatpush.bf16.msra.mxu0 %v993
        %1555 = vmatpush.bf16.msra.mxu0 %v985
        %1556 = vmatmul.bf16.gmra.mxu0 %v378
        %v1557 = vpop.f32.mrf.mxu0
        %v1558 = vadd.f32 %v1529, %v1557
        %v1559 = vpop.f32.mrf.mxu0
        %v1560 = vadd.f32 %v1531, %v1559
        %1561 = vmatmul.bf16.gmra.mxu0 %v380
        %v1562 = vpop.f32.mrf.mxu0
        %v1563 = vadd.f32 %v1534, %v1562
        %v1564 = vpop.f32.mrf.mxu0
        %v1565 = vadd.f32 %v1536, %v1564
        %1566 = vmatmul.bf16.gmra.mxu0 %v382
        %v1567 = vpop.f32.mrf.mxu0
        %v1568 = vadd.f32 %v1539, %v1567
        %v1569 = vpop.f32.mrf.mxu0
        %v1570 = vadd.f32 %v1541, %v1569
        %1571 = vmatmul.bf16.gmra.mxu0 %v384
        %v1572 = vpop.f32.mrf.mxu0
        %v1573 = vadd.f32 %v1544, %v1572
        %v1574 = vpop.f32.mrf.mxu0
        %v1575 = vadd.f32 %v1546, %v1574
        %1576 = vdwg.mxu0
        %1577 = vmatpush.bf16.msra.mxu0 %v978
        %1578 = vmatpush.bf16.msra.mxu0 %v970
        %1579 = vmatpush.bf16.msra.mxu0 %v962
        %1580 = vmatpush.bf16.msra.mxu0 %v954
        %1581 = vmatpush.bf16.msra.mxu0 %v946
        %1582 = vmatpush.bf16.msra.mxu0 %v938
        %1583 = vmatpush.bf16.msra.mxu0 %v930
        %1584 = vmatpush.bf16.msra.mxu0 %v922
        %1585 = vmatmul.bf16.gmra.mxu0 %v377
        %v1586 = vpop.f32.mrf.mxu0
        %v1587 = vadd.f32 %v522, %v1586
        %v1588 = vpop.f32.mrf.mxu0
        %v1589 = vadd.f32 %v522, %v1588
        %1590 = vmatmul.bf16.gmra.mxu0 %v379
        %v1591 = vpop.f32.mrf.mxu0
        %v1592 = vadd.f32 %v522, %v1591
        %v1593 = vpop.f32.mrf.mxu0
        %v1594 = vadd.f32 %v522, %v1593
        %1595 = vmatmul.bf16.gmra.mxu0 %v381
        %v1596 = vpop.f32.mrf.mxu0
        %v1597 = vadd.f32 %v522, %v1596
        %v1598 = vpop.f32.mrf.mxu0
        %v1599 = vadd.f32 %v522, %v1598
        %1600 = vmatmul.bf16.gmra.mxu0 %v383
        %v1601 = vpop.f32.mrf.mxu0
        %v1602 = vadd.f32 %v522, %v1601
        %v1603 = vpop.f32.mrf.mxu0
        %v1604 = vadd.f32 %v522, %v1603
        %1605 = vdwg.mxu0
        %1606 = vmatpush.bf16.msra.mxu0 %v1042
        %1607 = vmatpush.bf16.msra.mxu0 %v1034
        %1608 = vmatpush.bf16.msra.mxu0 %v1026
        %1609 = vmatpush.bf16.msra.mxu0 %v1018
        %1610 = vmatpush.bf16.msra.mxu0 %v1010
        %1611 = vmatpush.bf16.msra.mxu0 %v1002
        %1612 = vmatpush.bf16.msra.mxu0 %v994
        %1613 = vmatpush.bf16.msra.mxu0 %v986
        %1614 = vmatmul.bf16.gmra.mxu0 %v378
        %v1615 = vpop.f32.mrf.mxu0
        %v1616 = vadd.f32 %v1587, %v1615
        %v1617 = vpop.f32.mrf.mxu0
        %v1618 = vadd.f32 %v1589, %v1617
        %1619 = vmatmul.bf16.gmra.mxu0 %v380
        %v1620 = vpop.f32.mrf.mxu0
        %v1621 = vadd.f32 %v1592, %v1620
        %v1622 = vpop.f32.mrf.mxu0
        %v1623 = vadd.f32 %v1594, %v1622
        %1624 = vmatmul.bf16.gmra.mxu0 %v382
        %v1625 = vpop.f32.mrf.mxu0
        %v1626 = vadd.f32 %v1597, %v1625
        %v1627 = vpop.f32.mrf.mxu0
        %v1628 = vadd.f32 %v1599, %v1627
        %1629 = vmatmul.bf16.gmra.mxu0 %v384
        %v1630 = vpop.f32.mrf.mxu0
        %v1631 = vadd.f32 %v1602, %v1630
        %v1632 = vpop.f32.mrf.mxu0
        %v1633 = vadd.f32 %v1604, %v1632
        %1634 = vdwg.mxu0
        %v1635 = vmul.f32 %v1210, 0.5
        %v1636 = vmul.f32 %v1268, 0.5
        %v1637 = vmul.f32 %v1326, 0.5
        %v1638 = vmul.f32 %v1384, 0.5
        %v1639 = vmul.f32 %v1442, 0.5
        %v1640 = vmul.f32 %v1500, 0.5
        %v1641 = vmul.f32 %v1558, 0.5
        %v1642 = vmul.f32 %v1616, 0.5
        %v1643 = vmul.f32 %v1212, 0.5
        %v1644 = vmul.f32 %v1270, 0.5
        %v1645 = vmul.f32 %v1328, 0.5
        %v1646 = vmul.f32 %v1386, 0.5
        %v1647 = vmul.f32 %v1444, 0.5
        %v1648 = vmul.f32 %v1502, 0.5
        %v1649 = vmul.f32 %v1560, 0.5
        %v1650 = vmul.f32 %v1618, 0.5
        %v1651 = vmul.f32 %v1215, 0.5
        %v1652 = vmul.f32 %v1273, 0.5
        %v1653 = vmul.f32 %v1331, 0.5
        %v1654 = vmul.f32 %v1389, 0.5
        %v1655 = vmul.f32 %v1447, 0.5
        %v1656 = vmul.f32 %v1505, 0.5
        %v1657 = vmul.f32 %v1563, 0.5
        %v1658 = vmul.f32 %v1621, 0.5
        %v1659 = vmul.f32 %v1217, 0.5
        %v1660 = vmul.f32 %v1275, 0.5
        %v1661 = vmul.f32 %v1333, 0.5
        %v1662 = vmul.f32 %v1391, 0.5
        %v1663 = vmul.f32 %v1449, 0.5
        %v1664 = vmul.f32 %v1507, 0.5
        %v1665 = vmul.f32 %v1565, 0.5
        %v1666 = vmul.f32 %v1623, 0.5
        %v1667 = vmul.f32 %v1220, 0.5
        %v1668 = vmul.f32 %v1278, 0.5
        %v1669 = vmul.f32 %v1336, 0.5
        %v1670 = vmul.f32 %v1394, 0.5
        %v1671 = vmul.f32 %v1452, 0.5
        %v1672 = vmul.f32 %v1510, 0.5
        %v1673 = vmul.f32 %v1568, 0.5
        %v1674 = vmul.f32 %v1626, 0.5
        %v1675 = vmul.f32 %v1222, 0.5
        %v1676 = vmul.f32 %v1280, 0.5
        %v1677 = vmul.f32 %v1338, 0.5
        %v1678 = vmul.f32 %v1396, 0.5
        %v1679 = vmul.f32 %v1454, 0.5
        %v1680 = vmul.f32 %v1512, 0.5
        %v1681 = vmul.f32 %v1570, 0.5
        %v1682 = vmul.f32 %v1628, 0.5
        %v1683 = vmul.f32 %v1225, 0.5
        %v1684 = vmul.f32 %v1283, 0.5
        %v1685 = vmul.f32 %v1341, 0.5
        %v1686 = vmul.f32 %v1399, 0.5
        %v1687 = vmul.f32 %v1457, 0.5
        %v1688 = vmul.f32 %v1515, 0.5
        %v1689 = vmul.f32 %v1573, 0.5
        %v1690 = vmul.f32 %v1631, 0.5
        %v1691 = vmul.f32 %v1227, 0.5
        %v1692 = vmul.f32 %v1285, 0.5
        %v1693 = vmul.f32 %v1343, 0.5
        %v1694 = vmul.f32 %v1401, 0.5
        %v1695 = vmul.f32 %v1459, 0.5
        %v1696 = vmul.f32 %v1517, 0.5
        %v1697 = vmul.f32 %v1575, 0.5
        %v1698 = vmul.f32 %v1633, 0.5
        %v1699 = vmul.f32 %v1210, 0.044715
        %v1700 = vmul.f32 %v1268, 0.044715
        %v1701 = vmul.f32 %v1326, 0.044715
        %v1702 = vmul.f32 %v1384, 0.044715
        %v1703 = vmul.f32 %v1442, 0.044715
        %v1704 = vmul.f32 %v1500, 0.044715
        %v1705 = vmul.f32 %v1558, 0.044715
        %v1706 = vmul.f32 %v1616, 0.044715
        %v1707 = vmul.f32 %v1212, 0.044715
        %v1708 = vmul.f32 %v1270, 0.044715
        %v1709 = vmul.f32 %v1328, 0.044715
        %v1710 = vmul.f32 %v1386, 0.044715
        %v1711 = vmul.f32 %v1444, 0.044715
        %v1712 = vmul.f32 %v1502, 0.044715
        %v1713 = vmul.f32 %v1560, 0.044715
        %v1714 = vmul.f32 %v1618, 0.044715
        %v1715 = vmul.f32 %v1215, 0.044715
        %v1716 = vmul.f32 %v1273, 0.044715
        %v1717 = vmul.f32 %v1331, 0.044715
        %v1718 = vmul.f32 %v1389, 0.044715
        %v1719 = vmul.f32 %v1447, 0.044715
        %v1720 = vmul.f32 %v1505, 0.044715
        %v1721 = vmul.f32 %v1563, 0.044715
        %v1722 = vmul.f32 %v1621, 0.044715
        %v1723 = vmul.f32 %v1217, 0.044715
        %v1724 = vmul.f32 %v1275, 0.044715
        %v1725 = vmul.f32 %v1333, 0.044715
        %v1726 = vmul.f32 %v1391, 0.044715
        %v1727 = vmul.f32 %v1449, 0.044715
        %v1728 = vmul.f32 %v1507, 0.044715
        %v1729 = vmul.f32 %v1565, 0.044715
        %v1730 = vmul.f32 %v1623, 0.044715
        %v1731 = vmul.f32 %v1220, 0.044715
        %v1732 = vmul.f32 %v1278, 0.044715
        %v1733 = vmul.f32 %v1336, 0.044715
        %v1734 = vmul.f32 %v1394, 0.044715
        %v1735 = vmul.f32 %v1452, 0.044715
        %v1736 = vmul.f32 %v1510, 0.044715
        %v1737 = vmul.f32 %v1568, 0.044715
        %v1738 = vmul.f32 %v1626, 0.044715
        %v1739 = vmul.f32 %v1222, 0.044715
        %v1740 = vmul.f32 %v1280, 0.044715
        %v1741 = vmul.f32 %v1338, 0.044715
        %v1742 = vmul.f32 %v1396, 0.044715
        %v1743 = vmul.f32 %v1454, 0.044715
        %v1744 = vmul.f32 %v1512, 0.044715
        %v1745 = vmul.f32 %v1570, 0.044715
        %v1746 = vmul.f32 %v1628, 0.044715
        %v1747 = vmul.f32 %v1225, 0.044715
        %v1748 = vmul.f32 %v1283, 0.044715
        %v1749 = vmul.f32 %v1341, 0.044715
        %v1750 = vmul.f32 %v1399, 0.044715
        %v1751 = vmul.f32 %v1457, 0.044715
        %v1752 = vmul.f32 %v1515, 0.044715
        %v1753 = vmul.f32 %v1573, 0.044715
        %v1754 = vmul.f32 %v1631, 0.044715
        %v1755 = vmul.f32 %v1227, 0.044715
        %v1756 = vmul.f32 %v1285, 0.044715
        %v1757 = vmul.f32 %v1343, 0.044715
        %v1758 = vmul.f32 %v1401, 0.044715
        %v1759 = vmul.f32 %v1459, 0.044715
        %v1760 = vmul.f32 %v1517, 0.044715
        %v1761 = vmul.f32 %v1575, 0.044715
        %v1762 = vmul.f32 %v1633, 0.044715
        %v1763 = vmul.f32 %v1699, %v1210
        %v1764 = vmul.f32 %v1700, %v1268
        %v1765 = vmul.f32 %v1701, %v1326
        %v1766 = vmul.f32 %v1702, %v1384
        %v1767 = vmul.f32 %v1703, %v1442
        %v1768 = vmul.f32 %v1704, %v1500
        %v1769 = vmul.f32 %v1705, %v1558
        %v1770 = vmul.f32 %v1706, %v1616
        %v1771 = vmul.f32 %v1707, %v1212
        %v1772 = vmul.f32 %v1708, %v1270
        %v1773 = vmul.f32 %v1709, %v1328
        %v1774 = vmul.f32 %v1710, %v1386
        %v1775 = vmul.f32 %v1711, %v1444
        %v1776 = vmul.f32 %v1712, %v1502
        %v1777 = vmul.f32 %v1713, %v1560
        %v1778 = vmul.f32 %v1714, %v1618
        %v1779 = vmul.f32 %v1715, %v1215
        %v1780 = vmul.f32 %v1716, %v1273
        %v1781 = vmul.f32 %v1717, %v1331
        %v1782 = vmul.f32 %v1718, %v1389
        %v1783 = vmul.f32 %v1719, %v1447
        %v1784 = vmul.f32 %v1720, %v1505
        %v1785 = vmul.f32 %v1721, %v1563
        %v1786 = vmul.f32 %v1722, %v1621
        %v1787 = vmul.f32 %v1723, %v1217
        %v1788 = vmul.f32 %v1724, %v1275
        %v1789 = vmul.f32 %v1725, %v1333
        %v1790 = vmul.f32 %v1726, %v1391
        %v1791 = vmul.f32 %v1727, %v1449
        %v1792 = vmul.f32 %v1728, %v1507
        %v1793 = vmul.f32 %v1729, %v1565
        %v1794 = vmul.f32 %v1730, %v1623
        %v1795 = vmul.f32 %v1731, %v1220
        %v1796 = vmul.f32 %v1732, %v1278
        %v1797 = vmul.f32 %v1733, %v1336
        %v1798 = vmul.f32 %v1734, %v1394
        %v1799 = vmul.f32 %v1735, %v1452
        %v1800 = vmul.f32 %v1736, %v1510
        %v1801 = vmul.f32 %v1737, %v1568
        %v1802 = vmul.f32 %v1738, %v1626
        %v1803 = vmul.f32 %v1739, %v1222
        %v1804 = vmul.f32 %v1740, %v1280
        %v1805 = vmul.f32 %v1741, %v1338
        %v1806 = vmul.f32 %v1742, %v1396
        %v1807 = vmul.f32 %v1743, %v1454
        %v1808 = vmul.f32 %v1744, %v1512
        %v1809 = vmul.f32 %v1745, %v1570
        %v1810 = vmul.f32 %v1746, %v1628
        %v1811 = vmul.f32 %v1747, %v1225
        %v1812 = vmul.f32 %v1748, %v1283
        %v1813 = vmul.f32 %v1749, %v1341
        %v1814 = vmul.f32 %v1750, %v1399
        %v1815 = vmul.f32 %v1751, %v1457
        %v1816 = vmul.f32 %v1752, %v1515
        %v1817 = vmul.f32 %v1753, %v1573
        %v1818 = vmul.f32 %v1754, %v1631
        %v1819 = vmul.f32 %v1755, %v1227
        %v1820 = vmul.f32 %v1756, %v1285
        %v1821 = vmul.f32 %v1757, %v1343
        %v1822 = vmul.f32 %v1758, %v1401
        %v1823 = vmul.f32 %v1759, %v1459
        %v1824 = vmul.f32 %v1760, %v1517
        %v1825 = vmul.f32 %v1761, %v1575
        %v1826 = vmul.f32 %v1762, %v1633
        %v1827 = vmul.f32 %v1763, %v1210
        %v1828 = vmul.f32 %v1764, %v1268
        %v1829 = vmul.f32 %v1765, %v1326
        %v1830 = vmul.f32 %v1766, %v1384
        %v1831 = vmul.f32 %v1767, %v1442
        %v1832 = vmul.f32 %v1768, %v1500
        %v1833 = vmul.f32 %v1769, %v1558
        %v1834 = vmul.f32 %v1770, %v1616
        %v1835 = vmul.f32 %v1771, %v1212
        %v1836 = vmul.f32 %v1772, %v1270
        %v1837 = vmul.f32 %v1773, %v1328
        %v1838 = vmul.f32 %v1774, %v1386
        %v1839 = vmul.f32 %v1775, %v1444
        %v1840 = vmul.f32 %v1776, %v1502
        %v1841 = vmul.f32 %v1777, %v1560
        %v1842 = vmul.f32 %v1778, %v1618
        %v1843 = vmul.f32 %v1779, %v1215
        %v1844 = vmul.f32 %v1780, %v1273
        %v1845 = vmul.f32 %v1781, %v1331
        %v1846 = vmul.f32 %v1782, %v1389
        %v1847 = vmul.f32 %v1783, %v1447
        %v1848 = vmul.f32 %v1784, %v1505
        %v1849 = vmul.f32 %v1785, %v1563
        %v1850 = vmul.f32 %v1786, %v1621
        %v1851 = vmul.f32 %v1787, %v1217
        %v1852 = vmul.f32 %v1788, %v1275
        %v1853 = vmul.f32 %v1789, %v1333
        %v1854 = vmul.f32 %v1790, %v1391
        %v1855 = vmul.f32 %v1791, %v1449
        %v1856 = vmul.f32 %v1792, %v1507
        %v1857 = vmul.f32 %v1793, %v1565
        %v1858 = vmul.f32 %v1794, %v1623
        %v1859 = vmul.f32 %v1795, %v1220
        %v1860 = vmul.f32 %v1796, %v1278
        %v1861 = vmul.f32 %v1797, %v1336
        %v1862 = vmul.f32 %v1798, %v1394
        %v1863 = vmul.f32 %v1799, %v1452
        %v1864 = vmul.f32 %v1800, %v1510
        %v1865 = vmul.f32 %v1801, %v1568
        %v1866 = vmul.f32 %v1802, %v1626
        %v1867 = vmul.f32 %v1803, %v1222
        %v1868 = vmul.f32 %v1804, %v1280
        %v1869 = vmul.f32 %v1805, %v1338
        %v1870 = vmul.f32 %v1806, %v1396
        %v1871 = vmul.f32 %v1807, %v1454
        %v1872 = vmul.f32 %v1808, %v1512
        %v1873 = vmul.f32 %v1809, %v1570
        %v1874 = vmul.f32 %v1810, %v1628
        %v1875 = vmul.f32 %v1811, %v1225
        %v1876 = vmul.f32 %v1812, %v1283
        %v1877 = vmul.f32 %v1813, %v1341
        %v1878 = vmul.f32 %v1814, %v1399
        %v1879 = vmul.f32 %v1815, %v1457
        %v1880 = vmul.f32 %v1816, %v1515
        %v1881 = vmul.f32 %v1817, %v1573
        %v1882 = vmul.f32 %v1818, %v1631
        %v1883 = vmul.f32 %v1819, %v1227
        %v1884 = vmul.f32 %v1820, %v1285
        %v1885 = vmul.f32 %v1821, %v1343
        %v1886 = vmul.f32 %v1822, %v1401
        %v1887 = vmul.f32 %v1823, %v1459
        %v1888 = vmul.f32 %v1824, %v1517
        %v1889 = vmul.f32 %v1825, %v1575
        %v1890 = vmul.f32 %v1826, %v1633
        %v1891 = vadd.f32 %v1210, %v1827
        %v1892 = vadd.f32 %v1268, %v1828
        %v1893 = vadd.f32 %v1326, %v1829
        %v1894 = vadd.f32 %v1384, %v1830
        %v1895 = vadd.f32 %v1442, %v1831
        %v1896 = vadd.f32 %v1500, %v1832
        %v1897 = vadd.f32 %v1558, %v1833
        %v1898 = vadd.f32 %v1616, %v1834
        %v1899 = vadd.f32 %v1212, %v1835
        %v1900 = vadd.f32 %v1270, %v1836
        %v1901 = vadd.f32 %v1328, %v1837
        %v1902 = vadd.f32 %v1386, %v1838
        %v1903 = vadd.f32 %v1444, %v1839
        %v1904 = vadd.f32 %v1502, %v1840
        %v1905 = vadd.f32 %v1560, %v1841
        %v1906 = vadd.f32 %v1618, %v1842
        %v1907 = vadd.f32 %v1215, %v1843
        %v1908 = vadd.f32 %v1273, %v1844
        %v1909 = vadd.f32 %v1331, %v1845
        %v1910 = vadd.f32 %v1389, %v1846
        %v1911 = vadd.f32 %v1447, %v1847
        %v1912 = vadd.f32 %v1505, %v1848
        %v1913 = vadd.f32 %v1563, %v1849
        %v1914 = vadd.f32 %v1621, %v1850
        %v1915 = vadd.f32 %v1217, %v1851
        %v1916 = vadd.f32 %v1275, %v1852
        %v1917 = vadd.f32 %v1333, %v1853
        %v1918 = vadd.f32 %v1391, %v1854
        %v1919 = vadd.f32 %v1449, %v1855
        %v1920 = vadd.f32 %v1507, %v1856
        %v1921 = vadd.f32 %v1565, %v1857
        %v1922 = vadd.f32 %v1623, %v1858
        %v1923 = vadd.f32 %v1220, %v1859
        %v1924 = vadd.f32 %v1278, %v1860
        %v1925 = vadd.f32 %v1336, %v1861
        %v1926 = vadd.f32 %v1394, %v1862
        %v1927 = vadd.f32 %v1452, %v1863
        %v1928 = vadd.f32 %v1510, %v1864
        %v1929 = vadd.f32 %v1568, %v1865
        %v1930 = vadd.f32 %v1626, %v1866
        %v1931 = vadd.f32 %v1222, %v1867
        %v1932 = vadd.f32 %v1280, %v1868
        %v1933 = vadd.f32 %v1338, %v1869
        %v1934 = vadd.f32 %v1396, %v1870
        %v1935 = vadd.f32 %v1454, %v1871
        %v1936 = vadd.f32 %v1512, %v1872
        %v1937 = vadd.f32 %v1570, %v1873
        %v1938 = vadd.f32 %v1628, %v1874
        %v1939 = vadd.f32 %v1225, %v1875
        %v1940 = vadd.f32 %v1283, %v1876
        %v1941 = vadd.f32 %v1341, %v1877
        %v1942 = vadd.f32 %v1399, %v1878
        %v1943 = vadd.f32 %v1457, %v1879
        %v1944 = vadd.f32 %v1515, %v1880
        %v1945 = vadd.f32 %v1573, %v1881
        %v1946 = vadd.f32 %v1631, %v1882
        %v1947 = vadd.f32 %v1227, %v1883
        %v1948 = vadd.f32 %v1285, %v1884
        %v1949 = vadd.f32 %v1343, %v1885
        %v1950 = vadd.f32 %v1401, %v1886
        %v1951 = vadd.f32 %v1459, %v1887
        %v1952 = vadd.f32 %v1517, %v1888
        %v1953 = vadd.f32 %v1575, %v1889
        %v1954 = vadd.f32 %v1633, %v1890
        %v1955 = vmul.f32 %v1891, 0.7978846
        %v1956 = vmul.f32 %v1892, 0.7978846
        %v1957 = vmul.f32 %v1893, 0.7978846
        %v1958 = vmul.f32 %v1894, 0.7978846
        %v1959 = vmul.f32 %v1895, 0.7978846
        %v1960 = vmul.f32 %v1896, 0.7978846
        %v1961 = vmul.f32 %v1897, 0.7978846
        %v1962 = vmul.f32 %v1898, 0.7978846
        %v1963 = vmul.f32 %v1899, 0.7978846
        %v1964 = vmul.f32 %v1900, 0.7978846
        %v1965 = vmul.f32 %v1901, 0.7978846
        %v1966 = vmul.f32 %v1902, 0.7978846
        %v1967 = vmul.f32 %v1903, 0.7978846
        %v1968 = vmul.f32 %v1904, 0.7978846
        %v1969 = vmul.f32 %v1905, 0.7978846
        %v1970 = vmul.f32 %v1906, 0.7978846
        %v1971 = vmul.f32 %v1907, 0.7978846
        %v1972 = vmul.f32 %v1908, 0.7978846
        %v1973 = vmul.f32 %v1909, 0.7978846
        %v1974 = vmul.f32 %v1910, 0.7978846
        %v1975 = vmul.f32 %v1911, 0.7978846
        %v1976 = vmul.f32 %v1912, 0.7978846
        %v1977 = vmul.f32 %v1913, 0.7978846
        %v1978 = vmul.f32 %v1914, 0.7978846
        %v1979 = vmul.f32 %v1915, 0.7978846
        %v1980 = vmul.f32 %v1916, 0.7978846
        %v1981 = vmul.f32 %v1917, 0.7978846
        %v1982 = vmul.f32 %v1918, 0.7978846
        %v1983 = vmul.f32 %v1919, 0.7978846
        %v1984 = vmul.f32 %v1920, 0.7978846
        %v1985 = vmul.f32 %v1921, 0.7978846
        %v1986 = vmul.f32 %v1922, 0.7978846
        %v1987 = vmul.f32 %v1923, 0.7978846
        %v1988 = vmul.f32 %v1924, 0.7978846
        %v1989 = vmul.f32 %v1925, 0.7978846
        %v1990 = vmul.f32 %v1926, 0.7978846
        %v1991 = vmul.f32 %v1927, 0.7978846
        %v1992 = vmul.f32 %v1928, 0.7978846
        %v1993 = vmul.f32 %v1929, 0.7978846
        %v1994 = vmul.f32 %v1930, 0.7978846
        %v1995 = vmul.f32 %v1931, 0.7978846
        %v1996 = vmul.f32 %v1932, 0.7978846
        %v1997 = vmul.f32 %v1933, 0.7978846
        %v1998 = vmul.f32 %v1934, 0.7978846
        %v1999 = vmul.f32 %v1935, 0.7978846
        %v2000 = vmul.f32 %v1936, 0.7978846
        %v2001 = vmul.f32 %v1937, 0.7978846
        %v2002 = vmul.f32 %v1938, 0.7978846
        %v2003 = vmul.f32 %v1939, 0.7978846
        %v2004 = vmul.f32 %v1940, 0.7978846
        %v2005 = vmul.f32 %v1941, 0.7978846
        %v2006 = vmul.f32 %v1942, 0.7978846
        %v2007 = vmul.f32 %v1943, 0.7978846
        %v2008 = vmul.f32 %v1944, 0.7978846
        %v2009 = vmul.f32 %v1945, 0.7978846
        %v2010 = vmul.f32 %v1946, 0.7978846
        %v2011 = vmul.f32 %v1947, 0.7978846
        %v2012 = vmul.f32 %v1948, 0.7978846
        %v2013 = vmul.f32 %v1949, 0.7978846
        %v2014 = vmul.f32 %v1950, 0.7978846
        %v2015 = vmul.f32 %v1951, 0.7978846
        %v2016 = vmul.f32 %v1952, 0.7978846
        %v2017 = vmul.f32 %v1953, 0.7978846
        %v2018 = vmul.f32 %v1954, 0.7978846
        %v2019 = vtanh.pop %v1955
        %v2020 = vtanh.pop %v1956
        %v2021 = vtanh.pop %v1957
        %v2022 = vtanh.pop %v1958
        %v2023 = vtanh.pop %v1959
        %v2024 = vtanh.pop %v1960
        %v2025 = vtanh.pop %v1961
        %v2026 = vtanh.pop %v1962
        %v2027 = vtanh.pop %v1963
        %v2028 = vtanh.pop %v1964
        %v2029 = vtanh.pop %v1965
        %v2030 = vtanh.pop %v1966
        %v2031 = vtanh.pop %v1967
        %v2032 = vtanh.pop %v1968
        %v2033 = vtanh.pop %v1969
        %v2034 = vtanh.pop %v1970
        %v2035 = vtanh.pop %v1971
        %v2036 = vtanh.pop %v1972
        %v2037 = vtanh.pop %v1973
        %v2038 = vtanh.pop %v1974
        %v2039 = vtanh.pop %v1975
        %v2040 = vtanh.pop %v1976
        %v2041 = vtanh.pop %v1977
        %v2042 = vtanh.pop %v1978
        %v2043 = vtanh.pop %v1979
        %v2044 = vtanh.pop %v1980
        %v2045 = vtanh.pop %v1981
        %v2046 = vtanh.pop %v1982
        %v2047 = vtanh.pop %v1983
        %v2048 = vtanh.pop %v1984
        %v2049 = vtanh.pop %v1985
        %v2050 = vtanh.pop %v1986
        %v2051 = vtanh.pop %v1987
        %v2052 = vtanh.pop %v1988
        %v2053 = vtanh.pop %v1989
        %v2054 = vtanh.pop %v1990
        %v2055 = vtanh.pop %v1991
        %v2056 = vtanh.pop %v1992
        %v2057 = vtanh.pop %v1993
        %v2058 = vtanh.pop %v1994
        %v2059 = vtanh.pop %v1995
        %v2060 = vtanh.pop %v1996
        %v2061 = vtanh.pop %v1997
        %v2062 = vtanh.pop %v1998
        %v2063 = vtanh.pop %v1999
        %v2064 = vtanh.pop %v2000
        %v2065 = vtanh.pop %v2001
        %v2066 = vtanh.pop %v2002
        %v2067 = vtanh.pop %v2003
        %v2068 = vtanh.pop %v2004
        %v2069 = vtanh.pop %v2005
        %v2070 = vtanh.pop %v2006
        %v2071 = vtanh.pop %v2007
        %v2072 = vtanh.pop %v2008
        %v2073 = vtanh.pop %v2009
        %v2074 = vtanh.pop %v2010
        %v2075 = vtanh.pop %v2011
        %v2076 = vtanh.pop %v2012
        %v2077 = vtanh.pop %v2013
        %v2078 = vtanh.pop %v2014
        %v2079 = vtanh.pop %v2015
        %v2080 = vtanh.pop %v2016
        %v2081 = vtanh.pop %v2017
        %v2082 = vtanh.pop %v2018
        %v2083 = vadd.f32 %v2019, 1.0
        %v2084 = vadd.f32 %v2020, 1.0
        %v2085 = vadd.f32 %v2021, 1.0
        %v2086 = vadd.f32 %v2022, 1.0
        %v2087 = vadd.f32 %v2023, 1.0
        %v2088 = vadd.f32 %v2024, 1.0
        %v2089 = vadd.f32 %v2025, 1.0
        %v2090 = vadd.f32 %v2026, 1.0
        %v2091 = vadd.f32 %v2027, 1.0
        %v2092 = vadd.f32 %v2028, 1.0
        %v2093 = vadd.f32 %v2029, 1.0
        %v2094 = vadd.f32 %v2030, 1.0
        %v2095 = vadd.f32 %v2031, 1.0
        %v2096 = vadd.f32 %v2032, 1.0
        %v2097 = vadd.f32 %v2033, 1.0
        %v2098 = vadd.f32 %v2034, 1.0
        %v2099 = vadd.f32 %v2035, 1.0
        %v2100 = vadd.f32 %v2036, 1.0
        %v2101 = vadd.f32 %v2037, 1.0
        %v2102 = vadd.f32 %v2038, 1.0
        %v2103 = vadd.f32 %v2039, 1.0
        %v2104 = vadd.f32 %v2040, 1.0
        %v2105 = vadd.f32 %v2041, 1.0
        %v2106 = vadd.f32 %v2042, 1.0
        %v2107 = vadd.f32 %v2043, 1.0
        %v2108 = vadd.f32 %v2044, 1.0
        %v2109 = vadd.f32 %v2045, 1.0
        %v2110 = vadd.f32 %v2046, 1.0
        %v2111 = vadd.f32 %v2047, 1.0
        %v2112 = vadd.f32 %v2048, 1.0
        %v2113 = vadd.f32 %v2049, 1.0
        %v2114 = vadd.f32 %v2050, 1.0
        %v2115 = vadd.f32 %v2051, 1.0
        %v2116 = vadd.f32 %v2052, 1.0
        %v2117 = vadd.f32 %v2053, 1.0
        %v2118 = vadd.f32 %v2054, 1.0
        %v2119 = vadd.f32 %v2055, 1.0
        %v2120 = vadd.f32 %v2056, 1.0
        %v2121 = vadd.f32 %v2057, 1.0
        %v2122 = vadd.f32 %v2058, 1.0
        %v2123 = vadd.f32 %v2059, 1.0
        %v2124 = vadd.f32 %v2060, 1.0
        %v2125 = vadd.f32 %v2061, 1.0
        %v2126 = vadd.f32 %v2062, 1.0
        %v2127 = vadd.f32 %v2063, 1.0
        %v2128 = vadd.f32 %v2064, 1.0
        %v2129 = vadd.f32 %v2065, 1.0
        %v2130 = vadd.f32 %v2066, 1.0
        %v2131 = vadd.f32 %v2067, 1.0
        %v2132 = vadd.f32 %v2068, 1.0
        %v2133 = vadd.f32 %v2069, 1.0
        %v2134 = vadd.f32 %v2070, 1.0
        %v2135 = vadd.f32 %v2071, 1.0
        %v2136 = vadd.f32 %v2072, 1.0
        %v2137 = vadd.f32 %v2073, 1.0
        %v2138 = vadd.f32 %v2074, 1.0
        %v2139 = vadd.f32 %v2075, 1.0
        %v2140 = vadd.f32 %v2076, 1.0
        %v2141 = vadd.f32 %v2077, 1.0
        %v2142 = vadd.f32 %v2078, 1.0
        %v2143 = vadd.f32 %v2079, 1.0
        %v2144 = vadd.f32 %v2080, 1.0
        %v2145 = vadd.f32 %v2081, 1.0
        %v2146 = vadd.f32 %v2082, 1.0
        %v2147 = vmul.f32 %v1635, %v2083
        %v2148 = vmul.f32 %v1636, %v2084
        %v2149 = vmul.f32 %v1637, %v2085
        %v2150 = vmul.f32 %v1638, %v2086
        %v2151 = vmul.f32 %v1639, %v2087
        %v2152 = vmul.f32 %v1640, %v2088
        %v2153 = vmul.f32 %v1641, %v2089
        %v2154 = vmul.f32 %v1642, %v2090
        %v2155 = vmul.f32 %v1643, %v2091
        %v2156 = vmul.f32 %v1644, %v2092
        %v2157 = vmul.f32 %v1645, %v2093
        %v2158 = vmul.f32 %v1646, %v2094
        %v2159 = vmul.f32 %v1647, %v2095
        %v2160 = vmul.f32 %v1648, %v2096
        %v2161 = vmul.f32 %v1649, %v2097
        %v2162 = vmul.f32 %v1650, %v2098
        %v2163 = vmul.f32 %v1651, %v2099
        %v2164 = vmul.f32 %v1652, %v2100
        %v2165 = vmul.f32 %v1653, %v2101
        %v2166 = vmul.f32 %v1654, %v2102
        %v2167 = vmul.f32 %v1655, %v2103
        %v2168 = vmul.f32 %v1656, %v2104
        %v2169 = vmul.f32 %v1657, %v2105
        %v2170 = vmul.f32 %v1658, %v2106
        %v2171 = vmul.f32 %v1659, %v2107
        %v2172 = vmul.f32 %v1660, %v2108
        %v2173 = vmul.f32 %v1661, %v2109
        %v2174 = vmul.f32 %v1662, %v2110
        %v2175 = vmul.f32 %v1663, %v2111
        %v2176 = vmul.f32 %v1664, %v2112
        %v2177 = vmul.f32 %v1665, %v2113
        %v2178 = vmul.f32 %v1666, %v2114
        %v2179 = vmul.f32 %v1667, %v2115
        %v2180 = vmul.f32 %v1668, %v2116
        %v2181 = vmul.f32 %v1669, %v2117
        %v2182 = vmul.f32 %v1670, %v2118
        %v2183 = vmul.f32 %v1671, %v2119
        %v2184 = vmul.f32 %v1672, %v2120
        %v2185 = vmul.f32 %v1673, %v2121
        %v2186 = vmul.f32 %v1674, %v2122
        %v2187 = vmul.f32 %v1675, %v2123
        %v2188 = vmul.f32 %v1676, %v2124
        %v2189 = vmul.f32 %v1677, %v2125
        %v2190 = vmul.f32 %v1678, %v2126
        %v2191 = vmul.f32 %v1679, %v2127
        %v2192 = vmul.f32 %v1680, %v2128
        %v2193 = vmul.f32 %v1681, %v2129
        %v2194 = vmul.f32 %v1682, %v2130
        %v2195 = vmul.f32 %v1683, %v2131
        %v2196 = vmul.f32 %v1684, %v2132
        %v2197 = vmul.f32 %v1685, %v2133
        %v2198 = vmul.f32 %v1686, %v2134
        %v2199 = vmul.f32 %v1687, %v2135
        %v2200 = vmul.f32 %v1688, %v2136
        %v2201 = vmul.f32 %v1689, %v2137
        %v2202 = vmul.f32 %v1690, %v2138
        %v2203 = vmul.f32 %v1691, %v2139
        %v2204 = vmul.f32 %v1692, %v2140
        %v2205 = vmul.f32 %v1693, %v2141
        %v2206 = vmul.f32 %v1694, %v2142
        %v2207 = vmul.f32 %v1695, %v2143
        %v2208 = vmul.f32 %v1696, %v2144
        %v2209 = vmul.f32 %v1697, %v2145
        %v2210 = vmul.f32 %v1698, %v2146
        %v2211 = vld [vmem:[%s329] sm:$0xff]
        %v2212 = vld [vmem:[%s329 + $0x8] sm:$0xff]
        %v2213 = vld [vmem:[%s329 + $0x10] sm:$0xff]
        %v2214 = vld [vmem:[%s329 + $0x18] sm:$0xff]
        %v2215 = vld [vmem:[%s329 + $0x20] sm:$0xff]
        %v2216 = vld [vmem:[%s329 + $0x28] sm:$0xff]
        %v2217 = vld [vmem:[%s329 + $0x30] sm:$0xff]
        %v2218 = vld [vmem:[%s329 + $0x38] sm:$0xff]
        %v2219 = vld [vmem:[%s329 + $0x40] sm:$0xff]
        %v2220 = vld [vmem:[%s329 + $0x48] sm:$0xff]
        %v2221 = vld [vmem:[%s329 + $0x50] sm:$0xff]
        %v2222 = vld [vmem:[%s329 + $0x58] sm:$0xff]
        %v2223 = vld [vmem:[%s329 + $0x60] sm:$0xff]
        %v2224 = vld [vmem:[%s329 + $0x68] sm:$0xff]
        %v2225 = vld [vmem:[%s329 + $0x70] sm:$0xff]
        %v2226 = vld [vmem:[%s329 + $0x78] sm:$0xff]
        %v2227 = vpack.c.bf16 %v2155, %v2147
        %v2228 = vpack.c.bf16 %v2156, %v2148
        %v2229 = vpack.c.bf16 %v2157, %v2149
        %v2230 = vpack.c.bf16 %v2158, %v2150
        %v2231 = vpack.c.bf16 %v2159, %v2151
        %v2232 = vpack.c.bf16 %v2160, %v2152
        %v2233 = vpack.c.bf16 %v2161, %v2153
        %v2234 = vpack.c.bf16 %v2162, %v2154
        %v2235 = vpack.c.bf16 %v2171, %v2163
        %v2236 = vpack.c.bf16 %v2172, %v2164
        %v2237 = vpack.c.bf16 %v2173, %v2165
        %v2238 = vpack.c.bf16 %v2174, %v2166
        %v2239 = vpack.c.bf16 %v2175, %v2167
        %v2240 = vpack.c.bf16 %v2176, %v2168
        %v2241 = vpack.c.bf16 %v2177, %v2169
        %v2242 = vpack.c.bf16 %v2178, %v2170
        %v2243 = vpack.c.bf16 %v2187, %v2179
        %v2244 = vpack.c.bf16 %v2188, %v2180
        %v2245 = vpack.c.bf16 %v2189, %v2181
        %v2246 = vpack.c.bf16 %v2190, %v2182
        %v2247 = vpack.c.bf16 %v2191, %v2183
        %v2248 = vpack.c.bf16 %v2192, %v2184
        %v2249 = vpack.c.bf16 %v2193, %v2185
        %v2250 = vpack.c.bf16 %v2194, %v2186
        %v2251 = vpack.c.bf16 %v2203, %v2195
        %v2252 = vpack.c.bf16 %v2204, %v2196
        %v2253 = vpack.c.bf16 %v2205, %v2197
        %v2254 = vpack.c.bf16 %v2206, %v2198
        %v2255 = vpack.c.bf16 %v2207, %v2199
        %v2256 = vpack.c.bf16 %v2208, %v2200
        %v2257 = vpack.c.bf16 %v2209, %v2201
        %v2258 = vpack.c.bf16 %v2210, %v2202
        %v2259 = vld [vmem:[#allocation8] sm:$0xff]
        %v2260 = vld [vmem:[#allocation8 + $0x8] sm:$0xff]
        %v2261 = vld [vmem:[#allocation8 + $0x10] sm:$0xff]
        %v2262 = vld [vmem:[#allocation8 + $0x18] sm:$0xff]
        %v2263 = vld [vmem:[#allocation8 + $0x20] sm:$0xff]
        %v2264 = vld [vmem:[#allocation8 + $0x28] sm:$0xff]
        %v2265 = vld [vmem:[#allocation8 + $0x30] sm:$0xff]
        %v2266 = vld [vmem:[#allocation8 + $0x38] sm:$0xff]
        %v2267 = vld [vmem:[#allocation8 + $0x40] sm:$0xff]
        %v2268 = vld [vmem:[#allocation8 + $0x48] sm:$0xff]
        %v2269 = vld [vmem:[#allocation8 + $0x50] sm:$0xff]
        %v2270 = vld [vmem:[#allocation8 + $0x58] sm:$0xff]
        %v2271 = vld [vmem:[#allocation8 + $0x60] sm:$0xff]
        %v2272 = vld [vmem:[#allocation8 + $0x68] sm:$0xff]
        %v2273 = vld [vmem:[#allocation8 + $0x70] sm:$0xff]
        %v2274 = vld [vmem:[#allocation8 + $0x78] sm:$0xff]
        %v2275 = vld [vmem:[#allocation8 + $0x80] sm:$0xff]
        %v2276 = vld [vmem:[#allocation8 + $0x88] sm:$0xff]
        %v2277 = vld [vmem:[#allocation8 + $0x90] sm:$0xff]
        %v2278 = vld [vmem:[#allocation8 + $0x98] sm:$0xff]
        %v2279 = vld [vmem:[#allocation8 + $0xa0] sm:$0xff]
        %v2280 = vld [vmem:[#allocation8 + $0xa8] sm:$0xff]
        %v2281 = vld [vmem:[#allocation8 + $0xb0] sm:$0xff]
        %v2282 = vld [vmem:[#allocation8 + $0xb8] sm:$0xff]
        %v2283 = vld [vmem:[#allocation8 + $0xc0] sm:$0xff]
        %v2284 = vld [vmem:[#allocation8 + $0xc8] sm:$0xff]
        %v2285 = vld [vmem:[#allocation8 + $0xd0] sm:$0xff]
        %v2286 = vld [vmem:[#allocation8 + $0xd8] sm:$0xff]
        %v2287 = vld [vmem:[#allocation8 + $0xe0] sm:$0xff]
        %v2288 = vld [vmem:[#allocation8 + $0xe8] sm:$0xff]
        %v2289 = vld [vmem:[#allocation8 + $0xf0] sm:$0xff]
        %v2290 = vld [vmem:[#allocation8 + $0xf8] sm:$0xff]
        %v2291 = vld [vmem:[#allocation8 + $0x100] sm:$0xff]
        %v2292 = vld [vmem:[#allocation8 + $0x108] sm:$0xff]
        %v2293 = vld [vmem:[#allocation8 + $0x110] sm:$0xff]
        %v2294 = vld [vmem:[#allocation8 + $0x118] sm:$0xff]
        %v2295 = vld [vmem:[#allocation8 + $0x120] sm:$0xff]
        %v2296 = vld [vmem:[#allocation8 + $0x128] sm:$0xff]
        %v2297 = vld [vmem:[#allocation8 + $0x130] sm:$0xff]
        %v2298 = vld [vmem:[#allocation8 + $0x138] sm:$0xff]
        %v2299 = vld [vmem:[#allocation8 + $0x140] sm:$0xff]
        %v2300 = vld [vmem:[#allocation8 + $0x148] sm:$0xff]
        %v2301 = vld [vmem:[#allocation8 + $0x150] sm:$0xff]
        %v2302 = vld [vmem:[#allocation8 + $0x158] sm:$0xff]
        %v2303 = vld [vmem:[#allocation8 + $0x160] sm:$0xff]
        %v2304 = vld [vmem:[#allocation8 + $0x168] sm:$0xff]
        %v2305 = vld [vmem:[#allocation8 + $0x170] sm:$0xff]
        %v2306 = vld [vmem:[#allocation8 + $0x178] sm:$0xff]
        %v2307 = vld [vmem:[#allocation8 + $0x180] sm:$0xff]
        %v2308 = vld [vmem:[#allocation8 + $0x188] sm:$0xff]
        %v2309 = vld [vmem:[#allocation8 + $0x190] sm:$0xff]
        %v2310 = vld [vmem:[#allocation8 + $0x198] sm:$0xff]
        %v2311 = vld [vmem:[#allocation8 + $0x1a0] sm:$0xff]
        %v2312 = vld [vmem:[#allocation8 + $0x1a8] sm:$0xff]
        %v2313 = vld [vmem:[#allocation8 + $0x1b0] sm:$0xff]
        %v2314 = vld [vmem:[#allocation8 + $0x1b8] sm:$0xff]
        %v2315 = vld [vmem:[#allocation8 + $0x1c0] sm:$0xff]
        %v2316 = vld [vmem:[#allocation8 + $0x1c8] sm:$0xff]
        %v2317 = vld [vmem:[#allocation8 + $0x1d0] sm:$0xff]
        %v2318 = vld [vmem:[#allocation8 + $0x1d8] sm:$0xff]
        %v2319 = vld [vmem:[#allocation8 + $0x1e0] sm:$0xff]
        %v2320 = vld [vmem:[#allocation8 + $0x1e8] sm:$0xff]
        %v2321 = vld [vmem:[#allocation8 + $0x1f0] sm:$0xff]
        %v2322 = vld [vmem:[#allocation8 + $0x1f8] sm:$0xff]
        %v2323 = vld [vmem:[#allocation8 + $0x200] sm:$0xff]
        %v2324 = vld [vmem:[#allocation8 + $0x208] sm:$0xff]
        %v2325 = vld [vmem:[#allocation8 + $0x210] sm:$0xff]
        %v2326 = vld [vmem:[#allocation8 + $0x218] sm:$0xff]
        %v2327 = vld [vmem:[#allocation8 + $0x220] sm:$0xff]
        %v2328 = vld [vmem:[#allocation8 + $0x228] sm:$0xff]
        %v2329 = vld [vmem:[#allocation8 + $0x230] sm:$0xff]
        %v2330 = vld [vmem:[#allocation8 + $0x238] sm:$0xff]
        %v2331 = vld [vmem:[#allocation8 + $0x240] sm:$0xff]
        %v2332 = vld [vmem:[#allocation8 + $0x248] sm:$0xff]
        %v2333 = vld [vmem:[#allocation8 + $0x250] sm:$0xff]
        %v2334 = vld [vmem:[#allocation8 + $0x258] sm:$0xff]
        %v2335 = vld [vmem:[#allocation8 + $0x260] sm:$0xff]
        %v2336 = vld [vmem:[#allocation8 + $0x268] sm:$0xff]
        %v2337 = vld [vmem:[#allocation8 + $0x270] sm:$0xff]
        %v2338 = vld [vmem:[#allocation8 + $0x278] sm:$0xff]
        %v2339 = vld [vmem:[#allocation8 + $0x280] sm:$0xff]
        %v2340 = vld [vmem:[#allocation8 + $0x288] sm:$0xff]
        %v2341 = vld [vmem:[#allocation8 + $0x290] sm:$0xff]
        %v2342 = vld [vmem:[#allocation8 + $0x298] sm:$0xff]
        %v2343 = vld [vmem:[#allocation8 + $0x2a0] sm:$0xff]
        %v2344 = vld [vmem:[#allocation8 + $0x2a8] sm:$0xff]
        %v2345 = vld [vmem:[#allocation8 + $0x2b0] sm:$0xff]
        %v2346 = vld [vmem:[#allocation8 + $0x2b8] sm:$0xff]
        %v2347 = vld [vmem:[#allocation8 + $0x2c0] sm:$0xff]
        %v2348 = vld [vmem:[#allocation8 + $0x2c8] sm:$0xff]
        %v2349 = vld [vmem:[#allocation8 + $0x2d0] sm:$0xff]
        %v2350 = vld [vmem:[#allocation8 + $0x2d8] sm:$0xff]
        %v2351 = vld [vmem:[#allocation8 + $0x2e0] sm:$0xff]
        %v2352 = vld [vmem:[#allocation8 + $0x2e8] sm:$0xff]
        %v2353 = vld [vmem:[#allocation8 + $0x2f0] sm:$0xff]
        %v2354 = vld [vmem:[#allocation8 + $0x2f8] sm:$0xff]
        %v2355 = vld [vmem:[#allocation8 + $0x300] sm:$0xff]
        %v2356 = vld [vmem:[#allocation8 + $0x308] sm:$0xff]
        %v2357 = vld [vmem:[#allocation8 + $0x310] sm:$0xff]
        %v2358 = vld [vmem:[#allocation8 + $0x318] sm:$0xff]
        %v2359 = vld [vmem:[#allocation8 + $0x320] sm:$0xff]
        %v2360 = vld [vmem:[#allocation8 + $0x328] sm:$0xff]
        %v2361 = vld [vmem:[#allocation8 + $0x330] sm:$0xff]
        %v2362 = vld [vmem:[#allocation8 + $0x338] sm:$0xff]
        %v2363 = vld [vmem:[#allocation8 + $0x340] sm:$0xff]
        %v2364 = vld [vmem:[#allocation8 + $0x348] sm:$0xff]
        %v2365 = vld [vmem:[#allocation8 + $0x350] sm:$0xff]
        %v2366 = vld [vmem:[#allocation8 + $0x358] sm:$0xff]
        %v2367 = vld [vmem:[#allocation8 + $0x360] sm:$0xff]
        %v2368 = vld [vmem:[#allocation8 + $0x368] sm:$0xff]
        %v2369 = vld [vmem:[#allocation8 + $0x370] sm:$0xff]
        %v2370 = vld [vmem:[#allocation8 + $0x378] sm:$0xff]
        %v2371 = vld [vmem:[#allocation8 + $0x380] sm:$0xff]
        %v2372 = vld [vmem:[#allocation8 + $0x388] sm:$0xff]
        %v2373 = vld [vmem:[#allocation8 + $0x390] sm:$0xff]
        %v2374 = vld [vmem:[#allocation8 + $0x398] sm:$0xff]
        %v2375 = vld [vmem:[#allocation8 + $0x3a0] sm:$0xff]
        %v2376 = vld [vmem:[#allocation8 + $0x3a8] sm:$0xff]
        %v2377 = vld [vmem:[#allocation8 + $0x3b0] sm:$0xff]
        %v2378 = vld [vmem:[#allocation8 + $0x3b8] sm:$0xff]
        %v2379 = vld [vmem:[#allocation8 + $0x3c0] sm:$0xff]
        %v2380 = vld [vmem:[#allocation8 + $0x3c8] sm:$0xff]
        %v2381 = vld [vmem:[#allocation8 + $0x3d0] sm:$0xff]
        %v2382 = vld [vmem:[#allocation8 + $0x3d8] sm:$0xff]
        %v2383 = vld [vmem:[#allocation8 + $0x3e0] sm:$0xff]
        %v2384 = vld [vmem:[#allocation8 + $0x3e8] sm:$0xff]
        %v2385 = vld [vmem:[#allocation8 + $0x3f0] sm:$0xff]
        %v2386 = vld [vmem:[#allocation8 + $0x3f8] sm:$0xff]
        %v2515 = vunpack.c.l.b16 %v2259
        %v2516 = vunpack.c.h.b16 %v2259
        %v2517 = vunpack.c.l.b16 %v2260
        %v2518 = vunpack.c.h.b16 %v2260
        %v2519 = vunpack.c.l.b16 %v2261
        %v2520 = vunpack.c.h.b16 %v2261
        %v2521 = vunpack.c.l.b16 %v2262
        %v2522 = vunpack.c.h.b16 %v2262
        %v2523 = vunpack.c.l.b16 %v2263
        %v2524 = vunpack.c.h.b16 %v2263
        %v2525 = vunpack.c.l.b16 %v2264
        %v2526 = vunpack.c.h.b16 %v2264
        %v2527 = vunpack.c.l.b16 %v2265
        %v2528 = vunpack.c.h.b16 %v2265
        %v2529 = vunpack.c.l.b16 %v2266
        %v2530 = vunpack.c.h.b16 %v2266
        %v2531 = vunpack.c.l.b16 %v2267
        %v2532 = vunpack.c.h.b16 %v2267
        %v2533 = vunpack.c.l.b16 %v2268
        %v2534 = vunpack.c.h.b16 %v2268
        %v2535 = vunpack.c.l.b16 %v2269
        %v2536 = vunpack.c.h.b16 %v2269
        %v2537 = vunpack.c.l.b16 %v2270
        %v2538 = vunpack.c.h.b16 %v2270
        %v2539 = vunpack.c.l.b16 %v2271
        %v2540 = vunpack.c.h.b16 %v2271
        %v2541 = vunpack.c.l.b16 %v2272
        %v2542 = vunpack.c.h.b16 %v2272
        %v2543 = vunpack.c.l.b16 %v2273
        %v2544 = vunpack.c.h.b16 %v2273
        %v2545 = vunpack.c.l.b16 %v2274
        %v2546 = vunpack.c.h.b16 %v2274
        %v2547 = vunpack.c.l.b16 %v2275
        %v2548 = vunpack.c.h.b16 %v2275
        %v2549 = vunpack.c.l.b16 %v2276
        %v2550 = vunpack.c.h.b16 %v2276
        %v2551 = vunpack.c.l.b16 %v2277
        %v2552 = vunpack.c.h.b16 %v2277
        %v2553 = vunpack.c.l.b16 %v2278
        %v2554 = vunpack.c.h.b16 %v2278
        %v2555 = vunpack.c.l.b16 %v2279
        %v2556 = vunpack.c.h.b16 %v2279
        %v2557 = vunpack.c.l.b16 %v2280
        %v2558 = vunpack.c.h.b16 %v2280
        %v2559 = vunpack.c.l.b16 %v2281
        %v2560 = vunpack.c.h.b16 %v2281
        %v2561 = vunpack.c.l.b16 %v2282
        %v2562 = vunpack.c.h.b16 %v2282
        %v2563 = vunpack.c.l.b16 %v2283
        %v2564 = vunpack.c.h.b16 %v2283
        %v2565 = vunpack.c.l.b16 %v2284
        %v2566 = vunpack.c.h.b16 %v2284
        %v2567 = vunpack.c.l.b16 %v2285
        %v2568 = vunpack.c.h.b16 %v2285
        %v2569 = vunpack.c.l.b16 %v2286
        %v2570 = vunpack.c.h.b16 %v2286
        %v2571 = vunpack.c.l.b16 %v2287
        %v2572 = vunpack.c.h.b16 %v2287
        %v2573 = vunpack.c.l.b16 %v2288
        %v2574 = vunpack.c.h.b16 %v2288
        %v2575 = vunpack.c.l.b16 %v2289
        %v2576 = vunpack.c.h.b16 %v2289
        %v2577 = vunpack.c.l.b16 %v2290
        %v2578 = vunpack.c.h.b16 %v2290
        %v2579 = vunpack.c.l.b16 %v2291
        %v2580 = vunpack.c.h.b16 %v2291
        %v2581 = vunpack.c.l.b16 %v2292
        %v2582 = vunpack.c.h.b16 %v2292
        %v2583 = vunpack.c.l.b16 %v2293
        %v2584 = vunpack.c.h.b16 %v2293
        %v2585 = vunpack.c.l.b16 %v2294
        %v2586 = vunpack.c.h.b16 %v2294
        %v2587 = vunpack.c.l.b16 %v2295
        %v2588 = vunpack.c.h.b16 %v2295
        %v2589 = vunpack.c.l.b16 %v2296
        %v2590 = vunpack.c.h.b16 %v2296
        %v2591 = vunpack.c.l.b16 %v2297
        %v2592 = vunpack.c.h.b16 %v2297
        %v2593 = vunpack.c.l.b16 %v2298
        %v2594 = vunpack.c.h.b16 %v2298
        %v2595 = vunpack.c.l.b16 %v2299
        %v2596 = vunpack.c.h.b16 %v2299
        %v2597 = vunpack.c.l.b16 %v2300
        %v2598 = vunpack.c.h.b16 %v2300
        %v2599 = vunpack.c.l.b16 %v2301
        %v2600 = vunpack.c.h.b16 %v2301
        %v2601 = vunpack.c.l.b16 %v2302
        %v2602 = vunpack.c.h.b16 %v2302
        %v2603 = vunpack.c.l.b16 %v2303
        %v2604 = vunpack.c.h.b16 %v2303
        %v2605 = vunpack.c.l.b16 %v2304
        %v2606 = vunpack.c.h.b16 %v2304
        %v2607 = vunpack.c.l.b16 %v2305
        %v2608 = vunpack.c.h.b16 %v2305
        %v2609 = vunpack.c.l.b16 %v2306
        %v2610 = vunpack.c.h.b16 %v2306
        %v2611 = vunpack.c.l.b16 %v2307
        %v2612 = vunpack.c.h.b16 %v2307
        %v2613 = vunpack.c.l.b16 %v2308
        %v2614 = vunpack.c.h.b16 %v2308
        %v2615 = vunpack.c.l.b16 %v2309
        %v2616 = vunpack.c.h.b16 %v2309
        %v2617 = vunpack.c.l.b16 %v2310
        %v2618 = vunpack.c.h.b16 %v2310
        %v2619 = vunpack.c.l.b16 %v2311
        %v2620 = vunpack.c.h.b16 %v2311
        %v2621 = vunpack.c.l.b16 %v2312
        %v2622 = vunpack.c.h.b16 %v2312
        %v2623 = vunpack.c.l.b16 %v2313
        %v2624 = vunpack.c.h.b16 %v2313
        %v2625 = vunpack.c.l.b16 %v2314
        %v2626 = vunpack.c.h.b16 %v2314
        %v2627 = vunpack.c.l.b16 %v2315
        %v2628 = vunpack.c.h.b16 %v2315
        %v2629 = vunpack.c.l.b16 %v2316
        %v2630 = vunpack.c.h.b16 %v2316
        %v2631 = vunpack.c.l.b16 %v2317
        %v2632 = vunpack.c.h.b16 %v2317
        %v2633 = vunpack.c.l.b16 %v2318
        %v2634 = vunpack.c.h.b16 %v2318
        %v2635 = vunpack.c.l.b16 %v2319
        %v2636 = vunpack.c.h.b16 %v2319
        %v2637 = vunpack.c.l.b16 %v2320
        %v2638 = vunpack.c.h.b16 %v2320
        %v2639 = vunpack.c.l.b16 %v2321
        %v2640 = vunpack.c.h.b16 %v2321
        %v2641 = vunpack.c.l.b16 %v2322
        %v2642 = vunpack.c.h.b16 %v2322
        %v2643 = vunpack.c.l.b16 %v2323
        %v2644 = vunpack.c.h.b16 %v2323
        %v2645 = vunpack.c.l.b16 %v2324
        %v2646 = vunpack.c.h.b16 %v2324
        %v2647 = vunpack.c.l.b16 %v2325
        %v2648 = vunpack.c.h.b16 %v2325
        %v2649 = vunpack.c.l.b16 %v2326
        %v2650 = vunpack.c.h.b16 %v2326
        %v2651 = vunpack.c.l.b16 %v2327
        %v2652 = vunpack.c.h.b16 %v2327
        %v2653 = vunpack.c.l.b16 %v2328
        %v2654 = vunpack.c.h.b16 %v2328
        %v2655 = vunpack.c.l.b16 %v2329
        %v2656 = vunpack.c.h.b16 %v2329
        %v2657 = vunpack.c.l.b16 %v2330
        %v2658 = vunpack.c.h.b16 %v2330
        %v2659 = vunpack.c.l.b16 %v2331
        %v2660 = vunpack.c.h.b16 %v2331
        %v2661 = vunpack.c.l.b16 %v2332
        %v2662 = vunpack.c.h.b16 %v2332
        %v2663 = vunpack.c.l.b16 %v2333
        %v2664 = vunpack.c.h.b16 %v2333
        %v2665 = vunpack.c.l.b16 %v2334
        %v2666 = vunpack.c.h.b16 %v2334
        %v2667 = vunpack.c.l.b16 %v2335
        %v2668 = vunpack.c.h.b16 %v2335
        %v2669 = vunpack.c.l.b16 %v2336
        %v2670 = vunpack.c.h.b16 %v2336
        %v2671 = vunpack.c.l.b16 %v2337
        %v2672 = vunpack.c.h.b16 %v2337
        %v2673 = vunpack.c.l.b16 %v2338
        %v2674 = vunpack.c.h.b16 %v2338
        %v2675 = vunpack.c.l.b16 %v2339
        %v2676 = vunpack.c.h.b16 %v2339
        %v2677 = vunpack.c.l.b16 %v2340
        %v2678 = vunpack.c.h.b16 %v2340
        %v2679 = vunpack.c.l.b16 %v2341
        %v2680 = vunpack.c.h.b16 %v2341
        %v2681 = vunpack.c.l.b16 %v2342
        %v2682 = vunpack.c.h.b16 %v2342
        %v2683 = vunpack.c.l.b16 %v2343
        %v2684 = vunpack.c.h.b16 %v2343
        %v2685 = vunpack.c.l.b16 %v2344
        %v2686 = vunpack.c.h.b16 %v2344
        %v2687 = vunpack.c.l.b16 %v2345
        %v2688 = vunpack.c.h.b16 %v2345
        %v2689 = vunpack.c.l.b16 %v2346
        %v2690 = vunpack.c.h.b16 %v2346
        %v2691 = vunpack.c.l.b16 %v2347
        %v2692 = vunpack.c.h.b16 %v2347
        %v2693 = vunpack.c.l.b16 %v2348
        %v2694 = vunpack.c.h.b16 %v2348
        %v2695 = vunpack.c.l.b16 %v2349
        %v2696 = vunpack.c.h.b16 %v2349
        %v2697 = vunpack.c.l.b16 %v2350
        %v2698 = vunpack.c.h.b16 %v2350
        %v2699 = vunpack.c.l.b16 %v2351
        %v2700 = vunpack.c.h.b16 %v2351
        %v2701 = vunpack.c.l.b16 %v2352
        %v2702 = vunpack.c.h.b16 %v2352
        %v2703 = vunpack.c.l.b16 %v2353
        %v2704 = vunpack.c.h.b16 %v2353
        %v2705 = vunpack.c.l.b16 %v2354
        %v2706 = vunpack.c.h.b16 %v2354
        %v2707 = vunpack.c.l.b16 %v2355
        %v2708 = vunpack.c.h.b16 %v2355
        %v2709 = vunpack.c.l.b16 %v2356
        %v2710 = vunpack.c.h.b16 %v2356
        %v2711 = vunpack.c.l.b16 %v2357
        %v2712 = vunpack.c.h.b16 %v2357
        %v2713 = vunpack.c.l.b16 %v2358
        %v2714 = vunpack.c.h.b16 %v2358
        %v2715 = vunpack.c.l.b16 %v2359
        %v2716 = vunpack.c.h.b16 %v2359
        %v2717 = vunpack.c.l.b16 %v2360
        %v2718 = vunpack.c.h.b16 %v2360
        %v2719 = vunpack.c.l.b16 %v2361
        %v2720 = vunpack.c.h.b16 %v2361
        %v2721 = vunpack.c.l.b16 %v2362
        %v2722 = vunpack.c.h.b16 %v2362
        %v2723 = vunpack.c.l.b16 %v2363
        %v2724 = vunpack.c.h.b16 %v2363
        %v2725 = vunpack.c.l.b16 %v2364
        %v2726 = vunpack.c.h.b16 %v2364
        %v2727 = vunpack.c.l.b16 %v2365
        %v2728 = vunpack.c.h.b16 %v2365
        %v2729 = vunpack.c.l.b16 %v2366
        %v2730 = vunpack.c.h.b16 %v2366
        %v2731 = vunpack.c.l.b16 %v2367
        %v2732 = vunpack.c.h.b16 %v2367
        %v2733 = vunpack.c.l.b16 %v2368
        %v2734 = vunpack.c.h.b16 %v2368
        %v2735 = vunpack.c.l.b16 %v2369
        %v2736 = vunpack.c.h.b16 %v2369
        %v2737 = vunpack.c.l.b16 %v2370
        %v2738 = vunpack.c.h.b16 %v2370
        %v2739 = vunpack.c.l.b16 %v2371
        %v2740 = vunpack.c.h.b16 %v2371
        %v2741 = vunpack.c.l.b16 %v2372
        %v2742 = vunpack.c.h.b16 %v2372
        %v2743 = vunpack.c.l.b16 %v2373
        %v2744 = vunpack.c.h.b16 %v2373
        %v2745 = vunpack.c.l.b16 %v2374
        %v2746 = vunpack.c.h.b16 %v2374
        %v2747 = vunpack.c.l.b16 %v2375
        %v2748 = vunpack.c.h.b16 %v2375
        %v2749 = vunpack.c.l.b16 %v2376
        %v2750 = vunpack.c.h.b16 %v2376
        %v2751 = vunpack.c.l.b16 %v2377
        %v2752 = vunpack.c.h.b16 %v2377
        %v2753 = vunpack.c.l.b16 %v2378
        %v2754 = vunpack.c.h.b16 %v2378
        %v2755 = vunpack.c.l.b16 %v2379
        %v2756 = vunpack.c.h.b16 %v2379
        %v2757 = vunpack.c.l.b16 %v2380
        %v2758 = vunpack.c.h.b16 %v2380
        %v2759 = vunpack.c.l.b16 %v2381
        %v2760 = vunpack.c.h.b16 %v2381
        %v2761 = vunpack.c.l.b16 %v2382
        %v2762 = vunpack.c.h.b16 %v2382
        %v2763 = vunpack.c.l.b16 %v2383
        %v2764 = vunpack.c.h.b16 %v2383
        %v2765 = vunpack.c.l.b16 %v2384
        %v2766 = vunpack.c.h.b16 %v2384
        %v2767 = vunpack.c.l.b16 %v2385
        %v2768 = vunpack.c.h.b16 %v2385
        %v2769 = vunpack.c.l.b16 %v2386
        %v2770 = vunpack.c.h.b16 %v2386
        %v2771 = vpack.c.b16 %v2517, %v2515
        %v2772 = vpack.c.b16 %v2518, %v2516
        %v2773 = vpack.c.b16 %v2521, %v2519
        %v2774 = vpack.c.b16 %v2522, %v2520
        %v2775 = vpack.c.b16 %v2525, %v2523
        %v2776 = vpack.c.b16 %v2526, %v2524
        %v2777 = vpack.c.b16 %v2529, %v2527
        %v2778 = vpack.c.b16 %v2530, %v2528
        %v2779 = vpack.c.b16 %v2533, %v2531
        %v2780 = vpack.c.b16 %v2534, %v2532
        %v2781 = vpack.c.b16 %v2537, %v2535
        %v2782 = vpack.c.b16 %v2538, %v2536
        %v2783 = vpack.c.b16 %v2541, %v2539
        %v2784 = vpack.c.b16 %v2542, %v2540
        %v2785 = vpack.c.b16 %v2545, %v2543
        %v2786 = vpack.c.b16 %v2546, %v2544
        %v2787 = vpack.c.b16 %v2549, %v2547
        %v2788 = vpack.c.b16 %v2550, %v2548
        %v2789 = vpack.c.b16 %v2553, %v2551
        %v2790 = vpack.c.b16 %v2554, %v2552
        %v2791 = vpack.c.b16 %v2557, %v2555
        %v2792 = vpack.c.b16 %v2558, %v2556
        %v2793 = vpack.c.b16 %v2561, %v2559
        %v2794 = vpack.c.b16 %v2562, %v2560
        %v2795 = vpack.c.b16 %v2565, %v2563
        %v2796 = vpack.c.b16 %v2566, %v2564
        %v2797 = vpack.c.b16 %v2569, %v2567
        %v2798 = vpack.c.b16 %v2570, %v2568
        %v2799 = vpack.c.b16 %v2573, %v2571
        %v2800 = vpack.c.b16 %v2574, %v2572
        %v2801 = vpack.c.b16 %v2577, %v2575
        %v2802 = vpack.c.b16 %v2578, %v2576
        %v2803 = vpack.c.b16 %v2581, %v2579
        %v2804 = vpack.c.b16 %v2582, %v2580
        %v2805 = vpack.c.b16 %v2585, %v2583
        %v2806 = vpack.c.b16 %v2586, %v2584
        %v2807 = vpack.c.b16 %v2589, %v2587
        %v2808 = vpack.c.b16 %v2590, %v2588
        %v2809 = vpack.c.b16 %v2593, %v2591
        %v2810 = vpack.c.b16 %v2594, %v2592
        %v2811 = vpack.c.b16 %v2597, %v2595
        %v2812 = vpack.c.b16 %v2598, %v2596
        %v2813 = vpack.c.b16 %v2601, %v2599
        %v2814 = vpack.c.b16 %v2602, %v2600
        %v2815 = vpack.c.b16 %v2605, %v2603
        %v2816 = vpack.c.b16 %v2606, %v2604
        %v2817 = vpack.c.b16 %v2609, %v2607
        %v2818 = vpack.c.b16 %v2610, %v2608
        %v2819 = vpack.c.b16 %v2613, %v2611
        %v2820 = vpack.c.b16 %v2614, %v2612
        %v2821 = vpack.c.b16 %v2617, %v2615
        %v2822 = vpack.c.b16 %v2618, %v2616
        %v2823 = vpack.c.b16 %v2621, %v2619
        %v2824 = vpack.c.b16 %v2622, %v2620
        %v2825 = vpack.c.b16 %v2625, %v2623
        %v2826 = vpack.c.b16 %v2626, %v2624
        %v2827 = vpack.c.b16 %v2629, %v2627
        %v2828 = vpack.c.b16 %v2630, %v2628
        %v2829 = vpack.c.b16 %v2633, %v2631
        %v2830 = vpack.c.b16 %v2634, %v2632
        %v2831 = vpack.c.b16 %v2637, %v2635
        %v2832 = vpack.c.b16 %v2638, %v2636
        %v2833 = vpack.c.b16 %v2641, %v2639
        %v2834 = vpack.c.b16 %v2642, %v2640
        %v2835 = vpack.c.b16 %v2645, %v2643
        %v2836 = vpack.c.b16 %v2646, %v2644
        %v2837 = vpack.c.b16 %v2649, %v2647
        %v2838 = vpack.c.b16 %v2650, %v2648
        %v2839 = vpack.c.b16 %v2653, %v2651
        %v2840 = vpack.c.b16 %v2654, %v2652
        %v2841 = vpack.c.b16 %v2657, %v2655
        %v2842 = vpack.c.b16 %v2658, %v2656
        %v2843 = vpack.c.b16 %v2661, %v2659
        %v2844 = vpack.c.b16 %v2662, %v2660
        %v2845 = vpack.c.b16 %v2665, %v2663
        %v2846 = vpack.c.b16 %v2666, %v2664
        %v2847 = vpack.c.b16 %v2669, %v2667
        %v2848 = vpack.c.b16 %v2670, %v2668
        %v2849 = vpack.c.b16 %v2673, %v2671
        %v2850 = vpack.c.b16 %v2674, %v2672
        %v2851 = vpack.c.b16 %v2677, %v2675
        %v2852 = vpack.c.b16 %v2678, %v2676
        %v2853 = vpack.c.b16 %v2681, %v2679
        %v2854 = vpack.c.b16 %v2682, %v2680
        %v2855 = vpack.c.b16 %v2685, %v2683
        %v2856 = vpack.c.b16 %v2686, %v2684
        %v2857 = vpack.c.b16 %v2689, %v2687
        %v2858 = vpack.c.b16 %v2690, %v2688
        %v2859 = vpack.c.b16 %v2693, %v2691
        %v2860 = vpack.c.b16 %v2694, %v2692
        %v2861 = vpack.c.b16 %v2697, %v2695
        %v2862 = vpack.c.b16 %v2698, %v2696
        %v2863 = vpack.c.b16 %v2701, %v2699
        %v2864 = vpack.c.b16 %v2702, %v2700
        %v2865 = vpack.c.b16 %v2705, %v2703
        %v2866 = vpack.c.b16 %v2706, %v2704
        %v2867 = vpack.c.b16 %v2709, %v2707
        %v2868 = vpack.c.b16 %v2710, %v2708
        %v2869 = vpack.c.b16 %v2713, %v2711
        %v2870 = vpack.c.b16 %v2714, %v2712
        %v2871 = vpack.c.b16 %v2717, %v2715
        %v2872 = vpack.c.b16 %v2718, %v2716
        %v2873 = vpack.c.b16 %v2721, %v2719
        %v2874 = vpack.c.b16 %v2722, %v2720
        %v2875 = vpack.c.b16 %v2725, %v2723
        %v2876 = vpack.c.b16 %v2726, %v2724
        %v2877 = vpack.c.b16 %v2729, %v2727
        %v2878 = vpack.c.b16 %v2730, %v2728
        %v2879 = vpack.c.b16 %v2733, %v2731
        %v2880 = vpack.c.b16 %v2734, %v2732
        %v2881 = vpack.c.b16 %v2737, %v2735
        %v2882 = vpack.c.b16 %v2738, %v2736
        %v2883 = vpack.c.b16 %v2741, %v2739
        %v2884 = vpack.c.b16 %v2742, %v2740
        %v2885 = vpack.c.b16 %v2745, %v2743
        %v2886 = vpack.c.b16 %v2746, %v2744
        %v2887 = vpack.c.b16 %v2749, %v2747
        %v2888 = vpack.c.b16 %v2750, %v2748
        %v2889 = vpack.c.b16 %v2753, %v2751
        %v2890 = vpack.c.b16 %v2754, %v2752
        %v2891 = vpack.c.b16 %v2757, %v2755
        %v2892 = vpack.c.b16 %v2758, %v2756
        %v2893 = vpack.c.b16 %v2761, %v2759
        %v2894 = vpack.c.b16 %v2762, %v2760
        %v2895 = vpack.c.b16 %v2765, %v2763
        %v2896 = vpack.c.b16 %v2766, %v2764
        %v2897 = vpack.c.b16 %v2769, %v2767
        %v2898 = vpack.c.b16 %v2770, %v2768
        %3027 = vmatpush.bf16.msra.mxu0 %v2785
        %3028 = vmatpush.bf16.msra.mxu0 %v2783
        %3029 = vmatpush.bf16.msra.mxu0 %v2781
        %3030 = vmatpush.bf16.msra.mxu0 %v2779
        %3031 = vmatpush.bf16.msra.mxu0 %v2777
        %3032 = vmatpush.bf16.msra.mxu0 %v2775
        %3033 = vmatpush.bf16.msra.mxu0 %v2773
        %3034 = vmatpush.bf16.msra.mxu0 %v2771
        %3035 = vmatmul.bf16.gmra.mxu0 %v2227
        %v3036 = vpop.f32.mrf.mxu0
        %v3037 = vadd.f32 0.0, %v3036
        %v3038 = vpop.f32.mrf.mxu0
        %v3039 = vadd.f32 0.0, %v3038
        %3040 = vmatmul.bf16.gmra.mxu0 %v2235
        %v3041 = vpop.f32.mrf.mxu0
        %v3042 = vadd.f32 0.0, %v3041
        %v3043 = vpop.f32.mrf.mxu0
        %v3044 = vadd.f32 0.0, %v3043
        %3045 = vmatmul.bf16.gmra.mxu0 %v2243
        %v3046 = vpop.f32.mrf.mxu0
        %v3047 = vadd.f32 0.0, %v3046
        %v3048 = vpop.f32.mrf.mxu0
        %v3049 = vadd.f32 0.0, %v3048
        %3050 = vmatmul.bf16.gmra.mxu0 %v2251
        %v3051 = vpop.f32.mrf.mxu0
        %v3052 = vadd.f32 0.0, %v3051
        %v3053 = vpop.f32.mrf.mxu0
        %v3054 = vadd.f32 0.0, %v3053
        %3055 = vdwg.mxu0
        %3056 = vmatpush.bf16.msra.mxu0 %v2801
        %3057 = vmatpush.bf16.msra.mxu0 %v2799
        %3058 = vmatpush.bf16.msra.mxu0 %v2797
        %3059 = vmatpush.bf16.msra.mxu0 %v2795
        %3060 = vmatpush.bf16.msra.mxu0 %v2793
        %3061 = vmatpush.bf16.msra.mxu0 %v2791
        %3062 = vmatpush.bf16.msra.mxu0 %v2789
        %3063 = vmatpush.bf16.msra.mxu0 %v2787
        %3064 = vmatmul.bf16.gmra.mxu0 %v2228
        %v3065 = vpop.f32.mrf.mxu0
        %v3066 = vadd.f32 %v3037, %v3065
        %v3067 = vpop.f32.mrf.mxu0
        %v3068 = vadd.f32 %v3039, %v3067
        %3069 = vmatmul.bf16.gmra.mxu0 %v2236
        %v3070 = vpop.f32.mrf.mxu0
        %v3071 = vadd.f32 %v3042, %v3070
        %v3072 = vpop.f32.mrf.mxu0
        %v3073 = vadd.f32 %v3044, %v3072
        %3074 = vmatmul.bf16.gmra.mxu0 %v2244
        %v3075 = vpop.f32.mrf.mxu0
        %v3076 = vadd.f32 %v3047, %v3075
        %v3077 = vpop.f32.mrf.mxu0
        %v3078 = vadd.f32 %v3049, %v3077
        %3079 = vmatmul.bf16.gmra.mxu0 %v2252
        %v3080 = vpop.f32.mrf.mxu0
        %v3081 = vadd.f32 %v3052, %v3080
        %v3082 = vpop.f32.mrf.mxu0
        %v3083 = vadd.f32 %v3054, %v3082
        %3084 = vdwg.mxu0
        %3085 = vmatpush.bf16.msra.mxu0 %v2817
        %3086 = vmatpush.bf16.msra.mxu0 %v2815
        %3087 = vmatpush.bf16.msra.mxu0 %v2813
        %3088 = vmatpush.bf16.msra.mxu0 %v2811
        %3089 = vmatpush.bf16.msra.mxu0 %v2809
        %3090 = vmatpush.bf16.msra.mxu0 %v2807
        %3091 = vmatpush.bf16.msra.mxu0 %v2805
        %3092 = vmatpush.bf16.msra.mxu0 %v2803
        %3093 = vmatmul.bf16.gmra.mxu0 %v2229
        %v3094 = vpop.f32.mrf.mxu0
        %v3095 = vadd.f32 %v3066, %v3094
        %v3096 = vpop.f32.mrf.mxu0
        %v3097 = vadd.f32 %v3068, %v3096
        %3098 = vmatmul.bf16.gmra.mxu0 %v2237
        %v3099 = vpop.f32.mrf.mxu0
        %v3100 = vadd.f32 %v3071, %v3099
        %v3101 = vpop.f32.mrf.mxu0
        %v3102 = vadd.f32 %v3073, %v3101
        %3103 = vmatmul.bf16.gmra.mxu0 %v2245
        %v3104 = vpop.f32.mrf.mxu0
        %v3105 = vadd.f32 %v3076, %v3104
        %v3106 = vpop.f32.mrf.mxu0
        %v3107 = vadd.f32 %v3078, %v3106
        %3108 = vmatmul.bf16.gmra.mxu0 %v2253
        %v3109 = vpop.f32.mrf.mxu0
        %v3110 = vadd.f32 %v3081, %v3109
        %v3111 = vpop.f32.mrf.mxu0
        %v3112 = vadd.f32 %v3083, %v3111
        %3113 = vdwg.mxu0
        %3114 = vmatpush.bf16.msra.mxu0 %v2833
        %3115 = vmatpush.bf16.msra.mxu0 %v2831
        %3116 = vmatpush.bf16.msra.mxu0 %v2829
        %3117 = vmatpush.bf16.msra.mxu0 %v2827
        %3118 = vmatpush.bf16.msra.mxu0 %v2825
        %3119 = vmatpush.bf16.msra.mxu0 %v2823
        %3120 = vmatpush.bf16.msra.mxu0 %v2821
        %3121 = vmatpush.bf16.msra.mxu0 %v2819
        %3122 = vmatmul.bf16.gmra.mxu0 %v2230
        %v3123 = vpop.f32.mrf.mxu0
        %v3124 = vadd.f32 %v3095, %v3123
        %v3125 = vpop.f32.mrf.mxu0
        %v3126 = vadd.f32 %v3097, %v3125
        %3127 = vmatmul.bf16.gmra.mxu0 %v2238
        %v3128 = vpop.f32.mrf.mxu0
        %v3129 = vadd.f32 %v3100, %v3128
        %v3130 = vpop.f32.mrf.mxu0
        %v3131 = vadd.f32 %v3102, %v3130
        %3132 = vmatmul.bf16.gmra.mxu0 %v2246
        %v3133 = vpop.f32.mrf.mxu0
        %v3134 = vadd.f32 %v3105, %v3133
        %v3135 = vpop.f32.mrf.mxu0
        %v3136 = vadd.f32 %v3107, %v3135
        %3137 = vmatmul.bf16.gmra.mxu0 %v2254
        %v3138 = vpop.f32.mrf.mxu0
        %v3139 = vadd.f32 %v3110, %v3138
        %v3140 = vpop.f32.mrf.mxu0
        %v3141 = vadd.f32 %v3112, %v3140
        %3142 = vdwg.mxu0
        %3143 = vmatpush.bf16.msra.mxu0 %v2849
        %3144 = vmatpush.bf16.msra.mxu0 %v2847
        %3145 = vmatpush.bf16.msra.mxu0 %v2845
        %3146 = vmatpush.bf16.msra.mxu0 %v2843
        %3147 = vmatpush.bf16.msra.mxu0 %v2841
        %3148 = vmatpush.bf16.msra.mxu0 %v2839
        %3149 = vmatpush.bf16.msra.mxu0 %v2837
        %3150 = vmatpush.bf16.msra.mxu0 %v2835
        %3151 = vmatmul.bf16.gmra.mxu0 %v2231
        %v3152 = vpop.f32.mrf.mxu0
        %v3153 = vadd.f32 %v3124, %v3152
        %v3154 = vpop.f32.mrf.mxu0
        %v3155 = vadd.f32 %v3126, %v3154
        %3156 = vmatmul.bf16.gmra.mxu0 %v2239
        %v3157 = vpop.f32.mrf.mxu0
        %v3158 = vadd.f32 %v3129, %v3157
        %v3159 = vpop.f32.mrf.mxu0
        %v3160 = vadd.f32 %v3131, %v3159
        %3161 = vmatmul.bf16.gmra.mxu0 %v2247
        %v3162 = vpop.f32.mrf.mxu0
        %v3163 = vadd.f32 %v3134, %v3162
        %v3164 = vpop.f32.mrf.mxu0
        %v3165 = vadd.f32 %v3136, %v3164
        %3166 = vmatmul.bf16.gmra.mxu0 %v2255
        %v3167 = vpop.f32.mrf.mxu0
        %v3168 = vadd.f32 %v3139, %v3167
        %v3169 = vpop.f32.mrf.mxu0
        %v3170 = vadd.f32 %v3141, %v3169
        %3171 = vdwg.mxu0
        %3172 = vmatpush.bf16.msra.mxu0 %v2865
        %3173 = vmatpush.bf16.msra.mxu0 %v2863
        %3174 = vmatpush.bf16.msra.mxu0 %v2861
        %3175 = vmatpush.bf16.msra.mxu0 %v2859
        %3176 = vmatpush.bf16.msra.mxu0 %v2857
        %3177 = vmatpush.bf16.msra.mxu0 %v2855
        %3178 = vmatpush.bf16.msra.mxu0 %v2853
        %3179 = vmatpush.bf16.msra.mxu0 %v2851
        %3180 = vmatmul.bf16.gmra.mxu0 %v2232
        %v3181 = vpop.f32.mrf.mxu0
        %v3182 = vadd.f32 %v3153, %v3181
        %v3183 = vpop.f32.mrf.mxu0
        %v3184 = vadd.f32 %v3155, %v3183
        %3185 = vmatmul.bf16.gmra.mxu0 %v2240
        %v3186 = vpop.f32.mrf.mxu0
        %v3187 = vadd.f32 %v3158, %v3186
        %v3188 = vpop.f32.mrf.mxu0
        %v3189 = vadd.f32 %v3160, %v3188
        %3190 = vmatmul.bf16.gmra.mxu0 %v2248
        %v3191 = vpop.f32.mrf.mxu0
        %v3192 = vadd.f32 %v3163, %v3191
        %v3193 = vpop.f32.mrf.mxu0
        %v3194 = vadd.f32 %v3165, %v3193
        %3195 = vmatmul.bf16.gmra.mxu0 %v2256
        %v3196 = vpop.f32.mrf.mxu0
        %v3197 = vadd.f32 %v3168, %v3196
        %v3198 = vpop.f32.mrf.mxu0
        %v3199 = vadd.f32 %v3170, %v3198
        %3200 = vdwg.mxu0
        %3201 = vmatpush.bf16.msra.mxu0 %v2881
        %3202 = vmatpush.bf16.msra.mxu0 %v2879
        %3203 = vmatpush.bf16.msra.mxu0 %v2877
        %3204 = vmatpush.bf16.msra.mxu0 %v2875
        %3205 = vmatpush.bf16.msra.mxu0 %v2873
        %3206 = vmatpush.bf16.msra.mxu0 %v2871
        %3207 = vmatpush.bf16.msra.mxu0 %v2869
        %3208 = vmatpush.bf16.msra.mxu0 %v2867
        %3209 = vmatmul.bf16.gmra.mxu0 %v2233
        %v3210 = vpop.f32.mrf.mxu0
        %v3211 = vadd.f32 %v3182, %v3210
        %v3212 = vpop.f32.mrf.mxu0
        %v3213 = vadd.f32 %v3184, %v3212
        %3214 = vmatmul.bf16.gmra.mxu0 %v2241
        %v3215 = vpop.f32.mrf.mxu0
        %v3216 = vadd.f32 %v3187, %v3215
        %v3217 = vpop.f32.mrf.mxu0
        %v3218 = vadd.f32 %v3189, %v3217
        %3219 = vmatmul.bf16.gmra.mxu0 %v2249
        %v3220 = vpop.f32.mrf.mxu0
        %v3221 = vadd.f32 %v3192, %v3220
        %v3222 = vpop.f32.mrf.mxu0
        %v3223 = vadd.f32 %v3194, %v3222
        %3224 = vmatmul.bf16.gmra.mxu0 %v2257
        %v3225 = vpop.f32.mrf.mxu0
        %v3226 = vadd.f32 %v3197, %v3225
        %v3227 = vpop.f32.mrf.mxu0
        %v3228 = vadd.f32 %v3199, %v3227
        %3229 = vdwg.mxu0
        %3230 = vmatpush.bf16.msra.mxu0 %v2897
        %3231 = vmatpush.bf16.msra.mxu0 %v2895
        %3232 = vmatpush.bf16.msra.mxu0 %v2893
        %3233 = vmatpush.bf16.msra.mxu0 %v2891
        %3234 = vmatpush.bf16.msra.mxu0 %v2889
        %3235 = vmatpush.bf16.msra.mxu0 %v2887
        %3236 = vmatpush.bf16.msra.mxu0 %v2885
        %3237 = vmatpush.bf16.msra.mxu0 %v2883
        %3238 = vmatmul.bf16.gmra.mxu0 %v2234
        %v3239 = vpop.f32.mrf.mxu0
        %v3240 = vadd.f32 %v3211, %v3239
        %v3241 = vpop.f32.mrf.mxu0
        %v3242 = vadd.f32 %v3213, %v3241
        %3243 = vmatmul.bf16.gmra.mxu0 %v2242
        %v3244 = vpop.f32.mrf.mxu0
        %v3245 = vadd.f32 %v3216, %v3244
        %v3246 = vpop.f32.mrf.mxu0
        %v3247 = vadd.f32 %v3218, %v3246
        %3248 = vmatmul.bf16.gmra.mxu0 %v2250
        %v3249 = vpop.f32.mrf.mxu0
        %v3250 = vadd.f32 %v3221, %v3249
        %v3251 = vpop.f32.mrf.mxu0
        %v3252 = vadd.f32 %v3223, %v3251
        %3253 = vmatmul.bf16.gmra.mxu0 %v2258
        %v3254 = vpop.f32.mrf.mxu0
        %v3255 = vadd.f32 %v3226, %v3254
        %v3256 = vpop.f32.mrf.mxu0
        %v3257 = vadd.f32 %v3228, %v3256
        %3258 = vdwg.mxu0
        %3259 = vmatpush.bf16.msra.mxu0 %v2786
        %3260 = vmatpush.bf16.msra.mxu0 %v2784
        %3261 = vmatpush.bf16.msra.mxu0 %v2782
        %3262 = vmatpush.bf16.msra.mxu0 %v2780
        %3263 = vmatpush.bf16.msra.mxu0 %v2778
        %3264 = vmatpush.bf16.msra.mxu0 %v2776
        %3265 = vmatpush.bf16.msra.mxu0 %v2774
        %3266 = vmatpush.bf16.msra.mxu0 %v2772
        %3267 = vmatmul.bf16.gmra.mxu0 %v2227
        %v3268 = vpop.f32.mrf.mxu0
        %v3269 = vadd.f32 0.0, %v3268
        %v3270 = vpop.f32.mrf.mxu0
        %v3271 = vadd.f32 0.0, %v3270
        %3272 = vmatmul.bf16.gmra.mxu0 %v2235
        %v3273 = vpop.f32.mrf.mxu0
        %v3274 = vadd.f32 0.0, %v3273
        %v3275 = vpop.f32.mrf.mxu0
        %v3276 = vadd.f32 0.0, %v3275
        %3277 = vmatmul.bf16.gmra.mxu0 %v2243
        %v3278 = vpop.f32.mrf.mxu0
        %v3279 = vadd.f32 0.0, %v3278
        %v3280 = vpop.f32.mrf.mxu0
        %v3281 = vadd.f32 0.0, %v3280
        %3282 = vmatmul.bf16.gmra.mxu0 %v2251
        %v3283 = vpop.f32.mrf.mxu0
        %v3284 = vadd.f32 0.0, %v3283
        %v3285 = vpop.f32.mrf.mxu0
        %v3286 = vadd.f32 0.0, %v3285
        %3287 = vdwg.mxu0
        %3288 = vmatpush.bf16.msra.mxu0 %v2802
        %3289 = vmatpush.bf16.msra.mxu0 %v2800
        %3290 = vmatpush.bf16.msra.mxu0 %v2798
        %3291 = vmatpush.bf16.msra.mxu0 %v2796
        %3292 = vmatpush.bf16.msra.mxu0 %v2794
        %3293 = vmatpush.bf16.msra.mxu0 %v2792
        %3294 = vmatpush.bf16.msra.mxu0 %v2790
        %3295 = vmatpush.bf16.msra.mxu0 %v2788
        %3296 = vmatmul.bf16.gmra.mxu0 %v2228
        %v3297 = vpop.f32.mrf.mxu0
        %v3298 = vadd.f32 %v3269, %v3297
        %v3299 = vpop.f32.mrf.mxu0
        %v3300 = vadd.f32 %v3271, %v3299
        %3301 = vmatmul.bf16.gmra.mxu0 %v2236
        %v3302 = vpop.f32.mrf.mxu0
        %v3303 = vadd.f32 %v3274, %v3302
        %v3304 = vpop.f32.mrf.mxu0
        %v3305 = vadd.f32 %v3276, %v3304
        %3306 = vmatmul.bf16.gmra.mxu0 %v2244
        %v3307 = vpop.f32.mrf.mxu0
        %v3308 = vadd.f32 %v3279, %v3307
        %v3309 = vpop.f32.mrf.mxu0
        %v3310 = vadd.f32 %v3281, %v3309
        %3311 = vmatmul.bf16.gmra.mxu0 %v2252
        %v3312 = vpop.f32.mrf.mxu0
        %v3313 = vadd.f32 %v3284, %v3312
        %v3314 = vpop.f32.mrf.mxu0
        %v3315 = vadd.f32 %v3286, %v3314
        %3316 = vdwg.mxu0
        %3317 = vmatpush.bf16.msra.mxu0 %v2818
        %3318 = vmatpush.bf16.msra.mxu0 %v2816
        %3319 = vmatpush.bf16.msra.mxu0 %v2814
        %3320 = vmatpush.bf16.msra.mxu0 %v2812
        %3321 = vmatpush.bf16.msra.mxu0 %v2810
        %3322 = vmatpush.bf16.msra.mxu0 %v2808
        %3323 = vmatpush.bf16.msra.mxu0 %v2806
        %3324 = vmatpush.bf16.msra.mxu0 %v2804
        %3325 = vmatmul.bf16.gmra.mxu0 %v2229
        %v3326 = vpop.f32.mrf.mxu0
        %v3327 = vadd.f32 %v3298, %v3326
        %v3328 = vpop.f32.mrf.mxu0
        %v3329 = vadd.f32 %v3300, %v3328
        %3330 = vmatmul.bf16.gmra.mxu0 %v2237
        %v3331 = vpop.f32.mrf.mxu0
        %v3332 = vadd.f32 %v3303, %v3331
        %v3333 = vpop.f32.mrf.mxu0
        %v3334 = vadd.f32 %v3305, %v3333
        %3335 = vmatmul.bf16.gmra.mxu0 %v2245
        %v3336 = vpop.f32.mrf.mxu0
        %v3337 = vadd.f32 %v3308, %v3336
        %v3338 = vpop.f32.mrf.mxu0
        %v3339 = vadd.f32 %v3310, %v3338
        %3340 = vmatmul.bf16.gmra.mxu0 %v2253
        %v3341 = vpop.f32.mrf.mxu0
        %v3342 = vadd.f32 %v3313, %v3341
        %v3343 = vpop.f32.mrf.mxu0
        %v3344 = vadd.f32 %v3315, %v3343
        %3345 = vdwg.mxu0
        %3346 = vmatpush.bf16.msra.mxu0 %v2834
        %3347 = vmatpush.bf16.msra.mxu0 %v2832
        %3348 = vmatpush.bf16.msra.mxu0 %v2830
        %3349 = vmatpush.bf16.msra.mxu0 %v2828
        %3350 = vmatpush.bf16.msra.mxu0 %v2826
        %3351 = vmatpush.bf16.msra.mxu0 %v2824
        %3352 = vmatpush.bf16.msra.mxu0 %v2822
        %3353 = vmatpush.bf16.msra.mxu0 %v2820
        %3354 = vmatmul.bf16.gmra.mxu0 %v2230
        %v3355 = vpop.f32.mrf.mxu0
        %v3356 = vadd.f32 %v3327, %v3355
        %v3357 = vpop.f32.mrf.mxu0
        %v3358 = vadd.f32 %v3329, %v3357
        %3359 = vmatmul.bf16.gmra.mxu0 %v2238
        %v3360 = vpop.f32.mrf.mxu0
        %v3361 = vadd.f32 %v3332, %v3360
        %v3362 = vpop.f32.mrf.mxu0
        %v3363 = vadd.f32 %v3334, %v3362
        %3364 = vmatmul.bf16.gmra.mxu0 %v2246
        %v3365 = vpop.f32.mrf.mxu0
        %v3366 = vadd.f32 %v3337, %v3365
        %v3367 = vpop.f32.mrf.mxu0
        %v3368 = vadd.f32 %v3339, %v3367
        %3369 = vmatmul.bf16.gmra.mxu0 %v2254
        %v3370 = vpop.f32.mrf.mxu0
        %v3371 = vadd.f32 %v3342, %v3370
        %v3372 = vpop.f32.mrf.mxu0
        %v3373 = vadd.f32 %v3344, %v3372
        %3374 = vdwg.mxu0
        %3375 = vmatpush.bf16.msra.mxu0 %v2850
        %3376 = vmatpush.bf16.msra.mxu0 %v2848
        %3377 = vmatpush.bf16.msra.mxu0 %v2846
        %3378 = vmatpush.bf16.msra.mxu0 %v2844
        %3379 = vmatpush.bf16.msra.mxu0 %v2842
        %3380 = vmatpush.bf16.msra.mxu0 %v2840
        %3381 = vmatpush.bf16.msra.mxu0 %v2838
        %3382 = vmatpush.bf16.msra.mxu0 %v2836
        %3383 = vmatmul.bf16.gmra.mxu0 %v2231
        %v3384 = vpop.f32.mrf.mxu0
        %v3385 = vadd.f32 %v3356, %v3384
        %v3386 = vpop.f32.mrf.mxu0
        %v3387 = vadd.f32 %v3358, %v3386
        %3388 = vmatmul.bf16.gmra.mxu0 %v2239
        %v3389 = vpop.f32.mrf.mxu0
        %v3390 = vadd.f32 %v3361, %v3389
        %v3391 = vpop.f32.mrf.mxu0
        %v3392 = vadd.f32 %v3363, %v3391
        %3393 = vmatmul.bf16.gmra.mxu0 %v2247
        %v3394 = vpop.f32.mrf.mxu0
        %v3395 = vadd.f32 %v3366, %v3394
        %v3396 = vpop.f32.mrf.mxu0
        %v3397 = vadd.f32 %v3368, %v3396
        %3398 = vmatmul.bf16.gmra.mxu0 %v2255
        %v3399 = vpop.f32.mrf.mxu0
        %v3400 = vadd.f32 %v3371, %v3399
        %v3401 = vpop.f32.mrf.mxu0
        %v3402 = vadd.f32 %v3373, %v3401
        %3403 = vdwg.mxu0
        %3404 = vmatpush.bf16.msra.mxu0 %v2866
        %3405 = vmatpush.bf16.msra.mxu0 %v2864
        %3406 = vmatpush.bf16.msra.mxu0 %v2862
        %3407 = vmatpush.bf16.msra.mxu0 %v2860
        %3408 = vmatpush.bf16.msra.mxu0 %v2858
        %3409 = vmatpush.bf16.msra.mxu0 %v2856
        %3410 = vmatpush.bf16.msra.mxu0 %v2854
        %3411 = vmatpush.bf16.msra.mxu0 %v2852
        %3412 = vmatmul.bf16.gmra.mxu0 %v2232
        %v3413 = vpop.f32.mrf.mxu0
        %v3414 = vadd.f32 %v3385, %v3413
        %v3415 = vpop.f32.mrf.mxu0
        %v3416 = vadd.f32 %v3387, %v3415
        %3417 = vmatmul.bf16.gmra.mxu0 %v2240
        %v3418 = vpop.f32.mrf.mxu0
        %v3419 = vadd.f32 %v3390, %v3418
        %v3420 = vpop.f32.mrf.mxu0
        %v3421 = vadd.f32 %v3392, %v3420
        %3422 = vmatmul.bf16.gmra.mxu0 %v2248
        %v3423 = vpop.f32.mrf.mxu0
        %v3424 = vadd.f32 %v3395, %v3423
        %v3425 = vpop.f32.mrf.mxu0
        %v3426 = vadd.f32 %v3397, %v3425
        %3427 = vmatmul.bf16.gmra.mxu0 %v2256
        %v3428 = vpop.f32.mrf.mxu0
        %v3429 = vadd.f32 %v3400, %v3428
        %v3430 = vpop.f32.mrf.mxu0
        %v3431 = vadd.f32 %v3402, %v3430
        %3432 = vdwg.mxu0
        %3433 = vmatpush.bf16.msra.mxu0 %v2882
        %3434 = vmatpush.bf16.msra.mxu0 %v2880
        %3435 = vmatpush.bf16.msra.mxu0 %v2878
        %3436 = vmatpush.bf16.msra.mxu0 %v2876
        %3437 = vmatpush.bf16.msra.mxu0 %v2874
        %3438 = vmatpush.bf16.msra.mxu0 %v2872
        %3439 = vmatpush.bf16.msra.mxu0 %v2870
        %3440 = vmatpush.bf16.msra.mxu0 %v2868
        %3441 = vmatmul.bf16.gmra.mxu0 %v2233
        %v3442 = vpop.f32.mrf.mxu0
        %v3443 = vadd.f32 %v3414, %v3442
        %v3444 = vpop.f32.mrf.mxu0
        %v3445 = vadd.f32 %v3416, %v3444
        %3446 = vmatmul.bf16.gmra.mxu0 %v2241
        %v3447 = vpop.f32.mrf.mxu0
        %v3448 = vadd.f32 %v3419, %v3447
        %v3449 = vpop.f32.mrf.mxu0
        %v3450 = vadd.f32 %v3421, %v3449
        %3451 = vmatmul.bf16.gmra.mxu0 %v2249
        %v3452 = vpop.f32.mrf.mxu0
        %v3453 = vadd.f32 %v3424, %v3452
        %v3454 = vpop.f32.mrf.mxu0
        %v3455 = vadd.f32 %v3426, %v3454
        %3456 = vmatmul.bf16.gmra.mxu0 %v2257
        %v3457 = vpop.f32.mrf.mxu0
        %v3458 = vadd.f32 %v3429, %v3457
        %v3459 = vpop.f32.mrf.mxu0
        %v3460 = vadd.f32 %v3431, %v3459
        %3461 = vdwg.mxu0
        %3462 = vmatpush.bf16.msra.mxu0 %v2898
        %3463 = vmatpush.bf16.msra.mxu0 %v2896
        %3464 = vmatpush.bf16.msra.mxu0 %v2894
        %3465 = vmatpush.bf16.msra.mxu0 %v2892
        %3466 = vmatpush.bf16.msra.mxu0 %v2890
        %3467 = vmatpush.bf16.msra.mxu0 %v2888
        %3468 = vmatpush.bf16.msra.mxu0 %v2886
        %3469 = vmatpush.bf16.msra.mxu0 %v2884
        %3470 = vmatmul.bf16.gmra.mxu0 %v2234
        %v3471 = vpop.f32.mrf.mxu0
        %v3472 = vadd.f32 %v3443, %v3471
        %v3473 = vpop.f32.mrf.mxu0
        %v3474 = vadd.f32 %v3445, %v3473
        %3475 = vmatmul.bf16.gmra.mxu0 %v2242
        %v3476 = vpop.f32.mrf.mxu0
        %v3477 = vadd.f32 %v3448, %v3476
        %v3478 = vpop.f32.mrf.mxu0
        %v3479 = vadd.f32 %v3450, %v3478
        %3480 = vmatmul.bf16.gmra.mxu0 %v2250
        %v3481 = vpop.f32.mrf.mxu0
        %v3482 = vadd.f32 %v3453, %v3481
        %v3483 = vpop.f32.mrf.mxu0
        %v3484 = vadd.f32 %v3455, %v3483
        %3485 = vmatmul.bf16.gmra.mxu0 %v2258
        %v3486 = vpop.f32.mrf.mxu0
        %v3487 = vadd.f32 %v3458, %v3486
        %v3488 = vpop.f32.mrf.mxu0
        %v3489 = vadd.f32 %v3460, %v3488
        %3490 = vdwg.mxu0
        %v3491 = vadd.f32 %v2211, %v3240
        %v3492 = vadd.f32 %v2212, %v3472
        %v3493 = vadd.f32 %v2213, %v3242
        %v3494 = vadd.f32 %v2214, %v3474
        %v3495 = vadd.f32 %v2215, %v3245
        %v3496 = vadd.f32 %v2216, %v3477
        %v3497 = vadd.f32 %v2217, %v3247
        %v3498 = vadd.f32 %v2218, %v3479
        %v3499 = vadd.f32 %v2219, %v3250
        %v3500 = vadd.f32 %v2220, %v3482
        %v3501 = vadd.f32 %v2221, %v3252
        %v3502 = vadd.f32 %v2222, %v3484
        %v3503 = vadd.f32 %v2223, %v3255
        %v3504 = vadd.f32 %v2224, %v3487
        %v3505 = vadd.f32 %v2225, %v3257
        %v3506 = vadd.f32 %v2226, %v3489
        %3507 = vst [vmem:[%s329] sm:$0xff] %v3491
        %3508 = vst [vmem:[%s329 + $0x8] sm:$0xff] %v3492
        %3509 = vst [vmem:[%s329 + $0x10] sm:$0xff] %v3493
        %3510 = vst [vmem:[%s329 + $0x18] sm:$0xff] %v3494
        %3511 = vst [vmem:[%s329 + $0x20] sm:$0xff] %v3495
        %3512 = vst [vmem:[%s329 + $0x28] sm:$0xff] %v3496
        %3513 = vst [vmem:[%s329 + $0x30] sm:$0xff] %v3497
        %3514 = vst [vmem:[%s329 + $0x38] sm:$0xff] %v3498
        %3515 = vst [vmem:[%s329 + $0x40] sm:$0xff] %v3499
        %3516 = vst [vmem:[%s329 + $0x48] sm:$0xff] %v3500
        %3517 = vst [vmem:[%s329 + $0x50] sm:$0xff] %v3501
        %3518 = vst [vmem:[%s329 + $0x58] sm:$0xff] %v3502
        %3519 = vst [vmem:[%s329 + $0x60] sm:$0xff] %v3503
        %3520 = vst [vmem:[%s329 + $0x68] sm:$0xff] %v3504
        %3521 = vst [vmem:[%s329 + $0x70] sm:$0xff] %v3505
        %3522 = vst [vmem:[%s329 + $0x78] sm:$0xff] %v3506
        %s3523 = sand.u32 %s169, 1
        %s3524 = scalar_lea.sflag [#allocation4], %s3523
        %s3525 = sand.u32 %s169, 1
        %s3526 = smul.addr %s3525, 128
        %s3527 = scalar_lea.vmem [#allocation10], %s3526
        // Predicated region
        $region61: #{mlp_pallas.1} parent=39 // pred_check
          %p3528 = pneg %p179
        $region62: #{mlp_pallas.1} parent=39 // pred_check_branch
          %3530 = sbr.rel (%p3528) target = $region64
        $region63: #{mlp_pallas.1} parent=39 // pred_region
          %s3531 = smul.u32 8, %s28
          %3533 = vsyncadd %s3524, 0
          %s3534 = smul.addr %s3531, 2
          %s3535 = smul.addr %s3534, 8
          %s3536 = scalar_lea.hbm %s5, %s3535
          %s3537 = sshll.u32 %s3527, 4
          %s3538 = int_to_ptr.vmem [resolvable:$true] %s3537
          %s3539 = sshll.u32 %s3536, 4
          %s3540 = int_to_ptr.hbm [resolvable:$true] %s3539
          %3545 = dma.vmem_to_hbm [thread:$0]  %s3538, 2048, %s3540, %s3524, 256, 256, 16
        $region64: #{mlp_pallas.1} parent=39 // pred_fallthru
          _
      $region40: #{mlp_pallas.1} parent=5 // pred_fallthru
        _
      %p3546 = scmp.le.s32.totalorder 2, %s19
      // Predicated region
      $region65: #{mlp_pallas.1} parent=5 // pred_check
        %p3547 = pneg %p3546
      $region66: #{mlp_pallas.1} parent=5 // pred_check_branch
        %3549 = sbr.rel (%p3547) target = $region68
      $region67: #{mlp_pallas.1} parent=5 // pred_region
        %s3550 = ssub.s32 %s19, 2
        // Predicated region
        $region69: #{mlp_pallas.1} parent=67 // pred_check
          %p3551 = pneg %p185
        $region70: #{mlp_pallas.1} parent=67 // pred_check_branch
          %3553 = sbr.rel (%p3551) target = $region72
        $region71: #{mlp_pallas.1} parent=67 // pred_region
          %s3554 = sand.u32 %s170, 1
          %s3555 = scalar_lea.sflag [#allocation4], %s3554
          %s3556 = sand.u32 %s170, 1
          %s3557 = smul.addr %s3556, 128
          %s3558 = scalar_lea.vmem [#allocation10], %s3557
          %3560 = dma.done %s3555, 2048
        $region72: #{mlp_pallas.1} parent=67 // pred_fallthru
          _
      $region68: #{mlp_pallas.1} parent=5 // pred_fallthru
        _
    $region6: #{mlp_pallas.1} parent=1 // loop_footer
      %s23 = sadd.s32 1, %s19
    $region7: #{mlp_pallas.1} parent=1 // loop_footer_branch
      %18 = sbr.rel target = $region3
    $region8: #{mlp_pallas.1} parent=1 // loop_exit
      _
    %3561 = vsyncpa [#allocation3], 1
    %s3562 = scalar_lea.sflag [#allocation3], 1
    %3563 = vsyncpa %s3562, 1
    %3564 = vsyncpa [#allocation6], 1
    %3565 = vsyncpa [#allocation9], 1
    %3566 = vsyncpa [#allocation4], 1
    %s3567 = scalar_lea.sflag [#allocation4], 1
    %3568 = vsyncpa %s3567, 1

// kernel: mlp_pallas.1
$region0: #{mlp_pallas.1}
  #allocation0 [shape = 'u32[]', space=smem, size = 0x4, offset = 0x4, fixed_abs, tag = 'smem constant byte address 0x4 - core index']
  #allocation1 [shape = 'u32[72,128]{1,0:T(1,128)}', space=vmem, size = 0x9000, scoped, tag = 'internal scratch']
  %s0 = inlined_call_operand.hbm [shape: f32[128,256], index: 0, kind: input, shape index: {}]
  %s1 = inlined_call_operand.hbm [shape: bf16[256,1024], index: 1, kind: input, shape index: {}]
  %s2 = inlined_call_operand.hbm [shape: f32[1,1024], index: 2, kind: input, shape index: {}]
  %s3 = inlined_call_operand.hbm [shape: bf16[1024,256], index: 3, kind: input, shape index: {}]
  %s4 = inlined_call_operand.vmem [shape: f32[1,256], index: 4, kind: input, shape index: {}]
  %s5 = inlined_call_operand.hbm [shape: f32[128,256], index: 5, kind: output, shape index: {}]
  %s6 = sld [smem:[#allocation0]]
  $region73: #{mlp_pallas.1} parent=0
    _
  %s8 = ssub.s32 1, %s6
  %s9 = scalar_select 0, %s8, %s6
  $region1: #{mlp_pallas.1} parent=0
    #allocation2 [shape = 'u8[131072]{0}', space=vmem, size = 0x20000, scoped, tag = 'input window, operand 0']
    #allocation3 [shape = 's32[2]{0}', space=sflag, size = 0x8, scoped, tag = 'scoped memory for mlp_pallas.1']
    #allocation4 [shape = 's32[2]{0}', space=sflag, size = 0x8, scoped, tag = 'scoped memory for mlp_pallas.1']
    #allocation5 [shape = 'u8[524288]{0}', space=vmem, size = 0x80000, scoped, tag = 'input window, operand 1, single buffered']
    #allocation6 [shape = 's32[1]{0}', space=sflag, size = 0x4, scoped, tag = 'scoped memory for mlp_pallas.1']
    #allocation7 [shape = 'u8[4096]{0}', space=vmem, size = 0x1000, scoped, tag = 'input window, operand 2, single buffered']
    #allocation8 [shape = 'u8[524288]{0}', space=vmem, size = 0x80000, scoped, tag = 'input window, operand 3, single buffered']
    #allocation9 [shape = 's32[1]{0}', space=sflag, size = 0x4, scoped, tag = 'scoped memory for mlp_pallas.1']
    #allocation10 [shape = 'u8[131072]{0}', space=vmem, size = 0x20000, scoped, tag = 'output window, operand 0']
    %10 = vsyncpa [#allocation3], 0
    %s11 = scalar_lea.sflag [#allocation3], 1
    %12 = vsyncpa %s11, 0
    %13 = vsyncpa [#allocation6], 0
    %14 = vsyncpa [#allocation9], 0
    %15 = vsyncpa [#allocation4], 0
    %s16 = scalar_lea.sflag [#allocation4], 1
    %17 = vsyncpa %s16, 0
    loop: start=0, step=1, limit=4
    $region2: #{mlp_pallas.1} parent=1 // loop_pre_header
      _
    $region3: #{mlp_pallas.1} parent=1 // loop_header
      %s19 = sphi 0, %s23
      %p20 = scmp.ge.s32.totalorder %s19, 4
      %s26 = sphi 0, %s38
      %s27 = sphi 0, %s34
      %s28 = sphi 0, %s26
      %s29 = sphi 0, %s27
      %s30 = sphi 0, %s28
      %s31 = sphi 0, %s29
      %s41 = sphi 0, %s43
      %s44 = sphi 0, %s41
      %s45 = sphi 0, %s44
      %s61 = sphi 0, %s45
      %s67 = sphi 0, %s69
      %s70 = sphi 0, %s67
      %s71 = sphi 0, %s70
      %s87 = sphi 0, %s71
      %s93 = sphi 0, %s95
      %s96 = sphi 0, %s93
      %s97 = sphi 0, %s96
      %s113 = sphi 0, %s97
      %s119 = sphi 0, %s121
      %s122 = sphi 0, %s119
      %s123 = sphi 0, %s122
      %s139 = sphi 0, %s123
      %s143 = sphi 0, %s143
      %s145 = sphi 0, %s143
      %s146 = sphi 0, %s145
      %s160 = sphi 0, %s146
      %s166 = sphi 0, %s168
      %s169 = sphi 0, %s166
      %s170 = sphi 0, %s169
      %s186 = sphi 0, %s170
    $region4: #{mlp_pallas.1} parent=1 // loop_header_branch
      %22 = sbr.rel (%p20) target = $region8
    $region5: #{mlp_pallas.1} parent=1 // loop_body
      %s24 = ssub.s32 %s19, 1
      %s25 = ssub.s32 %s19, 2
      %s32 = sadd.s32 1, %s27
      %p33 = scmp.ge.s32.totalorder %s32, 1
      %s34 = scalar_select %p33, 0, %s32
      %s35 = sadd.s32 1, %s26
      %s36 = scalar_select %p33, %s35, %s26
      %p37 = scmp.ge.s32.totalorder %s36, 2
      %s38 = scalar_select %p37, 0, %s36
      %s39 = ssub.s32 %s26, %s38
      %p40 = scmp.eq.s32.totalorder %s39, 0
      %s42 = sadd.s32 %s41, 1
      %s43 = scalar_select %p40, %s41, %s42
      %p46 = pneg %p40
      %p47 = scmp.eq.s32.totalorder %s19, 1
      %p48 = por %p46, %p47
      %p49 = scmp.ne.s32.totalorder %s41, %s44
      %p50 = scmp.eq.s32.totalorder %s19, 0
      %p51 = por %p49, %p50
      %p52 = scmp.ne.s32.totalorder %s41, %s44
      %p53 = scmp.eq.s32.totalorder %s24, 1
      %p54 = por %p52, %p53
      %p55 = scmp.ne.s32.totalorder %s44, %s45
      %p56 = scmp.eq.s32.totalorder %s24, 0
      %p57 = por %p55, %p56
      %p58 = scmp.ne.s32.totalorder %s44, %s45
      %p59 = scmp.eq.s32.totalorder %s25, 1
      %p60 = por %p58, %p59
      %p62 = scmp.ne.s32.totalorder %s45, %s61
      %p63 = scmp.eq.s32.totalorder %s25, 0
      %p64 = por %p62, %p63
      %s65 = ssub.s32 %s27, %s34
      %p66 = scmp.eq.s32.totalorder %s65, 0
      %s68 = sadd.s32 %s67, 1
      %s69 = scalar_select %p66, %s67, %s68
      %p72 = pneg %p66
      %p73 = scmp.eq.s32.totalorder %s19, 1
      %p74 = por %p72, %p73
      %p75 = scmp.ne.s32.totalorder %s67, %s70
      %p76 = scmp.eq.s32.totalorder %s19, 0
      %p77 = por %p75, %p76
      %p78 = scmp.ne.s32.totalorder %s67, %s70
      %p79 = scmp.eq.s32.totalorder %s24, 1
      %p80 = por %p78, %p79
      %p81 = scmp.ne.s32.totalorder %s70, %s71
      %p82 = scmp.eq.s32.totalorder %s24, 0
      %p83 = por %p81, %p82
      %p84 = scmp.ne.s32.totalorder %s70, %s71
      %p85 = scmp.eq.s32.totalorder %s25, 1
      %p86 = por %p84, %p85
      %p88 = scmp.ne.s32.totalorder %s71, %s87
      %p89 = scmp.eq.s32.totalorder %s25, 0
      %p90 = por %p88, %p89
      %s91 = ssub.s32 %s27, %s34
      %p92 = scmp.eq.s32.totalorder %s91, 0
      %s94 = sadd.s32 %s93, 1
      %s95 = scalar_select %p92, %s93, %s94
      %p98 = pneg %p92
      %p99 = scmp.eq.s32.totalorder %s19, 1
      %p100 = por %p98, %p99
      %p101 = scmp.ne.s32.totalorder %s93, %s96
      %p102 = scmp.eq.s32.totalorder %s19, 0
      %p103 = por %p101, %p102
      %p104 = scmp.ne.s32.totalorder %s93, %s96
      %p105 = scmp.eq.s32.totalorder %s24, 1
      %p106 = por %p104, %p105
      %p107 = scmp.ne.s32.totalorder %s96, %s97
      %p108 = scmp.eq.s32.totalorder %s24, 0
      %p109 = por %p107, %p108
      %p110 = scmp.ne.s32.totalorder %s96, %s97
      %p111 = scmp.eq.s32.totalorder %s25, 1
      %p112 = por %p110, %p111
      %p114 = scmp.ne.s32.totalorder %s97, %s113
      %p115 = scmp.eq.s32.totalorder %s25, 0
      %p116 = por %p114, %p115
      %s117 = ssub.s32 %s27, %s34
      %p118 = scmp.eq.s32.totalorder %s117, 0
      %s120 = sadd.s32 %s119, 1
      %s121 = scalar_select %p118, %s119, %s120
      %p124 = pneg %p118
      %p125 = scmp.eq.s32.totalorder %s19, 1
      %p126 = por %p124, %p125
      %p127 = scmp.ne.s32.totalorder %s119, %s122
      %p128 = scmp.eq.s32.totalorder %s19, 0
      %p129 = por %p127, %p128
      %p130 = scmp.ne.s32.totalorder %s119, %s122
      %p131 = scmp.eq.s32.totalorder %s24, 1
      %p132 = por %p130, %p131
      %p133 = scmp.ne.s32.totalorder %s122, %s123
      %p134 = scmp.eq.s32.totalorder %s24, 0
      %p135 = por %p133, %p134
      %p136 = scmp.ne.s32.totalorder %s122, %s123
      %p137 = scmp.eq.s32.totalorder %s25, 1
      %p138 = por %p136, %p137
      %p140 = scmp.ne.s32.totalorder %s123, %s139
      %p141 = scmp.eq.s32.totalorder %s25, 0
      %p142 = por %p140, %p141
      %s144 = sadd.s32 %s143, 1
      %p147 = scmp.eq.s32.totalorder %s19, 1
      %p148 = scmp.ne.s32.totalorder %s143, %s145
      %p149 = scmp.eq.s32.totalorder %s19, 0
      %p150 = por %p148, %p149
      %p151 = scmp.ne.s32.totalorder %s143, %s145
      %p152 = scmp.eq.s32.totalorder %s24, 1
      %p153 = por %p151, %p152
      %p154 = scmp.ne.s32.totalorder %s145, %s146
      %p155 = scmp.eq.s32.totalorder %s24, 0
      %p156 = por %p154, %p155
      %p157 = scmp.ne.s32.totalorder %s145, %s146
      %p158 = scmp.eq.s32.totalorder %s25, 1
      %p159 = por %p157, %p158
      %p161 = scmp.ne.s32.totalorder %s146, %s160
      %p162 = scmp.eq.s32.totalorder %s25, 0
      %p163 = por %p161, %p162
      %s164 = ssub.s32 %s26, %s38
      %p165 = scmp.eq.s32.totalorder %s164, 0
      %s167 = sadd.s32 %s166, 1
      %s168 = scalar_select %p165, %s166, %s167
      %p171 = pneg %p165
      %p172 = scmp.eq.s32.totalorder %s19, 1
      %p173 = por %p171, %p172
      %p174 = scmp.ne.s32.totalorder %s166, %s169
      %p175 = scmp.eq.s32.totalorder %s19, 0
      %p176 = por %p174, %p175
      %p177 = scmp.ne.s32.totalorder %s166, %s169
      %p178 = scmp.eq.s32.totalorder %s24, 1
      %p179 = por %p177, %p178
      %p180 = scmp.ne.s32.totalorder %s169, %s170
      %p181 = scmp.eq.s32.totalorder %s24, 0
      %p182 = por %p180, %p181
      %p183 = scmp.ne.s32.totalorder %s169, %s170
      %p184 = scmp.eq.s32.totalorder %s25, 1
      %p185 = por %p183, %p184
      %p187 = scmp.ne.s32.totalorder %s170, %s186
      %p188 = scmp.eq.s32.totalorder %s25, 0
      %p189 = por %p187, %p188
      %p190 = scmp.le.s32.totalorder 1, %s19
      %p191 = scmp.lt.s32.totalorder %s19, 3
      %p192 = pnand %p190, %p191
      %p193 = pneg %p192
      // Predicated region
      $region9: #{mlp_pallas.1} parent=5 // pred_check
        _
      $region10: #{mlp_pallas.1} parent=5 // pred_check_branch
        %195 = sbr.rel (%p192) target = $region12
      $region11: #{mlp_pallas.1} parent=5 // pred_region
        %s196 = ssub.s32 %s19, 1
        // Predicated region
        $region13: #{mlp_pallas.1} parent=11 // pred_check
          %p197 = pneg %p83
        $region14: #{mlp_pallas.1} parent=11 // pred_check_branch
          %199 = sbr.rel (%p197) target = $region16
        $region15: #{mlp_pallas.1} parent=11 // pred_region
          %s200 = smul.u32 8, %s29
          %202 = vsyncadd [#allocation6], 0
          %s203 = smul.addr %s200, 4
          %s204 = scalar_lea.hbm %s1, %s203
          %s205 = sshll.u32 %s204, 4
          %s206 = int_to_ptr.hbm [resolvable:$true] %s205
          %s207 = sshll.u32 [#allocation5], 4
          %s208 = int_to_ptr.vmem [resolvable:$true] %s207
          %213 = dma.hbm_to_vmem [thread:$0]  %s206, 16384, %s208, [#allocation6], 512, 512, 32
        $region16: #{mlp_pallas.1} parent=11 // pred_fallthru
          _
        // Predicated region
        $region17: #{mlp_pallas.1} parent=11 // pred_check
          %p214 = pneg %p109
        $region18: #{mlp_pallas.1} parent=11 // pred_check_branch
          %216 = sbr.rel (%p214) target = $region20
        $region19: #{mlp_pallas.1} parent=11 // pred_region
          %s217 = smul.u32 8, %s29
          %219 = vsyncadd [#allocation6], 0
          %s220 = scalar_lea.hbm %s2, %s217
          %s222 = sshll.u32 %s220, 4
          %s223 = int_to_ptr.hbm [resolvable:$true] %s222
          %s224 = sshll.u32 [#allocation7], 4
          %s225 = int_to_ptr.vmem [resolvable:$true] %s224
          %227 = dma.hbm_to_vmem [thread:$0]  %s223, 128, %s225, [#allocation6]
        $region20: #{mlp_pallas.1} parent=11 // pred_fallthru
          _
        // Predicated region
        $region21: #{mlp_pallas.1} parent=11 // pred_check
          %p228 = pneg %p135
        $region22: #{mlp_pallas.1} parent=11 // pred_check_branch
          %230 = sbr.rel (%p228) target = $region24
        $region23: #{mlp_pallas.1} parent=11 // pred_region
          %s231 = smul.u32 128, %s29
          %233 = vsyncadd [#allocation9], 0
          %s234 = smul.addr %s231, 2
          %s235 = smul.addr %s234, 4
          %s236 = scalar_lea.hbm %s3, %s235
          %s237 = sshll.u32 %s236, 4
          %s238 = int_to_ptr.hbm [resolvable:$true] %s237
          %s239 = sshll.u32 [#allocation8], 4
          %s240 = int_to_ptr.vmem [resolvable:$true] %s239
          %245 = dma.hbm_to_vmem [thread:$0]  %s238, 16384, %s240, [#allocation9], 128, 128, 8
        $region24: #{mlp_pallas.1} parent=11 // pred_fallthru
          _
        // Predicated region
        $region25: #{mlp_pallas.1} parent=11 // pred_check
          %p246 = pneg %p156
        $region26: #{mlp_pallas.1} parent=11 // pred_check_branch
          %248 = sbr.rel (%p246) target = $region28
        $region27: #{mlp_pallas.1} parent=11 // pred_region
          _
        $region28: #{mlp_pallas.1} parent=11 // pred_fallthru
          _
      $region12: #{mlp_pallas.1} parent=5 // pred_fallthru
        _
      %p249 = scmp.lt.s32.totalorder %s19, 2
      // Predicated region
      $region29: #{mlp_pallas.1} parent=5 // pred_check
        %p250 = pneg %p249
      $region30: #{mlp_pallas.1} parent=5 // pred_check_branch
        %252 = sbr.rel (%p250) target = $region32
      $region31: #{mlp_pallas.1} parent=5 // pred_region
        // Predicated region
        $region33: #{mlp_pallas.1} parent=31 // pred_check
          %p253 = pneg %p51
        $region34: #{mlp_pallas.1} parent=31 // pred_check_branch
          %255 = sbr.rel (%p253) target = $region36
        $region35: #{mlp_pallas.1} parent=31 // pred_region
          %s256 = sand.u32 %s41, 1
          %s257 = scalar_lea.sflag [#allocation3], %s256
          %s258 = sand.u32 %s41, 1
          %s259 = smul.addr %s258, 128
          %s260 = scalar_lea.vmem [#allocation2], %s259
          %s261 = smul.u32 8, %s26
          %263 = vsyncadd %s257, 0
          %s264 = smul.addr %s261, 2
          %s265 = smul.addr %s264, 8
          %s266 = scalar_lea.hbm %s0, %s265
          %s267 = sshll.u32 %s266, 4
          %s268 = int_to_ptr.hbm [resolvable:$true] %s267
          %s269 = sshll.u32 %s260, 4
          %s270 = int_to_ptr.vmem [resolvable:$true] %s269
          %275 = dma.hbm_to_vmem [thread:$0]  %s268, 2048, %s270, %s257, 256, 256, 16
        $region36: #{mlp_pallas.1} parent=31 // pred_fallthru
          _
      $region32: #{mlp_pallas.1} parent=5 // pred_fallthru
        _
      %p276 = scmp.le.s32.totalorder 1, %s19
      %p277 = scmp.lt.s32.totalorder %s19, 3
      %p278 = pnand %p276, %p277
      %p279 = pneg %p278
      // Predicated region
      $region37: #{mlp_pallas.1} parent=5 // pred_check
        _
      $region38: #{mlp_pallas.1} parent=5 // pred_check_branch
        %281 = sbr.rel (%p278) target = $region40
      $region39: #{mlp_pallas.1} parent=5 // pred_region
        %s282 = ssub.s32 %s19, 1
        %s283 = sand.u32 %s44, 1
        %s284 = scalar_lea.sflag [#allocation3], %s283
        %s285 = sand.u32 %s44, 1
        %s286 = smul.addr %s285, 128
        %s287 = scalar_lea.vmem [#allocation2], %s286
        // Predicated region
        $region41: #{mlp_pallas.1} parent=39 // pred_check
          %p288 = pneg %p57
        $region42: #{mlp_pallas.1} parent=39 // pred_check_branch
          %290 = sbr.rel (%p288) target = $region44
        $region43: #{mlp_pallas.1} parent=39 // pred_region
          %292 = dma.done %s284, 2048
        $region44: #{mlp_pallas.1} parent=39 // pred_fallthru
          _
        // Predicated region
        $region45: #{mlp_pallas.1} parent=39 // pred_check
          %p293 = pneg %p83
        $region46: #{mlp_pallas.1} parent=39 // pred_check_branch
          %295 = sbr.rel (%p293) target = $region48
        $region47: #{mlp_pallas.1} parent=39 // pred_region
          %297 = dma.done [#allocation6], 16384
        $region48: #{mlp_pallas.1} parent=39 // pred_fallthru
          _
        // Predicated region
        $region49: #{mlp_pallas.1} parent=39 // pred_check
          %p298 = pneg %p109
        $region50: #{mlp_pallas.1} parent=39 // pred_check_branch
          %300 = sbr.rel (%p298) target = $region52
        $region51: #{mlp_pallas.1} parent=39 // pred_region
          %302 = dma.done [#allocation6], 128
        $region52: #{mlp_pallas.1} parent=39 // pred_fallthru
          _
        // Predicated region
        $region53: #{mlp_pallas.1} parent=39 // pred_check
          %p303 = pneg %p135
        $region54: #{mlp_pallas.1} parent=39 // pred_check_branch
          %305 = sbr.rel (%p303) target = $region56
        $region55: #{mlp_pallas.1} parent=39 // pred_region
          %307 = dma.done [#allocation9], 16384
        $region56: #{mlp_pallas.1} parent=39 // pred_fallthru
          _
        %s308 = sand.u32 %s44, 1
        %s309 = scalar_lea.sflag [#allocation3], %s308
        %s310 = sand.u32 %s44, 1
        %s311 = smul.addr %s310, 128
        %s312 = scalar_lea.vmem [#allocation2], %s311
        %p313 = pneg %p57
        %p314 = pneg %p54
        %p315 = pneg %p83
        %p316 = pneg %p80
        %p317 = pneg %p109
        %p318 = pneg %p106
        %p319 = pneg %p135
        %p320 = pneg %p132
        %p321 = pneg %p156
        %p322 = pneg %p153
        %p323 = pneg %p182
        %p324 = pneg %p179
        %s325 = sand.u32 %s169, 1
        %s326 = scalar_lea.sflag [#allocation4], %s325
        %s327 = sand.u32 %s169, 1
        %s328 = smul.addr %s327, 128
        %s329 = scalar_lea.vmem [#allocation10], %s328
        %s330 = smul.u32 8, %s28
        %s331 = smul.u32 8, %s29
        %s332 = smul.u32 8, %s29
        %s333 = smul.u32 128, %s29
        %s334 = smul.u32 8, %s28
        %p335 = scmp.eq.s32.totalorder %s29, 0
        // Predicated region
        $region57: #{mlp_pallas.1} parent=39 // pred_check
          %p336 = pneg %p335
        $region58: #{mlp_pallas.1} parent=39 // pred_check_branch
          %338 = sbr.rel (%p336) target = $region60
        $region59: #{mlp_pallas.1} parent=39 // pred_region
          %v339 = vld [vmem:[%s4] sm:$0x3]
          %v341 = vperm.slane %v339, 0
          %v342 = vperm.slane %v339, 1
          %345 = vst [vmem:[%s329] sm:$0xff] %v341
          %346 = vst [vmem:[%s329 + $0x8] sm:$0xff] %v342
          %347 = vst [vmem:[%s329 + $0x10] sm:$0xff] %v341
          %348 = vst [vmem:[%s329 + $0x18] sm:$0xff] %v342
          %349 = vst [vmem:[%s329 + $0x20] sm:$0xff] %v341
          %350 = vst [vmem:[%s329 + $0x28] sm:$0xff] %v342
          %351 = vst [vmem:[%s329 + $0x30] sm:$0xff] %v341
          %352 = vst [vmem:[%s329 + $0x38] sm:$0xff] %v342
          %353 = vst [vmem:[%s329 + $0x40] sm:$0xff] %v341
          %354 = vst [vmem:[%s329 + $0x48] sm:$0xff] %v342
          %355 = vst [vmem:[%s329 + $0x50] sm:$0xff] %v341
          %356 = vst [vmem:[%s329 + $0x58] sm:$0xff] %v342
          %357 = vst [vmem:[%s329 + $0x60] sm:$0xff] %v341
          %358 = vst [vmem:[%s329 + $0x68] sm:$0xff] %v342
          %359 = vst [vmem:[%s329 + $0x70] sm:$0xff] %v341
          %360 = vst [vmem:[%s329 + $0x78] sm:$0xff] %v342
        $region60: #{mlp_pallas.1} parent=39 // pred_fallthru
          _
        %v361 = vld [vmem:[%s287] sm:$0xff]
        %v362 = vld [vmem:[%s287 + $0x8] sm:$0xff]
        %v363 = vld [vmem:[%s287 + $0x10] sm:$0xff]
        %v364 = vld [vmem:[%s287 + $0x18] sm:$0xff]
        %v365 = vld [vmem:[%s287 + $0x20] sm:$0xff]
        %v366 = vld [vmem:[%s287 + $0x28] sm:$0xff]
        %v367 = vld [vmem:[%s287 + $0x30] sm:$0xff]
        %v368 = vld [vmem:[%s287 + $0x38] sm:$0xff]
        %v369 = vld [vmem:[%s287 + $0x40] sm:$0xff]
        %v370 = vld [vmem:[%s287 + $0x48] sm:$0xff]
        %v371 = vld [vmem:[%s287 + $0x50] sm:$0xff]
        %v372 = vld [vmem:[%s287 + $0x58] sm:$0xff]
        %v373 = vld [vmem:[%s287 + $0x60] sm:$0xff]
        %v374 = vld [vmem:[%s287 + $0x68] sm:$0xff]
        %v375 = vld [vmem:[%s287 + $0x70] sm:$0xff]
        %v376 = vld [vmem:[%s287 + $0x78] sm:$0xff]
        %v377 = vpack.c.bf16 %v363, %v361
        %v378 = vpack.c.bf16 %v364, %v362
        %v379 = vpack.c.bf16 %v367, %v365
        %v380 = vpack.c.bf16 %v368, %v366
        %v381 = vpack.c.bf16 %v371, %v369
        %v382 = vpack.c.bf16 %v372, %v370
        %v383 = vpack.c.bf16 %v375, %v373
        %v384 = vpack.c.bf16 %v376, %v374
        %v385 = vld [vmem:[#allocation5] sm:$0xff]
        %v386 = vld [vmem:[#allocation5 + $0x8] sm:$0xff]
        %v387 = vld [vmem:[#allocation5 + $0x10] sm:$0xff]
        %v388 = vld [vmem:[#allocation5 + $0x18] sm:$0xff]
        %v389 = vld [vmem:[#allocation5 + $0x20] sm:$0xff]
        %v390 = vld [vmem:[#allocation5 + $0x28] sm:$0xff]
        %v391 = vld [vmem:[#allocation5 + $0x30] sm:$0xff]
        %v392 = vld [vmem:[#allocation5 + $0x38] sm:$0xff]
        %v393 = vld [vmem:[#allocation5 + $0x40] sm:$0xff]
        %v394 = vld [vmem:[#allocation5 + $0x48] sm:$0xff]
        %v395 = vld [vmem:[#allocation5 + $0x50] sm:$0xff]
        %v396 = vld [vmem:[#allocation5 + $0x58] sm:$0xff]
        %v397 = vld [vmem:[#allocation5 + $0x60] sm:$0xff]
        %v398 = vld [vmem:[#allocation5 + $0x68] sm:$0xff]
        %v399 = vld [vmem:[#allocation5 + $0x70] sm:$0xff]
        %v400 = vld [vmem:[#allocation5 + $0x78] sm:$0xff]
        %v401 = vld [vmem:[#allocation5 + $0x80] sm:$0xff]
        %v402 = vld [vmem:[#allocation5 + $0x88] sm:$0xff]
        %v403 = vld [vmem:[#allocation5 + $0x90] sm:$0xff]
        %v404 = vld [vmem:[#allocation5 + $0x98] sm:$0xff]
        %v405 = vld [vmem:[#allocation5 + $0xa0] sm:$0xff]
        %v406 = vld [vmem:[#allocation5 + $0xa8] sm:$0xff]
        %v407 = vld [vmem:[#allocation5 + $0xb0] sm:$0xff]
        %v408 = vld [vmem:[#allocation5 + $0xb8] sm:$0xff]
        %v409 = vld [vmem:[#allocation5 + $0xc0] sm:$0xff]
        %v410 = vld [vmem:[#allocation5 + $0xc8] sm:$0xff]
        %v411 = vld [vmem:[#allocation5 + $0xd0] sm:$0xff]
        %v412 = vld [vmem:[#allocation5 + $0xd8] sm:$0xff]
        %v413 = vld [vmem:[#allocation5 + $0xe0] sm:$0xff]
        %v414 = vld [vmem:[#allocation5 + $0xe8] sm:$0xff]
        %v415 = vld [vmem:[#allocation5 + $0xf0] sm:$0xff]
        %v416 = vld [vmem:[#allocation5 + $0xf8] sm:$0xff]
        %v417 = vld [vmem:[#allocation5 + $0x100] sm:$0xff]
        %v418 = vld [vmem:[#allocation5 + $0x108] sm:$0xff]
        %v419 = vld [vmem:[#allocation5 + $0x110] sm:$0xff]
        %v420 = vld [vmem:[#allocation5 + $0x118] sm:$0xff]
        %v421 = vld [vmem:[#allocation5 + $0x120] sm:$0xff]
        %v422 = vld [vmem:[#allocation5 + $0x128] sm:$0xff]
        %v423 = vld [vmem:[#allocation5 + $0x130] sm:$0xff]
        %v424 = vld [vmem:[#allocation5 + $0x138] sm:$0xff]
        %v425 = vld [vmem:[#allocation5 + $0x140] sm:$0xff]
        %v426 = vld [vmem:[#allocation5 + $0x148] sm:$0xff]
        %v427 = vld [vmem:[#allocation5 + $0x150] sm:$0xff]
        %v428 = vld [vmem:[#allocation5 + $0x158] sm:$0xff]
        %v429 = vld [vmem:[#allocation5 + $0x160] sm:$0xff]
        %v430 = vld [vmem:[#allocation5 + $0x168] sm:$0xff]
        %v431 = vld [vmem:[#allocation5 + $0x170] sm:$0xff]
        %v432 = vld [vmem:[#allocation5 + $0x178] sm:$0xff]
        %v433 = vld [vmem:[#allocation5 + $0x180] sm:$0xff]
        %v434 = vld [vmem:[#allocation5 + $0x188] sm:$0xff]
        %v435 = vld [vmem:[#allocation5 + $0x190] sm:$0xff]
        %v436 = vld [vmem:[#allocation5 + $0x198] sm:$0xff]
        %v437 = vld [vmem:[#allocation5 + $0x1a0] sm:$0xff]
        %v438 = vld [vmem:[#allocation5 + $0x1a8] sm:$0xff]
        %v439 = vld [vmem:[#allocation5 + $0x1b0] sm:$0xff]
        %v440 = vld [vmem:[#allocation5 + $0x1b8] sm:$0xff]
        %v441 = vld [vmem:[#allocation5 + $0x1c0] sm:$0xff]
        %v442 = vld [vmem:[#allocation5 + $0x1c8] sm:$0xff]
        %v443 = vld [vmem:[#allocation5 + $0x1d0] sm:$0xff]
        %v444 = vld [vmem:[#allocation5 + $0x1d8] sm:$0xff]
        %v445 = vld [vmem:[#allocation5 + $0x1e0] sm:$0xff]
        %v446 = vld [vmem:[#allocation5 + $0x1e8] sm:$0xff]
        %v447 = vld [vmem:[#allocation5 + $0x1f0] sm:$0xff]
        %v448 = vld [vmem:[#allocation5 + $0x1f8] sm:$0xff]
        %v449 = vld [vmem:[#allocation5 + $0x200] sm:$0xff]
        %v450 = vld [vmem:[#allocation5 + $0x208] sm:$0xff]
        %v451 = vld [vmem:[#allocation5 + $0x210] sm:$0xff]
        %v452 = vld [vmem:[#allocation5 + $0x218] sm:$0xff]
        %v453 = vld [vmem:[#allocation5 + $0x220] sm:$0xff]
        %v454 = vld [vmem:[#allocation5 + $0x228] sm:$0xff]
        %v455 = vld [vmem:[#allocation5 + $0x230] sm:$0xff]
        %v456 = vld [vmem:[#allocation5 + $0x238] sm:$0xff]
        %v457 = vld [vmem:[#allocation5 + $0x240] sm:$0xff]
        %v458 = vld [vmem:[#allocation5 + $0x248] sm:$0xff]
        %v459 = vld [vmem:[#allocation5 + $0x250] sm:$0xff]
        %v460 = vld [vmem:[#allocation5 + $0x258] sm:$0xff]
        %v461 = vld [vmem:[#allocation5 + $0x260] sm:$0xff]
        %v462 = vld [vmem:[#allocation5 + $0x268] sm:$0xff]
        %v463 = vld [vmem:[#allocation5 + $0x270] sm:$0xff]
        %v464 = vld [vmem:[#allocation5 + $0x278] sm:$0xff]
        %v465 = vld [vmem:[#allocation5 + $0x280] sm:$0xff]
        %v466 = vld [vmem:[#allocation5 + $0x288] sm:$0xff]
        %v467 = vld [vmem:[#allocation5 + $0x290] sm:$0xff]
        %v468 = vld [vmem:[#allocation5 + $0x298] sm:$0xff]
        %v469 = vld [vmem:[#allocation5 + $0x2a0] sm:$0xff]
        %v470 = vld [vmem:[#allocation5 + $0x2a8] sm:$0xff]
        %v471 = vld [vmem:[#allocation5 + $0x2b0] sm:$0xff]
        %v472 = vld [vmem:[#allocation5 + $0x2b8] sm:$0xff]
        %v473 = vld [vmem:[#allocation5 + $0x2c0] sm:$0xff]
        %v474 = vld [vmem:[#allocation5 + $0x2c8] sm:$0xff]
        %v475 = vld [vmem:[#allocation5 + $0x2d0] sm:$0xff]
        %v476 = vld [vmem:[#allocation5 + $0x2d8] sm:$0xff]
        %v477 = vld [vmem:[#allocation5 + $0x2e0] sm:$0xff]
        %v478 = vld [vmem:[#allocation5 + $0x2e8] sm:$0xff]
        %v479 = vld [vmem:[#allocation5 + $0x2f0] sm:$0xff]
        %v480 = vld [vmem:[#allocation5 + $0x2f8] sm:$0xff]
        %v481 = vld [vmem:[#allocation5 + $0x300] sm:$0xff]
        %v482 = vld [vmem:[#allocation5 + $0x308] sm:$0xff]
        %v483 = vld [vmem:[#allocation5 + $0x310] sm:$0xff]
        %v484 = vld [vmem:[#allocation5 + $0x318] sm:$0xff]
        %v485 = vld [vmem:[#allocation5 + $0x320] sm:$0xff]
        %v486 = vld [vmem:[#allocation5 + $0x328] sm:$0xff]
        %v487 = vld [vmem:[#allocation5 + $0x330] sm:$0xff]
        %v488 = vld [vmem:[#allocation5 + $0x338] sm:$0xff]
        %v489 = vld [vmem:[#allocation5 + $0x340] sm:$0xff]
        %v490 = vld [vmem:[#allocation5 + $0x348] sm:$0xff]
        %v491 = vld [vmem:[#allocation5 + $0x350] sm:$0xff]
        %v492 = vld [vmem:[#allocation5 + $0x358] sm:$0xff]
        %v493 = vld [vmem:[#allocation5 + $0x360] sm:$0xff]
        %v494 = vld [vmem:[#allocation5 + $0x368] sm:$0xff]
        %v495 = vld [vmem:[#allocation5 + $0x370] sm:$0xff]
        %v496 = vld [vmem:[#allocation5 + $0x378] sm:$0xff]
        %v497 = vld [vmem:[#allocation5 + $0x380] sm:$0xff]
        %v498 = vld [vmem:[#allocation5 + $0x388] sm:$0xff]
        %v499 = vld [vmem:[#allocation5 + $0x390] sm:$0xff]
        %v500 = vld [vmem:[#allocation5 + $0x398] sm:$0xff]
        %v501 = vld [vmem:[#allocation5 + $0x3a0] sm:$0xff]
        %v502 = vld [vmem:[#allocation5 + $0x3a8] sm:$0xff]
        %v503 = vld [vmem:[#allocation5 + $0x3b0] sm:$0xff]
        %v504 = vld [vmem:[#allocation5 + $0x3b8] sm:$0xff]
        %v505 = vld [vmem:[#allocation5 + $0x3c0] sm:$0xff]
        %v506 = vld [vmem:[#allocation5 + $0x3c8] sm:$0xff]
        %v507 = vld [vmem:[#allocation5 + $0x3d0] sm:$0xff]
        %v508 = vld [vmem:[#allocation5 + $0x3d8] sm:$0xff]
        %v509 = vld [vmem:[#allocation5 + $0x3e0] sm:$0xff]
        %v510 = vld [vmem:[#allocation5 + $0x3e8] sm:$0xff]
        %v511 = vld [vmem:[#allocation5 + $0x3f0] sm:$0xff]
        %v512 = vld [vmem:[#allocation5 + $0x3f8] sm:$0xff]
        %v513 = vld [vmem:[#allocation7] sm:$0xff]
        %v515 = vperm.slane %v513, 0
        %v516 = vperm.slane %v513, 1
        %v517 = vperm.slane %v513, 2
        %v518 = vperm.slane %v513, 3
        %v519 = vperm.slane %v513, 4
        %v520 = vperm.slane %v513, 5
        %v521 = vperm.slane %v513, 6
        %v522 = vperm.slane %v513, 7
        %v659 = vunpack.c.l.b16 %v385
        %v660 = vunpack.c.h.b16 %v385
        %v661 = vunpack.c.l.b16 %v386
        %v662 = vunpack.c.h.b16 %v386
        %v663 = vunpack.c.l.b16 %v387
        %v664 = vunpack.c.h.b16 %v387
        %v665 = vunpack.c.l.b16 %v388
        %v666 = vunpack.c.h.b16 %v388
        %v667 = vunpack.c.l.b16 %v389
        %v668 = vunpack.c.h.b16 %v389
        %v669 = vunpack.c.l.b16 %v390
        %v670 = vunpack.c.h.b16 %v390
        %v671 = vunpack.c.l.b16 %v391
        %v672 = vunpack.c.h.b16 %v391
        %v673 = vunpack.c.l.b16 %v392
        %v674 = vunpack.c.h.b16 %v392
        %v675 = vunpack.c.l.b16 %v393
        %v676 = vunpack.c.h.b16 %v393
        %v677 = vunpack.c.l.b16 %v394
        %v678 = vunpack.c.h.b16 %v394
        %v679 = vunpack.c.l.b16 %v395
        %v680 = vunpack.c.h.b16 %v395
        %v681 = vunpack.c.l.b16 %v396
        %v682 = vunpack.c.h.b16 %v396
        %v683 = vunpack.c.l.b16 %v397
        %v684 = vunpack.c.h.b16 %v397
        %v685 = vunpack.c.l.b16 %v398
        %v686 = vunpack.c.h.b16 %v398
        %v687 = vunpack.c.l.b16 %v399
        %v688 = vunpack.c.h.b16 %v399
        %v689 = vunpack.c.l.b16 %v400
        %v690 = vunpack.c.h.b16 %v400
        %v691 = vunpack.c.l.b16 %v401
        %v692 = vunpack.c.h.b16 %v401
        %v693 = vunpack.c.l.b16 %v402
        %v694 = vunpack.c.h.b16 %v402
        %v695 = vunpack.c.l.b16 %v403
        %v696 = vunpack.c.h.b16 %v403
        %v697 = vunpack.c.l.b16 %v404
        %v698 = vunpack.c.h.b16 %v404
        %v699 = vunpack.c.l.b16 %v405
        %v700 = vunpack.c.h.b16 %v405
        %v701 = vunpack.c.l.b16 %v406
        %v702 = vunpack.c.h.b16 %v406
        %v703 = vunpack.c.l.b16 %v407
        %v704 = vunpack.c.h.b16 %v407
        %v705 = vunpack.c.l.b16 %v408
        %v706 = vunpack.c.h.b16 %v408
        %v707 = vunpack.c.l.b16 %v409
        %v708 = vunpack.c.h.b16 %v409
        %v709 = vunpack.c.l.b16 %v410
        %v710 = vunpack.c.h.b16 %v410
        %v711 = vunpack.c.l.b16 %v411
        %v712 = vunpack.c.h.b16 %v411
        %v713 = vunpack.c.l.b16 %v412
        %v714 = vunpack.c.h.b16 %v412
        %v715 = vunpack.c.l.b16 %v413
        %v716 = vunpack.c.h.b16 %v413
        %v717 = vunpack.c.l.b16 %v414
        %v718 = vunpack.c.h.b16 %v414
        %v719 = vunpack.c.l.b16 %v415
        %v720 = vunpack.c.h.b16 %v415
        %v721 = vunpack.c.l.b16 %v416
        %v722 = vunpack.c.h.b16 %v416
        %v723 = vunpack.c.l.b16 %v417
        %v724 = vunpack.c.h.b16 %v417
        %v725 = vunpack.c.l.b16 %v418
        %v726 = vunpack.c.h.b16 %v418
        %v727 = vunpack.c.l.b16 %v419
        %v728 = vunpack.c.h.b16 %v419
        %v729 = vunpack.c.l.b16 %v420
        %v730 = vunpack.c.h.b16 %v420
        %v731 = vunpack.c.l.b16 %v421
        %v732 = vunpack.c.h.b16 %v421
        %v733 = vunpack.c.l.b16 %v422
        %v734 = vunpack.c.h.b16 %v422
        %v735 = vunpack.c.l.b16 %v423
        %v736 = vunpack.c.h.b16 %v423
        %v737 = vunpack.c.l.b16 %v424
        %v738 = vunpack.c.h.b16 %v424
        %v739 = vunpack.c.l.b16 %v425
        %v740 = vunpack.c.h.b16 %v425
        %v741 = vunpack.c.l.b16 %v426
        %v742 = vunpack.c.h.b16 %v426
        %v743 = vunpack.c.l.b16 %v427
        %v744 = vunpack.c.h.b16 %v427
        %v745 = vunpack.c.l.b16 %v428
        %v746 = vunpack.c.h.b16 %v428
        %v747 = vunpack.c.l.b16 %v429
        %v748 = vunpack.c.h.b16 %v429
        %v749 = vunpack.c.l.b16 %v430
        %v750 = vunpack.c.h.b16 %v430
        %v751 = vunpack.c.l.b16 %v431
        %v752 = vunpack.c.h.b16 %v431
        %v753 = vunpack.c.l.b16 %v432
        %v754 = vunpack.c.h.b16 %v432
        %v755 = vunpack.c.l.b16 %v433
        %v756 = vunpack.c.h.b16 %v433
        %v757 = vunpack.c.l.b16 %v434
        %v758 = vunpack.c.h.b16 %v434
        %v759 = vunpack.c.l.b16 %v435
        %v760 = vunpack.c.h.b16 %v435
        %v761 = vunpack.c.l.b16 %v436
        %v762 = vunpack.c.h.b16 %v436
        %v763 = vunpack.c.l.b16 %v437
        %v764 = vunpack.c.h.b16 %v437
        %v765 = vunpack.c.l.b16 %v438
        %v766 = vunpack.c.h.b16 %v438
        %v767 = vunpack.c.l.b16 %v439
        %v768 = vunpack.c.h.b16 %v439
        %v769 = vunpack.c.l.b16 %v440
        %v770 = vunpack.c.h.b16 %v440
        %v771 = vunpack.c.l.b16 %v441
        %v772 = vunpack.c.h.b16 %v441
        %v773 = vunpack.c.l.b16 %v442
        %v774 = vunpack.c.h.b16 %v442
        %v775 = vunpack.c.l.b16 %v443
        %v776 = vunpack.c.h.b16 %v443
        %v777 = vunpack.c.l.b16 %v444
        %v778 = vunpack.c.h.b16 %v444
        %v779 = vunpack.c.l.b16 %v445
        %v780 = vunpack.c.h.b16 %v445
        %v781 = vunpack.c.l.b16 %v446
        %v782 = vunpack.c.h.b16 %v446
        %v783 = vunpack.c.l.b16 %v447
        %v784 = vunpack.c.h.b16 %v447
        %v785 = vunpack.c.l.b16 %v448
        %v786 = vunpack.c.h.b16 %v448
        %v787 = vunpack.c.l.b16 %v449
        %v788 = vunpack.c.h.b16 %v449
        %v789 = vunpack.c.l.b16 %v450
        %v790 = vunpack.c.h.b16 %v450
        %v791 = vunpack.c.l.b16 %v451
        %v792 = vunpack.c.h.b16 %v451
        %v793 = vunpack.c.l.b16 %v452
        %v794 = vunpack.c.h.b16 %v452
        %v795 = vunpack.c.l.b16 %v453
        %v796 = vunpack.c.h.b16 %v453
        %v797 = vunpack.c.l.b16 %v454
        %v798 = vunpack.c.h.b16 %v454
        %v799 = vunpack.c.l.b16 %v455
        %v800 = vunpack.c.h.b16 %v455
        %v801 = vunpack.c.l.b16 %v456
        %v802 = vunpack.c.h.b16 %v456
        %v803 = vunpack.c.l.b16 %v457
        %v804 = vunpack.c.h.b16 %v457
        %v805 = vunpack.c.l.b16 %v458
        %v806 = vunpack.c.h.b16 %v458
        %v807 = vunpack.c.l.b16 %v459
        %v808 = vunpack.c.h.b16 %v459
        %v809 = vunpack.c.l.b16 %v460
        %v810 = vunpack.c.h.b16 %v460
        %v811 = vunpack.c.l.b16 %v461
        %v812 = vunpack.c.h.b16 %v461
        %v813 = vunpack.c.l.b16 %v462
        %v814 = vunpack.c.h.b16 %v462
        %v815 = vunpack.c.l.b16 %v463
        %v816 = vunpack.c.h.b16 %v463
        %v817 = vunpack.c.l.b16 %v464
        %v818 = vunpack.c.h.b16 %v464
        %v819 = vunpack.c.l.b16 %v465
        %v820 = vunpack.c.h.b16 %v465
        %v821 = vunpack.c.l.b16 %v466
        %v822 = vunpack.c.h.b16 %v466
        %v823 = vunpack.c.l.b16 %v467
        %v824 = vunpack.c.h.b16 %v467
        %v825 = vunpack.c.l.b16 %v468
        %v826 = vunpack.c.h.b16 %v468
        %v827 = vunpack.c.l.b16 %v469
        %v828 = vunpack.c.h.b16 %v469
        %v829 = vunpack.c.l.b16 %v470
        %v830 = vunpack.c.h.b16 %v470
        %v831 = vunpack.c.l.b16 %v471
        %v832 = vunpack.c.h.b16 %v471
        %v833 = vunpack.c.l.b16 %v472
        %v834 = vunpack.c.h.b16 %v472
        %v835 = vunpack.c.l.b16 %v473
        %v836 = vunpack.c.h.b16 %v473
        %v837 = vunpack.c.l.b16 %v474
        %v838 = vunpack.c.h.b16 %v474
        %v839 = vunpack.c.l.b16 %v475
        %v840 = vunpack.c.h.b16 %v475
        %v841 = vunpack.c.l.b16 %v476
        %v842 = vunpack.c.h.b16 %v476
        %v843 = vunpack.c.l.b16 %v477
        %v844 = vunpack.c.h.b16 %v477
        %v845 = vunpack.c.l.b16 %v478
        %v846 = vunpack.c.h.b16 %v478
        %v847 = vunpack.c.l.b16 %v479
        %v848 = vunpack.c.h.b16 %v479
        %v849 = vunpack.c.l.b16 %v480
        %v850 = vunpack.c.h.b16 %v480
        %v851 = vunpack.c.l.b16 %v481
        %v852 = vunpack.c.h.b16 %v481
        %v853 = vunpack.c.l.b16 %v482
        %v854 = vunpack.c.h.b16 %v482
        %v855 = vunpack.c.l.b16 %v483
        %v856 = vunpack.c.h.b16 %v483
        %v857 = vunpack.c.l.b16 %v484
        %v858 = vunpack.c.h.b16 %v484
        %v859 = vunpack.c.l.b16 %v485
        %v860 = vunpack.c.h.b16 %v485
        %v861 = vunpack.c.l.b16 %v486
        %v862 = vunpack.c.h.b16 %v486
        %v863 = vunpack.c.l.b16 %v487
        %v864 = vunpack.c.h.b16 %v487
        %v865 = vunpack.c.l.b16 %v488
        %v866 = vunpack.c.h.b16 %v488
        %v867 = vunpack.c.l.b16 %v489
        %v868 = vunpack.c.h.b16 %v489
        %v869 = vunpack.c.l.b16 %v490
        %v870 = vunpack.c.h.b16 %v490
        %v871 = vunpack.c.l.b16 %v491
        %v872 = vunpack.c.h.b16 %v491
        %v873 = vunpack.c.l.b16 %v492
        %v874 = vunpack.c.h.b16 %v492
        %v875 = vunpack.c.l.b16 %v493
        %v876 = vunpack.c.h.b16 %v493
        %v877 = vunpack.c.l.b16 %v494
        %v878 = vunpack.c.h.b16 %v494
        %v879 = vunpack.c.l.b16 %v495
        %v880 = vunpack.c.h.b16 %v495
        %v881 = vunpack.c.l.b16 %v496
        %v882 = vunpack.c.h.b16 %v496
        %v883 = vunpack.c.l.b16 %v497
        %v884 = vunpack.c.h.b16 %v497
        %v885 = vunpack.c.l.b16 %v498
        %v886 = vunpack.c.h.b16 %v498
        %v887 = vunpack.c.l.b16 %v499
        %v888 = vunpack.c.h.b16 %v499
        %v889 = vunpack.c.l.b16 %v500
        %v890 = vunpack.c.h.b16 %v500
        %v891 = vunpack.c.l.b16 %v501
        %v892 = vunpack.c.h.b16 %v501
        %v893 = vunpack.c.l.b16 %v502
        %v894 = vunpack.c.h.b16 %v502
        %v895 = vunpack.c.l.b16 %v503
        %v896 = vunpack.c.h.b16 %v503
        %v897 = vunpack.c.l.b16 %v504
        %v898 = vunpack.c.h.b16 %v504
        %v899 = vunpack.c.l.b16 %v505
        %v900 = vunpack.c.h.b16 %v505
        %v901 = vunpack.c.l.b16 %v506
        %v902 = vunpack.c.h.b16 %v506
        %v903 = vunpack.c.l.b16 %v507
        %v904 = vunpack.c.h.b16 %v507
        %v905 = vunpack.c.l.b16 %v508
        %v906 = vunpack.c.h.b16 %v508
        %v907 = vunpack.c.l.b16 %v509
        %v908 = vunpack.c.h.b16 %v509
        %v909 = vunpack.c.l.b16 %v510
        %v910 = vunpack.c.h.b16 %v510
        %v911 = vunpack.c.l.b16 %v511
        %v912 = vunpack.c.h.b16 %v511
        %v913 = vunpack.c.l.b16 %v512
        %v914 = vunpack.c.h.b16 %v512
        %v915 = vpack.c.b16 %v667, %v659
        %v916 = vpack.c.b16 %v668, %v660
        %v917 = vpack.c.b16 %v669, %v661
        %v918 = vpack.c.b16 %v670, %v662
        %v919 = vpack.c.b16 %v671, %v663
        %v920 = vpack.c.b16 %v672, %v664
        %v921 = vpack.c.b16 %v673, %v665
        %v922 = vpack.c.b16 %v674, %v666
        %v923 = vpack.c.b16 %v683, %v675
        %v924 = vpack.c.b16 %v684, %v676
        %v925 = vpack.c.b16 %v685, %v677
        %v926 = vpack.c.b16 %v686, %v678
        %v927 = vpack.c.b16 %v687, %v679
        %v928 = vpack.c.b16 %v688, %v680
        %v929 = vpack.c.b16 %v689, %v681
        %v930 = vpack.c.b16 %v690, %v682
        %v931 = vpack.c.b16 %v699, %v691
        %v932 = vpack.c.b16 %v700, %v692
        %v933 = vpack.c.b16 %v701, %v693
        %v934 = vpack.c.b16 %v702, %v694
        %v935 = vpack.c.b16 %v703, %v695
        %v936 = vpack.c.b16 %v704, %v696
        %v937 = vpack.c.b16 %v705, %v697
        %v938 = vpack.c.b16 %v706, %v698
        %v939 = vpack.c.b16 %v715, %v707
        %v940 = vpack.c.b16 %v716, %v708
        %v941 = vpack.c.b16 %v717, %v709
        %v942 = vpack.c.b16 %v718, %v710
        %v943 = vpack.c.b16 %v719, %v711
        %v944 = vpack.c.b16 %v720, %v712
        %v945 = vpack.c.b16 %v721, %v713
        %v946 = vpack.c.b16 %v722, %v714
        %v947 = vpack.c.b16 %v731, %v723
        %v948 = vpack.c.b16 %v732, %v724
        %v949 = vpack.c.b16 %v733, %v725
        %v950 = vpack.c.b16 %v734, %v726
        %v951 = vpack.c.b16 %v735, %v727
        %v952 = vpack.c.b16 %v736, %v728
        %v953 = vpack.c.b16 %v737, %v729
        %v954 = vpack.c.b16 %v738, %v730
        %v955 = vpack.c.b16 %v747, %v739
        %v956 = vpack.c.b16 %v748, %v740
        %v957 = vpack.c.b16 %v749, %v741
        %v958 = vpack.c.b16 %v750, %v742
        %v959 = vpack.c.b16 %v751, %v743
        %v960 = vpack.c.b16 %v752, %v744
        %v961 = vpack.c.b16 %v753, %v745
        %v962 = vpack.c.b16 %v754, %v746
        %v963 = vpack.c.b16 %v763, %v755
        %v964 = vpack.c.b16 %v764, %v756
        %v965 = vpack.c.b16 %v765, %v757
        %v966 = vpack.c.b16 %v766, %v758
        %v967 = vpack.c.b16 %v767, %v759
        %v968 = vpack.c.b16 %v768, %v760
        %v969 = vpack.c.b16 %v769, %v761
        %v970 = vpack.c.b16 %v770, %v762
        %v971 = vpack.c.b16 %v779, %v771
        %v972 = vpack.c.b16 %v780, %v772
        %v973 = vpack.c.b16 %v781, %v773
        %v974 = vpack.c.b16 %v782, %v774
        %v975 = vpack.c.b16 %v783, %v775
        %v976 = vpack.c.b16 %v784, %v776
        %v977 = vpack.c.b16 %v785, %v777
        %v978 = vpack.c.b16 %v786, %v778
        %v979 = vpack.c.b16 %v795, %v787
        %v980 = vpack.c.b16 %v796, %v788
        %v981 = vpack.c.b16 %v797, %v789
        %v982 = vpack.c.b16 %v798, %v790
        %v983 = vpack.c.b16 %v799, %v791
        %v984 = vpack.c.b16 %v800, %v792
        %v985 = vpack.c.b16 %v801, %v793
        %v986 = vpack.c.b16 %v802, %v794
        %v987 = vpack.c.b16 %v811, %v803
        %v988 = vpack.c.b16 %v812, %v804
        %v989 = vpack.c.b16 %v813, %v805
        %v990 = vpack.c.b16 %v814, %v806
        %v991 = vpack.c.b16 %v815, %v807
        %v992 = vpack.c.b16 %v816, %v808
        %v993 = vpack.c.b16 %v817, %v809
        %v994 = vpack.c.b16 %v818, %v810
        %v995 = vpack.c.b16 %v827, %v819
        %v996 = vpack.c.b16 %v828, %v820
        %v997 = vpack.c.b16 %v829, %v821
        %v998 = vpack.c.b16 %v830, %v822
        %v999 = vpack.c.b16 %v831, %v823
        %v1000 = vpack.c.b16 %v832, %v824
        %v1001 = vpack.c.b16 %v833, %v825
        %v1002 = vpack.c.b16 %v834, %v826
        %v1003 = vpack.c.b16 %v843, %v835
        %v1004 = vpack.c.b16 %v844, %v836
        %v1005 = vpack.c.b16 %v845, %v837
        %v1006 = vpack.c.b16 %v846, %v838
        %v1007 = vpack.c.b16 %v847, %v839
        %v1008 = vpack.c.b16 %v848, %v840
        %v1009 = vpack.c.b16 %v849, %v841
        %v1010 = vpack.c.b16 %v850, %v842
        %v1011 = vpack.c.b16 %v859, %v851
        %v1012 = vpack.c.b16 %v860, %v852
        %v1013 = vpack.c.b16 %v861, %v853
        %v1014 = vpack.c.b16 %v862, %v854
        %v1015 = vpack.c.b16 %v863, %v855
        %v1016 = vpack.c.b16 %v864, %v856
        %v1017 = vpack.c.b16 %v865, %v857
        %v1018 = vpack.c.b16 %v866, %v858
        %v1019 = vpack.c.b16 %v875, %v867
        %v1020 = vpack.c.b16 %v876, %v868
        %v1021 = vpack.c.b16 %v877, %v869
        %v1022 = vpack.c.b16 %v878, %v870
        %v1023 = vpack.c.b16 %v879, %v871
        %v1024 = vpack.c.b16 %v880, %v872
        %v1025 = vpack.c.b16 %v881, %v873
        %v1026 = vpack.c.b16 %v882, %v874
        %v1027 = vpack.c.b16 %v891, %v883
        %v1028 = vpack.c.b16 %v892, %v884
        %v1029 = vpack.c.b16 %v893, %v885
        %v1030 = vpack.c.b16 %v894, %v886
        %v1031 = vpack.c.b16 %v895, %v887
        %v1032 = vpack.c.b16 %v896, %v888
        %v1033 = vpack.c.b16 %v897, %v889
        %v1034 = vpack.c.b16 %v898, %v890
        %v1035 = vpack.c.b16 %v907, %v899
        %v1036 = vpack.c.b16 %v908, %v900
        %v1037 = vpack.c.b16 %v909, %v901
        %v1038 = vpack.c.b16 %v910, %v902
        %v1039 = vpack.c.b16 %v911, %v903
        %v1040 = vpack.c.b16 %v912, %v904
        %v1041 = vpack.c.b16 %v913, %v905
        %v1042 = vpack.c.b16 %v914, %v906
        %1171 = vmatpush.bf16.msra.mxu0 %v971
        %1172 = vmatpush.bf16.msra.mxu0 %v963
        %1173 = vmatpush.bf16.msra.mxu0 %v955
        %1174 = vmatpush.bf16.msra.mxu0 %v947
        %1175 = vmatpush.bf16.msra.mxu0 %v939
        %1176 = vmatpush.bf16.msra.mxu0 %v931
        %1177 = vmatpush.bf16.msra.mxu0 %v923
        %1178 = vmatpush.bf16.msra.mxu0 %v915
        %1179 = vmatmul.bf16.gmra.mxu0 %v377
        %v1180 = vpop.f32.mrf.mxu0
        %v1181 = vadd.f32 %v515, %v1180
        %v1182 = vpop.f32.mrf.mxu0
        %v1183 = vadd.f32 %v515, %v1182
        %1184 = vmatmul.bf16.gmra.mxu0 %v379
        %v1185 = vpop.f32.mrf.mxu0
        %v1186 = vadd.f32 %v515, %v1185
        %v1187 = vpop.f32.mrf.mxu0
        %v1188 = vadd.f32 %v515, %v1187
        %1189 = vmatmul.bf16.gmra.mxu0 %v381
        %v1190 = vpop.f32.mrf.mxu0
        %v1191 = vadd.f32 %v515, %v1190
        %v1192 = vpop.f32.mrf.mxu0
        %v1193 = vadd.f32 %v515, %v1192
        %1194 = vmatmul.bf16.gmra.mxu0 %v383
        %v1195 = vpop.f32.mrf.mxu0
        %v1196 = vadd.f32 %v515, %v1195
        %v1197 = vpop.f32.mrf.mxu0
        %v1198 = vadd.f32 %v515, %v1197
        %1199 = vdwg.mxu0
        %1200 = vmatpush.bf16.msra.mxu0 %v1035
        %1201 = vmatpush.bf16.msra.mxu0 %v1027
        %1202 = vmatpush.bf16.msra.mxu0 %v1019
        %1203 = vmatpush.bf16.msra.mxu0 %v1011
        %1204 = vmatpush.bf16.msra.mxu0 %v1003
        %1205 = vmatpush.bf16.msra.mxu0 %v995
        %1206 = vmatpush.bf16.msra.mxu0 %v987
        %1207 = vmatpush.bf16.msra.mxu0 %v979
        %1208 = vmatmul.bf16.gmra.mxu0 %v378
        %v1209 = vpop.f32.mrf.mxu0
        %v1210 = vadd.f32 %v1181, %v1209
        %v1211 = vpop.f32.mrf.mxu0
        %v1212 = vadd.f32 %v1183, %v1211
        %1213 = vmatmul.bf16.gmra.mxu0 %v380
        %v1214 = vpop.f32.mrf.mxu0
        %v1215 = vadd.f32 %v1186, %v1214
        %v1216 = vpop.f32.mrf.mxu0
        %v1217 = vadd.f32 %v1188, %v1216
        %1218 = vmatmul.bf16.gmra.mxu0 %v382
        %v1219 = vpop.f32.mrf.mxu0
        %v1220 = vadd.f32 %v1191, %v1219
        %v1221 = vpop.f32.mrf.mxu0
        %v1222 = vadd.f32 %v1193, %v1221
        %1223 = vmatmul.bf16.gmra.mxu0 %v384
        %v1224 = vpop.f32.mrf.mxu0
        %v1225 = vadd.f32 %v1196, %v1224
        %v1226 = vpop.f32.mrf.mxu0
        %v1227 = vadd.f32 %v1198, %v1226
        %1228 = vdwg.mxu0
        %1229 = vmatpush.bf16.msra.mxu0 %v972
        %1230 = vmatpush.bf16.msra.mxu0 %v964
        %1231 = vmatpush.bf16.msra.mxu0 %v956
        %1232 = vmatpush.bf16.msra.mxu0 %v948
        %1233 = vmatpush.bf16.msra.mxu0 %v940
        %1234 = vmatpush.bf16.msra.mxu0 %v932
        %1235 = vmatpush.bf16.msra.mxu0 %v924
        %1236 = vmatpush.bf16.msra.mxu0 %v916
        %1237 = vmatmul.bf16.gmra.mxu0 %v377
        %v1238 = vpop.f32.mrf.mxu0
        %v1239 = vadd.f32 %v516, %v1238
        %v1240 = vpop.f32.mrf.mxu0
        %v1241 = vadd.f32 %v516, %v1240
        %1242 = vmatmul.bf16.gmra.mxu0 %v379
        %v1243 = vpop.f32.mrf.mxu0
        %v1244 = vadd.f32 %v516, %v1243
        %v1245 = vpop.f32.mrf.mxu0
        %v1246 = vadd.f32 %v516, %v1245
        %1247 = vmatmul.bf16.gmra.mxu0 %v381
        %v1248 = vpop.f32.mrf.mxu0
        %v1249 = vadd.f32 %v516, %v1248
        %v1250 = vpop.f32.mrf.mxu0
        %v1251 = vadd.f32 %v516, %v1250
        %1252 = vmatmul.bf16.gmra.mxu0 %v383
        %v1253 = vpop.f32.mrf.mxu0
        %v1254 = vadd.f32 %v516, %v1253
        %v1255 = vpop.f32.mrf.mxu0
        %v1256 = vadd.f32 %v516, %v1255
        %1257 = vdwg.mxu0
        %1258 = vmatpush.bf16.msra.mxu0 %v1036
        %1259 = vmatpush.bf16.msra.mxu0 %v1028
        %1260 = vmatpush.bf16.msra.mxu0 %v1020
        %1261 = vmatpush.bf16.msra.mxu0 %v1012
        %1262 = vmatpush.bf16.msra.mxu0 %v1004
        %1263 = vmatpush.bf16.msra.mxu0 %v996
        %1264 = vmatpush.bf16.msra.mxu0 %v988
        %1265 = vmatpush.bf16.msra.mxu0 %v980
        %1266 = vmatmul.bf16.gmra.mxu0 %v378
        %v1267 = vpop.f32.mrf.mxu0
        %v1268 = vadd.f32 %v1239, %v1267
        %v1269 = vpop.f32.mrf.mxu0
        %v1270 = vadd.f32 %v1241, %v1269
        %1271 = vmatmul.bf16.gmra.mxu0 %v380
        %v1272 = vpop.f32.mrf.mxu0
        %v1273 = vadd.f32 %v1244, %v1272
        %v1274 = vpop.f32.mrf.mxu0
        %v1275 = vadd.f32 %v1246, %v1274
        %1276 = vmatmul.bf16.gmra.mxu0 %v382
        %v1277 = vpop.f32.mrf.mxu0
        %v1278 = vadd.f32 %v1249, %v1277
        %v1279 = vpop.f32.mrf.mxu0
        %v1280 = vadd.f32 %v1251, %v1279
        %1281 = vmatmul.bf16.gmra.mxu0 %v384
        %v1282 = vpop.f32.mrf.mxu0
        %v1283 = vadd.f32 %v1254, %v1282
        %v1284 = vpop.f32.mrf.mxu0
        %v1285 = vadd.f32 %v1256, %v1284
        %1286 = vdwg.mxu0
        %1287 = vmatpush.bf16.msra.mxu0 %v973
        %1288 = vmatpush.bf16.msra.mxu0 %v965
        %1289 = vmatpush.bf16.msra.mxu0 %v957
        %1290 = vmatpush.bf16.msra.mxu0 %v949
        %1291 = vmatpush.bf16.msra.mxu0 %v941
        %1292 = vmatpush.bf16.msra.mxu0 %v933
        %1293 = vmatpush.bf16.msra.mxu0 %v925
        %1294 = vmatpush.bf16.msra.mxu0 %v917
        %1295 = vmatmul.bf16.gmra.mxu0 %v377
        %v1296 = vpop.f32.mrf.mxu0
        %v1297 = vadd.f32 %v517, %v1296
        %v1298 = vpop.f32.mrf.mxu0
        %v1299 = vadd.f32 %v517, %v1298
        %1300 = vmatmul.bf16.gmra.mxu0 %v379
        %v1301 = vpop.f32.mrf.mxu0
        %v1302 = vadd.f32 %v517, %v1301
        %v1303 = vpop.f32.mrf.mxu0
        %v1304 = vadd.f32 %v517, %v1303
        %1305 = vmatmul.bf16.gmra.mxu0 %v381
        %v1306 = vpop.f32.mrf.mxu0
        %v1307 = vadd.f32 %v517, %v1306
        %v1308 = vpop.f32.mrf.mxu0
        %v1309 = vadd.f32 %v517, %v1308
        %1310 = vmatmul.bf16.gmra.mxu0 %v383
        %v1311 = vpop.f32.mrf.mxu0
        %v1312 = vadd.f32 %v517, %v1311
        %v1313 = vpop.f32.mrf.mxu0
        %v1314 = vadd.f32 %v517, %v1313
        %1315 = vdwg.mxu0
        %1316 = vmatpush.bf16.msra.mxu0 %v1037
        %1317 = vmatpush.bf16.msra.mxu0 %v1029
        %1318 = vmatpush.bf16.msra.mxu0 %v1021
        %1319 = vmatpush.bf16.msra.mxu0 %v1013
        %1320 = vmatpush.bf16.msra.mxu0 %v1005
        %1321 = vmatpush.bf16.msra.mxu0 %v997
        %1322 = vmatpush.bf16.msra.mxu0 %v989
        %1323 = vmatpush.bf16.msra.mxu0 %v981
        %1324 = vmatmul.bf16.gmra.mxu0 %v378
        %v1325 = vpop.f32.mrf.mxu0
        %v1326 = vadd.f32 %v1297, %v1325
        %v1327 = vpop.f32.mrf.mxu0
        %v1328 = vadd.f32 %v1299, %v1327
        %1329 = vmatmul.bf16.gmra.mxu0 %v380
        %v1330 = vpop.f32.mrf.mxu0
        %v1331 = vadd.f32 %v1302, %v1330
        %v1332 = vpop.f32.mrf.mxu0
        %v1333 = vadd.f32 %v1304, %v1332
        %1334 = vmatmul.bf16.gmra.mxu0 %v382
        %v1335 = vpop.f32.mrf.mxu0
        %v1336 = vadd.f32 %v1307, %v1335
        %v1337 = vpop.f32.mrf.mxu0
        %v1338 = vadd.f32 %v1309, %v1337
        %1339 = vmatmul.bf16.gmra.mxu0 %v384
        %v1340 = vpop.f32.mrf.mxu0
        %v1341 = vadd.f32 %v1312, %v1340
        %v1342 = vpop.f32.mrf.mxu0
        %v1343 = vadd.f32 %v1314, %v1342
        %1344 = vdwg.mxu0
        %1345 = vmatpush.bf16.msra.mxu0 %v974
        %1346 = vmatpush.bf16.msra.mxu0 %v966
        %1347 = vmatpush.bf16.msra.mxu0 %v958
        %1348 = vmatpush.bf16.msra.mxu0 %v950
        %1349 = vmatpush.bf16.msra.mxu0 %v942
        %1350 = vmatpush.bf16.msra.mxu0 %v934
        %1351 = vmatpush.bf16.msra.mxu0 %v926
        %1352 = vmatpush.bf16.msra.mxu0 %v918
        %1353 = vmatmul.bf16.gmra.mxu0 %v377
        %v1354 = vpop.f32.mrf.mxu0
        %v1355 = vadd.f32 %v518, %v1354
        %v1356 = vpop.f32.mrf.mxu0
        %v1357 = vadd.f32 %v518, %v1356
        %1358 = vmatmul.bf16.gmra.mxu0 %v379
        %v1359 = vpop.f32.mrf.mxu0
        %v1360 = vadd.f32 %v518, %v1359
        %v1361 = vpop.f32.mrf.mxu0
        %v1362 = vadd.f32 %v518, %v1361
        %1363 = vmatmul.bf16.gmra.mxu0 %v381
        %v1364 = vpop.f32.mrf.mxu0
        %v1365 = vadd.f32 %v518, %v1364
        %v1366 = vpop.f32.mrf.mxu0
        %v1367 = vadd.f32 %v518, %v1366
        %1368 = vmatmul.bf16.gmra.mxu0 %v383
        %v1369 = vpop.f32.mrf.mxu0
        %v1370 = vadd.f32 %v518, %v1369
        %v1371 = vpop.f32.mrf.mxu0
        %v1372 = vadd.f32 %v518, %v1371
        %1373 = vdwg.mxu0
        %1374 = vmatpush.bf16.msra.mxu0 %v1038
        %1375 = vmatpush.bf16.msra.mxu0 %v1030
        %1376 = vmatpush.bf16.msra.mxu0 %v1022
        %1377 = vmatpush.bf16.msra.mxu0 %v1014
        %1378 = vmatpush.bf16.msra.mxu0 %v1006
        %1379 = vmatpush.bf16.msra.mxu0 %v998
        %1380 = vmatpush.bf16.msra.mxu0 %v990
        %1381 = vmatpush.bf16.msra.mxu0 %v982
        %1382 = vmatmul.bf16.gmra.mxu0 %v378
        %v1383 = vpop.f32.mrf.mxu0
        %v1384 = vadd.f32 %v1355, %v1383
        %v1385 = vpop.f32.mrf.mxu0
        %v1386 = vadd.f32 %v1357, %v1385
        %1387 = vmatmul.bf16.gmra.mxu0 %v380
        %v1388 = vpop.f32.mrf.mxu0
        %v1389 = vadd.f32 %v1360, %v1388
        %v1390 = vpop.f32.mrf.mxu0
        %v1391 = vadd.f32 %v1362, %v1390
        %1392 = vmatmul.bf16.gmra.mxu0 %v382
        %v1393 = vpop.f32.mrf.mxu0
        %v1394 = vadd.f32 %v1365, %v1393
        %v1395 = vpop.f32.mrf.mxu0
        %v1396 = vadd.f32 %v1367, %v1395
        %1397 = vmatmul.bf16.gmra.mxu0 %v384
        %v1398 = vpop.f32.mrf.mxu0
        %v1399 = vadd.f32 %v1370, %v1398
        %v1400 = vpop.f32.mrf.mxu0
        %v1401 = vadd.f32 %v1372, %v1400
        %1402 = vdwg.mxu0
        %1403 = vmatpush.bf16.msra.mxu0 %v975
        %1404 = vmatpush.bf16.msra.mxu0 %v967
        %1405 = vmatpush.bf16.msra.mxu0 %v959
        %1406 = vmatpush.bf16.msra.mxu0 %v951
        %1407 = vmatpush.bf16.msra.mxu0 %v943
        %1408 = vmatpush.bf16.msra.mxu0 %v935
        %1409 = vmatpush.bf16.msra.mxu0 %v927
        %1410 = vmatpush.bf16.msra.mxu0 %v919
        %1411 = vmatmul.bf16.gmra.mxu0 %v377
        %v1412 = vpop.f32.mrf.mxu0
        %v1413 = vadd.f32 %v519, %v1412
        %v1414 = vpop.f32.mrf.mxu0
        %v1415 = vadd.f32 %v519, %v1414
        %1416 = vmatmul.bf16.gmra.mxu0 %v379
        %v1417 = vpop.f32.mrf.mxu0
        %v1418 = vadd.f32 %v519, %v1417
        %v1419 = vpop.f32.mrf.mxu0
        %v1420 = vadd.f32 %v519, %v1419
        %1421 = vmatmul.bf16.gmra.mxu0 %v381
        %v1422 = vpop.f32.mrf.mxu0
        %v1423 = vadd.f32 %v519, %v1422
        %v1424 = vpop.f32.mrf.mxu0
        %v1425 = vadd.f32 %v519, %v1424
        %1426 = vmatmul.bf16.gmra.mxu0 %v383
        %v1427 = vpop.f32.mrf.mxu0
        %v1428 = vadd.f32 %v519, %v1427
        %v1429 = vpop.f32.mrf.mxu0
        %v1430 = vadd.f32 %v519, %v1429
        %1431 = vdwg.mxu0
        %1432 = vmatpush.bf16.msra.mxu0 %v1039
        %1433 = vmatpush.bf16.msra.mxu0 %v1031
        %1434 = vmatpush.bf16.msra.mxu0 %v1023
        %1435 = vmatpush.bf16.msra.mxu0 %v1015
        %1436 = vmatpush.bf16.msra.mxu0 %v1007
        %1437 = vmatpush.bf16.msra.mxu0 %v999
        %1438 = vmatpush.bf16.msra.mxu0 %v991
        %1439 = vmatpush.bf16.msra.mxu0 %v983
        %1440 = vmatmul.bf16.gmra.mxu0 %v378
        %v1441 = vpop.f32.mrf.mxu0
        %v1442 = vadd.f32 %v1413, %v1441
        %v1443 = vpop.f32.mrf.mxu0
        %v1444 = vadd.f32 %v1415, %v1443
        %1445 = vmatmul.bf16.gmra.mxu0 %v380
        %v1446 = vpop.f32.mrf.mxu0
        %v1447 = vadd.f32 %v1418, %v1446
        %v1448 = vpop.f32.mrf.mxu0
        %v1449 = vadd.f32 %v1420, %v1448
        %1450 = vmatmul.bf16.gmra.mxu0 %v382
        %v1451 = vpop.f32.mrf.mxu0
        %v1452 = vadd.f32 %v1423, %v1451
        %v1453 = vpop.f32.mrf.mxu0
        %v1454 = vadd.f32 %v1425, %v1453
        %1455 = vmatmul.bf16.gmra.mxu0 %v384
        %v1456 = vpop.f32.mrf.mxu0
        %v1457 = vadd.f32 %v1428, %v1456
        %v1458 = vpop.f32.mrf.mxu0
        %v1459 = vadd.f32 %v1430, %v1458
        %1460 = vdwg.mxu0
        %1461 = vmatpush.bf16.msra.mxu0 %v976
        %1462 = vmatpush.bf16.msra.mxu0 %v968
        %1463 = vmatpush.bf16.msra.mxu0 %v960
        %1464 = vmatpush.bf16.msra.mxu0 %v952
        %1465 = vmatpush.bf16.msra.mxu0 %v944
        %1466 = vmatpush.bf16.msra.mxu0 %v936
        %1467 = vmatpush.bf16.msra.mxu0 %v928
        %1468 = vmatpush.bf16.msra.mxu0 %v920
        %1469 = vmatmul.bf16.gmra.mxu0 %v377
        %v1470 = vpop.f32.mrf.mxu0
        %v1471 = vadd.f32 %v520, %v1470
        %v1472 = vpop.f32.mrf.mxu0
        %v1473 = vadd.f32 %v520, %v1472
        %1474 = vmatmul.bf16.gmra.mxu0 %v379
        %v1475 = vpop.f32.mrf.mxu0
        %v1476 = vadd.f32 %v520, %v1475
        %v1477 = vpop.f32.mrf.mxu0
        %v1478 = vadd.f32 %v520, %v1477
        %1479 = vmatmul.bf16.gmra.mxu0 %v381
        %v1480 = vpop.f32.mrf.mxu0
        %v1481 = vadd.f32 %v520, %v1480
        %v1482 = vpop.f32.mrf.mxu0
        %v1483 = vadd.f32 %v520, %v1482
        %1484 = vmatmul.bf16.gmra.mxu0 %v383
        %v1485 = vpop.f32.mrf.mxu0
        %v1486 = vadd.f32 %v520, %v1485
        %v1487 = vpop.f32.mrf.mxu0
        %v1488 = vadd.f32 %v520, %v1487
        %1489 = vdwg.mxu0
        %1490 = vmatpush.bf16.msra.mxu0 %v1040
        %1491 = vmatpush.bf16.msra.mxu0 %v1032
        %1492 = vmatpush.bf16.msra.mxu0 %v1024
        %1493 = vmatpush.bf16.msra.mxu0 %v1016
        %1494 = vmatpush.bf16.msra.mxu0 %v1008
        %1495 = vmatpush.bf16.msra.mxu0 %v1000
        %1496 = vmatpush.bf16.msra.mxu0 %v992
        %1497 = vmatpush.bf16.msra.mxu0 %v984
        %1498 = vmatmul.bf16.gmra.mxu0 %v378
        %v1499 = vpop.f32.mrf.mxu0
        %v1500 = vadd.f32 %v1471, %v1499
        %v1501 = vpop.f32.mrf.mxu0
        %v1502 = vadd.f32 %v1473, %v1501
        %1503 = vmatmul.bf16.gmra.mxu0 %v380
        %v1504 = vpop.f32.mrf.mxu0
        %v1505 = vadd.f32 %v1476, %v1504
        %v1506 = vpop.f32.mrf.mxu0
        %v1507 = vadd.f32 %v1478, %v1506
        %1508 = vmatmul.bf16.gmra.mxu0 %v382
        %v1509 = vpop.f32.mrf.mxu0
        %v1510 = vadd.f32 %v1481, %v1509
        %v1511 = vpop.f32.mrf.mxu0
        %v1512 = vadd.f32 %v1483, %v1511
        %1513 = vmatmul.bf16.gmra.mxu0 %v384
        %v1514 = vpop.f32.mrf.mxu0
        %v1515 = vadd.f32 %v1486, %v1514
        %v1516 = vpop.f32.mrf.mxu0
        %v1517 = vadd.f32 %v1488, %v1516
        %1518 = vdwg.mxu0
        %1519 = vmatpush.bf16.msra.mxu0 %v977
        %1520 = vmatpush.bf16.msra.mxu0 %v969
        %1521 = vmatpush.bf16.msra.mxu0 %v961
        %1522 = vmatpush.bf16.msra.mxu0 %v953
        %1523 = vmatpush.bf16.msra.mxu0 %v945
        %1524 = vmatpush.bf16.msra.mxu0 %v937
        %1525 = vmatpush.bf16.msra.mxu0 %v929
        %1526 = vmatpush.bf16.msra.mxu0 %v921
        %1527 = vmatmul.bf16.gmra.mxu0 %v377
        %v1528 = vpop.f32.mrf.mxu0
        %v1529 = vadd.f32 %v521, %v1528
        %v1530 = vpop.f32.mrf.mxu0
        %v1531 = vadd.f32 %v521, %v1530
        %1532 = vmatmul.bf16.gmra.mxu0 %v379
        %v1533 = vpop.f32.mrf.mxu0
        %v1534 = vadd.f32 %v521, %v1533
        %v1535 = vpop.f32.mrf.mxu0
        %v1536 = vadd.f32 %v521, %v1535
        %1537 = vmatmul.bf16.gmra.mxu0 %v381
        %v1538 = vpop.f32.mrf.mxu0
        %v1539 = vadd.f32 %v521, %v1538
        %v1540 = vpop.f32.mrf.mxu0
        %v1541 = vadd.f32 %v521, %v1540
        %1542 = vmatmul.bf16.gmra.mxu0 %v383
        %v1543 = vpop.f32.mrf.mxu0
        %v1544 = vadd.f32 %v521, %v1543
        %v1545 = vpop.f32.mrf.mxu0
        %v1546 = vadd.f32 %v521, %v1545
        %1547 = vdwg.mxu0
        %1548 = vmatpush.bf16.msra.mxu0 %v1041
        %1549 = vmatpush.bf16.msra.mxu0 %v1033
        %1550 = vmatpush.bf16.msra.mxu0 %v1025
        %1551 = vmatpush.bf16.msra.mxu0 %v1017
        %1552 = vmatpush.bf16.msra.mxu0 %v1009
        %1553 = vmatpush.bf16.msra.mxu0 %v1001
        %1554 = vmatpush.bf16.msra.mxu0 %v993
        %1555 = vmatpush.bf16.msra.mxu0 %v985
        %1556 = vmatmul.bf16.gmra.mxu0 %v378
        %v1557 = vpop.f32.mrf.mxu0
        %v1558 = vadd.f32 %v1529, %v1557
        %v1559 = vpop.f32.mrf.mxu0
        %v1560 = vadd.f32 %v1531, %v1559
        %1561 = vmatmul.bf16.gmra.mxu0 %v380
        %v1562 = vpop.f32.mrf.mxu0
        %v1563 = vadd.f32 %v1534, %v1562
        %v1564 = vpop.f32.mrf.mxu0
        %v1565 = vadd.f32 %v1536, %v1564
        %1566 = vmatmul.bf16.gmra.mxu0 %v382
        %v1567 = vpop.f32.mrf.mxu0
        %v1568 = vadd.f32 %v1539, %v1567
        %v1569 = vpop.f32.mrf.mxu0
        %v1570 = vadd.f32 %v1541, %v1569
        %1571 = vmatmul.bf16.gmra.mxu0 %v384
        %v1572 = vpop.f32.mrf.mxu0
        %v1573 = vadd.f32 %v1544, %v1572
        %v1574 = vpop.f32.mrf.mxu0
        %v1575 = vadd.f32 %v1546, %v1574
        %1576 = vdwg.mxu0
        %1577 = vmatpush.bf16.msra.mxu0 %v978
        %1578 = vmatpush.bf16.msra.mxu0 %v970
        %1579 = vmatpush.bf16.msra.mxu0 %v962
        %1580 = vmatpush.bf16.msra.mxu0 %v954
        %1581 = vmatpush.bf16.msra.mxu0 %v946
        %1582 = vmatpush.bf16.msra.mxu0 %v938
        %1583 = vmatpush.bf16.msra.mxu0 %v930
        %1584 = vmatpush.bf16.msra.mxu0 %v922
        %1585 = vmatmul.bf16.gmra.mxu0 %v377
        %v1586 = vpop.f32.mrf.mxu0
        %v1587 = vadd.f32 %v522, %v1586
        %v1588 = vpop.f32.mrf.mxu0
        %v1589 = vadd.f32 %v522, %v1588
        %1590 = vmatmul.bf16.gmra.mxu0 %v379
        %v1591 = vpop.f32.mrf.mxu0
        %v1592 = vadd.f32 %v522, %v1591
        %v1593 = vpop.f32.mrf.mxu0
        %v1594 = vadd.f32 %v522, %v1593
        %1595 = vmatmul.bf16.gmra.mxu0 %v381
        %v1596 = vpop.f32.mrf.mxu0
        %v1597 = vadd.f32 %v522, %v1596
        %v1598 = vpop.f32.mrf.mxu0
        %v1599 = vadd.f32 %v522, %v1598
        %1600 = vmatmul.bf16.gmra.mxu0 %v383
        %v1601 = vpop.f32.mrf.mxu0
        %v1602 = vadd.f32 %v522, %v1601
        %v1603 = vpop.f32.mrf.mxu0
        %v1604 = vadd.f32 %v522, %v1603
        %1605 = vdwg.mxu0
        %1606 = vmatpush.bf16.msra.mxu0 %v1042
        %1607 = vmatpush.bf16.msra.mxu0 %v1034
        %1608 = vmatpush.bf16.msra.mxu0 %v1026
        %1609 = vmatpush.bf16.msra.mxu0 %v1018
        %1610 = vmatpush.bf16.msra.mxu0 %v1010
        %1611 = vmatpush.bf16.msra.mxu0 %v1002
        %1612 = vmatpush.bf16.msra.mxu0 %v994
        %1613 = vmatpush.bf16.msra.mxu0 %v986
        %1614 = vmatmul.bf16.gmra.mxu0 %v378
        %v1615 = vpop.f32.mrf.mxu0
        %v1616 = vadd.f32 %v1587, %v1615
        %v1617 = vpop.f32.mrf.mxu0
        %v1618 = vadd.f32 %v1589, %v1617
        %1619 = vmatmul.bf16.gmra.mxu0 %v380
        %v1620 = vpop.f32.mrf.mxu0
        %v1621 = vadd.f32 %v1592, %v1620
        %v1622 = vpop.f32.mrf.mxu0
        %v1623 = vadd.f32 %v1594, %v1622
        %1624 = vmatmul.bf16.gmra.mxu0 %v382
        %v1625 = vpop.f32.mrf.mxu0
        %v1626 = vadd.f32 %v1597, %v1625
        %v1627 = vpop.f32.mrf.mxu0
        %v1628 = vadd.f32 %v1599, %v1627
        %1629 = vmatmul.bf16.gmra.mxu0 %v384
        %v1630 = vpop.f32.mrf.mxu0
        %v1631 = vadd.f32 %v1602, %v1630
        %v1632 = vpop.f32.mrf.mxu0
        %v1633 = vadd.f32 %v1604, %v1632
        %1634 = vdwg.mxu0
        %v1635 = vmul.f32 %v1210, 0.5
        %v1636 = vmul.f32 %v1268, 0.5
        %v1637 = vmul.f32 %v1326, 0.5
        %v1638 = vmul.f32 %v1384, 0.5
        %v1639 = vmul.f32 %v1442, 0.5
        %v1640 = vmul.f32 %v1500, 0.5
        %v1641 = vmul.f32 %v1558, 0.5
        %v1642 = vmul.f32 %v1616, 0.5
        %v1643 = vmul.f32 %v1212, 0.5
        %v1644 = vmul.f32 %v1270, 0.5
        %v1645 = vmul.f32 %v1328, 0.5
        %v1646 = vmul.f32 %v1386, 0.5
        %v1647 = vmul.f32 %v1444, 0.5
        %v1648 = vmul.f32 %v1502, 0.5
        %v1649 = vmul.f32 %v1560, 0.5
        %v1650 = vmul.f32 %v1618, 0.5
        %v1651 = vmul.f32 %v1215, 0.5
        %v1652 = vmul.f32 %v1273, 0.5
        %v1653 = vmul.f32 %v1331, 0.5
        %v1654 = vmul.f32 %v1389, 0.5
        %v1655 = vmul.f32 %v1447, 0.5
        %v1656 = vmul.f32 %v1505, 0.5
        %v1657 = vmul.f32 %v1563, 0.5
        %v1658 = vmul.f32 %v1621, 0.5
        %v1659 = vmul.f32 %v1217, 0.5
        %v1660 = vmul.f32 %v1275, 0.5
        %v1661 = vmul.f32 %v1333, 0.5
        %v1662 = vmul.f32 %v1391, 0.5
        %v1663 = vmul.f32 %v1449, 0.5
        %v1664 = vmul.f32 %v1507, 0.5
        %v1665 = vmul.f32 %v1565, 0.5
        %v1666 = vmul.f32 %v1623, 0.5
        %v1667 = vmul.f32 %v1220, 0.5
        %v1668 = vmul.f32 %v1278, 0.5
        %v1669 = vmul.f32 %v1336, 0.5
        %v1670 = vmul.f32 %v1394, 0.5
        %v1671 = vmul.f32 %v1452, 0.5
        %v1672 = vmul.f32 %v1510, 0.5
        %v1673 = vmul.f32 %v1568, 0.5
        %v1674 = vmul.f32 %v1626, 0.5
        %v1675 = vmul.f32 %v1222, 0.5
        %v1676 = vmul.f32 %v1280, 0.5
        %v1677 = vmul.f32 %v1338, 0.5
        %v1678 = vmul.f32 %v1396, 0.5
        %v1679 = vmul.f32 %v1454, 0.5
        %v1680 = vmul.f32 %v1512, 0.5
        %v1681 = vmul.f32 %v1570, 0.5
        %v1682 = vmul.f32 %v1628, 0.5
        %v1683 = vmul.f32 %v1225, 0.5
        %v1684 = vmul.f32 %v1283, 0.5
        %v1685 = vmul.f32 %v1341, 0.5
        %v1686 = vmul.f32 %v1399, 0.5
        %v1687 = vmul.f32 %v1457, 0.5
        %v1688 = vmul.f32 %v1515, 0.5
        %v1689 = vmul.f32 %v1573, 0.5
        %v1690 = vmul.f32 %v1631, 0.5
        %v1691 = vmul.f32 %v1227, 0.5
        %v1692 = vmul.f32 %v1285, 0.5
        %v1693 = vmul.f32 %v1343, 0.5
        %v1694 = vmul.f32 %v1401, 0.5
        %v1695 = vmul.f32 %v1459, 0.5
        %v1696 = vmul.f32 %v1517, 0.5
        %v1697 = vmul.f32 %v1575, 0.5
        %v1698 = vmul.f32 %v1633, 0.5
        %v1699 = vmul.f32 %v1210, 0.044715
        %v1700 = vmul.f32 %v1268, 0.044715
        %v1701 = vmul.f32 %v1326, 0.044715
        %v1702 = vmul.f32 %v1384, 0.044715
        %v1703 = vmul.f32 %v1442, 0.044715
        %v1704 = vmul.f32 %v1500, 0.044715
        %v1705 = vmul.f32 %v1558, 0.044715
        %v1706 = vmul.f32 %v1616, 0.044715
        %v1707 = vmul.f32 %v1212, 0.044715
        %v1708 = vmul.f32 %v1270, 0.044715
        %v1709 = vmul.f32 %v1328, 0.044715
        %v1710 = vmul.f32 %v1386, 0.044715
        %v1711 = vmul.f32 %v1444, 0.044715
        %v1712 = vmul.f32 %v1502, 0.044715
        %v1713 = vmul.f32 %v1560, 0.044715
        %v1714 = vmul.f32 %v1618, 0.044715
        %v1715 = vmul.f32 %v1215, 0.044715
        %v1716 = vmul.f32 %v1273, 0.044715
        %v1717 = vmul.f32 %v1331, 0.044715
        %v1718 = vmul.f32 %v1389, 0.044715
        %v1719 = vmul.f32 %v1447, 0.044715
        %v1720 = vmul.f32 %v1505, 0.044715
        %v1721 = vmul.f32 %v1563, 0.044715
        %v1722 = vmul.f32 %v1621, 0.044715
        %v1723 = vmul.f32 %v1217, 0.044715
        %v1724 = vmul.f32 %v1275, 0.044715
        %v1725 = vmul.f32 %v1333, 0.044715
        %v1726 = vmul.f32 %v1391, 0.044715
        %v1727 = vmul.f32 %v1449, 0.044715
        %v1728 = vmul.f32 %v1507, 0.044715
        %v1729 = vmul.f32 %v1565, 0.044715
        %v1730 = vmul.f32 %v1623, 0.044715
        %v1731 = vmul.f32 %v1220, 0.044715
        %v1732 = vmul.f32 %v1278, 0.044715
        %v1733 = vmul.f32 %v1336, 0.044715
        %v1734 = vmul.f32 %v1394, 0.044715
        %v1735 = vmul.f32 %v1452, 0.044715
        %v1736 = vmul.f32 %v1510, 0.044715
        %v1737 = vmul.f32 %v1568, 0.044715
        %v1738 = vmul.f32 %v1626, 0.044715
        %v1739 = vmul.f32 %v1222, 0.044715
        %v1740 = vmul.f32 %v1280, 0.044715
        %v1741 = vmul.f32 %v1338, 0.044715
        %v1742 = vmul.f32 %v1396, 0.044715
        %v1743 = vmul.f32 %v1454, 0.044715
        %v1744 = vmul.f32 %v1512, 0.044715
        %v1745 = vmul.f32 %v1570, 0.044715
        %v1746 = vmul.f32 %v1628, 0.044715
        %v1747 = vmul.f32 %v1225, 0.044715
        %v1748 = vmul.f32 %v1283, 0.044715
        %v1749 = vmul.f32 %v1341, 0.044715
        %v1750 = vmul.f32 %v1399, 0.044715
        %v1751 = vmul.f32 %v1457, 0.044715
        %v1752 = vmul.f32 %v1515, 0.044715
        %v1753 = vmul.f32 %v1573, 0.044715
        %v1754 = vmul.f32 %v1631, 0.044715
        %v1755 = vmul.f32 %v1227, 0.044715
        %v1756 = vmul.f32 %v1285, 0.044715
        %v1757 = vmul.f32 %v1343, 0.044715
        %v1758 = vmul.f32 %v1401, 0.044715
        %v1759 = vmul.f32 %v1459, 0.044715
        %v1760 = vmul.f32 %v1517, 0.044715
        %v1761 = vmul.f32 %v1575, 0.044715
        %v1762 = vmul.f32 %v1633, 0.044715
        %v1763 = vmul.f32 %v1699, %v1210
        %v1764 = vmul.f32 %v1700, %v1268
        %v1765 = vmul.f32 %v1701, %v1326
        %v1766 = vmul.f32 %v1702, %v1384
        %v1767 = vmul.f32 %v1703, %v1442
        %v1768 = vmul.f32 %v1704, %v1500
        %v1769 = vmul.f32 %v1705, %v1558
        %v1770 = vmul.f32 %v1706, %v1616
        %v1771 = vmul.f32 %v1707, %v1212
        %v1772 = vmul.f32 %v1708, %v1270
        %v1773 = vmul.f32 %v1709, %v1328
        %v1774 = vmul.f32 %v1710, %v1386
        %v1775 = vmul.f32 %v1711, %v1444
        %v1776 = vmul.f32 %v1712, %v1502
        %v1777 = vmul.f32 %v1713, %v1560
        %v1778 = vmul.f32 %v1714, %v1618
        %v1779 = vmul.f32 %v1715, %v1215
        %v1780 = vmul.f32 %v1716, %v1273
        %v1781 = vmul.f32 %v1717, %v1331
        %v1782 = vmul.f32 %v1718, %v1389
        %v1783 = vmul.f32 %v1719, %v1447
        %v1784 = vmul.f32 %v1720, %v1505
        %v1785 = vmul.f32 %v1721, %v1563
        %v1786 = vmul.f32 %v1722, %v1621
        %v1787 = vmul.f32 %v1723, %v1217
        %v1788 = vmul.f32 %v1724, %v1275
        %v1789 = vmul.f32 %v1725, %v1333
        %v1790 = vmul.f32 %v1726, %v1391
        %v1791 = vmul.f32 %v1727, %v1449
        %v1792 = vmul.f32 %v1728, %v1507
        %v1793 = vmul.f32 %v1729, %v1565
        %v1794 = vmul.f32 %v1730, %v1623
        %v1795 = vmul.f32 %v1731, %v1220
        %v1796 = vmul.f32 %v1732, %v1278
        %v1797 = vmul.f32 %v1733, %v1336
        %v1798 = vmul.f32 %v1734, %v1394
        %v1799 = vmul.f32 %v1735, %v1452
        %v1800 = vmul.f32 %v1736, %v1510
        %v1801 = vmul.f32 %v1737, %v1568
        %v1802 = vmul.f32 %v1738, %v1626
        %v1803 = vmul.f32 %v1739, %v1222
        %v1804 = vmul.f32 %v1740, %v1280
        %v1805 = vmul.f32 %v1741, %v1338
        %v1806 = vmul.f32 %v1742, %v1396
        %v1807 = vmul.f32 %v1743, %v1454
        %v1808 = vmul.f32 %v1744, %v1512
        %v1809 = vmul.f32 %v1745, %v1570
        %v1810 = vmul.f32 %v1746, %v1628
        %v1811 = vmul.f32 %v1747, %v1225
        %v1812 = vmul.f32 %v1748, %v1283
        %v1813 = vmul.f32 %v1749, %v1341
        %v1814 = vmul.f32 %v1750, %v1399
        %v1815 = vmul.f32 %v1751, %v1457
        %v1816 = vmul.f32 %v1752, %v1515
        %v1817 = vmul.f32 %v1753, %v1573
        %v1818 = vmul.f32 %v1754, %v1631
        %v1819 = vmul.f32 %v1755, %v1227
        %v1820 = vmul.f32 %v1756, %v1285
        %v1821 = vmul.f32 %v1757, %v1343
        %v1822 = vmul.f32 %v1758, %v1401
        %v1823 = vmul.f32 %v1759, %v1459
        %v1824 = vmul.f32 %v1760, %v1517
        %v1825 = vmul.f32 %v1761, %v1575
        %v1826 = vmul.f32 %v1762, %v1633
        %v1827 = vmul.f32 %v1763, %v1210
        %v1828 = vmul.f32 %v1764, %v1268
        %v1829 = vmul.f32 %v1765, %v1326
        %v1830 = vmul.f32 %v1766, %v1384
        %v1831 = vmul.f32 %v1767, %v1442
        %v1832 = vmul.f32 %v1768, %v1500
        %v1833 = vmul.f32 %v1769, %v1558
        %v1834 = vmul.f32 %v1770, %v1616
        %v1835 = vmul.f32 %v1771, %v1212
        %v1836 = vmul.f32 %v1772, %v1270
        %v1837 = vmul.f32 %v1773, %v1328
        %v1838 = vmul.f32 %v1774, %v1386
        %v1839 = vmul.f32 %v1775, %v1444
        %v1840 = vmul.f32 %v1776, %v1502
        %v1841 = vmul.f32 %v1777, %v1560
        %v1842 = vmul.f32 %v1778, %v1618
        %v1843 = vmul.f32 %v1779, %v1215
        %v1844 = vmul.f32 %v1780, %v1273
        %v1845 = vmul.f32 %v1781, %v1331
        %v1846 = vmul.f32 %v1782, %v1389
        %v1847 = vmul.f32 %v1783, %v1447
        %v1848 = vmul.f32 %v1784, %v1505
        %v1849 = vmul.f32 %v1785, %v1563
        %v1850 = vmul.f32 %v1786, %v1621
        %v1851 = vmul.f32 %v1787, %v1217
        %v1852 = vmul.f32 %v1788, %v1275
        %v1853 = vmul.f32 %v1789, %v1333
        %v1854 = vmul.f32 %v1790, %v1391
        %v1855 = vmul.f32 %v1791, %v1449
        %v1856 = vmul.f32 %v1792, %v1507
        %v1857 = vmul.f32 %v1793, %v1565
        %v1858 = vmul.f32 %v1794, %v1623
        %v1859 = vmul.f32 %v1795, %v1220
        %v1860 = vmul.f32 %v1796, %v1278
        %v1861 = vmul.f32 %v1797, %v1336
        %v1862 = vmul.f32 %v1798, %v1394
        %v1863 = vmul.f32 %v1799, %v1452
        %v1864 = vmul.f32 %v1800, %v1510
        %v1865 = vmul.f32 %v1801, %v1568
        %v1866 = vmul.f32 %v1802, %v1626
        %v1867 = vmul.f32 %v1803, %v1222
        %v1868 = vmul.f32 %v1804, %v1280
        %v1869 = vmul.f32 %v1805, %v1338
        %v1870 = vmul.f32 %v1806, %v1396
        %v1871 = vmul.f32 %v1807, %v1454
        %v1872 = vmul.f32 %v1808, %v1512
        %v1873 = vmul.f32 %v1809, %v1570
        %v1874 = vmul.f32 %v1810, %v1628
        %v1875 = vmul.f32 %v1811, %v1225
        %v1876 = vmul.f32 %v1812, %v1283
        %v1877 = vmul.f32 %v1813, %v1341
        %v1878 = vmul.f32 %v1814, %v1399
        %v1879 = vmul.f32 %v1815, %v1457
        %v1880 = vmul.f32 %v1816, %v1515
        %v1881 = vmul.f32 %v1817, %v1573
        %v1882 = vmul.f32 %v1818, %v1631
        %v1883 = vmul.f32 %v1819, %v1227
        %v1884 = vmul.f32 %v1820, %v1285
        %v1885 = vmul.f32 %v1821, %v1343
        %v1886 = vmul.f32 %v1822, %v1401
        %v1887 = vmul.f32 %v1823, %v1459
        %v1888 = vmul.f32 %v1824, %v1517
        %v1889 = vmul.f32 %v1825, %v1575
        %v1890 = vmul.f32 %v1826, %v1633
        %v1891 = vadd.f32 %v1210, %v1827
        %v1892 = vadd.f32 %v1268, %v1828
        %v1893 = vadd.f32 %v1326, %v1829
        %v1894 = vadd.f32 %v1384, %v1830
        %v1895 = vadd.f32 %v1442, %v1831
        %v1896 = vadd.f32 %v1500, %v1832
        %v1897 = vadd.f32 %v1558, %v1833
        %v1898 = vadd.f32 %v1616, %v1834
        %v1899 = vadd.f32 %v1212, %v1835
        %v1900 = vadd.f32 %v1270, %v1836
        %v1901 = vadd.f32 %v1328, %v1837
        %v1902 = vadd.f32 %v1386, %v1838
        %v1903 = vadd.f32 %v1444, %v1839
        %v1904 = vadd.f32 %v1502, %v1840
        %v1905 = vadd.f32 %v1560, %v1841
        %v1906 = vadd.f32 %v1618, %v1842
        %v1907 = vadd.f32 %v1215, %v1843
        %v1908 = vadd.f32 %v1273, %v1844
        %v1909 = vadd.f32 %v1331, %v1845
        %v1910 = vadd.f32 %v1389, %v1846
        %v1911 = vadd.f32 %v1447, %v1847
        %v1912 = vadd.f32 %v1505, %v1848
        %v1913 = vadd.f32 %v1563, %v1849
        %v1914 = vadd.f32 %v1621, %v1850
        %v1915 = vadd.f32 %v1217, %v1851
        %v1916 = vadd.f32 %v1275, %v1852
        %v1917 = vadd.f32 %v1333, %v1853
        %v1918 = vadd.f32 %v1391, %v1854
        %v1919 = vadd.f32 %v1449, %v1855
        %v1920 = vadd.f32 %v1507, %v1856
        %v1921 = vadd.f32 %v1565, %v1857
        %v1922 = vadd.f32 %v1623, %v1858
        %v1923 = vadd.f32 %v1220, %v1859
        %v1924 = vadd.f32 %v1278, %v1860
        %v1925 = vadd.f32 %v1336, %v1861
        %v1926 = vadd.f32 %v1394, %v1862
        %v1927 = vadd.f32 %v1452, %v1863
        %v1928 = vadd.f32 %v1510, %v1864
        %v1929 = vadd.f32 %v1568, %v1865
        %v1930 = vadd.f32 %v1626, %v1866
        %v1931 = vadd.f32 %v1222, %v1867
        %v1932 = vadd.f32 %v1280, %v1868
        %v1933 = vadd.f32 %v1338, %v1869
        %v1934 = vadd.f32 %v1396, %v1870
        %v1935 = vadd.f32 %v1454, %v1871
        %v1936 = vadd.f32 %v1512, %v1872
        %v1937 = vadd.f32 %v1570, %v1873
        %v1938 = vadd.f32 %v1628, %v1874
        %v1939 = vadd.f32 %v1225, %v1875
        %v1940 = vadd.f32 %v1283, %v1876
        %v1941 = vadd.f32 %v1341, %v1877
        %v1942 = vadd.f32 %v1399, %v1878
        %v1943 = vadd.f32 %v1457, %v1879
        %v1944 = vadd.f32 %v1515, %v1880
        %v1945 = vadd.f32 %v1573, %v1881
        %v1946 = vadd.f32 %v1631, %v1882
        %v1947 = vadd.f32 %v1227, %v1883
        %v1948 = vadd.f32 %v1285, %v1884
        %v1949 = vadd.f32 %v1343, %v1885
        %v1950 = vadd.f32 %v1401, %v1886
        %v1951 = vadd.f32 %v1459, %v1887
        %v1952 = vadd.f32 %v1517, %v1888
        %v1953 = vadd.f32 %v1575, %v1889
        %v1954 = vadd.f32 %v1633, %v1890
        %v1955 = vmul.f32 %v1891, 0.7978846
        %v1956 = vmul.f32 %v1892, 0.7978846
        %v1957 = vmul.f32 %v1893, 0.7978846
        %v1958 = vmul.f32 %v1894, 0.7978846
        %v1959 = vmul.f32 %v1895, 0.7978846
        %v1960 = vmul.f32 %v1896, 0.7978846
        %v1961 = vmul.f32 %v1897, 0.7978846
        %v1962 = vmul.f32 %v1898, 0.7978846
        %v1963 = vmul.f32 %v1899, 0.7978846
        %v1964 = vmul.f32 %v1900, 0.7978846
        %v1965 = vmul.f32 %v1901, 0.7978846
        %v1966 = vmul.f32 %v1902, 0.7978846
        %v1967 = vmul.f32 %v1903, 0.7978846
        %v1968 = vmul.f32 %v1904, 0.7978846
        %v1969 = vmul.f32 %v1905, 0.7978846
        %v1970 = vmul.f32 %v1906, 0.7978846
        %v1971 = vmul.f32 %v1907, 0.7978846
        %v1972 = vmul.f32 %v1908, 0.7978846
        %v1973 = vmul.f32 %v1909, 0.7978846
        %v1974 = vmul.f32 %v1910, 0.7978846
        %v1975 = vmul.f32 %v1911, 0.7978846
        %v1976 = vmul.f32 %v1912, 0.7978846
        %v1977 = vmul.f32 %v1913, 0.7978846
        %v1978 = vmul.f32 %v1914, 0.7978846
        %v1979 = vmul.f32 %v1915, 0.7978846
        %v1980 = vmul.f32 %v1916, 0.7978846
        %v1981 = vmul.f32 %v1917, 0.7978846
        %v1982 = vmul.f32 %v1918, 0.7978846
        %v1983 = vmul.f32 %v1919, 0.7978846
        %v1984 = vmul.f32 %v1920, 0.7978846
        %v1985 = vmul.f32 %v1921, 0.7978846
        %v1986 = vmul.f32 %v1922, 0.7978846
        %v1987 = vmul.f32 %v1923, 0.7978846
        %v1988 = vmul.f32 %v1924, 0.7978846
        %v1989 = vmul.f32 %v1925, 0.7978846
        %v1990 = vmul.f32 %v1926, 0.7978846
        %v1991 = vmul.f32 %v1927, 0.7978846
        %v1992 = vmul.f32 %v1928, 0.7978846
        %v1993 = vmul.f32 %v1929, 0.7978846
        %v1994 = vmul.f32 %v1930, 0.7978846
        %v1995 = vmul.f32 %v1931, 0.7978846
        %v1996 = vmul.f32 %v1932, 0.7978846
        %v1997 = vmul.f32 %v1933, 0.7978846
        %v1998 = vmul.f32 %v1934, 0.7978846
        %v1999 = vmul.f32 %v1935, 0.7978846
        %v2000 = vmul.f32 %v1936, 0.7978846
        %v2001 = vmul.f32 %v1937, 0.7978846
        %v2002 = vmul.f32 %v1938, 0.7978846
        %v2003 = vmul.f32 %v1939, 0.7978846
        %v2004 = vmul.f32 %v1940, 0.7978846
        %v2005 = vmul.f32 %v1941, 0.7978846
        %v2006 = vmul.f32 %v1942, 0.7978846
        %v2007 = vmul.f32 %v1943, 0.7978846
        %v2008 = vmul.f32 %v1944, 0.7978846
        %v2009 = vmul.f32 %v1945, 0.7978846
        %v2010 = vmul.f32 %v1946, 0.7978846
        %v2011 = vmul.f32 %v1947, 0.7978846
        %v2012 = vmul.f32 %v1948, 0.7978846
        %v2013 = vmul.f32 %v1949, 0.7978846
        %v2014 = vmul.f32 %v1950, 0.7978846
        %v2015 = vmul.f32 %v1951, 0.7978846
        %v2016 = vmul.f32 %v1952, 0.7978846
        %v2017 = vmul.f32 %v1953, 0.7978846
        %v2018 = vmul.f32 %v1954, 0.7978846
        %v2019 = vtanh.pop %v1955
        %v2020 = vtanh.pop %v1956
        %v2021 = vtanh.pop %v1957
        %v2022 = vtanh.pop %v1958
        %v2023 = vtanh.pop %v1959
        %v2024 = vtanh.pop %v1960
        %v2025 = vtanh.pop %v1961
        %v2026 = vtanh.pop %v1962
        %v2027 = vtanh.pop %v1963
        %v2028 = vtanh.pop %v1964
        %v2029 = vtanh.pop %v1965
        %v2030 = vtanh.pop %v1966
        %v2031 = vtanh.pop %v1967
        %v2032 = vtanh.pop %v1968
        %v2033 = vtanh.pop %v1969
        %v2034 = vtanh.pop %v1970
        %v2035 = vtanh.pop %v1971
        %v2036 = vtanh.pop %v1972
        %v2037 = vtanh.pop %v1973
        %v2038 = vtanh.pop %v1974
        %v2039 = vtanh.pop %v1975
        %v2040 = vtanh.pop %v1976
        %v2041 = vtanh.pop %v1977
        %v2042 = vtanh.pop %v1978
        %v2043 = vtanh.pop %v1979
        %v2044 = vtanh.pop %v1980
        %v2045 = vtanh.pop %v1981
        %v2046 = vtanh.pop %v1982
        %v2047 = vtanh.pop %v1983
        %v2048 = vtanh.pop %v1984
        %v2049 = vtanh.pop %v1985
        %v2050 = vtanh.pop %v1986
        %v2051 = vtanh.pop %v1987
        %v2052 = vtanh.pop %v1988
        %v2053 = vtanh.pop %v1989
        %v2054 = vtanh.pop %v1990
        %v2055 = vtanh.pop %v1991
        %v2056 = vtanh.pop %v1992
        %v2057 = vtanh.pop %v1993
        %v2058 = vtanh.pop %v1994
        %v2059 = vtanh.pop %v1995
        %v2060 = vtanh.pop %v1996
        %v2061 = vtanh.pop %v1997
        %v2062 = vtanh.pop %v1998
        %v2063 = vtanh.pop %v1999
        %v2064 = vtanh.pop %v2000
        %v2065 = vtanh.pop %v2001
        %v2066 = vtanh.pop %v2002
        %v2067 = vtanh.pop %v2003
        %v2068 = vtanh.pop %v2004
        %v2069 = vtanh.pop %v2005
        %v2070 = vtanh.pop %v2006
        %v2071 = vtanh.pop %v2007
        %v2072 = vtanh.pop %v2008
        %v2073 = vtanh.pop %v2009
        %v2074 = vtanh.pop %v2010
        %v2075 = vtanh.pop %v2011
        %v2076 = vtanh.pop %v2012
        %v2077 = vtanh.pop %v2013
        %v2078 = vtanh.pop %v2014
        %v2079 = vtanh.pop %v2015
        %v2080 = vtanh.pop %v2016
        %v2081 = vtanh.pop %v2017
        %v2082 = vtanh.pop %v2018
        %v2083 = vadd.f32 %v2019, 1.0
        %v2084 = vadd.f32 %v2020, 1.0
        %v2085 = vadd.f32 %v2021, 1.0
        %v2086 = vadd.f32 %v2022, 1.0
        %v2087 = vadd.f32 %v2023, 1.0
        %v2088 = vadd.f32 %v2024, 1.0
        %v2089 = vadd.f32 %v2025, 1.0
        %v2090 = vadd.f32 %v2026, 1.0
        %v2091 = vadd.f32 %v2027, 1.0
        %v2092 = vadd.f32 %v2028, 1.0
        %v2093 = vadd.f32 %v2029, 1.0
        %v2094 = vadd.f32 %v2030, 1.0
        %v2095 = vadd.f32 %v2031, 1.0
        %v2096 = vadd.f32 %v2032, 1.0
        %v2097 = vadd.f32 %v2033, 1.0
        %v2098 = vadd.f32 %v2034, 1.0
        %v2099 = vadd.f32 %v2035, 1.0
        %v2100 = vadd.f32 %v2036, 1.0
        %v2101 = vadd.f32 %v2037, 1.0
        %v2102 = vadd.f32 %v2038, 1.0
        %v2103 = vadd.f32 %v2039, 1.0
        %v2104 = vadd.f32 %v2040, 1.0
        %v2105 = vadd.f32 %v2041, 1.0
        %v2106 = vadd.f32 %v2042, 1.0
        %v2107 = vadd.f32 %v2043, 1.0
        %v2108 = vadd.f32 %v2044, 1.0
        %v2109 = vadd.f32 %v2045, 1.0
        %v2110 = vadd.f32 %v2046, 1.0
        %v2111 = vadd.f32 %v2047, 1.0
        %v2112 = vadd.f32 %v2048, 1.0
        %v2113 = vadd.f32 %v2049, 1.0
        %v2114 = vadd.f32 %v2050, 1.0
        %v2115 = vadd.f32 %v2051, 1.0
        %v2116 = vadd.f32 %v2052, 1.0
        %v2117 = vadd.f32 %v2053, 1.0
        %v2118 = vadd.f32 %v2054, 1.0
        %v2119 = vadd.f32 %v2055, 1.0
        %v2120 = vadd.f32 %v2056, 1.0
        %v2121 = vadd.f32 %v2057, 1.0
        %v2122 = vadd.f32 %v2058, 1.0
        %v2123 = vadd.f32 %v2059, 1.0
        %v2124 = vadd.f32 %v2060, 1.0
        %v2125 = vadd.f32 %v2061, 1.0
        %v2126 = vadd.f32 %v2062, 1.0
        %v2127 = vadd.f32 %v2063, 1.0
        %v2128 = vadd.f32 %v2064, 1.0
        %v2129 = vadd.f32 %v2065, 1.0
        %v2130 = vadd.f32 %v2066, 1.0
        %v2131 = vadd.f32 %v2067, 1.0
        %v2132 = vadd.f32 %v2068, 1.0
        %v2133 = vadd.f32 %v2069, 1.0
        %v2134 = vadd.f32 %v2070, 1.0
        %v2135 = vadd.f32 %v2071, 1.0
        %v2136 = vadd.f32 %v2072, 1.0
        %v2137 = vadd.f32 %v2073, 1.0
        %v2138 = vadd.f32 %v2074, 1.0
        %v2139 = vadd.f32 %v2075, 1.0
        %v2140 = vadd.f32 %v2076, 1.0
        %v2141 = vadd.f32 %v2077, 1.0
        %v2142 = vadd.f32 %v2078, 1.0
        %v2143 = vadd.f32 %v2079, 1.0
        %v2144 = vadd.f32 %v2080, 1.0
        %v2145 = vadd.f32 %v2081, 1.0
        %v2146 = vadd.f32 %v2082, 1.0
        %v2147 = vmul.f32 %v1635, %v2083
        %v2148 = vmul.f32 %v1636, %v2084
        %v2149 = vmul.f32 %v1637, %v2085
        %v2150 = vmul.f32 %v1638, %v2086
        %v2151 = vmul.f32 %v1639, %v2087
        %v2152 = vmul.f32 %v1640, %v2088
        %v2153 = vmul.f32 %v1641, %v2089
        %v2154 = vmul.f32 %v1642, %v2090
        %v2155 = vmul.f32 %v1643, %v2091
        %v2156 = vmul.f32 %v1644, %v2092
        %v2157 = vmul.f32 %v1645, %v2093
        %v2158 = vmul.f32 %v1646, %v2094
        %v2159 = vmul.f32 %v1647, %v2095
        %v2160 = vmul.f32 %v1648, %v2096
        %v2161 = vmul.f32 %v1649, %v2097
        %v2162 = vmul.f32 %v1650, %v2098
        %v2163 = vmul.f32 %v1651, %v2099
        %v2164 = vmul.f32 %v1652, %v2100
        %v2165 = vmul.f32 %v1653, %v2101
        %v2166 = vmul.f32 %v1654, %v2102
        %v2167 = vmul.f32 %v1655, %v2103
        %v2168 = vmul.f32 %v1656, %v2104
        %v2169 = vmul.f32 %v1657, %v2105
        %v2170 = vmul.f32 %v1658, %v2106
        %v2171 = vmul.f32 %v1659, %v2107
        %v2172 = vmul.f32 %v1660, %v2108
        %v2173 = vmul.f32 %v1661, %v2109
        %v2174 = vmul.f32 %v1662, %v2110
        %v2175 = vmul.f32 %v1663, %v2111
        %v2176 = vmul.f32 %v1664, %v2112
        %v2177 = vmul.f32 %v1665, %v2113
        %v2178 = vmul.f32 %v1666, %v2114
        %v2179 = vmul.f32 %v1667, %v2115
        %v2180 = vmul.f32 %v1668, %v2116
        %v2181 = vmul.f32 %v1669, %v2117
        %v2182 = vmul.f32 %v1670, %v2118
        %v2183 = vmul.f32 %v1671, %v2119
        %v2184 = vmul.f32 %v1672, %v2120
        %v2185 = vmul.f32 %v1673, %v2121
        %v2186 = vmul.f32 %v1674, %v2122
        %v2187 = vmul.f32 %v1675, %v2123
        %v2188 = vmul.f32 %v1676, %v2124
        %v2189 = vmul.f32 %v1677, %v2125
        %v2190 = vmul.f32 %v1678, %v2126
        %v2191 = vmul.f32 %v1679, %v2127
        %v2192 = vmul.f32 %v1680, %v2128
        %v2193 = vmul.f32 %v1681, %v2129
        %v2194 = vmul.f32 %v1682, %v2130
        %v2195 = vmul.f32 %v1683, %v2131
        %v2196 = vmul.f32 %v1684, %v2132
        %v2197 = vmul.f32 %v1685, %v2133
        %v2198 = vmul.f32 %v1686, %v2134
        %v2199 = vmul.f32 %v1687, %v2135
        %v2200 = vmul.f32 %v1688, %v2136
        %v2201 = vmul.f32 %v1689, %v2137
        %v2202 = vmul.f32 %v1690, %v2138
        %v2203 = vmul.f32 %v1691, %v2139
        %v2204 = vmul.f32 %v1692, %v2140
        %v2205 = vmul.f32 %v1693, %v2141
        %v2206 = vmul.f32 %v1694, %v2142
        %v2207 = vmul.f32 %v1695, %v2143
        %v2208 = vmul.f32 %v1696, %v2144
        %v2209 = vmul.f32 %v1697, %v2145
        %v2210 = vmul.f32 %v1698, %v2146
        %v2211 = vld [vmem:[%s329] sm:$0xff]
        %v2212 = vld [vmem:[%s329 + $0x8] sm:$0xff]
        %v2213 = vld [vmem:[%s329 + $0x10] sm:$0xff]
        %v2214 = vld [vmem:[%s329 + $0x18] sm:$0xff]
        %v2215 = vld [vmem:[%s329 + $0x20] sm:$0xff]
        %v2216 = vld [vmem:[%s329 + $0x28] sm:$0xff]
        %v2217 = vld [vmem:[%s329 + $0x30] sm:$0xff]
        %v2218 = vld [vmem:[%s329 + $0x38] sm:$0xff]
        %v2219 = vld [vmem:[%s329 + $0x40] sm:$0xff]
        %v2220 = vld [vmem:[%s329 + $0x48] sm:$0xff]
        %v2221 = vld [vmem:[%s329 + $0x50] sm:$0xff]
        %v2222 = vld [vmem:[%s329 + $0x58] sm:$0xff]
        %v2223 = vld [vmem:[%s329 + $0x60] sm:$0xff]
        %v2224 = vld [vmem:[%s329 + $0x68] sm:$0xff]
        %v2225 = vld [vmem:[%s329 + $0x70] sm:$0xff]
        %v2226 = vld [vmem:[%s329 + $0x78] sm:$0xff]
        %v2227 = vpack.c.bf16 %v2155, %v2147
        %v2228 = vpack.c.bf16 %v2156, %v2148
        %v2229 = vpack.c.bf16 %v2157, %v2149
        %v2230 = vpack.c.bf16 %v2158, %v2150
        %v2231 = vpack.c.bf16 %v2159, %v2151
        %v2232 = vpack.c.bf16 %v2160, %v2152
        %v2233 = vpack.c.bf16 %v2161, %v2153
        %v2234 = vpack.c.bf16 %v2162, %v2154
        %v2235 = vpack.c.bf16 %v2171, %v2163
        %v2236 = vpack.c.bf16 %v2172, %v2164
        %v2237 = vpack.c.bf16 %v2173, %v2165
        %v2238 = vpack.c.bf16 %v2174, %v2166
        %v2239 = vpack.c.bf16 %v2175, %v2167
        %v2240 = vpack.c.bf16 %v2176, %v2168
        %v2241 = vpack.c.bf16 %v2177, %v2169
        %v2242 = vpack.c.bf16 %v2178, %v2170
        %v2243 = vpack.c.bf16 %v2187, %v2179
        %v2244 = vpack.c.bf16 %v2188, %v2180
        %v2245 = vpack.c.bf16 %v2189, %v2181
        %v2246 = vpack.c.bf16 %v2190, %v2182
        %v2247 = vpack.c.bf16 %v2191, %v2183
        %v2248 = vpack.c.bf16 %v2192, %v2184
        %v2249 = vpack.c.bf16 %v2193, %v2185
        %v2250 = vpack.c.bf16 %v2194, %v2186
        %v2251 = vpack.c.bf16 %v2203, %v2195
        %v2252 = vpack.c.bf16 %v2204, %v2196
        %v2253 = vpack.c.bf16 %v2205, %v2197
        %v2254 = vpack.c.bf16 %v2206, %v2198
        %v2255 = vpack.c.bf16 %v2207, %v2199
        %v2256 = vpack.c.bf16 %v2208, %v2200
        %v2257 = vpack.c.bf16 %v2209, %v2201
        %v2258 = vpack.c.bf16 %v2210, %v2202
        %v2259 = vld [vmem:[#allocation8] sm:$0xff]
        %v2260 = vld [vmem:[#allocation8 + $0x8] sm:$0xff]
        %v2261 = vld [vmem:[#allocation8 + $0x10] sm:$0xff]
        %v2262 = vld [vmem:[#allocation8 + $0x18] sm:$0xff]
        %v2263 = vld [vmem:[#allocation8 + $0x20] sm:$0xff]
        %v2264 = vld [vmem:[#allocation8 + $0x28] sm:$0xff]
        %v2265 = vld [vmem:[#allocation8 + $0x30] sm:$0xff]
        %v2266 = vld [vmem:[#allocation8 + $0x38] sm:$0xff]
        %v2267 = vld [vmem:[#allocation8 + $0x40] sm:$0xff]
        %v2268 = vld [vmem:[#allocation8 + $0x48] sm:$0xff]
        %v2269 = vld [vmem:[#allocation8 + $0x50] sm:$0xff]
        %v2270 = vld [vmem:[#allocation8 + $0x58] sm:$0xff]
        %v2271 = vld [vmem:[#allocation8 + $0x60] sm:$0xff]
        %v2272 = vld [vmem:[#allocation8 + $0x68] sm:$0xff]
        %v2273 = vld [vmem:[#allocation8 + $0x70] sm:$0xff]
        %v2274 = vld [vmem:[#allocation8 + $0x78] sm:$0xff]
        %v2275 = vld [vmem:[#allocation8 + $0x80] sm:$0xff]
        %v2276 = vld [vmem:[#allocation8 + $0x88] sm:$0xff]
        %v2277 = vld [vmem:[#allocation8 + $0x90] sm:$0xff]
        %v2278 = vld [vmem:[#allocation8 + $0x98] sm:$0xff]
        %v2279 = vld [vmem:[#allocation8 + $0xa0] sm:$0xff]
        %v2280 = vld [vmem:[#allocation8 + $0xa8] sm:$0xff]
        %v2281 = vld [vmem:[#allocation8 + $0xb0] sm:$0xff]
        %v2282 = vld [vmem:[#allocation8 + $0xb8] sm:$0xff]
        %v2283 = vld [vmem:[#allocation8 + $0xc0] sm:$0xff]
        %v2284 = vld [vmem:[#allocation8 + $0xc8] sm:$0xff]
        %v2285 = vld [vmem:[#allocation8 + $0xd0] sm:$0xff]
        %v2286 = vld [vmem:[#allocation8 + $0xd8] sm:$0xff]
        %v2287 = vld [vmem:[#allocation8 + $0xe0] sm:$0xff]
        %v2288 = vld [vmem:[#allocation8 + $0xe8] sm:$0xff]
        %v2289 = vld [vmem:[#allocation8 + $0xf0] sm:$0xff]
        %v2290 = vld [vmem:[#allocation8 + $0xf8] sm:$0xff]
        %v2291 = vld [vmem:[#allocation8 + $0x100] sm:$0xff]
        %v2292 = vld [vmem:[#allocation8 + $0x108] sm:$0xff]
        %v2293 = vld [vmem:[#allocation8 + $0x110] sm:$0xff]
        %v2294 = vld [vmem:[#allocation8 + $0x118] sm:$0xff]
        %v2295 = vld [vmem:[#allocation8 + $0x120] sm:$0xff]
        %v2296 = vld [vmem:[#allocation8 + $0x128] sm:$0xff]
        %v2297 = vld [vmem:[#allocation8 + $0x130] sm:$0xff]
        %v2298 = vld [vmem:[#allocation8 + $0x138] sm:$0xff]
        %v2299 = vld [vmem:[#allocation8 + $0x140] sm:$0xff]
        %v2300 = vld [vmem:[#allocation8 + $0x148] sm:$0xff]
        %v2301 = vld [vmem:[#allocation8 + $0x150] sm:$0xff]
        %v2302 = vld [vmem:[#allocation8 + $0x158] sm:$0xff]
        %v2303 = vld [vmem:[#allocation8 + $0x160] sm:$0xff]
        %v2304 = vld [vmem:[#allocation8 + $0x168] sm:$0xff]
        %v2305 = vld [vmem:[#allocation8 + $0x170] sm:$0xff]
        %v2306 = vld [vmem:[#allocation8 + $0x178] sm:$0xff]
        %v2307 = vld [vmem:[#allocation8 + $0x180] sm:$0xff]
        %v2308 = vld [vmem:[#allocation8 + $0x188] sm:$0xff]
        %v2309 = vld [vmem:[#allocation8 + $0x190] sm:$0xff]
        %v2310 = vld [vmem:[#allocation8 + $0x198] sm:$0xff]
        %v2311 = vld [vmem:[#allocation8 + $0x1a0] sm:$0xff]
        %v2312 = vld [vmem:[#allocation8 + $0x1a8] sm:$0xff]
        %v2313 = vld [vmem:[#allocation8 + $0x1b0] sm:$0xff]
        %v2314 = vld [vmem:[#allocation8 + $0x1b8] sm:$0xff]
        %v2315 = vld [vmem:[#allocation8 + $0x1c0] sm:$0xff]
        %v2316 = vld [vmem:[#allocation8 + $0x1c8] sm:$0xff]
        %v2317 = vld [vmem:[#allocation8 + $0x1d0] sm:$0xff]
        %v2318 = vld [vmem:[#allocation8 + $0x1d8] sm:$0xff]
        %v2319 = vld [vmem:[#allocation8 + $0x1e0] sm:$0xff]
        %v2320 = vld [vmem:[#allocation8 + $0x1e8] sm:$0xff]
        %v2321 = vld [vmem:[#allocation8 + $0x1f0] sm:$0xff]
        %v2322 = vld [vmem:[#allocation8 + $0x1f8] sm:$0xff]
        %v2323 = vld [vmem:[#allocation8 + $0x200] sm:$0xff]
        %v2324 = vld [vmem:[#allocation8 + $0x208] sm:$0xff]
        %v2325 = vld [vmem:[#allocation8 + $0x210] sm:$0xff]
        %v2326 = vld [vmem:[#allocation8 + $0x218] sm:$0xff]
        %v2327 = vld [vmem:[#allocation8 + $0x220] sm:$0xff]
        %v2328 = vld [vmem:[#allocation8 + $0x228] sm:$0xff]
        %v2329 = vld [vmem:[#allocation8 + $0x230] sm:$0xff]
        %v2330 = vld [vmem:[#allocation8 + $0x238] sm:$0xff]
        %v2331 = vld [vmem:[#allocation8 + $0x240] sm:$0xff]
        %v2332 = vld [vmem:[#allocation8 + $0x248] sm:$0xff]
        %v2333 = vld [vmem:[#allocation8 + $0x250] sm:$0xff]
        %v2334 = vld [vmem:[#allocation8 + $0x258] sm:$0xff]
        %v2335 = vld [vmem:[#allocation8 + $0x260] sm:$0xff]
        %v2336 = vld [vmem:[#allocation8 + $0x268] sm:$0xff]
        %v2337 = vld [vmem:[#allocation8 + $0x270] sm:$0xff]
        %v2338 = vld [vmem:[#allocation8 + $0x278] sm:$0xff]
        %v2339 = vld [vmem:[#allocation8 + $0x280] sm:$0xff]
        %v2340 = vld [vmem:[#allocation8 + $0x288] sm:$0xff]
        %v2341 = vld [vmem:[#allocation8 + $0x290] sm:$0xff]
        %v2342 = vld [vmem:[#allocation8 + $0x298] sm:$0xff]
        %v2343 = vld [vmem:[#allocation8 + $0x2a0] sm:$0xff]
        %v2344 = vld [vmem:[#allocation8 + $0x2a8] sm:$0xff]
        %v2345 = vld [vmem:[#allocation8 + $0x2b0] sm:$0xff]
        %v2346 = vld [vmem:[#allocation8 + $0x2b8] sm:$0xff]
        %v2347 = vld [vmem:[#allocation8 + $0x2c0] sm:$0xff]
        %v2348 = vld [vmem:[#allocation8 + $0x2c8] sm:$0xff]
        %v2349 = vld [vmem:[#allocation8 + $0x2d0] sm:$0xff]
        %v2350 = vld [vmem:[#allocation8 + $0x2d8] sm:$0xff]
        %v2351 = vld [vmem:[#allocation8 + $0x2e0] sm:$0xff]
        %v2352 = vld [vmem:[#allocation8 + $0x2e8] sm:$0xff]
        %v2353 = vld [vmem:[#allocation8 + $0x2f0] sm:$0xff]
        %v2354 = vld [vmem:[#allocation8 + $0x2f8] sm:$0xff]
        %v2355 = vld [vmem:[#allocation8 + $0x300] sm:$0xff]
        %v2356 = vld [vmem:[#allocation8 + $0x308] sm:$0xff]
        %v2357 = vld [vmem:[#allocation8 + $0x310] sm:$0xff]
        %v2358 = vld [vmem:[#allocation8 + $0x318] sm:$0xff]
        %v2359 = vld [vmem:[#allocation8 + $0x320] sm:$0xff]
        %v2360 = vld [vmem:[#allocation8 + $0x328] sm:$0xff]
        %v2361 = vld [vmem:[#allocation8 + $0x330] sm:$0xff]
        %v2362 = vld [vmem:[#allocation8 + $0x338] sm:$0xff]
        %v2363 = vld [vmem:[#allocation8 + $0x340] sm:$0xff]
        %v2364 = vld [vmem:[#allocation8 + $0x348] sm:$0xff]
        %v2365 = vld [vmem:[#allocation8 + $0x350] sm:$0xff]
        %v2366 = vld [vmem:[#allocation8 + $0x358] sm:$0xff]
        %v2367 = vld [vmem:[#allocation8 + $0x360] sm:$0xff]
        %v2368 = vld [vmem:[#allocation8 + $0x368] sm:$0xff]
        %v2369 = vld [vmem:[#allocation8 + $0x370] sm:$0xff]
        %v2370 = vld [vmem:[#allocation8 + $0x378] sm:$0xff]
        %v2371 = vld [vmem:[#allocation8 + $0x380] sm:$0xff]
        %v2372 = vld [vmem:[#allocation8 + $0x388] sm:$0xff]
        %v2373 = vld [vmem:[#allocation8 + $0x390] sm:$0xff]
        %v2374 = vld [vmem:[#allocation8 + $0x398] sm:$0xff]
        %v2375 = vld [vmem:[#allocation8 + $0x3a0] sm:$0xff]
        %v2376 = vld [vmem:[#allocation8 + $0x3a8] sm:$0xff]
        %v2377 = vld [vmem:[#allocation8 + $0x3b0] sm:$0xff]
        %v2378 = vld [vmem:[#allocation8 + $0x3b8] sm:$0xff]
        %v2379 = vld [vmem:[#allocation8 + $0x3c0] sm:$0xff]
        %v2380 = vld [vmem:[#allocation8 + $0x3c8] sm:$0xff]
        %v2381 = vld [vmem:[#allocation8 + $0x3d0] sm:$0xff]
        %v2382 = vld [vmem:[#allocation8 + $0x3d8] sm:$0xff]
        %v2383 = vld [vmem:[#allocation8 + $0x3e0] sm:$0xff]
        %v2384 = vld [vmem:[#allocation8 + $0x3e8] sm:$0xff]
        %v2385 = vld [vmem:[#allocation8 + $0x3f0] sm:$0xff]
        %v2386 = vld [vmem:[#allocation8 + $0x3f8] sm:$0xff]
        %v2515 = vunpack.c.l.b16 %v2259
        %v2516 = vunpack.c.h.b16 %v2259
        %v2517 = vunpack.c.l.b16 %v2260
        %v2518 = vunpack.c.h.b16 %v2260
        %v2519 = vunpack.c.l.b16 %v2261
        %v2520 = vunpack.c.h.b16 %v2261
        %v2521 = vunpack.c.l.b16 %v2262
        %v2522 = vunpack.c.h.b16 %v2262
        %v2523 = vunpack.c.l.b16 %v2263
        %v2524 = vunpack.c.h.b16 %v2263
        %v2525 = vunpack.c.l.b16 %v2264
        %v2526 = vunpack.c.h.b16 %v2264
        %v2527 = vunpack.c.l.b16 %v2265
        %v2528 = vunpack.c.h.b16 %v2265
        %v2529 = vunpack.c.l.b16 %v2266
        %v2530 = vunpack.c.h.b16 %v2266
        %v2531 = vunpack.c.l.b16 %v2267
        %v2532 = vunpack.c.h.b16 %v2267
        %v2533 = vunpack.c.l.b16 %v2268
        %v2534 = vunpack.c.h.b16 %v2268
        %v2535 = vunpack.c.l.b16 %v2269
        %v2536 = vunpack.c.h.b16 %v2269
        %v2537 = vunpack.c.l.b16 %v2270
        %v2538 = vunpack.c.h.b16 %v2270
        %v2539 = vunpack.c.l.b16 %v2271
        %v2540 = vunpack.c.h.b16 %v2271
        %v2541 = vunpack.c.l.b16 %v2272
        %v2542 = vunpack.c.h.b16 %v2272
        %v2543 = vunpack.c.l.b16 %v2273
        %v2544 = vunpack.c.h.b16 %v2273
        %v2545 = vunpack.c.l.b16 %v2274
        %v2546 = vunpack.c.h.b16 %v2274
        %v2547 = vunpack.c.l.b16 %v2275
        %v2548 = vunpack.c.h.b16 %v2275
        %v2549 = vunpack.c.l.b16 %v2276
        %v2550 = vunpack.c.h.b16 %v2276
        %v2551 = vunpack.c.l.b16 %v2277
        %v2552 = vunpack.c.h.b16 %v2277
        %v2553 = vunpack.c.l.b16 %v2278
        %v2554 = vunpack.c.h.b16 %v2278
        %v2555 = vunpack.c.l.b16 %v2279
        %v2556 = vunpack.c.h.b16 %v2279
        %v2557 = vunpack.c.l.b16 %v2280
        %v2558 = vunpack.c.h.b16 %v2280
        %v2559 = vunpack.c.l.b16 %v2281
        %v2560 = vunpack.c.h.b16 %v2281
        %v2561 = vunpack.c.l.b16 %v2282
        %v2562 = vunpack.c.h.b16 %v2282
        %v2563 = vunpack.c.l.b16 %v2283
        %v2564 = vunpack.c.h.b16 %v2283
        %v2565 = vunpack.c.l.b16 %v2284
        %v2566 = vunpack.c.h.b16 %v2284
        %v2567 = vunpack.c.l.b16 %v2285
        %v2568 = vunpack.c.h.b16 %v2285
        %v2569 = vunpack.c.l.b16 %v2286
        %v2570 = vunpack.c.h.b16 %v2286
        %v2571 = vunpack.c.l.b16 %v2287
        %v2572 = vunpack.c.h.b16 %v2287
        %v2573 = vunpack.c.l.b16 %v2288
        %v2574 = vunpack.c.h.b16 %v2288
        %v2575 = vunpack.c.l.b16 %v2289
        %v2576 = vunpack.c.h.b16 %v2289
        %v2577 = vunpack.c.l.b16 %v2290
        %v2578 = vunpack.c.h.b16 %v2290
        %v2579 = vunpack.c.l.b16 %v2291
        %v2580 = vunpack.c.h.b16 %v2291
        %v2581 = vunpack.c.l.b16 %v2292
        %v2582 = vunpack.c.h.b16 %v2292
        %v2583 = vunpack.c.l.b16 %v2293
        %v2584 = vunpack.c.h.b16 %v2293
        %v2585 = vunpack.c.l.b16 %v2294
        %v2586 = vunpack.c.h.b16 %v2294
        %v2587 = vunpack.c.l.b16 %v2295
        %v2588 = vunpack.c.h.b16 %v2295
        %v2589 = vunpack.c.l.b16 %v2296
        %v2590 = vunpack.c.h.b16 %v2296
        %v2591 = vunpack.c.l.b16 %v2297
        %v2592 = vunpack.c.h.b16 %v2297
        %v2593 = vunpack.c.l.b16 %v2298
        %v2594 = vunpack.c.h.b16 %v2298
        %v2595 = vunpack.c.l.b16 %v2299
        %v2596 = vunpack.c.h.b16 %v2299
        %v2597 = vunpack.c.l.b16 %v2300
        %v2598 = vunpack.c.h.b16 %v2300
        %v2599 = vunpack.c.l.b16 %v2301
        %v2600 = vunpack.c.h.b16 %v2301
        %v2601 = vunpack.c.l.b16 %v2302
        %v2602 = vunpack.c.h.b16 %v2302
        %v2603 = vunpack.c.l.b16 %v2303
        %v2604 = vunpack.c.h.b16 %v2303
        %v2605 = vunpack.c.l.b16 %v2304
        %v2606 = vunpack.c.h.b16 %v2304
        %v2607 = vunpack.c.l.b16 %v2305
        %v2608 = vunpack.c.h.b16 %v2305
        %v2609 = vunpack.c.l.b16 %v2306
        %v2610 = vunpack.c.h.b16 %v2306
        %v2611 = vunpack.c.l.b16 %v2307
        %v2612 = vunpack.c.h.b16 %v2307
        %v2613 = vunpack.c.l.b16 %v2308
        %v2614 = vunpack.c.h.b16 %v2308
        %v2615 = vunpack.c.l.b16 %v2309
        %v2616 = vunpack.c.h.b16 %v2309
        %v2617 = vunpack.c.l.b16 %v2310
        %v2618 = vunpack.c.h.b16 %v2310
        %v2619 = vunpack.c.l.b16 %v2311
        %v2620 = vunpack.c.h.b16 %v2311
        %v2621 = vunpack.c.l.b16 %v2312
        %v2622 = vunpack.c.h.b16 %v2312
        %v2623 = vunpack.c.l.b16 %v2313
        %v2624 = vunpack.c.h.b16 %v2313
        %v2625 = vunpack.c.l.b16 %v2314
        %v2626 = vunpack.c.h.b16 %v2314
        %v2627 = vunpack.c.l.b16 %v2315
        %v2628 = vunpack.c.h.b16 %v2315
        %v2629 = vunpack.c.l.b16 %v2316
        %v2630 = vunpack.c.h.b16 %v2316
        %v2631 = vunpack.c.l.b16 %v2317
        %v2632 = vunpack.c.h.b16 %v2317
        %v2633 = vunpack.c.l.b16 %v2318
        %v2634 = vunpack.c.h.b16 %v2318
        %v2635 = vunpack.c.l.b16 %v2319
        %v2636 = vunpack.c.h.b16 %v2319
        %v2637 = vunpack.c.l.b16 %v2320
        %v2638 = vunpack.c.h.b16 %v2320
        %v2639 = vunpack.c.l.b16 %v2321
        %v2640 = vunpack.c.h.b16 %v2321
        %v2641 = vunpack.c.l.b16 %v2322
        %v2642 = vunpack.c.h.b16 %v2322
        %v2643 = vunpack.c.l.b16 %v2323
        %v2644 = vunpack.c.h.b16 %v2323
        %v2645 = vunpack.c.l.b16 %v2324
        %v2646 = vunpack.c.h.b16 %v2324
        %v2647 = vunpack.c.l.b16 %v2325
        %v2648 = vunpack.c.h.b16 %v2325
        %v2649 = vunpack.c.l.b16 %v2326
        %v2650 = vunpack.c.h.b16 %v2326
        %v2651 = vunpack.c.l.b16 %v2327
        %v2652 = vunpack.c.h.b16 %v2327
        %v2653 = vunpack.c.l.b16 %v2328
        %v2654 = vunpack.c.h.b16 %v2328
        %v2655 = vunpack.c.l.b16 %v2329
        %v2656 = vunpack.c.h.b16 %v2329
        %v2657 = vunpack.c.l.b16 %v2330
        %v2658 = vunpack.c.h.b16 %v2330
        %v2659 = vunpack.c.l.b16 %v2331
        %v2660 = vunpack.c.h.b16 %v2331
        %v2661 = vunpack.c.l.b16 %v2332
        %v2662 = vunpack.c.h.b16 %v2332
        %v2663 = vunpack.c.l.b16 %v2333
        %v2664 = vunpack.c.h.b16 %v2333
        %v2665 = vunpack.c.l.b16 %v2334
        %v2666 = vunpack.c.h.b16 %v2334
        %v2667 = vunpack.c.l.b16 %v2335
        %v2668 = vunpack.c.h.b16 %v2335
        %v2669 = vunpack.c.l.b16 %v2336
        %v2670 = vunpack.c.h.b16 %v2336
        %v2671 = vunpack.c.l.b16 %v2337
        %v2672 = vunpack.c.h.b16 %v2337
        %v2673 = vunpack.c.l.b16 %v2338
        %v2674 = vunpack.c.h.b16 %v2338
        %v2675 = vunpack.c.l.b16 %v2339
        %v2676 = vunpack.c.h.b16 %v2339
        %v2677 = vunpack.c.l.b16 %v2340
        %v2678 = vunpack.c.h.b16 %v2340
        %v2679 = vunpack.c.l.b16 %v2341
        %v2680 = vunpack.c.h.b16 %v2341
        %v2681 = vunpack.c.l.b16 %v2342
        %v2682 = vunpack.c.h.b16 %v2342
        %v2683 = vunpack.c.l.b16 %v2343
        %v2684 = vunpack.c.h.b16 %v2343
        %v2685 = vunpack.c.l.b16 %v2344
        %v2686 = vunpack.c.h.b16 %v2344
        %v2687 = vunpack.c.l.b16 %v2345
        %v2688 = vunpack.c.h.b16 %v2345
        %v2689 = vunpack.c.l.b16 %v2346
        %v2690 = vunpack.c.h.b16 %v2346
        %v2691 = vunpack.c.l.b16 %v2347
        %v2692 = vunpack.c.h.b16 %v2347
        %v2693 = vunpack.c.l.b16 %v2348
        %v2694 = vunpack.c.h.b16 %v2348
        %v2695 = vunpack.c.l.b16 %v2349
        %v2696 = vunpack.c.h.b16 %v2349
        %v2697 = vunpack.c.l.b16 %v2350
        %v2698 = vunpack.c.h.b16 %v2350
        %v2699 = vunpack.c.l.b16 %v2351
        %v2700 = vunpack.c.h.b16 %v2351
        %v2701 = vunpack.c.l.b16 %v2352
        %v2702 = vunpack.c.h.b16 %v2352
        %v2703 = vunpack.c.l.b16 %v2353
        %v2704 = vunpack.c.h.b16 %v2353
        %v2705 = vunpack.c.l.b16 %v2354
        %v2706 = vunpack.c.h.b16 %v2354
        %v2707 = vunpack.c.l.b16 %v2355
        %v2708 = vunpack.c.h.b16 %v2355
        %v2709 = vunpack.c.l.b16 %v2356
        %v2710 = vunpack.c.h.b16 %v2356
        %v2711 = vunpack.c.l.b16 %v2357
        %v2712 = vunpack.c.h.b16 %v2357
        %v2713 = vunpack.c.l.b16 %v2358
        %v2714 = vunpack.c.h.b16 %v2358
        %v2715 = vunpack.c.l.b16 %v2359
        %v2716 = vunpack.c.h.b16 %v2359
        %v2717 = vunpack.c.l.b16 %v2360
        %v2718 = vunpack.c.h.b16 %v2360
        %v2719 = vunpack.c.l.b16 %v2361
        %v2720 = vunpack.c.h.b16 %v2361
        %v2721 = vunpack.c.l.b16 %v2362
        %v2722 = vunpack.c.h.b16 %v2362
        %v2723 = vunpack.c.l.b16 %v2363
        %v2724 = vunpack.c.h.b16 %v2363
        %v2725 = vunpack.c.l.b16 %v2364
        %v2726 = vunpack.c.h.b16 %v2364
        %v2727 = vunpack.c.l.b16 %v2365
        %v2728 = vunpack.c.h.b16 %v2365
        %v2729 = vunpack.c.l.b16 %v2366
        %v2730 = vunpack.c.h.b16 %v2366
        %v2731 = vunpack.c.l.b16 %v2367
        %v2732 = vunpack.c.h.b16 %v2367
        %v2733 = vunpack.c.l.b16 %v2368
        %v2734 = vunpack.c.h.b16 %v2368
        %v2735 = vunpack.c.l.b16 %v2369
        %v2736 = vunpack.c.h.b16 %v2369
        %v2737 = vunpack.c.l.b16 %v2370
        %v2738 = vunpack.c.h.b16 %v2370
        %v2739 = vunpack.c.l.b16 %v2371
        %v2740 = vunpack.c.h.b16 %v2371
        %v2741 = vunpack.c.l.b16 %v2372
        %v2742 = vunpack.c.h.b16 %v2372
        %v2743 = vunpack.c.l.b16 %v2373
        %v2744 = vunpack.c.h.b16 %v2373
        %v2745 = vunpack.c.l.b16 %v2374
        %v2746 = vunpack.c.h.b16 %v2374
        %v2747 = vunpack.c.l.b16 %v2375
        %v2748 = vunpack.c.h.b16 %v2375
        %v2749 = vunpack.c.l.b16 %v2376
        %v2750 = vunpack.c.h.b16 %v2376
        %v2751 = vunpack.c.l.b16 %v2377
        %v2752 = vunpack.c.h.b16 %v2377
        %v2753 = vunpack.c.l.b16 %v2378
        %v2754 = vunpack.c.h.b16 %v2378
        %v2755 = vunpack.c.l.b16 %v2379
        %v2756 = vunpack.c.h.b16 %v2379
        %v2757 = vunpack.c.l.b16 %v2380
        %v2758 = vunpack.c.h.b16 %v2380
        %v2759 = vunpack.c.l.b16 %v2381
        %v2760 = vunpack.c.h.b16 %v2381
        %v2761 = vunpack.c.l.b16 %v2382
        %v2762 = vunpack.c.h.b16 %v2382
        %v2763 = vunpack.c.l.b16 %v2383
        %v2764 = vunpack.c.h.b16 %v2383
        %v2765 = vunpack.c.l.b16 %v2384
        %v2766 = vunpack.c.h.b16 %v2384
        %v2767 = vunpack.c.l.b16 %v2385
        %v2768 = vunpack.c.h.b16 %v2385
        %v2769 = vunpack.c.l.b16 %v2386
        %v2770 = vunpack.c.h.b16 %v2386
        %v2771 = vpack.c.b16 %v2517, %v2515
        %v2772 = vpack.c.b16 %v2518, %v2516
        %v2773 = vpack.c.b16 %v2521, %v2519
        %v2774 = vpack.c.b16 %v2522, %v2520
        %v2775 = vpack.c.b16 %v2525, %v2523
        %v2776 = vpack.c.b16 %v2526, %v2524
        %v2777 = vpack.c.b16 %v2529, %v2527
        %v2778 = vpack.c.b16 %v2530, %v2528
        %v2779 = vpack.c.b16 %v2533, %v2531
        %v2780 = vpack.c.b16 %v2534, %v2532
        %v2781 = vpack.c.b16 %v2537, %v2535
        %v2782 = vpack.c.b16 %v2538, %v2536
        %v2783 = vpack.c.b16 %v2541, %v2539
        %v2784 = vpack.c.b16 %v2542, %v2540
        %v2785 = vpack.c.b16 %v2545, %v2543
        %v2786 = vpack.c.b16 %v2546, %v2544
        %v2787 = vpack.c.b16 %v2549, %v2547
        %v2788 = vpack.c.b16 %v2550, %v2548
        %v2789 = vpack.c.b16 %v2553, %v2551
        %v2790 = vpack.c.b16 %v2554, %v2552
        %v2791 = vpack.c.b16 %v2557, %v2555
        %v2792 = vpack.c.b16 %v2558, %v2556
        %v2793 = vpack.c.b16 %v2561, %v2559
        %v2794 = vpack.c.b16 %v2562, %v2560
        %v2795 = vpack.c.b16 %v2565, %v2563
        %v2796 = vpack.c.b16 %v2566, %v2564
        %v2797 = vpack.c.b16 %v2569, %v2567
        %v2798 = vpack.c.b16 %v2570, %v2568
        %v2799 = vpack.c.b16 %v2573, %v2571
        %v2800 = vpack.c.b16 %v2574, %v2572
        %v2801 = vpack.c.b16 %v2577, %v2575
        %v2802 = vpack.c.b16 %v2578, %v2576
        %v2803 = vpack.c.b16 %v2581, %v2579
        %v2804 = vpack.c.b16 %v2582, %v2580
        %v2805 = vpack.c.b16 %v2585, %v2583
        %v2806 = vpack.c.b16 %v2586, %v2584
        %v2807 = vpack.c.b16 %v2589, %v2587
        %v2808 = vpack.c.b16 %v2590, %v2588
        %v2809 = vpack.c.b16 %v2593, %v2591
        %v2810 = vpack.c.b16 %v2594, %v2592
        %v2811 = vpack.c.b16 %v2597, %v2595
        %v2812 = vpack.c.b16 %v2598, %v2596
        %v2813 = vpack.c.b16 %v2601, %v2599
        %v2814 = vpack.c.b16 %v2602, %v2600
        %v2815 = vpack.c.b16 %v2605, %v2603
        %v2816 = vpack.c.b16 %v2606, %v2604
        %v2817 = vpack.c.b16 %v2609, %v2607
        %v2818 = vpack.c.b16 %v2610, %v2608
        %v2819 = vpack.c.b16 %v2613, %v2611
        %v2820 = vpack.c.b16 %v2614, %v2612
        %v2821 = vpack.c.b16 %v2617, %v2615
        %v2822 = vpack.c.b16 %v2618, %v2616
        %v2823 = vpack.c.b16 %v2621, %v2619
        %v2824 = vpack.c.b16 %v2622, %v2620
        %v2825 = vpack.c.b16 %v2625, %v2623
        %v2826 = vpack.c.b16 %v2626, %v2624
        %v2827 = vpack.c.b16 %v2629, %v2627
        %v2828 = vpack.c.b16 %v2630, %v2628
        %v2829 = vpack.c.b16 %v2633, %v2631
        %v2830 = vpack.c.b16 %v2634, %v2632
        %v2831 = vpack.c.b16 %v2637, %v2635
        %v2832 = vpack.c.b16 %v2638, %v2636
        %v2833 = vpack.c.b16 %v2641, %v2639
        %v2834 = vpack.c.b16 %v2642, %v2640
        %v2835 = vpack.c.b16 %v2645, %v2643
        %v2836 = vpack.c.b16 %v2646, %v2644
        %v2837 = vpack.c.b16 %v2649, %v2647
        %v2838 = vpack.c.b16 %v2650, %v2648
        %v2839 = vpack.c.b16 %v2653, %v2651
        %v2840 = vpack.c.b16 %v2654, %v2652
        %v2841 = vpack.c.b16 %v2657, %v2655
        %v2842 = vpack.c.b16 %v2658, %v2656
        %v2843 = vpack.c.b16 %v2661, %v2659
        %v2844 = vpack.c.b16 %v2662, %v2660
        %v2845 = vpack.c.b16 %v2665, %v2663
        %v2846 = vpack.c.b16 %v2666, %v2664
        %v2847 = vpack.c.b16 %v2669, %v2667
        %v2848 = vpack.c.b16 %v2670, %v2668
        %v2849 = vpack.c.b16 %v2673, %v2671
        %v2850 = vpack.c.b16 %v2674, %v2672
        %v2851 = vpack.c.b16 %v2677, %v2675
        %v2852 = vpack.c.b16 %v2678, %v2676
        %v2853 = vpack.c.b16 %v2681, %v2679
        %v2854 = vpack.c.b16 %v2682, %v2680
        %v2855 = vpack.c.b16 %v2685, %v2683
        %v2856 = vpack.c.b16 %v2686, %v2684
        %v2857 = vpack.c.b16 %v2689, %v2687
        %v2858 = vpack.c.b16 %v2690, %v2688
        %v2859 = vpack.c.b16 %v2693, %v2691
        %v2860 = vpack.c.b16 %v2694, %v2692
        %v2861 = vpack.c.b16 %v2697, %v2695
        %v2862 = vpack.c.b16 %v2698, %v2696
        %v2863 = vpack.c.b16 %v2701, %v2699
        %v2864 = vpack.c.b16 %v2702, %v2700
        %v2865 = vpack.c.b16 %v2705, %v2703
        %v2866 = vpack.c.b16 %v2706, %v2704
        %v2867 = vpack.c.b16 %v2709, %v2707
        %v2868 = vpack.c.b16 %v2710, %v2708
        %v2869 = vpack.c.b16 %v2713, %v2711
        %v2870 = vpack.c.b16 %v2714, %v2712
        %v2871 = vpack.c.b16 %v2717, %v2715
        %v2872 = vpack.c.b16 %v2718, %v2716
        %v2873 = vpack.c.b16 %v2721, %v2719
        %v2874 = vpack.c.b16 %v2722, %v2720
        %v2875 = vpack.c.b16 %v2725, %v2723
        %v2876 = vpack.c.b16 %v2726, %v2724
        %v2877 = vpack.c.b16 %v2729, %v2727
        %v2878 = vpack.c.b16 %v2730, %v2728
        %v2879 = vpack.c.b16 %v2733, %v2731
        %v2880 = vpack.c.b16 %v2734, %v2732
        %v2881 = vpack.c.b16 %v2737, %v2735
        %v2882 = vpack.c.b16 %v2738, %v2736
        %v2883 = vpack.c.b16 %v2741, %v2739
        %v2884 = vpack.c.b16 %v2742, %v2740
        %v2885 = vpack.c.b16 %v2745, %v2743
        %v2886 = vpack.c.b16 %v2746, %v2744
        %v2887 = vpack.c.b16 %v2749, %v2747
        %v2888 = vpack.c.b16 %v2750, %v2748
        %v2889 = vpack.c.b16 %v2753, %v2751
        %v2890 = vpack.c.b16 %v2754, %v2752
        %v2891 = vpack.c.b16 %v2757, %v2755
        %v2892 = vpack.c.b16 %v2758, %v2756
        %v2893 = vpack.c.b16 %v2761, %v2759
        %v2894 = vpack.c.b16 %v2762, %v2760
        %v2895 = vpack.c.b16 %v2765, %v2763
        %v2896 = vpack.c.b16 %v2766, %v2764
        %v2897 = vpack.c.b16 %v2769, %v2767
        %v2898 = vpack.c.b16 %v2770, %v2768
        %3027 = vmatpush.bf16.msra.mxu0 %v2785
        %3028 = vmatpush.bf16.msra.mxu0 %v2783
        %3029 = vmatpush.bf16.msra.mxu0 %v2781
        %3030 = vmatpush.bf16.msra.mxu0 %v2779
        %3031 = vmatpush.bf16.msra.mxu0 %v2777
        %3032 = vmatpush.bf16.msra.mxu0 %v2775
        %3033 = vmatpush.bf16.msra.mxu0 %v2773
        %3034 = vmatpush.bf16.msra.mxu0 %v2771
        %3035 = vmatmul.bf16.gmra.mxu0 %v2227
        %v3036 = vpop.f32.mrf.mxu0
        %v3037 = vadd.f32 0.0, %v3036
        %v3038 = vpop.f32.mrf.mxu0
        %v3039 = vadd.f32 0.0, %v3038
        %3040 = vmatmul.bf16.gmra.mxu0 %v2235
        %v3041 = vpop.f32.mrf.mxu0
        %v3042 = vadd.f32 0.0, %v3041
        %v3043 = vpop.f32.mrf.mxu0
        %v3044 = vadd.f32 0.0, %v3043
        %3045 = vmatmul.bf16.gmra.mxu0 %v2243
        %v3046 = vpop.f32.mrf.mxu0
        %v3047 = vadd.f32 0.0, %v3046
        %v3048 = vpop.f32.mrf.mxu0
        %v3049 = vadd.f32 0.0, %v3048
        %3050 = vmatmul.bf16.gmra.mxu0 %v2251
        %v3051 = vpop.f32.mrf.mxu0
        %v3052 = vadd.f32 0.0, %v3051
        %v3053 = vpop.f32.mrf.mxu0
        %v3054 = vadd.f32 0.0, %v3053
        %3055 = vdwg.mxu0
        %3056 = vmatpush.bf16.msra.mxu0 %v2801
        %3057 = vmatpush.bf16.msra.mxu0 %v2799
        %3058 = vmatpush.bf16.msra.mxu0 %v2797
        %3059 = vmatpush.bf16.msra.mxu0 %v2795
        %3060 = vmatpush.bf16.msra.mxu0 %v2793
        %3061 = vmatpush.bf16.msra.mxu0 %v2791
        %3062 = vmatpush.bf16.msra.mxu0 %v2789
        %3063 = vmatpush.bf16.msra.mxu0 %v2787
        %3064 = vmatmul.bf16.gmra.mxu0 %v2228
        %v3065 = vpop.f32.mrf.mxu0
        %v3066 = vadd.f32 %v3037, %v3065
        %v3067 = vpop.f32.mrf.mxu0
        %v3068 = vadd.f32 %v3039, %v3067
        %3069 = vmatmul.bf16.gmra.mxu0 %v2236
        %v3070 = vpop.f32.mrf.mxu0
        %v3071 = vadd.f32 %v3042, %v3070
        %v3072 = vpop.f32.mrf.mxu0
        %v3073 = vadd.f32 %v3044, %v3072
        %3074 = vmatmul.bf16.gmra.mxu0 %v2244
        %v3075 = vpop.f32.mrf.mxu0
        %v3076 = vadd.f32 %v3047, %v3075
        %v3077 = vpop.f32.mrf.mxu0
        %v3078 = vadd.f32 %v3049, %v3077
        %3079 = vmatmul.bf16.gmra.mxu0 %v2252
        %v3080 = vpop.f32.mrf.mxu0
        %v3081 = vadd.f32 %v3052, %v3080
        %v3082 = vpop.f32.mrf.mxu0
        %v3083 = vadd.f32 %v3054, %v3082
        %3084 = vdwg.mxu0
        %3085 = vmatpush.bf16.msra.mxu0 %v2817
        %3086 = vmatpush.bf16.msra.mxu0 %v2815
        %3087 = vmatpush.bf16.msra.mxu0 %v2813
        %3088 = vmatpush.bf16.msra.mxu0 %v2811
        %3089 = vmatpush.bf16.msra.mxu0 %v2809
        %3090 = vmatpush.bf16.msra.mxu0 %v2807
        %3091 = vmatpush.bf16.msra.mxu0 %v2805
        %3092 = vmatpush.bf16.msra.mxu0 %v2803
        %3093 = vmatmul.bf16.gmra.mxu0 %v2229
        %v3094 = vpop.f32.mrf.mxu0
        %v3095 = vadd.f32 %v3066, %v3094
        %v3096 = vpop.f32.mrf.mxu0
        %v3097 = vadd.f32 %v3068, %v3096
        %3098 = vmatmul.bf16.gmra.mxu0 %v2237
        %v3099 = vpop.f32.mrf.mxu0
        %v3100 = vadd.f32 %v3071, %v3099
        %v3101 = vpop.f32.mrf.mxu0
        %v3102 = vadd.f32 %v3073, %v3101
        %3103 = vmatmul.bf16.gmra.mxu0 %v2245
        %v3104 = vpop.f32.mrf.mxu0
        %v3105 = vadd.f32 %v3076, %v3104
        %v3106 = vpop.f32.mrf.mxu0
        %v3107 = vadd.f32 %v3078, %v3106
        %3108 = vmatmul.bf16.gmra.mxu0 %v2253
        %v3109 = vpop.f32.mrf.mxu0
        %v3110 = vadd.f32 %v3081, %v3109
        %v3111 = vpop.f32.mrf.mxu0
        %v3112 = vadd.f32 %v3083, %v3111
        %3113 = vdwg.mxu0
        %3114 = vmatpush.bf16.msra.mxu0 %v2833
        %3115 = vmatpush.bf16.msra.mxu0 %v2831
        %3116 = vmatpush.bf16.msra.mxu0 %v2829
        %3117 = vmatpush.bf16.msra.mxu0 %v2827
        %3118 = vmatpush.bf16.msra.mxu0 %v2825
        %3119 = vmatpush.bf16.msra.mxu0 %v2823
        %3120 = vmatpush.bf16.msra.mxu0 %v2821
        %3121 = vmatpush.bf16.msra.mxu0 %v2819
        %3122 = vmatmul.bf16.gmra.mxu0 %v2230
        %v3123 = vpop.f32.mrf.mxu0
        %v3124 = vadd.f32 %v3095, %v3123
        %v3125 = vpop.f32.mrf.mxu0
        %v3126 = vadd.f32 %v3097, %v3125
        %3127 = vmatmul.bf16.gmra.mxu0 %v2238
        %v3128 = vpop.f32.mrf.mxu0
        %v3129 = vadd.f32 %v3100, %v3128
        %v3130 = vpop.f32.mrf.mxu0
        %v3131 = vadd.f32 %v3102, %v3130
        %3132 = vmatmul.bf16.gmra.mxu0 %v2246
        %v3133 = vpop.f32.mrf.mxu0
        %v3134 = vadd.f32 %v3105, %v3133
        %v3135 = vpop.f32.mrf.mxu0
        %v3136 = vadd.f32 %v3107, %v3135
        %3137 = vmatmul.bf16.gmra.mxu0 %v2254
        %v3138 = vpop.f32.mrf.mxu0
        %v3139 = vadd.f32 %v3110, %v3138
        %v3140 = vpop.f32.mrf.mxu0
        %v3141 = vadd.f32 %v3112, %v3140
        %3142 = vdwg.mxu0
        %3143 = vmatpush.bf16.msra.mxu0 %v2849
        %3144 = vmatpush.bf16.msra.mxu0 %v2847
        %3145 = vmatpush.bf16.msra.mxu0 %v2845
        %3146 = vmatpush.bf16.msra.mxu0 %v2843
        %3147 = vmatpush.bf16.msra.mxu0 %v2841
        %3148 = vmatpush.bf16.msra.mxu0 %v2839
        %3149 = vmatpush.bf16.msra.mxu0 %v2837
        %3150 = vmatpush.bf16.msra.mxu0 %v2835
        %3151 = vmatmul.bf16.gmra.mxu0 %v2231
        %v3152 = vpop.f32.mrf.mxu0
        %v3153 = vadd.f32 %v3124, %v3152
        %v3154 = vpop.f32.mrf.mxu0
        %v3155 = vadd.f32 %v3126, %v3154
        %3156 = vmatmul.bf16.gmra.mxu0 %v2239
        %v3157 = vpop.f32.mrf.mxu0
        %v3158 = vadd.f32 %v3129, %v3157
        %v3159 = vpop.f32.mrf.mxu0
        %v3160 = vadd.f32 %v3131, %v3159
        %3161 = vmatmul.bf16.gmra.mxu0 %v2247
        %v3162 = vpop.f32.mrf.mxu0
        %v3163 = vadd.f32 %v3134, %v3162
        %v3164 = vpop.f32.mrf.mxu0
        %v3165 = vadd.f32 %v3136, %v3164
        %3166 = vmatmul.bf16.gmra.mxu0 %v2255
        %v3167 = vpop.f32.mrf.mxu0
        %v3168 = vadd.f32 %v3139, %v3167
        %v3169 = vpop.f32.mrf.mxu0
        %v3170 = vadd.f32 %v3141, %v3169
        %3171 = vdwg.mxu0
        %3172 = vmatpush.bf16.msra.mxu0 %v2865
        %3173 = vmatpush.bf16.msra.mxu0 %v2863
        %3174 = vmatpush.bf16.msra.mxu0 %v2861
        %3175 = vmatpush.bf16.msra.mxu0 %v2859
        %3176 = vmatpush.bf16.msra.mxu0 %v2857
        %3177 = vmatpush.bf16.msra.mxu0 %v2855
        %3178 = vmatpush.bf16.msra.mxu0 %v2853
        %3179 = vmatpush.bf16.msra.mxu0 %v2851
        %3180 = vmatmul.bf16.gmra.mxu0 %v2232
        %v3181 = vpop.f32.mrf.mxu0
        %v3182 = vadd.f32 %v3153, %v3181
        %v3183 = vpop.f32.mrf.mxu0
        %v3184 = vadd.f32 %v3155, %v3183
        %3185 = vmatmul.bf16.gmra.mxu0 %v2240
        %v3186 = vpop.f32.mrf.mxu0
        %v3187 = vadd.f32 %v3158, %v3186
        %v3188 = vpop.f32.mrf.mxu0
        %v3189 = vadd.f32 %v3160, %v3188
        %3190 = vmatmul.bf16.gmra.mxu0 %v2248
        %v3191 = vpop.f32.mrf.mxu0
        %v3192 = vadd.f32 %v3163, %v3191
        %v3193 = vpop.f32.mrf.mxu0
        %v3194 = vadd.f32 %v3165, %v3193
        %3195 = vmatmul.bf16.gmra.mxu0 %v2256
        %v3196 = vpop.f32.mrf.mxu0
        %v3197 = vadd.f32 %v3168, %v3196
        %v3198 = vpop.f32.mrf.mxu0
        %v3199 = vadd.f32 %v3170, %v3198
        %3200 = vdwg.mxu0
        %3201 = vmatpush.bf16.msra.mxu0 %v2881
        %3202 = vmatpush.bf16.msra.mxu0 %v2879
        %3203 = vmatpush.bf16.msra.mxu0 %v2877
        %3204 = vmatpush.bf16.msra.mxu0 %v2875
        %3205 = vmatpush.bf16.msra.mxu0 %v2873
        %3206 = vmatpush.bf16.msra.mxu0 %v2871
        %3207 = vmatpush.bf16.msra.mxu0 %v2869
        %3208 = vmatpush.bf16.msra.mxu0 %v2867
        %3209 = vmatmul.bf16.gmra.mxu0 %v2233
        %v3210 = vpop.f32.mrf.mxu0
        %v3211 = vadd.f32 %v3182, %v3210
        %v3212 = vpop.f32.mrf.mxu0
        %v3213 = vadd.f32 %v3184, %v3212
        %3214 = vmatmul.bf16.gmra.mxu0 %v2241
        %v3215 = vpop.f32.mrf.mxu0
        %v3216 = vadd.f32 %v3187, %v3215
        %v3217 = vpop.f32.mrf.mxu0
        %v3218 = vadd.f32 %v3189, %v3217
        %3219 = vmatmul.bf16.gmra.mxu0 %v2249
        %v3220 = vpop.f32.mrf.mxu0
        %v3221 = vadd.f32 %v3192, %v3220
        %v3222 = vpop.f32.mrf.mxu0
        %v3223 = vadd.f32 %v3194, %v3222
        %3224 = vmatmul.bf16.gmra.mxu0 %v2257
        %v3225 = vpop.f32.mrf.mxu0
        %v3226 = vadd.f32 %v3197, %v3225
        %v3227 = vpop.f32.mrf.mxu0
        %v3228 = vadd.f32 %v3199, %v3227
        %3229 = vdwg.mxu0
        %3230 = vmatpush.bf16.msra.mxu0 %v2897
        %3231 = vmatpush.bf16.msra.mxu0 %v2895
        %3232 = vmatpush.bf16.msra.mxu0 %v2893
        %3233 = vmatpush.bf16.msra.mxu0 %v2891
        %3234 = vmatpush.bf16.msra.mxu0 %v2889
        %3235 = vmatpush.bf16.msra.mxu0 %v2887
        %3236 = vmatpush.bf16.msra.mxu0 %v2885
        %3237 = vmatpush.bf16.msra.mxu0 %v2883
        %3238 = vmatmul.bf16.gmra.mxu0 %v2234
        %v3239 = vpop.f32.mrf.mxu0
        %v3240 = vadd.f32 %v3211, %v3239
        %v3241 = vpop.f32.mrf.mxu0
        %v3242 = vadd.f32 %v3213, %v3241
        %3243 = vmatmul.bf16.gmra.mxu0 %v2242
        %v3244 = vpop.f32.mrf.mxu0
        %v3245 = vadd.f32 %v3216, %v3244
        %v3246 = vpop.f32.mrf.mxu0
        %v3247 = vadd.f32 %v3218, %v3246
        %3248 = vmatmul.bf16.gmra.mxu0 %v2250
        %v3249 = vpop.f32.mrf.mxu0
        %v3250 = vadd.f32 %v3221, %v3249
        %v3251 = vpop.f32.mrf.mxu0
        %v3252 = vadd.f32 %v3223, %v3251
        %3253 = vmatmul.bf16.gmra.mxu0 %v2258
        %v3254 = vpop.f32.mrf.mxu0
        %v3255 = vadd.f32 %v3226, %v3254
        %v3256 = vpop.f32.mrf.mxu0
        %v3257 = vadd.f32 %v3228, %v3256
        %3258 = vdwg.mxu0
        %3259 = vmatpush.bf16.msra.mxu0 %v2786
        %3260 = vmatpush.bf16.msra.mxu0 %v2784
        %3261 = vmatpush.bf16.msra.mxu0 %v2782
        %3262 = vmatpush.bf16.msra.mxu0 %v2780
        %3263 = vmatpush.bf16.msra.mxu0 %v2778
        %3264 = vmatpush.bf16.msra.mxu0 %v2776
        %3265 = vmatpush.bf16.msra.mxu0 %v2774
        %3266 = vmatpush.bf16.msra.mxu0 %v2772
        %3267 = vmatmul.bf16.gmra.mxu0 %v2227
        %v3268 = vpop.f32.mrf.mxu0
        %v3269 = vadd.f32 0.0, %v3268
        %v3270 = vpop.f32.mrf.mxu0
        %v3271 = vadd.f32 0.0, %v3270
        %3272 = vmatmul.bf16.gmra.mxu0 %v2235
        %v3273 = vpop.f32.mrf.mxu0
        %v3274 = vadd.f32 0.0, %v3273
        %v3275 = vpop.f32.mrf.mxu0
        %v3276 = vadd.f32 0.0, %v3275
        %3277 = vmatmul.bf16.gmra.mxu0 %v2243
        %v3278 = vpop.f32.mrf.mxu0
        %v3279 = vadd.f32 0.0, %v3278
        %v3280 = vpop.f32.mrf.mxu0
        %v3281 = vadd.f32 0.0, %v3280
        %3282 = vmatmul.bf16.gmra.mxu0 %v2251
        %v3283 = vpop.f32.mrf.mxu0
        %v3284 = vadd.f32 0.0, %v3283
        %v3285 = vpop.f32.mrf.mxu0
        %v3286 = vadd.f32 0.0, %v3285
        %3287 = vdwg.mxu0
        %3288 = vmatpush.bf16.msra.mxu0 %v2802
        %3289 = vmatpush.bf16.msra.mxu0 %v2800
        %3290 = vmatpush.bf16.msra.mxu0 %v2798
        %3291 = vmatpush.bf16.msra.mxu0 %v2796
        %3292 = vmatpush.bf16.msra.mxu0 %v2794
        %3293 = vmatpush.bf16.msra.mxu0 %v2792
        %3294 = vmatpush.bf16.msra.mxu0 %v2790
        %3295 = vmatpush.bf16.msra.mxu0 %v2788
        %3296 = vmatmul.bf16.gmra.mxu0 %v2228
        %v3297 = vpop.f32.mrf.mxu0
        %v3298 = vadd.f32 %v3269, %v3297
        %v3299 = vpop.f32.mrf.mxu0
        %v3300 = vadd.f32 %v3271, %v3299
        %3301 = vmatmul.bf16.gmra.mxu0 %v2236
        %v3302 = vpop.f32.mrf.mxu0
        %v3303 = vadd.f32 %v3274, %v3302
        %v3304 = vpop.f32.mrf.mxu0
        %v3305 = vadd.f32 %v3276, %v3304
        %3306 = vmatmul.bf16.gmra.mxu0 %v2244
        %v3307 = vpop.f32.mrf.mxu0
        %v3308 = vadd.f32 %v3279, %v3307
        %v3309 = vpop.f32.mrf.mxu0
        %v3310 = vadd.f32 %v3281, %v3309
        %3311 = vmatmul.bf16.gmra.mxu0 %v2252
        %v3312 = vpop.f32.mrf.mxu0
        %v3313 = vadd.f32 %v3284, %v3312
        %v3314 = vpop.f32.mrf.mxu0
        %v3315 = vadd.f32 %v3286, %v3314
        %3316 = vdwg.mxu0
        %3317 = vmatpush.bf16.msra.mxu0 %v2818
        %3318 = vmatpush.bf16.msra.mxu0 %v2816
        %3319 = vmatpush.bf16.msra.mxu0 %v2814
        %3320 = vmatpush.bf16.msra.mxu0 %v2812
        %3321 = vmatpush.bf16.msra.mxu0 %v2810
        %3322 = vmatpush.bf16.msra.mxu0 %v2808
        %3323 = vmatpush.bf16.msra.mxu0 %v2806
        %3324 = vmatpush.bf16.msra.mxu0 %v2804
        %3325 = vmatmul.bf16.gmra.mxu0 %v2229
        %v3326 = vpop.f32.mrf.mxu0
        %v3327 = vadd.f32 %v3298, %v3326
        %v3328 = vpop.f32.mrf.mxu0
        %v3329 = vadd.f32 %v3300, %v3328
        %3330 = vmatmul.bf16.gmra.mxu0 %v2237
        %v3331 = vpop.f32.mrf.mxu0
        %v3332 = vadd.f32 %v3303, %v3331
        %v3333 = vpop.f32.mrf.mxu0
        %v3334 = vadd.f32 %v3305, %v3333
        %3335 = vmatmul.bf16.gmra.mxu0 %v2245
        %v3336 = vpop.f32.mrf.mxu0
        %v3337 = vadd.f32 %v3308, %v3336
        %v3338 = vpop.f32.mrf.mxu0
        %v3339 = vadd.f32 %v3310, %v3338
        %3340 = vmatmul.bf16.gmra.mxu0 %v2253
        %v3341 = vpop.f32.mrf.mxu0
        %v3342 = vadd.f32 %v3313, %v3341
        %v3343 = vpop.f32.mrf.mxu0
        %v3344 = vadd.f32 %v3315, %v3343
        %3345 = vdwg.mxu0
        %3346 = vmatpush.bf16.msra.mxu0 %v2834
        %3347 = vmatpush.bf16.msra.mxu0 %v2832
        %3348 = vmatpush.bf16.msra.mxu0 %v2830
        %3349 = vmatpush.bf16.msra.mxu0 %v2828
        %3350 = vmatpush.bf16.msra.mxu0 %v2826
        %3351 = vmatpush.bf16.msra.mxu0 %v2824
        %3352 = vmatpush.bf16.msra.mxu0 %v2822
        %3353 = vmatpush.bf16.msra.mxu0 %v2820
        %3354 = vmatmul.bf16.gmra.mxu0 %v2230
        %v3355 = vpop.f32.mrf.mxu0
        %v3356 = vadd.f32 %v3327, %v3355
        %v3357 = vpop.f32.mrf.mxu0
        %v3358 = vadd.f32 %v3329, %v3357
        %3359 = vmatmul.bf16.gmra.mxu0 %v2238
        %v3360 = vpop.f32.mrf.mxu0
        %v3361 = vadd.f32 %v3332, %v3360
        %v3362 = vpop.f32.mrf.mxu0
        %v3363 = vadd.f32 %v3334, %v3362
        %3364 = vmatmul.bf16.gmra.mxu0 %v2246
        %v3365 = vpop.f32.mrf.mxu0
        %v3366 = vadd.f32 %v3337, %v3365
        %v3367 = vpop.f32.mrf.mxu0
        %v3368 = vadd.f32 %v3339, %v3367
        %3369 = vmatmul.bf16.gmra.mxu0 %v2254
        %v3370 = vpop.f32.mrf.mxu0
        %v3371 = vadd.f32 %v3342, %v3370
        %v3372 = vpop.f32.mrf.mxu0
        %v3373 = vadd.f32 %v3344, %v3372
        %3374 = vdwg.mxu0
        %3375 = vmatpush.bf16.msra.mxu0 %v2850
        %3376 = vmatpush.bf16.msra.mxu0 %v2848
        %3377 = vmatpush.bf16.msra.mxu0 %v2846
        %3378 = vmatpush.bf16.msra.mxu0 %v2844
        %3379 = vmatpush.bf16.msra.mxu0 %v2842
        %3380 = vmatpush.bf16.msra.mxu0 %v2840
        %3381 = vmatpush.bf16.msra.mxu0 %v2838
        %3382 = vmatpush.bf16.msra.mxu0 %v2836
        %3383 = vmatmul.bf16.gmra.mxu0 %v2231
        %v3384 = vpop.f32.mrf.mxu0
        %v3385 = vadd.f32 %v3356, %v3384
        %v3386 = vpop.f32.mrf.mxu0
        %v3387 = vadd.f32 %v3358, %v3386
        %3388 = vmatmul.bf16.gmra.mxu0 %v2239
        %v3389 = vpop.f32.mrf.mxu0
        %v3390 = vadd.f32 %v3361, %v3389
        %v3391 = vpop.f32.mrf.mxu0
        %v3392 = vadd.f32 %v3363, %v3391
        %3393 = vmatmul.bf16.gmra.mxu0 %v2247
        %v3394 = vpop.f32.mrf.mxu0
        %v3395 = vadd.f32 %v3366, %v3394
        %v3396 = vpop.f32.mrf.mxu0
        %v3397 = vadd.f32 %v3368, %v3396
        %3398 = vmatmul.bf16.gmra.mxu0 %v2255
        %v3399 = vpop.f32.mrf.mxu0
        %v3400 = vadd.f32 %v3371, %v3399
        %v3401 = vpop.f32.mrf.mxu0
        %v3402 = vadd.f32 %v3373, %v3401
        %3403 = vdwg.mxu0
        %3404 = vmatpush.bf16.msra.mxu0 %v2866
        %3405 = vmatpush.bf16.msra.mxu0 %v2864
        %3406 = vmatpush.bf16.msra.mxu0 %v2862
        %3407 = vmatpush.bf16.msra.mxu0 %v2860
        %3408 = vmatpush.bf16.msra.mxu0 %v2858
        %3409 = vmatpush.bf16.msra.mxu0 %v2856
        %3410 = vmatpush.bf16.msra.mxu0 %v2854
        %3411 = vmatpush.bf16.msra.mxu0 %v2852
        %3412 = vmatmul.bf16.gmra.mxu0 %v2232
        %v3413 = vpop.f32.mrf.mxu0
        %v3414 = vadd.f32 %v3385, %v3413
        %v3415 = vpop.f32.mrf.mxu0
        %v3416 = vadd.f32 %v3387, %v3415
        %3417 = vmatmul.bf16.gmra.mxu0 %v2240
        %v3418 = vpop.f32.mrf.mxu0
        %v3419 = vadd.f32 %v3390, %v3418
        %v3420 = vpop.f32.mrf.mxu0
        %v3421 = vadd.f32 %v3392, %v3420
        %3422 = vmatmul.bf16.gmra.mxu0 %v2248
        %v3423 = vpop.f32.mrf.mxu0
        %v3424 = vadd.f32 %v3395, %v3423
        %v3425 = vpop.f32.mrf.mxu0
        %v3426 = vadd.f32 %v3397, %v3425
        %3427 = vmatmul.bf16.gmra.mxu0 %v2256
        %v3428 = vpop.f32.mrf.mxu0
        %v3429 = vadd.f32 %v3400, %v3428
        %v3430 = vpop.f32.mrf.mxu0
        %v3431 = vadd.f32 %v3402, %v3430
        %3432 = vdwg.mxu0
        %3433 = vmatpush.bf16.msra.mxu0 %v2882
        %3434 = vmatpush.bf16.msra.mxu0 %v2880
        %3435 = vmatpush.bf16.msra.mxu0 %v2878
        %3436 = vmatpush.bf16.msra.mxu0 %v2876
        %3437 = vmatpush.bf16.msra.mxu0 %v2874
        %3438 = vmatpush.bf16.msra.mxu0 %v2872
        %3439 = vmatpush.bf16.msra.mxu0 %v2870
        %3440 = vmatpush.bf16.msra.mxu0 %v2868
        %3441 = vmatmul.bf16.gmra.mxu0 %v2233
        %v3442 = vpop.f32.mrf.mxu0
        %v3443 = vadd.f32 %v3414, %v3442
        %v3444 = vpop.f32.mrf.mxu0
        %v3445 = vadd.f32 %v3416, %v3444
        %3446 = vmatmul.bf16.gmra.mxu0 %v2241
        %v3447 = vpop.f32.mrf.mxu0
        %v3448 = vadd.f32 %v3419, %v3447
        %v3449 = vpop.f32.mrf.mxu0
        %v3450 = vadd.f32 %v3421, %v3449
        %3451 = vmatmul.bf16.gmra.mxu0 %v2249
        %v3452 = vpop.f32.mrf.mxu0
        %v3453 = vadd.f32 %v3424, %v3452
        %v3454 = vpop.f32.mrf.mxu0
        %v3455 = vadd.f32 %v3426, %v3454
        %3456 = vmatmul.bf16.gmra.mxu0 %v2257
        %v3457 = vpop.f32.mrf.mxu0
        %v3458 = vadd.f32 %v3429, %v3457
        %v3459 = vpop.f32.mrf.mxu0
        %v3460 = vadd.f32 %v3431, %v3459
        %3461 = vdwg.mxu0
        %3462 = vmatpush.bf16.msra.mxu0 %v2898
        %3463 = vmatpush.bf16.msra.mxu0 %v2896
        %3464 = vmatpush.bf16.msra.mxu0 %v2894
        %3465 = vmatpush.bf16.msra.mxu0 %v2892
        %3466 = vmatpush.bf16.msra.mxu0 %v2890
        %3467 = vmatpush.bf16.msra.mxu0 %v2888
        %3468 = vmatpush.bf16.msra.mxu0 %v2886
        %3469 = vmatpush.bf16.msra.mxu0 %v2884
        %3470 = vmatmul.bf16.gmra.mxu0 %v2234
        %v3471 = vpop.f32.mrf.mxu0
        %v3472 = vadd.f32 %v3443, %v3471
        %v3473 = vpop.f32.mrf.mxu0
        %v3474 = vadd.f32 %v3445, %v3473
        %3475 = vmatmul.bf16.gmra.mxu0 %v2242
        %v3476 = vpop.f32.mrf.mxu0
        %v3477 = vadd.f32 %v3448, %v3476
        %v3478 = vpop.f32.mrf.mxu0
        %v3479 = vadd.f32 %v3450, %v3478
        %3480 = vmatmul.bf16.gmra.mxu0 %v2250
        %v3481 = vpop.f32.mrf.mxu0
        %v3482 = vadd.f32 %v3453, %v3481
        %v3483 = vpop.f32.mrf.mxu0
        %v3484 = vadd.f32 %v3455, %v3483
        %3485 = vmatmul.bf16.gmra.mxu0 %v2258
        %v3486 = vpop.f32.mrf.mxu0
        %v3487 = vadd.f32 %v3458, %v3486
        %v3488 = vpop.f32.mrf.mxu0
        %v3489 = vadd.f32 %v3460, %v3488
        %3490 = vdwg.mxu0
        %v3491 = vadd.f32 %v2211, %v3240
        %v3492 = vadd.f32 %v2212, %v3472
        %v3493 = vadd.f32 %v2213, %v3242
        %v3494 = vadd.f32 %v2214, %v3474
        %v3495 = vadd.f32 %v2215, %v3245
        %v3496 = vadd.f32 %v2216, %v3477
        %v3497 = vadd.f32 %v2217, %v3247
        %v3498 = vadd.f32 %v2218, %v3479
        %v3499 = vadd.f32 %v2219, %v3250
        %v3500 = vadd.f32 %v2220, %v3482
        %v3501 = vadd.f32 %v2221, %v3252
        %v3502 = vadd.f32 %v2222, %v3484
        %v3503 = vadd.f32 %v2223, %v3255
        %v3504 = vadd.f32 %v2224, %v3487
        %v3505 = vadd.f32 %v2225, %v3257
        %v3506 = vadd.f32 %v2226, %v3489
        %3507 = vst [vmem:[%s329] sm:$0xff] %v3491
        %3508 = vst [vmem:[%s329 + $0x8] sm:$0xff] %v3492
        %3509 = vst [vmem:[%s329 + $0x10] sm:$0xff] %v3493
        %3510 = vst [vmem:[%s329 + $0x18] sm:$0xff] %v3494
        %3511 = vst [vmem:[%s329 + $0x20] sm:$0xff] %v3495
        %3512 = vst [vmem:[%s329 + $0x28] sm:$0xff] %v3496
        %3513 = vst [vmem:[%s329 + $0x30] sm:$0xff] %v3497
        %3514 = vst [vmem:[%s329 + $0x38] sm:$0xff] %v3498
        %3515 = vst [vmem:[%s329 + $0x40] sm:$0xff] %v3499
        %3516 = vst [vmem:[%s329 + $0x48] sm:$0xff] %v3500
        %3517 = vst [vmem:[%s329 + $0x50] sm:$0xff] %v3501
        %3518 = vst [vmem:[%s329 + $0x58] sm:$0xff] %v3502
        %3519 = vst [vmem:[%s329 + $0x60] sm:$0xff] %v3503
        %3520 = vst [vmem:[%s329 + $0x68] sm:$0xff] %v3504
        %3521 = vst [vmem:[%s329 + $0x70] sm:$0xff] %v3505
        %3522 = vst [vmem:[%s329 + $0x78] sm:$0xff] %v3506
        %s3523 = sand.u32 %s169, 1
        %s3524 = scalar_lea.sflag [#allocation4], %s3523
        %s3525 = sand.u32 %s169, 1
        %s3526 = smul.addr %s3525, 128
        %s3527 = scalar_lea.vmem [#allocation10], %s3526
        // Predicated region
        $region61: #{mlp_pallas.1} parent=39 // pred_check
          %p3528 = pneg %p179
        $region62: #{mlp_pallas.1} parent=39 // pred_check_branch
          %3530 = sbr.rel (%p3528) target = $region64
        $region63: #{mlp_pallas.1} parent=39 // pred_region
          %s3531 = smul.u32 8, %s28
          %3533 = vsyncadd %s3524, 0
          %s3534 = smul.addr %s3531, 2
          %s3535 = smul.addr %s3534, 8
          %s3536 = scalar_lea.hbm %s5, %s3535
          %s3537 = sshll.u32 %s3527, 4
          %s3538 = int_to_ptr.vmem [resolvable:$true] %s3537
          %s3539 = sshll.u32 %s3536, 4
          %s3540 = int_to_ptr.hbm [resolvable:$true] %s3539
          %3545 = dma.vmem_to_hbm [thread:$0]  %s3538, 2048, %s3540, %s3524, 256, 256, 16
        $region64: #{mlp_pallas.1} parent=39 // pred_fallthru
          _
      $region40: #{mlp_pallas.1} parent=5 // pred_fallthru
        _
      %p3546 = scmp.le.s32.totalorder 2, %s19
      // Predicated region
      $region65: #{mlp_pallas.1} parent=5 // pred_check
        %p3547 = pneg %p3546
      $region66: #{mlp_pallas.1} parent=5 // pred_check_branch
        %3549 = sbr.rel (%p3547) target = $region68
      $region67: #{mlp_pallas.1} parent=5 // pred_region
        %s3550 = ssub.s32 %s19, 2
        // Predicated region
        $region69: #{mlp_pallas.1} parent=67 // pred_check
          %p3551 = pneg %p185
        $region70: #{mlp_pallas.1} parent=67 // pred_check_branch
          %3553 = sbr.rel (%p3551) target = $region72
        $region71: #{mlp_pallas.1} parent=67 // pred_region
          %s3554 = sand.u32 %s170, 1
          %s3555 = scalar_lea.sflag [#allocation4], %s3554
          %s3556 = sand.u32 %s170, 1
          %s3557 = smul.addr %s3556, 128
          %s3558 = scalar_lea.vmem [#allocation10], %s3557
          %3560 = dma.done %s3555, 2048
        $region72: #{mlp_pallas.1} parent=67 // pred_fallthru
          _
      $region68: #{mlp_pallas.1} parent=5 // pred_fallthru
        _
    $region6: #{mlp_pallas.1} parent=1 // loop_footer
      %s23 = sadd.s32 1, %s19
    $region7: #{mlp_pallas.1} parent=1 // loop_footer_branch
      %18 = sbr.rel target = $region3
    $region8: #{mlp_pallas.1} parent=1 // loop_exit
      _
    %3561 = vsyncpa [#allocation3], 1
    %s3562 = scalar_lea.sflag [#allocation3], 1
    %3563 = vsyncpa %s3562, 1
    %3564 = vsyncpa [#allocation6], 1
    %3565 = vsyncpa [#allocation9], 1
    %3566 = vsyncpa [#allocation4], 1
    %s3567 = scalar_lea.sflag [#allocation4], 1
    %3568 = vsyncpa %s3567, 1

</llo_original>
